<compile_context>
chip_gen: v5e
topology: v5e:2x2
jax: 0.10.0
libtpu: 0.0.40
codegen_flags: <defaults>
</compile_context>

<pallas_src>
import functools

import numpy as np
import jax
import jax.numpy as jnp
from jax import lax
from jax.experimental import pallas as pl
from jax.experimental.pallas import tpu as pltpu

HIDDEN1_UNITS = 256
HIDDEN2_UNITS = 254
N_ACTION = 3
K = 5      # conv kernel size
PAD = 2    # conv padding


# ---------------------------------------------------------------------------
# Fully fused kernel: conv1+pool3 -> conv2+pool4 -> fc1 -> fc2 -> out
# One grid step processes `nb` images.  Row layout everywhere: (spatial, image).
# ---------------------------------------------------------------------------
def _critic_kernel(xg_ref, a_ref, m1_ref, b1_ref, m2_ref, b2_ref,
                   w1_ref, bfc1_ref, w2_ref, bfc2_ref, wo_ref, bo_ref,
                   o_ref, *, nb):
    f32 = jnp.float32
    bf16 = jnp.bfloat16
    g1 = 16 * nb                       # rows per H-phase slab / conv1 output rows

    # ---------------- conv1 + ReLU + MaxPool(3) ----------------
    # xg_ref: (1, 3, 24*nb, 256) bf16, rows grouped by (padded H row mod 3), image-minor.
    # Build one long-K LHS: rows = (H-phase, pooled-H index, image), lanes = (tap di, w, cin).
    phase_rows = []
    for ph in range(3):                                  # H-pool phase
        taps = []
        for di in range(K):                              # conv kernel rows
            q = ph + di                                  # padded input row offset
            js = (q // 3) * nb
            taps.append(xg_ref[0, q % 3, js:js + g1, :])          # (16nb, 256)
        phase_rows.append(jnp.concatenate(taps, axis=1))          # (16nb, 1280)
    lhs1 = jnp.concatenate(phase_rows, axis=0)                    # (48nb, 1280)
    y1 = jnp.dot(lhs1, m1_ref[...], preferred_element_type=f32)   # (48nb, 768)
    # W-pool: max over the 3 pool-phase column slabs (128-aligned)
    y1 = jnp.maximum(jnp.maximum(y1[:, 0:256], y1[:, 256:512]), y1[:, 512:768])
    y1 = jnp.maximum(y1 + b1_ref[...], 0.0)                       # bias + ReLU
    # H-pool: max over the 3 H-phase row slabs
    z1 = jnp.maximum(jnp.maximum(y1[0:g1], y1[g1:2 * g1]), y1[2 * g1:3 * g1])  # (16nb, 256)

    # ---------------- conv2 + ReLU + MaxPool(4) ----------------
    # Zero-pad conv1 output by 2 rows (per spatial position, image-minor layout keeps this a
    # simple row concat); W padding is baked into the banded weights.
    zpad = jnp.zeros((2 * nb, 256), bf16)
    z1p = jnp.concatenate([zpad, z1.astype(bf16), zpad], axis=0)              # (20nb, 256)
    lhs2 = jnp.concatenate(
        [z1p[di * nb:(di + 16) * nb, :] for di in range(K)], axis=1)          # (16nb, 1280)
    y2 = jnp.dot(lhs2, m2_ref[...], preferred_element_type=f32)               # (16nb, 512)
    y2 = jnp.maximum(jnp.maximum(y2[:, 0:128], y2[:, 128:256]),
                     jnp.maximum(y2[:, 256:384], y2[:, 384:512]))             # W-pool
    y2 = jnp.maximum(y2 + b2_ref[...], 0.0)                                   # (16nb, 128)

    # ---- MaxPool(4) along H (4 contiguous nb-row chunks) + flatten into fc1 LHS ----
    slabs = []
    for oh in range(4):
        r0 = 4 * oh * nb
        s01 = jnp.maximum(y2[r0:r0 + nb], y2[r0 + nb:r0 + 2 * nb])
        s23 = jnp.maximum(y2[r0 + 2 * nb:r0 + 3 * nb], y2[r0 + 3 * nb:r0 + 4 * nb])
        slabs.append(jnp.maximum(s01, s23).astype(bf16))                      # (nb, 128)
    # fc1 LHS = [pooled conv2 (512 lanes, order folded into w1), action (128 lanes, zero padded)]
    lhs_fc = jnp.concatenate(slabs + [a_ref[0]], axis=1)                      # (nb, 640)

    # ---------------- fc1 + ReLU, fc2 + ReLU, out ----------------
    h1 = jnp.dot(lhs_fc, w1_ref[...], preferred_element_type=f32) + bfc1_ref[...]
    h1 = jnp.maximum(h1, 0.0).astype(bf16)                                    # (nb, 256)
    h2 = jnp.dot(h1, w2_ref[...], preferred_element_type=f32) + bfc2_ref[...]
    h2 = jnp.maximum(h2, 0.0).astype(bf16)                                    # (nb, 256)
    o_ref[0] = jnp.dot(h2, wo_ref[...], preferred_element_type=f32) + bo_ref[...]


# ---------------------------------------------------------------------------
# Banded pool-phase conv weights (built once, host side, numpy).
# Columns = (W-pool phase, pooled W index, Cout); rows = (tap di, w, Cin).
# ---------------------------------------------------------------------------
def _build_m1(w_hwio):                      # (5,5,3,16) -> (1280, 768)
    m = np.zeros((K, 256, 3, 16, 16), np.float32)
    for di in range(K):
        for pw in range(3):
            for ow in range(16):
                for dj in range(K):
                    w = 3 * ow + pw + dj - PAD
                    if 0 <= w < 48:
                        m[di, w * 3:w * 3 + 3, pw, ow, :] += w_hwio[di, dj, :, :]
    return m.reshape(K * 256, 3 * 16 * 16)


def _build_m2(w_hwio):                      # (5,5,16,32) -> (1280, 512)
    m = np.zeros((K, 256, 4, 4, 32), np.float32)
    for di in range(K):
        for pw in range(4):
            for ow in range(4):
                for dj in range(K):
                    w = 4 * ow + pw + dj - PAD
                    if 0 <= w < 16:
                        m[di, w * 16:(w + 1) * 16, pw, ow, :] += w_hwio[di, dj, :, :]
    return m.reshape(K * 256, 4 * 4 * 32)


# ---------------------------------------------------------------------------
# Parameters (PyTorch layouts) + one-time repack into kernel layouts
# ---------------------------------------------------------------------------
def init_params(key):
    def uni(k, shape, fan_in):
        b = 1.0 / np.sqrt(fan_in)
        return jax.random.uniform(k, shape, jnp.float32, -b, b)

    ks = jax.random.split(key, 10)
    return {
        "conv1_w": uni(ks[0], (16, 3, K, K), 3 * K * K),        # OIHW (PyTorch)
        "conv1_b": uni(ks[1], (16,), 3 * K * K),
        "conv2_w": uni(ks[2], (32, 16, K, K), 16 * K * K),
        "conv2_b": uni(ks[3], (32,), 16 * K * K),
        "fc1_w": uni(ks[4], (HIDDEN1_UNITS, 512 + N_ACTION), 512 + N_ACTION),
        "fc1_b": uni(ks[5], (HIDDEN1_UNITS,), 512 + N_ACTION),
        "fc2_w": uni(ks[6], (HIDDEN2_UNITS, HIDDEN1_UNITS), HIDDEN1_UNITS),
        "fc2_b": uni(ks[7], (HIDDEN2_UNITS,), HIDDEN1_UNITS),
        "out_w": uni(ks[8], (1, HIDDEN2_UNITS), HIDDEN2_UNITS),
        "out_b": uni(ks[9], (1,), HIDDEN2_UNITS),
    }


def prepare_params(p):
    """One-time repack of PyTorch-layout params into kernel-friendly bf16 layouts."""
    f32 = np.float32
    bf = jnp.bfloat16
    w1 = np.asarray(p["conv1_w"], f32).transpose(2, 3, 1, 0)     # (kh,kw,cin,cout)
    w2 = np.asarray(p["conv2_w"], f32).transpose(2, 3, 1, 0)
    m1 = _build_m1(w1)
    m2 = _build_m2(w2)
    b1row = np.tile(np.asarray(p["conv1_b"], f32), 16).reshape(1, 256)
    b2row = np.tile(np.asarray(p["conv2_b"], f32), 4).reshape(1, 128)

    # fc1: fold the PyTorch NCHW flatten (c,h,w) into the weight row order used by the kernel
    # (kernel flat order is oh*128 + ow*32 + c).
    W1 = np.asarray(p["fc1_w"], f32).T                           # (515, 256)
    w1s = W1[:512].reshape(32, 4, 4, HIDDEN1_UNITS).transpose(1, 2, 0, 3).reshape(512, HIDDEN1_UNITS)
    w1a = np.zeros((128, HIDDEN1_UNITS), f32)
    w1a[:N_ACTION] = W1[512:512 + N_ACTION]
    w1cat = np.concatenate([w1s, w1a], axis=0)                   # (640, 256)
    bfc1 = np.asarray(p["fc1_b"], f32).reshape(1, HIDDEN1_UNITS)

    # fc2 / out: pad HIDDEN2 (254) to 256 lanes and the final layer to 128 output lanes.
    W2 = np.asarray(p["fc2_w"], f32).T                           # (256, 254)
    w2p = np.zeros((256, 256), f32)
    w2p[:, :HIDDEN2_UNITS] = W2
    bfc2 = np.zeros((1, 256), f32)
    bfc2[0, :HIDDEN2_UNITS] = np.asarray(p["fc2_b"], f32)
    Wo = np.asarray(p["out_w"], f32).T                           # (254, 1)
    wop = np.zeros((256, 128), f32)
    wop[:HIDDEN2_UNITS, 0] = Wo[:, 0]
    bop = np.zeros((1, 128), f32)
    bop[0, 0] = np.asarray(p["out_b"], f32)[0]

    return dict(
        m1=jnp.asarray(m1, bf), b1=jnp.asarray(b1row),
        m2=jnp.asarray(m2, bf), b2=jnp.asarray(b2row),
        w1=jnp.asarray(w1cat, bf), bfc1=jnp.asarray(bfc1),
        w2=jnp.asarray(w2p, bf), bfc2=jnp.asarray(bfc2),
        wo=jnp.asarray(wop, bf), bo=jnp.asarray(bop),
    )


# ---------------------------------------------------------------------------
# Forward pass (matches CriticNetwork.forward)
# ---------------------------------------------------------------------------
def critic_forward(pp, s_nchw, a):
    B = s_nchw.shape[0]
    assert s_nchw.shape[1:] == (3, 48, 48)
    # batch block size: keep >=2 grid steps (both v7x cores busy), cap blocks at 4 images
    nb = 4 if B >= 8 else (2 if B >= 4 else 1)
    nblk = -(-B // nb)
    Bp = nblk * nb

    # NCHW -> row layout (B, 48, 144), zero-pad H and lanes, group rows by (padded H mod 3),
    # image-minor within each batch block -> (nblk, 3, 24*nb, 256) bf16.
    x = jnp.transpose(s_nchw, (0, 2, 3, 1)).reshape(B, 48, 48 * 3)
    if Bp > B:
        x = jnp.pad(x, ((0, Bp - B), (0, 0), (0, 0)))
    x72 = jnp.zeros((Bp, 72, 256), jnp.float32).at[:, 2:50, :144].set(x)
    xg = x72.reshape(Bp, 24, 3, 256).transpose(0, 2, 1, 3)            # (Bp, 3, 24, 256)
    xg = xg.reshape(nblk, nb, 3, 24, 256).transpose(0, 2, 3, 1, 4)
    xg = xg.reshape(nblk, 3, 24 * nb, 256).astype(jnp.bfloat16)

    ap = jnp.zeros((Bp, 128), jnp.float32).at[:B, :N_ACTION].set(a)
    ap = ap.reshape(nblk, nb, 128).astype(jnp.bfloat16)

    kern = functools.partial(_critic_kernel, nb=nb)
    out = pl.pallas_call(
        kern,
        out_shape=jax.ShapeDtypeStruct((nblk, nb, 128), jnp.float32),
        grid=(nblk,),
        in_specs=[
            pl.BlockSpec((1, 3, 24 * nb, 256), lambda i: (i, 0, 0, 0)),   # xg
            pl.BlockSpec((1, nb, 128), lambda i: (i, 0, 0)),              # action
            pl.BlockSpec((1280, 768), lambda i: (0, 0)),                  # m1 (banded conv1)
            pl.BlockSpec((1, 256), lambda i: (0, 0)),                     # b1
            pl.BlockSpec((1280, 512), lambda i: (0, 0)),                  # m2 (banded conv2)
            pl.BlockSpec((1, 128), lambda i: (0, 0)),                     # b2
            pl.BlockSpec((640, 256), lambda i: (0, 0)),                   # fc1 (state+action)
            pl.BlockSpec((1, 256), lambda i: (0, 0)),                     # bfc1
            pl.BlockSpec((256, 256), lambda i: (0, 0)),                   # fc2 (padded to 256)
            pl.BlockSpec((1, 256), lambda i: (0, 0)),                     # bfc2
            pl.BlockSpec((256, 128), lambda i: (0, 0)),                   # out (padded to 128)
            pl.BlockSpec((1, 128), lambda i: (0, 0)),                     # bout
        ],
        out_specs=pl.BlockSpec((1, nb, 128), lambda i: (i, 0, 0)),
        compiler_params=pltpu.CompilerParams(
            dimension_semantics=("parallel",)),
    )(xg, ap, pp["m1"], pp["b1"], pp["m2"], pp["b2"],
      pp["w1"], pp["bfc1"], pp["w2"], pp["bfc2"], pp["wo"], pp["bo"])

    return out.reshape(Bp, 128)[:B, :1]                                   # (B, 1)


# ---------------------------------------------------------------------------
# Pure-JAX f32 reference (uses the raw PyTorch-layout params)
# ---------------------------------------------------------------------------
def critic_forward_ref(params, s_nchw, a):
    x = jnp.transpose(s_nchw, (0, 2, 3, 1))
    w1 = jnp.transpose(params["conv1_w"], (2, 3, 1, 0))
    w2 = jnp.transpose(params["conv2_w"], (2, 3, 1, 0))
    dn = ("NHWC", "HWIO", "NHWC")

    def conv(x, w, b):
        y = lax.conv_general_dilated(x, w, (1, 1), [(PAD, PAD), (PAD, PAD)],
                                     dimension_numbers=dn)
        return jnp.maximum(y + b, 0.0)

    def pool(x, k):
        return lax.reduce_window(x, -jnp.inf, lax.max,
                                 (1, k, k, 1), (1, k, k, 1), "VALID")

    y = pool(conv(x, w1, params["conv1_b"]), 3)
    y = pool(conv(y, w2, params["conv2_b"]), 4)
    B = y.shape[0]
    flat = jnp.transpose(y, (0, 3, 1, 2)).reshape(B, 512)
    x2 = jnp.concatenate([flat, a], axis=1)
    h1 = jnp.maximum(x2 @ params["fc1_w"].T + params["fc1_b"], 0.0)
    h2 = jnp.maximum(h1 @ params["fc2_w"].T + params["fc2_b"], 0.0)
    return h2 @ params["out_w"].T + params["out_b"]


if __name__ == "__main__":
    key = jax.random.PRNGKey(0)
    kp, ks_, ka = jax.random.split(key, 3)

    params = init_params(kp)
    pp = prepare_params(params)                      # one-time weight repack

    s = jax.random.normal(ks_, (2, 3, 48, 48), jnp.float32)   # NCHW, like PyTorch
    a = jax.random.normal(ka, (2, N_ACTION), jnp.float32)

    out = jax.jit(critic_forward)(pp, s, a)
    out = jax.block_until_ready(out)
    assert out.shape == (2, 1), out.shape

    ref = critic_forward_ref(params, s, a)
    # bf16 inputs/weights with f32 accumulation -> loosened tolerance
    assert jnp.allclose(out, ref, rtol=2e-2, atol=2e-2), (out, ref)

    print("KERNEL_OK")
</pallas_src>

<mosaic_0001>
module attributes {stable_mosaic.version = 11 : i64} {
  func.func @_critic_kernel(%arg0: i32, %arg1: memref<1x3x24x256xbf16, #tpu.memory_space<vmem>>, %arg2: memref<1x1x128xbf16, #tpu.memory_space<vmem>>, %arg3: memref<1280x768xbf16, #tpu.memory_space<vmem>>, %arg4: memref<1x256xf32, #tpu.memory_space<vmem>>, %arg5: memref<1280x512xbf16, #tpu.memory_space<vmem>>, %arg6: memref<1x128xf32, #tpu.memory_space<vmem>>, %arg7: memref<640x256xbf16, #tpu.memory_space<vmem>>, %arg8: memref<1x256xf32, #tpu.memory_space<vmem>>, %arg9: memref<256x256xbf16, #tpu.memory_space<vmem>>, %arg10: memref<1x256xf32, #tpu.memory_space<vmem>>, %arg11: memref<256x128xbf16, #tpu.memory_space<vmem>>, %arg12: memref<1x128xf32, #tpu.memory_space<vmem>>, %arg13: memref<1x1x128xf32, #tpu.memory_space<vmem>>) attributes {dimension_semantics = [#tpu.dimension_semantics<parallel>], iteration_bounds = array<i64: 2>, scalar_prefetch = 0 : i64, scratch_operands = 0 : i64, tpu.core_type = #tpu.core_type<tc>, window_params = [{transform_indices = @transform_0, window_bounds = array<i64: 1, 3, 24, 256>}, {transform_indices = @transform_1, window_bounds = array<i64: 1, 1, 128>}, {pipeline_mode = #tpu.pipeline_mode<synchronous>, transform_indices = @transform_2, window_bounds = array<i64: 1280, 768>}, {pipeline_mode = #tpu.pipeline_mode<synchronous>, transform_indices = @transform_3, window_bounds = array<i64: 1, 256>}, {pipeline_mode = #tpu.pipeline_mode<synchronous>, transform_indices = @transform_4, window_bounds = array<i64: 1280, 512>}, {pipeline_mode = #tpu.pipeline_mode<synchronous>, transform_indices = @transform_5, window_bounds = array<i64: 1, 128>}, {pipeline_mode = #tpu.pipeline_mode<synchronous>, transform_indices = @transform_6, window_bounds = array<i64: 640, 256>}, {pipeline_mode = #tpu.pipeline_mode<synchronous>, transform_indices = @transform_7, window_bounds = array<i64: 1, 256>}, {pipeline_mode = #tpu.pipeline_mode<synchronous>, transform_indices = @transform_8, window_bounds = array<i64: 256, 256>}, {pipeline_mode = #tpu.pipeline_mode<synchronous>, transform_indices = @transform_9, window_bounds = array<i64: 1, 256>}, {pipeline_mode = #tpu.pipeline_mode<synchronous>, transform_indices = @transform_10, window_bounds = array<i64: 256, 128>}, {pipeline_mode = #tpu.pipeline_mode<synchronous>, transform_indices = @transform_11, window_bounds = array<i64: 1, 128>}, {transform_indices = @transform_12, window_bounds = array<i64: 1, 1, 128>}]} {
    %c0 = arith.constant 0 : index
    %c0_0 = arith.constant 0 : index
    %c0_1 = arith.constant 0 : index
    %c0_2 = arith.constant 0 : index
    %0 = vector.load %arg1[%c0, %c0_0, %c0_1, %c0_2] : memref<1x3x24x256xbf16, #tpu.memory_space<vmem>>, vector<1x1x16x256xbf16>
    %1 = vector.shape_cast %0 : vector<1x1x16x256xbf16> to vector<16x256xbf16>
    %c0_3 = arith.constant 0 : index
    %c1 = arith.constant 1 : index
    %c0_4 = arith.constant 0 : index
    %c0_5 = arith.constant 0 : index
    %2 = vector.load %arg1[%c0_3, %c1, %c0_4, %c0_5] : memref<1x3x24x256xbf16, #tpu.memory_space<vmem>>, vector<1x1x16x256xbf16>
    %3 = vector.shape_cast %2 : vector<1x1x16x256xbf16> to vector<16x256xbf16>
    %c0_6 = arith.constant 0 : index
    %c2 = arith.constant 2 : index
    %c0_7 = arith.constant 0 : index
    %c0_8 = arith.constant 0 : index
    %4 = vector.load %arg1[%c0_6, %c2, %c0_7, %c0_8] : memref<1x3x24x256xbf16, #tpu.memory_space<vmem>>, vector<1x1x16x256xbf16>
    %5 = vector.shape_cast %4 : vector<1x1x16x256xbf16> to vector<16x256xbf16>
    %c0_9 = arith.constant 0 : index
    %c0_10 = arith.constant 0 : index
    %c1_11 = arith.constant 1 : index
    %c0_12 = arith.constant 0 : index
    %6 = vector.load %arg1[%c0_9, %c0_10, %c1_11, %c0_12] : memref<1x3x24x256xbf16, #tpu.memory_space<vmem>>, vector<1x1x16x256xbf16>
    %7 = vector.shape_cast %6 : vector<1x1x16x256xbf16> to vector<16x256xbf16>
    %c0_13 = arith.constant 0 : index
    %c1_14 = arith.constant 1 : index
    %c1_15 = arith.constant 1 : index
    %c0_16 = arith.constant 0 : index
    %8 = vector.load %arg1[%c0_13, %c1_14, %c1_15, %c0_16] : memref<1x3x24x256xbf16, #tpu.memory_space<vmem>>, vector<1x1x16x256xbf16>
    %9 = vector.shape_cast %8 : vector<1x1x16x256xbf16> to vector<16x256xbf16>
    %10 = tpu.concatenate %1, %3, %5, %7, %9 in 1 : vector<16x256xbf16>, vector<16x256xbf16>, vector<16x256xbf16>, vector<16x256xbf16>, vector<16x256xbf16> -> vector<16x1280xbf16>
    %c0_17 = arith.constant 0 : index
    %c1_18 = arith.constant 1 : index
    %c0_19 = arith.constant 0 : index
    %c0_20 = arith.constant 0 : index
    %11 = vector.load %arg1[%c0_17, %c1_18, %c0_19, %c0_20] : memref<1x3x24x256xbf16, #tpu.memory_space<vmem>>, vector<1x1x16x256xbf16>
    %12 = vector.shape_cast %11 : vector<1x1x16x256xbf16> to vector<16x256xbf16>
    %c0_21 = arith.constant 0 : index
    %c2_22 = arith.constant 2 : index
    %c0_23 = arith.constant 0 : index
    %c0_24 = arith.constant 0 : index
    %13 = vector.load %arg1[%c0_21, %c2_22, %c0_23, %c0_24] : memref<1x3x24x256xbf16, #tpu.memory_space<vmem>>, vector<1x1x16x256xbf16>
    %14 = vector.shape_cast %13 : vector<1x1x16x256xbf16> to vector<16x256xbf16>
    %c0_25 = arith.constant 0 : index
    %c0_26 = arith.constant 0 : index
    %c1_27 = arith.constant 1 : index
    %c0_28 = arith.constant 0 : index
    %15 = vector.load %arg1[%c0_25, %c0_26, %c1_27, %c0_28] : memref<1x3x24x256xbf16, #tpu.memory_space<vmem>>, vector<1x1x16x256xbf16>
    %16 = vector.shape_cast %15 : vector<1x1x16x256xbf16> to vector<16x256xbf16>
    %c0_29 = arith.constant 0 : index
    %c1_30 = arith.constant 1 : index
    %c1_31 = arith.constant 1 : index
    %c0_32 = arith.constant 0 : index
    %17 = vector.load %arg1[%c0_29, %c1_30, %c1_31, %c0_32] : memref<1x3x24x256xbf16, #tpu.memory_space<vmem>>, vector<1x1x16x256xbf16>
    %18 = vector.shape_cast %17 : vector<1x1x16x256xbf16> to vector<16x256xbf16>
    %c0_33 = arith.constant 0 : index
    %c2_34 = arith.constant 2 : index
    %c1_35 = arith.constant 1 : index
    %c0_36 = arith.constant 0 : index
    %19 = vector.load %arg1[%c0_33, %c2_34, %c1_35, %c0_36] : memref<1x3x24x256xbf16, #tpu.memory_space<vmem>>, vector<1x1x16x256xbf16>
    %20 = vector.shape_cast %19 : vector<1x1x16x256xbf16> to vector<16x256xbf16>
    %21 = tpu.concatenate %12, %14, %16, %18, %20 in 1 : vector<16x256xbf16>, vector<16x256xbf16>, vector<16x256xbf16>, vector<16x256xbf16>, vector<16x256xbf16> -> vector<16x1280xbf16>
    %c0_37 = arith.constant 0 : index
    %c2_38 = arith.constant 2 : index
    %c0_39 = arith.constant 0 : index
    %c0_40 = arith.constant 0 : index
    %22 = vector.load %arg1[%c0_37, %c2_38, %c0_39, %c0_40] : memref<1x3x24x256xbf16, #tpu.memory_space<vmem>>, vector<1x1x16x256xbf16>
    %23 = vector.shape_cast %22 : vector<1x1x16x256xbf16> to vector<16x256xbf16>
    %c0_41 = arith.constant 0 : index
    %c0_42 = arith.constant 0 : index
    %c1_43 = arith.constant 1 : index
    %c0_44 = arith.constant 0 : index
    %24 = vector.load %arg1[%c0_41, %c0_42, %c1_43, %c0_44] : memref<1x3x24x256xbf16, #tpu.memory_space<vmem>>, vector<1x1x16x256xbf16>
    %25 = vector.shape_cast %24 : vector<1x1x16x256xbf16> to vector<16x256xbf16>
    %c0_45 = arith.constant 0 : index
    %c1_46 = arith.constant 1 : index
    %c1_47 = arith.constant 1 : index
    %c0_48 = arith.constant 0 : index
    %26 = vector.load %arg1[%c0_45, %c1_46, %c1_47, %c0_48] : memref<1x3x24x256xbf16, #tpu.memory_space<vmem>>, vector<1x1x16x256xbf16>
    %27 = vector.shape_cast %26 : vector<1x1x16x256xbf16> to vector<16x256xbf16>
    %c0_49 = arith.constant 0 : index
    %c2_50 = arith.constant 2 : index
    %c1_51 = arith.constant 1 : index
    %c0_52 = arith.constant 0 : index
    %28 = vector.load %arg1[%c0_49, %c2_50, %c1_51, %c0_52] : memref<1x3x24x256xbf16, #tpu.memory_space<vmem>>, vector<1x1x16x256xbf16>
    %29 = vector.shape_cast %28 : vector<1x1x16x256xbf16> to vector<16x256xbf16>
    %c0_53 = arith.constant 0 : index
    %c0_54 = arith.constant 0 : index
    %c2_55 = arith.constant 2 : index
    %c0_56 = arith.constant 0 : index
    %30 = vector.load %arg1[%c0_53, %c0_54, %c2_55, %c0_56] : memref<1x3x24x256xbf16, #tpu.memory_space<vmem>>, vector<1x1x16x256xbf16>
    %31 = vector.shape_cast %30 : vector<1x1x16x256xbf16> to vector<16x256xbf16>
    %32 = tpu.concatenate %23, %25, %27, %29, %31 in 1 : vector<16x256xbf16>, vector<16x256xbf16>, vector<16x256xbf16>, vector<16x256xbf16>, vector<16x256xbf16> -> vector<16x1280xbf16>
    %33 = tpu.concatenate %10, %21, %32 in 0 : vector<16x1280xbf16>, vector<16x1280xbf16>, vector<16x1280xbf16> -> vector<48x1280xbf16>
    %c0_57 = arith.constant 0 : index
    %c0_58 = arith.constant 0 : index
    %34 = vector.load %arg3[%c0_57, %c0_58] : memref<1280x768xbf16, #tpu.memory_space<vmem>>, vector<1280x768xbf16>
    %cst = arith.constant dense<0.000000e+00> : vector<48x768xf32>
    %35 = tpu.matmul %33, %34, %cst {dimension_numbers = #tpu.dot_dimension_numbers<[1], [0], [0], [1], [0, 0, 1, 1], [], []>} : vector<48x1280xbf16>, vector<1280x768xbf16>, vector<48x768xf32> -> vector<48x768xf32>
    %36 = vector.extract_strided_slice %35 {offsets = [0, 0], sizes = [48, 256], strides = [1, 1]} : vector<48x768xf32> to vector<48x256xf32>
    %37 = vector.extract_strided_slice %35 {offsets = [0, 256], sizes = [48, 256], strides = [1, 1]} : vector<48x768xf32> to vector<48x256xf32>
    %38 = arith.maximumf %36, %37 : vector<48x256xf32>
    %39 = vector.extract_strided_slice %35 {offsets = [0, 512], sizes = [48, 256], strides = [1, 1]} : vector<48x768xf32> to vector<48x256xf32>
    %40 = arith.maximumf %38, %39 : vector<48x256xf32>
    %c0_59 = arith.constant 0 : index
    %c0_60 = arith.constant 0 : index
    %41 = vector.load %arg4[%c0_59, %c0_60] : memref<1x256xf32, #tpu.memory_space<vmem>>, vector<1x256xf32>
    %42 = vector.broadcast %41 : vector<1x256xf32> to vector<48x256xf32>
    %43 = arith.addf %40, %42 : vector<48x256xf32>
    %cst_61 = arith.constant 0.000000e+00 : f32
    %44 = vector.broadcast %cst_61 : f32 to vector<48x256xf32>
    %45 = arith.maximumf %43, %44 : vector<48x256xf32>
    %46 = vector.extract_strided_slice %45 {offsets = [0, 0], sizes = [16, 256], strides = [1, 1]} : vector<48x256xf32> to vector<16x256xf32>
    %47 = vector.extract_strided_slice %45 {offsets = [16, 0], sizes = [16, 256], strides = [1, 1]} : vector<48x256xf32> to vector<16x256xf32>
    %48 = arith.maximumf %46, %47 : vector<16x256xf32>
    %49 = vector.extract_strided_slice %45 {offsets = [32, 0], sizes = [16, 256], strides = [1, 1]} : vector<48x256xf32> to vector<16x256xf32>
    %50 = arith.maximumf %48, %49 : vector<16x256xf32>
    %cst_62 = arith.constant 0.000000e+00 : bf16
    %51 = vector.broadcast %cst_62 : bf16 to vector<2x256xbf16>
    %52 = arith.truncf %50 : vector<16x256xf32> to vector<16x256xbf16>
    %53 = tpu.concatenate %51, %52, %51 in 0 : vector<2x256xbf16>, vector<16x256xbf16>, vector<2x256xbf16> -> vector<20x256xbf16>
    %54 = vector.extract_strided_slice %53 {offsets = [0, 0], sizes = [16, 256], strides = [1, 1]} : vector<20x256xbf16> to vector<16x256xbf16>
    %55 = vector.extract_strided_slice %53 {offsets = [1, 0], sizes = [16, 256], strides = [1, 1]} : vector<20x256xbf16> to vector<16x256xbf16>
    %56 = vector.extract_strided_slice %53 {offsets = [2, 0], sizes = [16, 256], strides = [1, 1]} : vector<20x256xbf16> to vector<16x256xbf16>
    %57 = vector.extract_strided_slice %53 {offsets = [3, 0], sizes = [16, 256], strides = [1, 1]} : vector<20x256xbf16> to vector<16x256xbf16>
    %58 = vector.extract_strided_slice %53 {offsets = [4, 0], sizes = [16, 256], strides = [1, 1]} : vector<20x256xbf16> to vector<16x256xbf16>
    %59 = tpu.concatenate %54, %55, %56, %57, %58 in 1 : vector<16x256xbf16>, vector<16x256xbf16>, vector<16x256xbf16>, vector<16x256xbf16>, vector<16x256xbf16> -> vector<16x1280xbf16>
    %c0_63 = arith.constant 0 : index
    %c0_64 = arith.constant 0 : index
    %60 = vector.load %arg5[%c0_63, %c0_64] : memref<1280x512xbf16, #tpu.memory_space<vmem>>, vector<1280x512xbf16>
    %cst_65 = arith.constant dense<0.000000e+00> : vector<16x512xf32>
    %61 = tpu.matmul %59, %60, %cst_65 {dimension_numbers = #tpu.dot_dimension_numbers<[1], [0], [0], [1], [0, 0, 1, 1], [], []>} : vector<16x1280xbf16>, vector<1280x512xbf16>, vector<16x512xf32> -> vector<16x512xf32>
    %62 = vector.extract_strided_slice %61 {offsets = [0, 0], sizes = [16, 128], strides = [1, 1]} : vector<16x512xf32> to vector<16x128xf32>
    %63 = vector.extract_strided_slice %61 {offsets = [0, 128], sizes = [16, 128], strides = [1, 1]} : vector<16x512xf32> to vector<16x128xf32>
    %64 = arith.maximumf %62, %63 : vector<16x128xf32>
    %65 = vector.extract_strided_slice %61 {offsets = [0, 256], sizes = [16, 128], strides = [1, 1]} : vector<16x512xf32> to vector<16x128xf32>
    %66 = vector.extract_strided_slice %61 {offsets = [0, 384], sizes = [16, 128], strides = [1, 1]} : vector<16x512xf32> to vector<16x128xf32>
    %67 = arith.maximumf %65, %66 : vector<16x128xf32>
    %68 = arith.maximumf %64, %67 : vector<16x128xf32>
    %c0_66 = arith.constant 0 : index
    %c0_67 = arith.constant 0 : index
    %69 = vector.load %arg6[%c0_66, %c0_67] : memref<1x128xf32, #tpu.memory_space<vmem>>, vector<1x128xf32>
    %70 = vector.broadcast %69 : vector<1x128xf32> to vector<16x128xf32>
    %71 = arith.addf %68, %70 : vector<16x128xf32>
    %cst_68 = arith.constant 0.000000e+00 : f32
    %72 = vector.broadcast %cst_68 : f32 to vector<16x128xf32>
    %73 = arith.maximumf %71, %72 : vector<16x128xf32>
    %74 = vector.extract_strided_slice %73 {offsets = [0, 0], sizes = [1, 128], strides = [1, 1]} : vector<16x128xf32> to vector<1x128xf32>
    %75 = vector.extract_strided_slice %73 {offsets = [1, 0], sizes = [1, 128], strides = [1, 1]} : vector<16x128xf32> to vector<1x128xf32>
    %76 = arith.maximumf %74, %75 : vector<1x128xf32>
    %77 = vector.extract_strided_slice %73 {offsets = [2, 0], sizes = [1, 128], strides = [1, 1]} : vector<16x128xf32> to vector<1x128xf32>
    %78 = vector.extract_strided_slice %73 {offsets = [3, 0], sizes = [1, 128], strides = [1, 1]} : vector<16x128xf32> to vector<1x128xf32>
    %79 = arith.maximumf %77, %78 : vector<1x128xf32>
    %80 = arith.maximumf %76, %79 : vector<1x128xf32>
    %81 = arith.truncf %80 : vector<1x128xf32> to vector<1x128xbf16>
    %82 = vector.extract_strided_slice %73 {offsets = [4, 0], sizes = [1, 128], strides = [1, 1]} : vector<16x128xf32> to vector<1x128xf32>
    %83 = vector.extract_strided_slice %73 {offsets = [5, 0], sizes = [1, 128], strides = [1, 1]} : vector<16x128xf32> to vector<1x128xf32>
    %84 = arith.maximumf %82, %83 : vector<1x128xf32>
    %85 = vector.extract_strided_slice %73 {offsets = [6, 0], sizes = [1, 128], strides = [1, 1]} : vector<16x128xf32> to vector<1x128xf32>
    %86 = vector.extract_strided_slice %73 {offsets = [7, 0], sizes = [1, 128], strides = [1, 1]} : vector<16x128xf32> to vector<1x128xf32>
    %87 = arith.maximumf %85, %86 : vector<1x128xf32>
    %88 = arith.maximumf %84, %87 : vector<1x128xf32>
    %89 = arith.truncf %88 : vector<1x128xf32> to vector<1x128xbf16>
    %90 = vector.extract_strided_slice %73 {offsets = [8, 0], sizes = [1, 128], strides = [1, 1]} : vector<16x128xf32> to vector<1x128xf32>
    %91 = vector.extract_strided_slice %73 {offsets = [9, 0], sizes = [1, 128], strides = [1, 1]} : vector<16x128xf32> to vector<1x128xf32>
    %92 = arith.maximumf %90, %91 : vector<1x128xf32>
    %93 = vector.extract_strided_slice %73 {offsets = [10, 0], sizes = [1, 128], strides = [1, 1]} : vector<16x128xf32> to vector<1x128xf32>
    %94 = vector.extract_strided_slice %73 {offsets = [11, 0], sizes = [1, 128], strides = [1, 1]} : vector<16x128xf32> to vector<1x128xf32>
    %95 = arith.maximumf %93, %94 : vector<1x128xf32>
    %96 = arith.maximumf %92, %95 : vector<1x128xf32>
    %97 = arith.truncf %96 : vector<1x128xf32> to vector<1x128xbf16>
    %98 = vector.extract_strided_slice %73 {offsets = [12, 0], sizes = [1, 128], strides = [1, 1]} : vector<16x128xf32> to vector<1x128xf32>
    %99 = vector.extract_strided_slice %73 {offsets = [13, 0], sizes = [1, 128], strides = [1, 1]} : vector<16x128xf32> to vector<1x128xf32>
    %100 = arith.maximumf %98, %99 : vector<1x128xf32>
    %101 = vector.extract_strided_slice %73 {offsets = [14, 0], sizes = [1, 128], strides = [1, 1]} : vector<16x128xf32> to vector<1x128xf32>
    %102 = vector.extract_strided_slice %73 {offsets = [15, 0], sizes = [1, 128], strides = [1, 1]} : vector<16x128xf32> to vector<1x128xf32>
    %103 = arith.maximumf %101, %102 : vector<1x128xf32>
    %104 = arith.maximumf %100, %103 : vector<1x128xf32>
    %105 = arith.truncf %104 : vector<1x128xf32> to vector<1x128xbf16>
    %c0_69 = arith.constant 0 : index
    %c0_70 = arith.constant 0 : index
    %c0_71 = arith.constant 0 : index
    %106 = vector.load %arg2[%c0_69, %c0_70, %c0_71] : memref<1x1x128xbf16, #tpu.memory_space<vmem>>, vector<1x1x128xbf16>
    %107 = vector.shape_cast %106 : vector<1x1x128xbf16> to vector<1x128xbf16>
    %108 = tpu.concatenate %81, %89, %97, %105, %107 in 1 : vector<1x128xbf16>, vector<1x128xbf16>, vector<1x128xbf16>, vector<1x128xbf16>, vector<1x128xbf16> -> vector<1x640xbf16>
    %c0_72 = arith.constant 0 : index
    %c0_73 = arith.constant 0 : index
    %109 = vector.load %arg7[%c0_72, %c0_73] : memref<640x256xbf16, #tpu.memory_space<vmem>>, vector<640x256xbf16>
    %cst_74 = arith.constant dense<0.000000e+00> : vector<1x256xf32>
    %110 = tpu.matmul %108, %109, %cst_74 {dimension_numbers = #tpu.dot_dimension_numbers<[1], [0], [0], [1], [0, 0, 1, 1], [], []>} : vector<1x640xbf16>, vector<640x256xbf16>, vector<1x256xf32> -> vector<1x256xf32>
    %c0_75 = arith.constant 0 : index
    %c0_76 = arith.constant 0 : index
    %111 = vector.load %arg8[%c0_75, %c0_76] : memref<1x256xf32, #tpu.memory_space<vmem>>, vector<1x256xf32>
    %112 = arith.addf %110, %111 : vector<1x256xf32>
    %cst_77 = arith.constant 0.000000e+00 : f32
    %113 = vector.broadcast %cst_77 : f32 to vector<1x256xf32>
    %114 = arith.maximumf %112, %113 : vector<1x256xf32>
    %115 = arith.truncf %114 : vector<1x256xf32> to vector<1x256xbf16>
    %c0_78 = arith.constant 0 : index
    %c0_79 = arith.constant 0 : index
    %116 = vector.load %arg9[%c0_78, %c0_79] : memref<256x256xbf16, #tpu.memory_space<vmem>>, vector<256x256xbf16>
    %cst_80 = arith.constant dense<0.000000e+00> : vector<1x256xf32>
    %117 = tpu.matmul %115, %116, %cst_80 {dimension_numbers = #tpu.dot_dimension_numbers<[1], [0], [0], [1], [0, 0, 1, 1], [], []>} : vector<1x256xbf16>, vector<256x256xbf16>, vector<1x256xf32> -> vector<1x256xf32>
    %c0_81 = arith.constant 0 : index
    %c0_82 = arith.constant 0 : index
    %118 = vector.load %arg10[%c0_81, %c0_82] : memref<1x256xf32, #tpu.memory_space<vmem>>, vector<1x256xf32>
    %119 = arith.addf %117, %118 : vector<1x256xf32>
    %cst_83 = arith.constant 0.000000e+00 : f32
    %120 = vector.broadcast %cst_83 : f32 to vector<1x256xf32>
    %121 = arith.maximumf %119, %120 : vector<1x256xf32>
    %122 = arith.truncf %121 : vector<1x256xf32> to vector<1x256xbf16>
    %c0_84 = arith.constant 0 : index
    %c0_85 = arith.constant 0 : index
    %123 = vector.load %arg11[%c0_84, %c0_85] : memref<256x128xbf16, #tpu.memory_space<vmem>>, vector<256x128xbf16>
    %cst_86 = arith.constant dense<0.000000e+00> : vector<1x128xf32>
    %124 = tpu.matmul %122, %123, %cst_86 {dimension_numbers = #tpu.dot_dimension_numbers<[1], [0], [0], [1], [0, 0, 1, 1], [], []>} : vector<1x256xbf16>, vector<256x128xbf16>, vector<1x128xf32> -> vector<1x128xf32>
    %c0_87 = arith.constant 0 : index
    %c0_88 = arith.constant 0 : index
    %125 = vector.load %arg12[%c0_87, %c0_88] : memref<1x128xf32, #tpu.memory_space<vmem>>, vector<1x128xf32>
    %126 = arith.addf %124, %125 : vector<1x128xf32>
    %c0_89 = arith.constant 0 : index
    %c0_90 = arith.constant 0 : index
    %c0_91 = arith.constant 0 : index
    %127 = vector.load %arg13[%c0_89, %c0_90, %c0_91] : memref<1x1x128xf32, #tpu.memory_space<vmem>>, vector<1x1x128xf32>
    %128 = vector.shape_cast %127 : vector<1x1x128xf32> to vector<1x128xf32>
    %129 = vector.shape_cast %126 : vector<1x128xf32> to vector<1x1x128xf32>
    tpu.vector_store %arg13[%c0_89, %c0_90, %c0_91], %129 {strides = array<i32>} : memref<1x1x128xf32, #tpu.memory_space<vmem>>, vector<1x1x128xf32>,
    return
  }
  func.func @transform_0(%arg0: i32) -> (i32, i32, i32, i32) {
    %c0_i32 = arith.constant 0 : i32
    %c0_i32_0 = arith.constant 0 : i32
    %c0_i32_1 = arith.constant 0 : i32
    %c0_i32_2 = arith.constant 0 : i32
    return %arg0, %c0_i32, %c0_i32_0, %c0_i32_1 : i32, i32, i32, i32
  }
  func.func @transform_1(%arg0: i32) -> (i32, i32, i32) {
    %c0_i32 = arith.constant 0 : i32
    %c0_i32_0 = arith.constant 0 : i32
    %c0_i32_1 = arith.constant 0 : i32
    return %arg0, %c0_i32, %c0_i32_0 : i32, i32, i32
  }
  func.func @transform_2(%arg0: i32) -> (i32, i32) {
    %c0_i32 = arith.constant 0 : i32
    %c0_i32_0 = arith.constant 0 : i32
    %c0_i32_1 = arith.constant 0 : i32
    return %c0_i32, %c0_i32_0 : i32, i32
  }
  func.func @transform_3(%arg0: i32) -> (i32, i32) {
    %c0_i32 = arith.constant 0 : i32
    %c0_i32_0 = arith.constant 0 : i32
    %c0_i32_1 = arith.constant 0 : i32
    return %c0_i32, %c0_i32_0 : i32, i32
  }
  func.func @transform_4(%arg0: i32) -> (i32, i32) {
    %c0_i32 = arith.constant 0 : i32
    %c0_i32_0 = arith.constant 0 : i32
    %c0_i32_1 = arith.constant 0 : i32
    return %c0_i32, %c0_i32_0 : i32, i32
  }
  func.func @transform_5(%arg0: i32) -> (i32, i32) {
    %c0_i32 = arith.constant 0 : i32
    %c0_i32_0 = arith.constant 0 : i32
    %c0_i32_1 = arith.constant 0 : i32
    return %c0_i32, %c0_i32_0 : i32, i32
  }
  func.func @transform_6(%arg0: i32) -> (i32, i32) {
    %c0_i32 = arith.constant 0 : i32
    %c0_i32_0 = arith.constant 0 : i32
    %c0_i32_1 = arith.constant 0 : i32
    return %c0_i32, %c0_i32_0 : i32, i32
  }
  func.func @transform_7(%arg0: i32) -> (i32, i32) {
    %c0_i32 = arith.constant 0 : i32
    %c0_i32_0 = arith.constant 0 : i32
    %c0_i32_1 = arith.constant 0 : i32
    return %c0_i32, %c0_i32_0 : i32, i32
  }
  func.func @transform_8(%arg0: i32) -> (i32, i32) {
    %c0_i32 = arith.constant 0 : i32
    %c0_i32_0 = arith.constant 0 : i32
    %c0_i32_1 = arith.constant 0 : i32
    return %c0_i32, %c0_i32_0 : i32, i32
  }
  func.func @transform_9(%arg0: i32) -> (i32, i32) {
    %c0_i32 = arith.constant 0 : i32
    %c0_i32_0 = arith.constant 0 : i32
    %c0_i32_1 = arith.constant 0 : i32
    return %c0_i32, %c0_i32_0 : i32, i32
  }
  func.func @transform_10(%arg0: i32) -> (i32, i32) {
    %c0_i32 = arith.constant 0 : i32
    %c0_i32_0 = arith.constant 0 : i32
    %c0_i32_1 = arith.constant 0 : i32
    return %c0_i32, %c0_i32_0 : i32, i32
  }
  func.func @transform_11(%arg0: i32) -> (i32, i32) {
    %c0_i32 = arith.constant 0 : i32
    %c0_i32_0 = arith.constant 0 : i32
    %c0_i32_1 = arith.constant 0 : i32
    return %c0_i32, %c0_i32_0 : i32, i32
  }
  func.func @transform_12(%arg0: i32) -> (i32, i32, i32) {
    %c0_i32 = arith.constant 0 : i32
    %c0_i32_0 = arith.constant 0 : i32
    %c0_i32_1 = arith.constant 0 : i32
    return %arg0, %c0_i32, %c0_i32_0 : i32, i32, i32
  }
}

</mosaic_0001>

<llo_original>
// kernel: critic_forward.1
$region0: #{critic_forward.1}
  #allocation0 [shape = 'u32[]', space=smem, size = 0x4, offset = 0x4, fixed_abs, tag = 'smem constant byte address 0x4 - core index']
  #allocation1 [shape = 'u32[72,128]{1,0:T(1,128)}', space=vmem, size = 0x9000, scoped, tag = 'internal scratch']
  %s0 = inlined_call_operand.vmem [shape: bf16[2,3,24,256], index: 0, kind: input, shape index: {}]
  %s1 = inlined_call_operand.vmem [shape: bf16[2,1,128], index: 1, kind: input, shape index: {}]
  %s2 = inlined_call_operand.hbm [shape: bf16[1280,768], index: 2, kind: input, shape index: {}]
  %s3 = inlined_call_operand.hbm [shape: f32[1,256], index: 3, kind: input, shape index: {}]
  %s4 = inlined_call_operand.hbm [shape: bf16[1280,512], index: 4, kind: input, shape index: {}]
  %s5 = inlined_call_operand.hbm [shape: f32[1,128], index: 5, kind: input, shape index: {}]
  %s6 = inlined_call_operand.hbm [shape: bf16[640,256], index: 6, kind: input, shape index: {}]
  %s7 = inlined_call_operand.hbm [shape: f32[1,256], index: 7, kind: input, shape index: {}]
  %s8 = inlined_call_operand.hbm [shape: bf16[256,256], index: 8, kind: input, shape index: {}]
  %s9 = inlined_call_operand.hbm [shape: f32[1,256], index: 9, kind: input, shape index: {}]
  %s10 = inlined_call_operand.hbm [shape: bf16[256,128], index: 10, kind: input, shape index: {}]
  %s11 = inlined_call_operand.hbm [shape: f32[1,128], index: 11, kind: input, shape index: {}]
  %s12 = inlined_call_operand.vmem [shape: f32[2,1,128], index: 12, kind: output, shape index: {}]
  %s13 = sld [smem:[#allocation0]]
  $region121: #{critic_forward.1} parent=0
    _
  %s15 = ssub.s32 1, %s13
  %s16 = scalar_select 0, %s15, %s13
  $region1: #{critic_forward.1} parent=0
    #allocation2 [shape = 'u8[1966080]{0}', space=vmem, size = 0x1e0000, scoped, tag = 'input window, operand 2, single buffered']
    #allocation3 [shape = 's32[2]{0}', space=sflag, size = 0x8, scoped, tag = 'scoped memory for critic_forward.1']
    #allocation4 [shape = 'u8[1024]{0}', space=vmem, size = 0x400, scoped, tag = 'input window, operand 3, single buffered']
    #allocation5 [shape = 's32[1]{0}', space=sflag, size = 0x4, scoped, tag = 'scoped memory for critic_forward.1']
    #allocation6 [shape = 'u8[1310720]{0}', space=vmem, size = 0x140000, scoped, tag = 'input window, operand 4, single buffered']
    #allocation7 [shape = 'u8[512]{0}', space=vmem, size = 0x400, scoped, tag = 'input window, operand 5, single buffered']
    #allocation8 [shape = 's32[1]{0}', space=sflag, size = 0x4, scoped, tag = 'scoped memory for critic_forward.1']
    #allocation9 [shape = 'u8[327680]{0}', space=vmem, size = 0x50000, scoped, tag = 'input window, operand 6, single buffered']
    #allocation10 [shape = 'u8[1024]{0}', space=vmem, size = 0x400, scoped, tag = 'input window, operand 7, single buffered']
    #allocation11 [shape = 's32[1]{0}', space=sflag, size = 0x4, scoped, tag = 'scoped memory for critic_forward.1']
    #allocation12 [shape = 'u8[131072]{0}', space=vmem, size = 0x20000, scoped, tag = 'input window, operand 8, single buffered']
    #allocation13 [shape = 'u8[1024]{0}', space=vmem, size = 0x400, scoped, tag = 'input window, operand 9, single buffered']
    #allocation14 [shape = 's32[1]{0}', space=sflag, size = 0x4, scoped, tag = 'scoped memory for critic_forward.1']
    #allocation15 [shape = 'u8[65536]{0}', space=vmem, size = 0x10000, scoped, tag = 'input window, operand 10, single buffered']
    #allocation16 [shape = 'u8[512]{0}', space=vmem, size = 0x400, scoped, tag = 'input window, operand 11, single buffered']
    #allocation17 [shape = 's32[1]{0}', space=sflag, size = 0x4, scoped, tag = 'scoped memory for critic_forward.1']
    %17 = vsyncpa [#allocation3], 0
    %18 = vsyncpa [#allocation5], 0
    %19 = vsyncpa [#allocation8], 0
    %20 = vsyncpa [#allocation11], 0
    %21 = vsyncpa [#allocation14], 0
    %22 = vsyncpa [#allocation17], 0
    loop: start=0, step=1, limit=4
    $region2: #{critic_forward.1} parent=1 // loop_pre_header
      _
    $region3: #{critic_forward.1} parent=1 // loop_header
      %s24 = sphi 0, %s28
      %p25 = scmp.ge.s32.totalorder %s24, 4
      %s34 = sphi 0, %s36
      %s37 = sphi 0, %s34
      %s38 = sphi 0, %s37
      %s54 = sphi 0, %s38
      %s60 = sphi 0, %s62
      %s63 = sphi 0, %s60
      %s64 = sphi 0, %s63
      %s80 = sphi 0, %s64
      %s84 = sphi 0, %s84
      %s86 = sphi 0, %s84
      %s87 = sphi 0, %s86
      %s101 = sphi 0, %s87
      %s105 = sphi 0, %s105
      %s107 = sphi 0, %s105
      %s108 = sphi 0, %s107
      %s122 = sphi 0, %s108
      %s126 = sphi 0, %s126
      %s128 = sphi 0, %s126
      %s129 = sphi 0, %s128
      %s143 = sphi 0, %s129
      %s147 = sphi 0, %s147
      %s149 = sphi 0, %s147
      %s150 = sphi 0, %s149
      %s164 = sphi 0, %s150
      %s168 = sphi 0, %s168
      %s170 = sphi 0, %s168
      %s171 = sphi 0, %s170
      %s185 = sphi 0, %s171
      %s189 = sphi 0, %s189
      %s191 = sphi 0, %s189
      %s192 = sphi 0, %s191
      %s206 = sphi 0, %s192
      %s210 = sphi 0, %s210
      %s212 = sphi 0, %s210
      %s213 = sphi 0, %s212
      %s227 = sphi 0, %s213
      %s231 = sphi 0, %s231
      %s233 = sphi 0, %s231
      %s234 = sphi 0, %s233
      %s248 = sphi 0, %s234
      %s252 = sphi 0, %s252
      %s254 = sphi 0, %s252
      %s255 = sphi 0, %s254
      %s269 = sphi 0, %s255
      %s273 = sphi 0, %s273
      %s275 = sphi 0, %s273
      %s276 = sphi 0, %s275
      %s290 = sphi 0, %s276
      %s296 = sphi 0, %s298
      %s299 = sphi 0, %s296
      %s300 = sphi 0, %s299
      %s316 = sphi 0, %s300
    $region4: #{critic_forward.1} parent=1 // loop_header_branch
      %27 = sbr.rel (%p25) target = $region8
    $region5: #{critic_forward.1} parent=1 // loop_body
      %s29 = ssub.s32 %s24, 1
      %s30 = ssub.s32 %s24, 2
      %s31 = sadd.s32 %s24, 1
      %s32 = ssub.s32 %s24, %s31
      %p33 = scmp.eq.s32.totalorder %s32, 0
      %s35 = sadd.s32 %s34, 1
      %s36 = scalar_select %p33, %s34, %s35
      %p39 = pneg %p33
      %p40 = scmp.eq.s32.totalorder %s24, 1
      %p41 = por %p39, %p40
      %p42 = scmp.ne.s32.totalorder %s34, %s37
      %p43 = scmp.eq.s32.totalorder %s24, 0
      %p44 = por %p42, %p43
      %p45 = scmp.ne.s32.totalorder %s34, %s37
      %p46 = scmp.eq.s32.totalorder %s29, 1
      %p47 = por %p45, %p46
      %p48 = scmp.ne.s32.totalorder %s37, %s38
      %p49 = scmp.eq.s32.totalorder %s29, 0
      %p50 = por %p48, %p49
      %p51 = scmp.ne.s32.totalorder %s37, %s38
      %p52 = scmp.eq.s32.totalorder %s30, 1
      %p53 = por %p51, %p52
      %p55 = scmp.ne.s32.totalorder %s38, %s54
      %p56 = scmp.eq.s32.totalorder %s30, 0
      %p57 = por %p55, %p56
      %s58 = ssub.s32 %s24, %s31
      %p59 = scmp.eq.s32.totalorder %s58, 0
      %s61 = sadd.s32 %s60, 1
      %s62 = scalar_select %p59, %s60, %s61
      %p65 = pneg %p59
      %p66 = scmp.eq.s32.totalorder %s24, 1
      %p67 = por %p65, %p66
      %p68 = scmp.ne.s32.totalorder %s60, %s63
      %p69 = scmp.eq.s32.totalorder %s24, 0
      %p70 = por %p68, %p69
      %p71 = scmp.ne.s32.totalorder %s60, %s63
      %p72 = scmp.eq.s32.totalorder %s29, 1
      %p73 = por %p71, %p72
      %p74 = scmp.ne.s32.totalorder %s63, %s64
      %p75 = scmp.eq.s32.totalorder %s29, 0
      %p76 = por %p74, %p75
      %p77 = scmp.ne.s32.totalorder %s63, %s64
      %p78 = scmp.eq.s32.totalorder %s30, 1
      %p79 = por %p77, %p78
      %p81 = scmp.ne.s32.totalorder %s64, %s80
      %p82 = scmp.eq.s32.totalorder %s30, 0
      %p83 = por %p81, %p82
      %s85 = sadd.s32 %s84, 1
      %p88 = scmp.eq.s32.totalorder %s24, 1
      %p89 = scmp.ne.s32.totalorder %s84, %s86
      %p90 = scmp.eq.s32.totalorder %s24, 0
      %p91 = por %p89, %p90
      %p92 = scmp.ne.s32.totalorder %s84, %s86
      %p93 = scmp.eq.s32.totalorder %s29, 1
      %p94 = por %p92, %p93
      %p95 = scmp.ne.s32.totalorder %s86, %s87
      %p96 = scmp.eq.s32.totalorder %s29, 0
      %p97 = por %p95, %p96
      %p98 = scmp.ne.s32.totalorder %s86, %s87
      %p99 = scmp.eq.s32.totalorder %s30, 1
      %p100 = por %p98, %p99
      %p102 = scmp.ne.s32.totalorder %s87, %s101
      %p103 = scmp.eq.s32.totalorder %s30, 0
      %p104 = por %p102, %p103
      %s106 = sadd.s32 %s105, 1
      %p109 = scmp.eq.s32.totalorder %s24, 1
      %p110 = scmp.ne.s32.totalorder %s105, %s107
      %p111 = scmp.eq.s32.totalorder %s24, 0
      %p112 = por %p110, %p111
      %p113 = scmp.ne.s32.totalorder %s105, %s107
      %p114 = scmp.eq.s32.totalorder %s29, 1
      %p115 = por %p113, %p114
      %p116 = scmp.ne.s32.totalorder %s107, %s108
      %p117 = scmp.eq.s32.totalorder %s29, 0
      %p118 = por %p116, %p117
      %p119 = scmp.ne.s32.totalorder %s107, %s108
      %p120 = scmp.eq.s32.totalorder %s30, 1
      %p121 = por %p119, %p120
      %p123 = scmp.ne.s32.totalorder %s108, %s122
      %p124 = scmp.eq.s32.totalorder %s30, 0
      %p125 = por %p123, %p124
      %s127 = sadd.s32 %s126, 1
      %p130 = scmp.eq.s32.totalorder %s24, 1
      %p131 = scmp.ne.s32.totalorder %s126, %s128
      %p132 = scmp.eq.s32.totalorder %s24, 0
      %p133 = por %p131, %p132
      %p134 = scmp.ne.s32.totalorder %s126, %s128
      %p135 = scmp.eq.s32.totalorder %s29, 1
      %p136 = por %p134, %p135
      %p137 = scmp.ne.s32.totalorder %s128, %s129
      %p138 = scmp.eq.s32.totalorder %s29, 0
      %p139 = por %p137, %p138
      %p140 = scmp.ne.s32.totalorder %s128, %s129
      %p141 = scmp.eq.s32.totalorder %s30, 1
      %p142 = por %p140, %p141
      %p144 = scmp.ne.s32.totalorder %s129, %s143
      %p145 = scmp.eq.s32.totalorder %s30, 0
      %p146 = por %p144, %p145
      %s148 = sadd.s32 %s147, 1
      %p151 = scmp.eq.s32.totalorder %s24, 1
      %p152 = scmp.ne.s32.totalorder %s147, %s149
      %p153 = scmp.eq.s32.totalorder %s24, 0
      %p154 = por %p152, %p153
      %p155 = scmp.ne.s32.totalorder %s147, %s149
      %p156 = scmp.eq.s32.totalorder %s29, 1
      %p157 = por %p155, %p156
      %p158 = scmp.ne.s32.totalorder %s149, %s150
      %p159 = scmp.eq.s32.totalorder %s29, 0
      %p160 = por %p158, %p159
      %p161 = scmp.ne.s32.totalorder %s149, %s150
      %p162 = scmp.eq.s32.totalorder %s30, 1
      %p163 = por %p161, %p162
      %p165 = scmp.ne.s32.totalorder %s150, %s164
      %p166 = scmp.eq.s32.totalorder %s30, 0
      %p167 = por %p165, %p166
      %s169 = sadd.s32 %s168, 1
      %p172 = scmp.eq.s32.totalorder %s24, 1
      %p173 = scmp.ne.s32.totalorder %s168, %s170
      %p174 = scmp.eq.s32.totalorder %s24, 0
      %p175 = por %p173, %p174
      %p176 = scmp.ne.s32.totalorder %s168, %s170
      %p177 = scmp.eq.s32.totalorder %s29, 1
      %p178 = por %p176, %p177
      %p179 = scmp.ne.s32.totalorder %s170, %s171
      %p180 = scmp.eq.s32.totalorder %s29, 0
      %p181 = por %p179, %p180
      %p182 = scmp.ne.s32.totalorder %s170, %s171
      %p183 = scmp.eq.s32.totalorder %s30, 1
      %p184 = por %p182, %p183
      %p186 = scmp.ne.s32.totalorder %s171, %s185
      %p187 = scmp.eq.s32.totalorder %s30, 0
      %p188 = por %p186, %p187
      %s190 = sadd.s32 %s189, 1
      %p193 = scmp.eq.s32.totalorder %s24, 1
      %p194 = scmp.ne.s32.totalorder %s189, %s191
      %p195 = scmp.eq.s32.totalorder %s24, 0
      %p196 = por %p194, %p195
      %p197 = scmp.ne.s32.totalorder %s189, %s191
      %p198 = scmp.eq.s32.totalorder %s29, 1
      %p199 = por %p197, %p198
      %p200 = scmp.ne.s32.totalorder %s191, %s192
      %p201 = scmp.eq.s32.totalorder %s29, 0
      %p202 = por %p200, %p201
      %p203 = scmp.ne.s32.totalorder %s191, %s192
      %p204 = scmp.eq.s32.totalorder %s30, 1
      %p205 = por %p203, %p204
      %p207 = scmp.ne.s32.totalorder %s192, %s206
      %p208 = scmp.eq.s32.totalorder %s30, 0
      %p209 = por %p207, %p208
      %s211 = sadd.s32 %s210, 1
      %p214 = scmp.eq.s32.totalorder %s24, 1
      %p215 = scmp.ne.s32.totalorder %s210, %s212
      %p216 = scmp.eq.s32.totalorder %s24, 0
      %p217 = por %p215, %p216
      %p218 = scmp.ne.s32.totalorder %s210, %s212
      %p219 = scmp.eq.s32.totalorder %s29, 1
      %p220 = por %p218, %p219
      %p221 = scmp.ne.s32.totalorder %s212, %s213
      %p222 = scmp.eq.s32.totalorder %s29, 0
      %p223 = por %p221, %p222
      %p224 = scmp.ne.s32.totalorder %s212, %s213
      %p225 = scmp.eq.s32.totalorder %s30, 1
      %p226 = por %p224, %p225
      %p228 = scmp.ne.s32.totalorder %s213, %s227
      %p229 = scmp.eq.s32.totalorder %s30, 0
      %p230 = por %p228, %p229
      %s232 = sadd.s32 %s231, 1
      %p235 = scmp.eq.s32.totalorder %s24, 1
      %p236 = scmp.ne.s32.totalorder %s231, %s233
      %p237 = scmp.eq.s32.totalorder %s24, 0
      %p238 = por %p236, %p237
      %p239 = scmp.ne.s32.totalorder %s231, %s233
      %p240 = scmp.eq.s32.totalorder %s29, 1
      %p241 = por %p239, %p240
      %p242 = scmp.ne.s32.totalorder %s233, %s234
      %p243 = scmp.eq.s32.totalorder %s29, 0
      %p244 = por %p242, %p243
      %p245 = scmp.ne.s32.totalorder %s233, %s234
      %p246 = scmp.eq.s32.totalorder %s30, 1
      %p247 = por %p245, %p246
      %p249 = scmp.ne.s32.totalorder %s234, %s248
      %p250 = scmp.eq.s32.totalorder %s30, 0
      %p251 = por %p249, %p250
      %s253 = sadd.s32 %s252, 1
      %p256 = scmp.eq.s32.totalorder %s24, 1
      %p257 = scmp.ne.s32.totalorder %s252, %s254
      %p258 = scmp.eq.s32.totalorder %s24, 0
      %p259 = por %p257, %p258
      %p260 = scmp.ne.s32.totalorder %s252, %s254
      %p261 = scmp.eq.s32.totalorder %s29, 1
      %p262 = por %p260, %p261
      %p263 = scmp.ne.s32.totalorder %s254, %s255
      %p264 = scmp.eq.s32.totalorder %s29, 0
      %p265 = por %p263, %p264
      %p266 = scmp.ne.s32.totalorder %s254, %s255
      %p267 = scmp.eq.s32.totalorder %s30, 1
      %p268 = por %p266, %p267
      %p270 = scmp.ne.s32.totalorder %s255, %s269
      %p271 = scmp.eq.s32.totalorder %s30, 0
      %p272 = por %p270, %p271
      %s274 = sadd.s32 %s273, 1
      %p277 = scmp.eq.s32.totalorder %s24, 1
      %p278 = scmp.ne.s32.totalorder %s273, %s275
      %p279 = scmp.eq.s32.totalorder %s24, 0
      %p280 = por %p278, %p279
      %p281 = scmp.ne.s32.totalorder %s273, %s275
      %p282 = scmp.eq.s32.totalorder %s29, 1
      %p283 = por %p281, %p282
      %p284 = scmp.ne.s32.totalorder %s275, %s276
      %p285 = scmp.eq.s32.totalorder %s29, 0
      %p286 = por %p284, %p285
      %p287 = scmp.ne.s32.totalorder %s275, %s276
      %p288 = scmp.eq.s32.totalorder %s30, 1
      %p289 = por %p287, %p288
      %p291 = scmp.ne.s32.totalorder %s276, %s290
      %p292 = scmp.eq.s32.totalorder %s30, 0
      %p293 = por %p291, %p292
      %s294 = ssub.s32 %s24, %s31
      %p295 = scmp.eq.s32.totalorder %s294, 0
      %s297 = sadd.s32 %s296, 1
      %s298 = scalar_select %p295, %s296, %s297
      %p301 = pneg %p295
      %p302 = scmp.eq.s32.totalorder %s24, 1
      %p303 = por %p301, %p302
      %p304 = scmp.ne.s32.totalorder %s296, %s299
      %p305 = scmp.eq.s32.totalorder %s24, 0
      %p306 = por %p304, %p305
      %p307 = scmp.ne.s32.totalorder %s296, %s299
      %p308 = scmp.eq.s32.totalorder %s29, 1
      %p309 = por %p307, %p308
      %p310 = scmp.ne.s32.totalorder %s299, %s300
      %p311 = scmp.eq.s32.totalorder %s29, 0
      %p312 = por %p310, %p311
      %p313 = scmp.ne.s32.totalorder %s299, %s300
      %p314 = scmp.eq.s32.totalorder %s30, 1
      %p315 = por %p313, %p314
      %p317 = scmp.ne.s32.totalorder %s300, %s316
      %p318 = scmp.eq.s32.totalorder %s30, 0
      %p319 = por %p317, %p318
      %p320 = scmp.le.s32.totalorder 1, %s24
      %p321 = scmp.lt.s32.totalorder %s24, 3
      %p322 = pnand %p320, %p321
      %p323 = pneg %p322
      // Predicated region
      $region9: #{critic_forward.1} parent=5 // pred_check
        _
      $region10: #{critic_forward.1} parent=5 // pred_check_branch
        %325 = sbr.rel (%p322) target = $region12
      $region11: #{critic_forward.1} parent=5 // pred_region
        %s326 = ssub.s32 %s24, 1
        // Predicated region
        $region13: #{critic_forward.1} parent=11 // pred_check
          %p327 = pneg %p97
        $region14: #{critic_forward.1} parent=11 // pred_check_branch
          %329 = sbr.rel (%p327) target = $region16
        $region15: #{critic_forward.1} parent=11 // pred_region
          %331 = vsyncadd [#allocation3], 0
          %s332 = sshll.u32 %s2, 4
          %s333 = int_to_ptr.hbm [resolvable:$true] %s332
          %s334 = sshll.u32 [#allocation2], 4
          %s335 = int_to_ptr.vmem [resolvable:$true] %s334
          %340 = dma.hbm_to_vmem [thread:$0]  %s333, 61440, %s335, [#allocation3], 384, 384, 24
        $region16: #{critic_forward.1} parent=11 // pred_fallthru
          _
        // Predicated region
        $region17: #{critic_forward.1} parent=11 // pred_check
          %p341 = pneg %p118
        $region18: #{critic_forward.1} parent=11 // pred_check_branch
          %343 = sbr.rel (%p341) target = $region20
        $region19: #{critic_forward.1} parent=11 // pred_region
          %345 = vsyncadd [#allocation5], 0
          %s347 = sshll.u32 %s3, 4
          %s348 = int_to_ptr.hbm [resolvable:$true] %s347
          %s349 = sshll.u32 [#allocation4], 4
          %s350 = int_to_ptr.vmem [resolvable:$true] %s349
          %352 = dma.hbm_to_vmem [thread:$0]  %s348, 32, %s350, [#allocation5]
        $region20: #{critic_forward.1} parent=11 // pred_fallthru
          _
        // Predicated region
        $region21: #{critic_forward.1} parent=11 // pred_check
          %p353 = pneg %p139
        $region22: #{critic_forward.1} parent=11 // pred_check_branch
          %355 = sbr.rel (%p353) target = $region24
        $region23: #{critic_forward.1} parent=11 // pred_region
          %357 = vsyncadd [#allocation5], 0
          %s358 = sshll.u32 %s4, 4
          %s359 = int_to_ptr.hbm [resolvable:$true] %s358
          %s360 = sshll.u32 [#allocation6], 4
          %s361 = int_to_ptr.vmem [resolvable:$true] %s360
          %366 = dma.hbm_to_vmem [thread:$0]  %s359, 40960, %s361, [#allocation5], 256, 256, 16
        $region24: #{critic_forward.1} parent=11 // pred_fallthru
          _
        // Predicated region
        $region25: #{critic_forward.1} parent=11 // pred_check
          %p367 = pneg %p160
        $region26: #{critic_forward.1} parent=11 // pred_check_branch
          %369 = sbr.rel (%p367) target = $region28
        $region27: #{critic_forward.1} parent=11 // pred_region
          %371 = vsyncadd [#allocation8], 0
          %s373 = sshll.u32 %s5, 4
          %s374 = int_to_ptr.hbm [resolvable:$true] %s373
          %s375 = sshll.u32 [#allocation7], 4
          %s376 = int_to_ptr.vmem [resolvable:$true] %s375
          %378 = dma.hbm_to_vmem [thread:$0]  %s374, 16, %s376, [#allocation8]
        $region28: #{critic_forward.1} parent=11 // pred_fallthru
          _
        // Predicated region
        $region29: #{critic_forward.1} parent=11 // pred_check
          %p379 = pneg %p181
        $region30: #{critic_forward.1} parent=11 // pred_check_branch
          %381 = sbr.rel (%p379) target = $region32
        $region31: #{critic_forward.1} parent=11 // pred_region
          %383 = vsyncadd [#allocation8], 0
          %s384 = sshll.u32 %s6, 4
          %s385 = int_to_ptr.hbm [resolvable:$true] %s384
          %s386 = sshll.u32 [#allocation9], 4
          %s387 = int_to_ptr.vmem [resolvable:$true] %s386
          %392 = dma.hbm_to_vmem [thread:$0]  %s385, 10240, %s387, [#allocation8], 128, 128, 8
        $region32: #{critic_forward.1} parent=11 // pred_fallthru
          _
        // Predicated region
        $region33: #{critic_forward.1} parent=11 // pred_check
          %p393 = pneg %p202
        $region34: #{critic_forward.1} parent=11 // pred_check_branch
          %395 = sbr.rel (%p393) target = $region36
        $region35: #{critic_forward.1} parent=11 // pred_region
          %397 = vsyncadd [#allocation11], 0
          %s399 = sshll.u32 %s7, 4
          %s400 = int_to_ptr.hbm [resolvable:$true] %s399
          %s401 = sshll.u32 [#allocation10], 4
          %s402 = int_to_ptr.vmem [resolvable:$true] %s401
          %404 = dma.hbm_to_vmem [thread:$0]  %s400, 32, %s402, [#allocation11]
        $region36: #{critic_forward.1} parent=11 // pred_fallthru
          _
        // Predicated region
        $region37: #{critic_forward.1} parent=11 // pred_check
          %p405 = pneg %p223
        $region38: #{critic_forward.1} parent=11 // pred_check_branch
          %407 = sbr.rel (%p405) target = $region40
        $region39: #{critic_forward.1} parent=11 // pred_region
          %409 = vsyncadd [#allocation11], 0
          %s410 = sshll.u32 %s8, 4
          %s411 = int_to_ptr.hbm [resolvable:$true] %s410
          %s412 = sshll.u32 [#allocation12], 4
          %s413 = int_to_ptr.vmem [resolvable:$true] %s412
          %418 = dma.hbm_to_vmem [thread:$0]  %s411, 4096, %s413, [#allocation11], 128, 128, 8
        $region40: #{critic_forward.1} parent=11 // pred_fallthru
          _
        // Predicated region
        $region41: #{critic_forward.1} parent=11 // pred_check
          %p419 = pneg %p244
        $region42: #{critic_forward.1} parent=11 // pred_check_branch
          %421 = sbr.rel (%p419) target = $region44
        $region43: #{critic_forward.1} parent=11 // pred_region
          %423 = vsyncadd [#allocation14], 0
          %s425 = sshll.u32 %s9, 4
          %s426 = int_to_ptr.hbm [resolvable:$true] %s425
          %s427 = sshll.u32 [#allocation13], 4
          %s428 = int_to_ptr.vmem [resolvable:$true] %s427
          %430 = dma.hbm_to_vmem [thread:$0]  %s426, 32, %s428, [#allocation14]
        $region44: #{critic_forward.1} parent=11 // pred_fallthru
          _
        // Predicated region
        $region45: #{critic_forward.1} parent=11 // pred_check
          %p431 = pneg %p265
        $region46: #{critic_forward.1} parent=11 // pred_check_branch
          %433 = sbr.rel (%p431) target = $region48
        $region47: #{critic_forward.1} parent=11 // pred_region
          %435 = vsyncadd [#allocation14], 0
          %s436 = sshll.u32 %s10, 4
          %s437 = int_to_ptr.hbm [resolvable:$true] %s436
          %s438 = sshll.u32 [#allocation15], 4
          %s439 = int_to_ptr.vmem [resolvable:$true] %s438
          %444 = dma.hbm_to_vmem [thread:$0]  %s437, 2048, %s439, [#allocation14], 64, 64, 4
        $region48: #{critic_forward.1} parent=11 // pred_fallthru
          _
        // Predicated region
        $region49: #{critic_forward.1} parent=11 // pred_check
          %p445 = pneg %p286
        $region50: #{critic_forward.1} parent=11 // pred_check_branch
          %447 = sbr.rel (%p445) target = $region52
        $region51: #{critic_forward.1} parent=11 // pred_region
          %449 = vsyncadd [#allocation17], 0
          %s451 = sshll.u32 %s11, 4
          %s452 = int_to_ptr.hbm [resolvable:$true] %s451
          %s453 = sshll.u32 [#allocation16], 4
          %s454 = int_to_ptr.vmem [resolvable:$true] %s453
          %456 = dma.hbm_to_vmem [thread:$0]  %s452, 16, %s454, [#allocation17]
        $region52: #{critic_forward.1} parent=11 // pred_fallthru
          _
      $region12: #{critic_forward.1} parent=5 // pred_fallthru
        _
      %p457 = scmp.lt.s32.totalorder %s24, 2
      // Predicated region
      $region53: #{critic_forward.1} parent=5 // pred_check
        %p458 = pneg %p457
      $region54: #{critic_forward.1} parent=5 // pred_check_branch
        %460 = sbr.rel (%p458) target = $region56
      $region55: #{critic_forward.1} parent=5 // pred_region
        // Predicated region
        $region57: #{critic_forward.1} parent=55 // pred_check
          %p461 = pneg %p44
        $region58: #{critic_forward.1} parent=55 // pred_check_branch
          %463 = sbr.rel (%p461) target = $region60
        $region59: #{critic_forward.1} parent=55 // pred_region
          %p464 = scmp.lt.s32.totalorder %s24, 1
          %s465 = scalar_select %p464, %s24, 1
          %s466 = smul.addr %s465, 18
          %s467 = smul.addr %s466, 4
          %s468 = scalar_lea.vmem %s0, %s467
        $region60: #{critic_forward.1} parent=55 // pred_fallthru
          _
        // Predicated region
        $region61: #{critic_forward.1} parent=55 // pred_check
          %p469 = pneg %p70
        $region62: #{critic_forward.1} parent=55 // pred_check_branch
          %471 = sbr.rel (%p469) target = $region64
        $region63: #{critic_forward.1} parent=55 // pred_region
          %p472 = scmp.lt.s32.totalorder %s24, 1
          %s473 = scalar_select %p472, %s24, 1
          %s474 = scalar_lea.vmem %s1, %s473
        $region64: #{critic_forward.1} parent=55 // pred_fallthru
          _
      $region56: #{critic_forward.1} parent=5 // pred_fallthru
        _
      %p475 = scmp.le.s32.totalorder 1, %s24
      %p476 = scmp.lt.s32.totalorder %s24, 3
      %p477 = pnand %p475, %p476
      %p478 = pneg %p477
      // Predicated region
      $region65: #{critic_forward.1} parent=5 // pred_check
        _
      $region66: #{critic_forward.1} parent=5 // pred_check_branch
        %480 = sbr.rel (%p477) target = $region68
      $region67: #{critic_forward.1} parent=5 // pred_region
        %s481 = ssub.s32 %s24, 1
        // Predicated region
        $region69: #{critic_forward.1} parent=67 // pred_check
          %p482 = pneg %p97
        $region70: #{critic_forward.1} parent=67 // pred_check_branch
          %484 = sbr.rel (%p482) target = $region72
        $region71: #{critic_forward.1} parent=67 // pred_region
          %486 = dma.done [#allocation3], 61440
        $region72: #{critic_forward.1} parent=67 // pred_fallthru
          _
        // Predicated region
        $region73: #{critic_forward.1} parent=67 // pred_check
          %p487 = pneg %p118
        $region74: #{critic_forward.1} parent=67 // pred_check_branch
          %489 = sbr.rel (%p487) target = $region76
        $region75: #{critic_forward.1} parent=67 // pred_region
          %491 = dma.done [#allocation5], 32
        $region76: #{critic_forward.1} parent=67 // pred_fallthru
          _
        // Predicated region
        $region77: #{critic_forward.1} parent=67 // pred_check
          %p492 = pneg %p139
        $region78: #{critic_forward.1} parent=67 // pred_check_branch
          %494 = sbr.rel (%p492) target = $region80
        $region79: #{critic_forward.1} parent=67 // pred_region
          %496 = dma.done [#allocation5], 40960
        $region80: #{critic_forward.1} parent=67 // pred_fallthru
          _
        // Predicated region
        $region81: #{critic_forward.1} parent=67 // pred_check
          %p497 = pneg %p160
        $region82: #{critic_forward.1} parent=67 // pred_check_branch
          %499 = sbr.rel (%p497) target = $region84
        $region83: #{critic_forward.1} parent=67 // pred_region
          %501 = dma.done [#allocation8], 16
        $region84: #{critic_forward.1} parent=67 // pred_fallthru
          _
        // Predicated region
        $region85: #{critic_forward.1} parent=67 // pred_check
          %p502 = pneg %p181
        $region86: #{critic_forward.1} parent=67 // pred_check_branch
          %504 = sbr.rel (%p502) target = $region88
        $region87: #{critic_forward.1} parent=67 // pred_region
          %506 = dma.done [#allocation8], 10240
        $region88: #{critic_forward.1} parent=67 // pred_fallthru
          _
        // Predicated region
        $region89: #{critic_forward.1} parent=67 // pred_check
          %p507 = pneg %p202
        $region90: #{critic_forward.1} parent=67 // pred_check_branch
          %509 = sbr.rel (%p507) target = $region92
        $region91: #{critic_forward.1} parent=67 // pred_region
          %511 = dma.done [#allocation11], 32
        $region92: #{critic_forward.1} parent=67 // pred_fallthru
          _
        // Predicated region
        $region93: #{critic_forward.1} parent=67 // pred_check
          %p512 = pneg %p223
        $region94: #{critic_forward.1} parent=67 // pred_check_branch
          %514 = sbr.rel (%p512) target = $region96
        $region95: #{critic_forward.1} parent=67 // pred_region
          %516 = dma.done [#allocation11], 4096
        $region96: #{critic_forward.1} parent=67 // pred_fallthru
          _
        // Predicated region
        $region97: #{critic_forward.1} parent=67 // pred_check
          %p517 = pneg %p244
        $region98: #{critic_forward.1} parent=67 // pred_check_branch
          %519 = sbr.rel (%p517) target = $region100
        $region99: #{critic_forward.1} parent=67 // pred_region
          %521 = dma.done [#allocation14], 32
        $region100: #{critic_forward.1} parent=67 // pred_fallthru
          _
        // Predicated region
        $region101: #{critic_forward.1} parent=67 // pred_check
          %p522 = pneg %p265
        $region102: #{critic_forward.1} parent=67 // pred_check_branch
          %524 = sbr.rel (%p522) target = $region104
        $region103: #{critic_forward.1} parent=67 // pred_region
          %526 = dma.done [#allocation14], 2048
        $region104: #{critic_forward.1} parent=67 // pred_fallthru
          _
        // Predicated region
        $region105: #{critic_forward.1} parent=67 // pred_check
          %p527 = pneg %p286
        $region106: #{critic_forward.1} parent=67 // pred_check_branch
          %529 = sbr.rel (%p527) target = $region108
        $region107: #{critic_forward.1} parent=67 // pred_region
          %531 = dma.done [#allocation17], 16
        $region108: #{critic_forward.1} parent=67 // pred_fallthru
          _
        %p532 = scmp.lt.s32.totalorder %s29, 1
        %s533 = scalar_select %p532, %s29, 1
        %s534 = smul.addr %s533, 18
        %s535 = smul.addr %s534, 4
        %s536 = scalar_lea.vmem %s0, %s535
        %p537 = pneg %p50
        %p538 = pneg %p47
        %p539 = scmp.lt.s32.totalorder %s29, 1
        %s540 = scalar_select %p539, %s29, 1
        %s541 = scalar_lea.vmem %s1, %s540
        %p542 = pneg %p76
        %p543 = pneg %p73
        %p544 = pneg %p97
        %p545 = pneg %p94
        %p546 = pneg %p118
        %p547 = pneg %p115
        %p548 = pneg %p139
        %p549 = pneg %p136
        %p550 = pneg %p160
        %p551 = pneg %p157
        %p552 = pneg %p181
        %p553 = pneg %p178
        %p554 = pneg %p202
        %p555 = pneg %p199
        %p556 = pneg %p223
        %p557 = pneg %p220
        %p558 = pneg %p244
        %p559 = pneg %p241
        %p560 = pneg %p265
        %p561 = pneg %p262
        %p562 = pneg %p286
        %p563 = pneg %p283
        %p564 = pneg %p312
        %p565 = pneg %p309
        %p566 = scmp.lt.s32.totalorder %s29, 1
        %s567 = scalar_select %p566, %s29, 1
        %s568 = scalar_lea.vmem %s12, %s567
        %p569 = scmp.lt.s32.totalorder %s29, 1
        %s570 = scalar_select %p569, %s29, 1
        %s571 = smul.addr %s570, 18
        %s572 = smul.addr %s571, 4
        %s573 = scalar_lea.vmem %s0, %s572
        %p574 = scmp.lt.s32.totalorder %s29, 1
        %s575 = scalar_select %p574, %s29, 1
        %s576 = scalar_lea.vmem %s1, %s575
        %p577 = scmp.lt.s32.totalorder %s29, 1
        %s578 = scalar_select %p577, %s29, 1
        %s579 = scalar_lea.vmem %s12, %s578
        %v581 = vld [vmem:[%s573] sm:$0xff]
        %v582 = vld [vmem:[%s573 + $0x8] sm:$0xff]
        %s583 = scalar_lea.vmem %s573, 24
        %v584 = vld [vmem:[%s583] sm:$0xff]
        %v585 = vld [vmem:[%s583 + $0x8] sm:$0xff]
        %s586 = scalar_lea.vmem %s573, 48
        %v587 = vld [vmem:[%s586] sm:$0xff]
        %v588 = vld [vmem:[%s586 + $0x8] sm:$0xff]
        %v589 = vld [vmem:[%s573 + $0x10] sm:$0x11]
        %v590 = vld [vmem:[%s583 + $0x10] sm:$0x11]
        %v593 = vunpack.c.l.b16 %v581
        %v594 = vunpack.c.h.b16 %v581
        %v595 = vunpack.c.l.b16 %v582
        %v596 = vunpack.c.h.b16 %v582
        %v597 = vpack.c.b16 %v595, %v593
        %v598 = vpack.c.b16 %v596, %v594
        %v603 = vunpack.c.l.b16 %v584
        %v604 = vunpack.c.h.b16 %v584
        %v605 = vunpack.c.l.b16 %v585
        %v606 = vunpack.c.h.b16 %v585
        %v607 = vpack.c.b16 %v605, %v603
        %v608 = vpack.c.b16 %v606, %v604
        %v613 = vunpack.c.l.b16 %v587
        %v614 = vunpack.c.h.b16 %v587
        %v615 = vunpack.c.l.b16 %v588
        %v616 = vunpack.c.h.b16 %v588
        %v617 = vpack.c.b16 %v615, %v613
        %v618 = vpack.c.b16 %v616, %v614
        %v622 = vunpack.c.l.b16 %v589
        %v623 = vunpack.c.h.b16 %v589
        %v624 = vpack.c.b16 %v622, %v622
        %v625 = vpack.c.b16 %v623, %v623
        %vm626 = vsmask.f32 7424
        %v628 = vshrl.u32 %v597, 16
        %v630 = vshll.u32 %v597, 16
        %v632 = vrot.slane %v630, 1
        %v633 = vor.u32 %v628, %v632
        %v635 = vshll.u32 %v624, 16
        %v637 = vrot.slane %v635, 1
        %v638 = vsel %vm626, %v633, %v637
        %v640 = vshrl.u32 %v598, 16
        %v642 = vshll.u32 %v598, 16
        %v644 = vrot.slane %v642, 1
        %v645 = vor.u32 %v640, %v644
        %v647 = vshll.u32 %v625, 16
        %v649 = vrot.slane %v647, 1
        %v650 = vsel %vm626, %v645, %v649
        %v654 = vunpack.c.l.b16 %v590
        %v655 = vunpack.c.h.b16 %v590
        %v656 = vpack.c.b16 %v654, %v654
        %v657 = vpack.c.b16 %v655, %v655
        %v659 = vshrl.u32 %v607, 16
        %v661 = vshll.u32 %v607, 16
        %v663 = vrot.slane %v661, 1
        %v664 = vor.u32 %v659, %v663
        %v666 = vshll.u32 %v656, 16
        %v668 = vrot.slane %v666, 1
        %v669 = vsel %vm626, %v664, %v668
        %v671 = vshrl.u32 %v608, 16
        %v673 = vshll.u32 %v608, 16
        %v675 = vrot.slane %v673, 1
        %v676 = vor.u32 %v671, %v675
        %v678 = vshll.u32 %v657, 16
        %v680 = vrot.slane %v678, 1
        %v681 = vsel %vm626, %v676, %v680
        %v684 = vld [vmem:[%s586 + $0x10] sm:$0x11]
        %v686 = vunpack.c.l.b16 %v684
        %v687 = vunpack.c.h.b16 %v684
        %v688 = vpack.c.b16 %v686, %v686
        %v689 = vpack.c.b16 %v687, %v687
        %v691 = vshrl.u32 %v617, 16
        %v693 = vshll.u32 %v617, 16
        %v695 = vrot.slane %v693, 1
        %v696 = vor.u32 %v691, %v695
        %v698 = vshll.u32 %v688, 16
        %v700 = vrot.slane %v698, 1
        %v701 = vsel %vm626, %v696, %v700
        %v703 = vshrl.u32 %v618, 16
        %v705 = vshll.u32 %v618, 16
        %v707 = vrot.slane %v705, 1
        %v708 = vor.u32 %v703, %v707
        %v710 = vshll.u32 %v689, 16
        %v712 = vrot.slane %v710, 1
        %v713 = vsel %vm626, %v708, %v712
        %v716 = vld [vmem:[%s573] sm:$0xee]
        %v718 = vunpack.c.l.b16 %v716
        %v719 = vunpack.c.h.b16 %v716
        %v720 = vpack.c.b16 %v595, %v718
        %v721 = vpack.c.b16 %v596, %v719
        %vm722 = vcmask 1046528
        %v723 = vrot.slane %v720, 1
        %v724 = vrot.slane %v624, 1
        %v725 = vsel %vm722, %v723, %v724
        %v726 = vrot.slane %v721, 1
        %v727 = vrot.slane %v625, 1
        %v728 = vsel %vm722, %v726, %v727
        %v731 = vld [vmem:[#allocation2] sm:$0xff]
        %v732 = vld [vmem:[#allocation2 + $0x8] sm:$0xff]
        %v733 = vld [vmem:[#allocation2 + $0x10] sm:$0xff]
        %v734 = vld [vmem:[#allocation2 + $0x18] sm:$0xff]
        %v735 = vld [vmem:[#allocation2 + $0x20] sm:$0xff]
        %v736 = vld [vmem:[#allocation2 + $0x28] sm:$0xff]
        %v737 = vld [vmem:[#allocation2 + $0x30] sm:$0xff]
        %v738 = vld [vmem:[#allocation2 + $0x38] sm:$0xff]
        %v739 = vld [vmem:[#allocation2 + $0x40] sm:$0xff]
        %v740 = vld [vmem:[#allocation2 + $0x48] sm:$0xff]
        %v741 = vld [vmem:[#allocation2 + $0x50] sm:$0xff]
        %v742 = vld [vmem:[#allocation2 + $0x58] sm:$0xff]
        %v743 = vld [vmem:[#allocation2 + $0x60] sm:$0xff]
        %v744 = vld [vmem:[#allocation2 + $0x68] sm:$0xff]
        %v745 = vld [vmem:[#allocation2 + $0x70] sm:$0xff]
        %v746 = vld [vmem:[#allocation2 + $0x78] sm:$0xff]
        %v747 = vld [vmem:[#allocation2 + $0x80] sm:$0xff]
        %v748 = vld [vmem:[#allocation2 + $0x88] sm:$0xff]
        %v749 = vld [vmem:[#allocation2 + $0x90] sm:$0xff]
        %v750 = vld [vmem:[#allocation2 + $0x98] sm:$0xff]
        %v751 = vld [vmem:[#allocation2 + $0xa0] sm:$0xff]
        %v752 = vld [vmem:[#allocation2 + $0xa8] sm:$0xff]
        %v753 = vld [vmem:[#allocation2 + $0xb0] sm:$0xff]
        %v754 = vld [vmem:[#allocation2 + $0xb8] sm:$0xff]
        %v755 = vld [vmem:[#allocation2 + $0xc0] sm:$0xff]
        %v756 = vld [vmem:[#allocation2 + $0xc8] sm:$0xff]
        %v757 = vld [vmem:[#allocation2 + $0xd0] sm:$0xff]
        %v758 = vld [vmem:[#allocation2 + $0xd8] sm:$0xff]
        %v759 = vld [vmem:[#allocation2 + $0xe0] sm:$0xff]
        %v760 = vld [vmem:[#allocation2 + $0xe8] sm:$0xff]
        %v761 = vld [vmem:[#allocation2 + $0xf0] sm:$0xff]
        %v762 = vld [vmem:[#allocation2 + $0xf8] sm:$0xff]
        %v763 = vld [vmem:[#allocation2 + $0x100] sm:$0xff]
        %v764 = vld [vmem:[#allocation2 + $0x108] sm:$0xff]
        %v765 = vld [vmem:[#allocation2 + $0x110] sm:$0xff]
        %v766 = vld [vmem:[#allocation2 + $0x118] sm:$0xff]
        %v767 = vld [vmem:[#allocation2 + $0x120] sm:$0xff]
        %v768 = vld [vmem:[#allocation2 + $0x128] sm:$0xff]
        %v769 = vld [vmem:[#allocation2 + $0x130] sm:$0xff]
        %v770 = vld [vmem:[#allocation2 + $0x138] sm:$0xff]
        %v771 = vld [vmem:[#allocation2 + $0x140] sm:$0xff]
        %v772 = vld [vmem:[#allocation2 + $0x148] sm:$0xff]
        %v773 = vld [vmem:[#allocation2 + $0x150] sm:$0xff]
        %v774 = vld [vmem:[#allocation2 + $0x158] sm:$0xff]
        %v775 = vld [vmem:[#allocation2 + $0x160] sm:$0xff]
        %v776 = vld [vmem:[#allocation2 + $0x168] sm:$0xff]
        %v777 = vld [vmem:[#allocation2 + $0x170] sm:$0xff]
        %v778 = vld [vmem:[#allocation2 + $0x178] sm:$0xff]
        %v779 = vld [vmem:[#allocation2 + $0x180] sm:$0xff]
        %v780 = vld [vmem:[#allocation2 + $0x188] sm:$0xff]
        %v781 = vld [vmem:[#allocation2 + $0x190] sm:$0xff]
        %v782 = vld [vmem:[#allocation2 + $0x198] sm:$0xff]
        %v783 = vld [vmem:[#allocation2 + $0x1a0] sm:$0xff]
        %v784 = vld [vmem:[#allocation2 + $0x1a8] sm:$0xff]
        %v785 = vld [vmem:[#allocation2 + $0x1b0] sm:$0xff]
        %v786 = vld [vmem:[#allocation2 + $0x1b8] sm:$0xff]
        %v787 = vld [vmem:[#allocation2 + $0x1c0] sm:$0xff]
        %v788 = vld [vmem:[#allocation2 + $0x1c8] sm:$0xff]
        %v789 = vld [vmem:[#allocation2 + $0x1d0] sm:$0xff]
        %v790 = vld [vmem:[#allocation2 + $0x1d8] sm:$0xff]
        %v791 = vld [vmem:[#allocation2 + $0x1e0] sm:$0xff]
        %v792 = vld [vmem:[#allocation2 + $0x1e8] sm:$0xff]
        %v793 = vld [vmem:[#allocation2 + $0x1f0] sm:$0xff]
        %v794 = vld [vmem:[#allocation2 + $0x1f8] sm:$0xff]
        %v795 = vld [vmem:[#allocation2 + $0x200] sm:$0xff]
        %v796 = vld [vmem:[#allocation2 + $0x208] sm:$0xff]
        %v797 = vld [vmem:[#allocation2 + $0x210] sm:$0xff]
        %v798 = vld [vmem:[#allocation2 + $0x218] sm:$0xff]
        %v799 = vld [vmem:[#allocation2 + $0x220] sm:$0xff]
        %v800 = vld [vmem:[#allocation2 + $0x228] sm:$0xff]
        %v801 = vld [vmem:[#allocation2 + $0x230] sm:$0xff]
        %v802 = vld [vmem:[#allocation2 + $0x238] sm:$0xff]
        %v803 = vld [vmem:[#allocation2 + $0x240] sm:$0xff]
        %v804 = vld [vmem:[#allocation2 + $0x248] sm:$0xff]
        %v805 = vld [vmem:[#allocation2 + $0x250] sm:$0xff]
        %v806 = vld [vmem:[#allocation2 + $0x258] sm:$0xff]
        %v807 = vld [vmem:[#allocation2 + $0x260] sm:$0xff]
        %v808 = vld [vmem:[#allocation2 + $0x268] sm:$0xff]
        %v809 = vld [vmem:[#allocation2 + $0x270] sm:$0xff]
        %v810 = vld [vmem:[#allocation2 + $0x278] sm:$0xff]
        %v811 = vld [vmem:[#allocation2 + $0x280] sm:$0xff]
        %v812 = vld [vmem:[#allocation2 + $0x288] sm:$0xff]
        %v813 = vld [vmem:[#allocation2 + $0x290] sm:$0xff]
        %v814 = vld [vmem:[#allocation2 + $0x298] sm:$0xff]
        %v815 = vld [vmem:[#allocation2 + $0x2a0] sm:$0xff]
        %v816 = vld [vmem:[#allocation2 + $0x2a8] sm:$0xff]
        %v817 = vld [vmem:[#allocation2 + $0x2b0] sm:$0xff]
        %v818 = vld [vmem:[#allocation2 + $0x2b8] sm:$0xff]
        %v819 = vld [vmem:[#allocation2 + $0x2c0] sm:$0xff]
        %v820 = vld [vmem:[#allocation2 + $0x2c8] sm:$0xff]
        %v821 = vld [vmem:[#allocation2 + $0x2d0] sm:$0xff]
        %v822 = vld [vmem:[#allocation2 + $0x2d8] sm:$0xff]
        %v823 = vld [vmem:[#allocation2 + $0x2e0] sm:$0xff]
        %v824 = vld [vmem:[#allocation2 + $0x2e8] sm:$0xff]
        %v825 = vld [vmem:[#allocation2 + $0x2f0] sm:$0xff]
        %v826 = vld [vmem:[#allocation2 + $0x2f8] sm:$0xff]
        %v827 = vld [vmem:[#allocation2 + $0x300] sm:$0xff]
        %v828 = vld [vmem:[#allocation2 + $0x308] sm:$0xff]
        %v829 = vld [vmem:[#allocation2 + $0x310] sm:$0xff]
        %v830 = vld [vmem:[#allocation2 + $0x318] sm:$0xff]
        %v831 = vld [vmem:[#allocation2 + $0x320] sm:$0xff]
        %v832 = vld [vmem:[#allocation2 + $0x328] sm:$0xff]
        %v833 = vld [vmem:[#allocation2 + $0x330] sm:$0xff]
        %v834 = vld [vmem:[#allocation2 + $0x338] sm:$0xff]
        %v835 = vld [vmem:[#allocation2 + $0x340] sm:$0xff]
        %v836 = vld [vmem:[#allocation2 + $0x348] sm:$0xff]
        %v837 = vld [vmem:[#allocation2 + $0x350] sm:$0xff]
        %v838 = vld [vmem:[#allocation2 + $0x358] sm:$0xff]
        %v839 = vld [vmem:[#allocation2 + $0x360] sm:$0xff]
        %v840 = vld [vmem:[#allocation2 + $0x368] sm:$0xff]
        %v841 = vld [vmem:[#allocation2 + $0x370] sm:$0xff]
        %v842 = vld [vmem:[#allocation2 + $0x378] sm:$0xff]
        %v843 = vld [vmem:[#allocation2 + $0x380] sm:$0xff]
        %v844 = vld [vmem:[#allocation2 + $0x388] sm:$0xff]
        %v845 = vld [vmem:[#allocation2 + $0x390] sm:$0xff]
        %v846 = vld [vmem:[#allocation2 + $0x398] sm:$0xff]
        %v847 = vld [vmem:[#allocation2 + $0x3a0] sm:$0xff]
        %v848 = vld [vmem:[#allocation2 + $0x3a8] sm:$0xff]
        %v849 = vld [vmem:[#allocation2 + $0x3b0] sm:$0xff]
        %v850 = vld [vmem:[#allocation2 + $0x3b8] sm:$0xff]
        %v851 = vld [vmem:[#allocation2 + $0x3c0] sm:$0xff]
        %v852 = vld [vmem:[#allocation2 + $0x3c8] sm:$0xff]
        %v853 = vld [vmem:[#allocation2 + $0x3d0] sm:$0xff]
        %v854 = vld [vmem:[#allocation2 + $0x3d8] sm:$0xff]
        %v855 = vld [vmem:[#allocation2 + $0x3e0] sm:$0xff]
        %v856 = vld [vmem:[#allocation2 + $0x3e8] sm:$0xff]
        %v857 = vld [vmem:[#allocation2 + $0x3f0] sm:$0xff]
        %v858 = vld [vmem:[#allocation2 + $0x3f8] sm:$0xff]
        %v859 = vld [vmem:[#allocation2 + $0x400] sm:$0xff]
        %v860 = vld [vmem:[#allocation2 + $0x408] sm:$0xff]
        %v861 = vld [vmem:[#allocation2 + $0x410] sm:$0xff]
        %v862 = vld [vmem:[#allocation2 + $0x418] sm:$0xff]
        %v863 = vld [vmem:[#allocation2 + $0x420] sm:$0xff]
        %v864 = vld [vmem:[#allocation2 + $0x428] sm:$0xff]
        %v865 = vld [vmem:[#allocation2 + $0x430] sm:$0xff]
        %v866 = vld [vmem:[#allocation2 + $0x438] sm:$0xff]
        %v867 = vld [vmem:[#allocation2 + $0x440] sm:$0xff]
        %v868 = vld [vmem:[#allocation2 + $0x448] sm:$0xff]
        %v869 = vld [vmem:[#allocation2 + $0x450] sm:$0xff]
        %v870 = vld [vmem:[#allocation2 + $0x458] sm:$0xff]
        %v871 = vld [vmem:[#allocation2 + $0x460] sm:$0xff]
        %v872 = vld [vmem:[#allocation2 + $0x468] sm:$0xff]
        %v873 = vld [vmem:[#allocation2 + $0x470] sm:$0xff]
        %v874 = vld [vmem:[#allocation2 + $0x478] sm:$0xff]
        %v875 = vld [vmem:[#allocation2 + $0x480] sm:$0xff]
        %v876 = vld [vmem:[#allocation2 + $0x488] sm:$0xff]
        %v877 = vld [vmem:[#allocation2 + $0x490] sm:$0xff]
        %v878 = vld [vmem:[#allocation2 + $0x498] sm:$0xff]
        %v879 = vld [vmem:[#allocation2 + $0x4a0] sm:$0xff]
        %v880 = vld [vmem:[#allocation2 + $0x4a8] sm:$0xff]
        %v881 = vld [vmem:[#allocation2 + $0x4b0] sm:$0xff]
        %v882 = vld [vmem:[#allocation2 + $0x4b8] sm:$0xff]
        %v883 = vld [vmem:[#allocation2 + $0x4c0] sm:$0xff]
        %v884 = vld [vmem:[#allocation2 + $0x4c8] sm:$0xff]
        %v885 = vld [vmem:[#allocation2 + $0x4d0] sm:$0xff]
        %v886 = vld [vmem:[#allocation2 + $0x4d8] sm:$0xff]
        %v887 = vld [vmem:[#allocation2 + $0x4e0] sm:$0xff]
        %v888 = vld [vmem:[#allocation2 + $0x4e8] sm:$0xff]
        %v889 = vld [vmem:[#allocation2 + $0x4f0] sm:$0xff]
        %v890 = vld [vmem:[#allocation2 + $0x4f8] sm:$0xff]
        %v891 = vld [vmem:[#allocation2 + $0x500] sm:$0xff]
        %v892 = vld [vmem:[#allocation2 + $0x508] sm:$0xff]
        %v893 = vld [vmem:[#allocation2 + $0x510] sm:$0xff]
        %v894 = vld [vmem:[#allocation2 + $0x518] sm:$0xff]
        %v895 = vld [vmem:[#allocation2 + $0x520] sm:$0xff]
        %v896 = vld [vmem:[#allocation2 + $0x528] sm:$0xff]
        %v897 = vld [vmem:[#allocation2 + $0x530] sm:$0xff]
        %v898 = vld [vmem:[#allocation2 + $0x538] sm:$0xff]
        %v899 = vld [vmem:[#allocation2 + $0x540] sm:$0xff]
        %v900 = vld [vmem:[#allocation2 + $0x548] sm:$0xff]
        %v901 = vld [vmem:[#allocation2 + $0x550] sm:$0xff]
        %v902 = vld [vmem:[#allocation2 + $0x558] sm:$0xff]
        %v903 = vld [vmem:[#allocation2 + $0x560] sm:$0xff]
        %v904 = vld [vmem:[#allocation2 + $0x568] sm:$0xff]
        %v905 = vld [vmem:[#allocation2 + $0x570] sm:$0xff]
        %v906 = vld [vmem:[#allocation2 + $0x578] sm:$0xff]
        %v907 = vld [vmem:[#allocation2 + $0x580] sm:$0xff]
        %v908 = vld [vmem:[#allocation2 + $0x588] sm:$0xff]
        %v909 = vld [vmem:[#allocation2 + $0x590] sm:$0xff]
        %v910 = vld [vmem:[#allocation2 + $0x598] sm:$0xff]
        %v911 = vld [vmem:[#allocation2 + $0x5a0] sm:$0xff]
        %v912 = vld [vmem:[#allocation2 + $0x5a8] sm:$0xff]
        %v913 = vld [vmem:[#allocation2 + $0x5b0] sm:$0xff]
        %v914 = vld [vmem:[#allocation2 + $0x5b8] sm:$0xff]
        %v915 = vld [vmem:[#allocation2 + $0x5c0] sm:$0xff]
        %v916 = vld [vmem:[#allocation2 + $0x5c8] sm:$0xff]
        %v917 = vld [vmem:[#allocation2 + $0x5d0] sm:$0xff]
        %v918 = vld [vmem:[#allocation2 + $0x5d8] sm:$0xff]
        %v919 = vld [vmem:[#allocation2 + $0x5e0] sm:$0xff]
        %v920 = vld [vmem:[#allocation2 + $0x5e8] sm:$0xff]
        %v921 = vld [vmem:[#allocation2 + $0x5f0] sm:$0xff]
        %v922 = vld [vmem:[#allocation2 + $0x5f8] sm:$0xff]
        %v923 = vld [vmem:[#allocation2 + $0x600] sm:$0xff]
        %v924 = vld [vmem:[#allocation2 + $0x608] sm:$0xff]
        %v925 = vld [vmem:[#allocation2 + $0x610] sm:$0xff]
        %v926 = vld [vmem:[#allocation2 + $0x618] sm:$0xff]
        %v927 = vld [vmem:[#allocation2 + $0x620] sm:$0xff]
        %v928 = vld [vmem:[#allocation2 + $0x628] sm:$0xff]
        %v929 = vld [vmem:[#allocation2 + $0x630] sm:$0xff]
        %v930 = vld [vmem:[#allocation2 + $0x638] sm:$0xff]
        %v931 = vld [vmem:[#allocation2 + $0x640] sm:$0xff]
        %v932 = vld [vmem:[#allocation2 + $0x648] sm:$0xff]
        %v933 = vld [vmem:[#allocation2 + $0x650] sm:$0xff]
        %v934 = vld [vmem:[#allocation2 + $0x658] sm:$0xff]
        %v935 = vld [vmem:[#allocation2 + $0x660] sm:$0xff]
        %v936 = vld [vmem:[#allocation2 + $0x668] sm:$0xff]
        %v937 = vld [vmem:[#allocation2 + $0x670] sm:$0xff]
        %v938 = vld [vmem:[#allocation2 + $0x678] sm:$0xff]
        %v939 = vld [vmem:[#allocation2 + $0x680] sm:$0xff]
        %v940 = vld [vmem:[#allocation2 + $0x688] sm:$0xff]
        %v941 = vld [vmem:[#allocation2 + $0x690] sm:$0xff]
        %v942 = vld [vmem:[#allocation2 + $0x698] sm:$0xff]
        %v943 = vld [vmem:[#allocation2 + $0x6a0] sm:$0xff]
        %v944 = vld [vmem:[#allocation2 + $0x6a8] sm:$0xff]
        %v945 = vld [vmem:[#allocation2 + $0x6b0] sm:$0xff]
        %v946 = vld [vmem:[#allocation2 + $0x6b8] sm:$0xff]
        %v947 = vld [vmem:[#allocation2 + $0x6c0] sm:$0xff]
        %v948 = vld [vmem:[#allocation2 + $0x6c8] sm:$0xff]
        %v949 = vld [vmem:[#allocation2 + $0x6d0] sm:$0xff]
        %v950 = vld [vmem:[#allocation2 + $0x6d8] sm:$0xff]
        %v951 = vld [vmem:[#allocation2 + $0x6e0] sm:$0xff]
        %v952 = vld [vmem:[#allocation2 + $0x6e8] sm:$0xff]
        %v953 = vld [vmem:[#allocation2 + $0x6f0] sm:$0xff]
        %v954 = vld [vmem:[#allocation2 + $0x6f8] sm:$0xff]
        %v955 = vld [vmem:[#allocation2 + $0x700] sm:$0xff]
        %v956 = vld [vmem:[#allocation2 + $0x708] sm:$0xff]
        %v957 = vld [vmem:[#allocation2 + $0x710] sm:$0xff]
        %v958 = vld [vmem:[#allocation2 + $0x718] sm:$0xff]
        %v959 = vld [vmem:[#allocation2 + $0x720] sm:$0xff]
        %v960 = vld [vmem:[#allocation2 + $0x728] sm:$0xff]
        %v961 = vld [vmem:[#allocation2 + $0x730] sm:$0xff]
        %v962 = vld [vmem:[#allocation2 + $0x738] sm:$0xff]
        %v963 = vld [vmem:[#allocation2 + $0x740] sm:$0xff]
        %v964 = vld [vmem:[#allocation2 + $0x748] sm:$0xff]
        %v965 = vld [vmem:[#allocation2 + $0x750] sm:$0xff]
        %v966 = vld [vmem:[#allocation2 + $0x758] sm:$0xff]
        %v967 = vld [vmem:[#allocation2 + $0x760] sm:$0xff]
        %v968 = vld [vmem:[#allocation2 + $0x768] sm:$0xff]
        %v969 = vld [vmem:[#allocation2 + $0x770] sm:$0xff]
        %v970 = vld [vmem:[#allocation2 + $0x778] sm:$0xff]
        %v971 = vld [vmem:[#allocation2 + $0x780] sm:$0xff]
        %v972 = vld [vmem:[#allocation2 + $0x788] sm:$0xff]
        %v973 = vld [vmem:[#allocation2 + $0x790] sm:$0xff]
        %v974 = vld [vmem:[#allocation2 + $0x798] sm:$0xff]
        %v975 = vld [vmem:[#allocation2 + $0x7a0] sm:$0xff]
        %v976 = vld [vmem:[#allocation2 + $0x7a8] sm:$0xff]
        %v977 = vld [vmem:[#allocation2 + $0x7b0] sm:$0xff]
        %v978 = vld [vmem:[#allocation2 + $0x7b8] sm:$0xff]
        %v979 = vld [vmem:[#allocation2 + $0x7c0] sm:$0xff]
        %v980 = vld [vmem:[#allocation2 + $0x7c8] sm:$0xff]
        %v981 = vld [vmem:[#allocation2 + $0x7d0] sm:$0xff]
        %v982 = vld [vmem:[#allocation2 + $0x7d8] sm:$0xff]
        %v983 = vld [vmem:[#allocation2 + $0x7e0] sm:$0xff]
        %v984 = vld [vmem:[#allocation2 + $0x7e8] sm:$0xff]
        %v985 = vld [vmem:[#allocation2 + $0x7f0] sm:$0xff]
        %v986 = vld [vmem:[#allocation2 + $0x7f8] sm:$0xff]
        %v987 = vld [vmem:[#allocation2 + $0x800] sm:$0xff]
        %v988 = vld [vmem:[#allocation2 + $0x808] sm:$0xff]
        %v989 = vld [vmem:[#allocation2 + $0x810] sm:$0xff]
        %v990 = vld [vmem:[#allocation2 + $0x818] sm:$0xff]
        %v991 = vld [vmem:[#allocation2 + $0x820] sm:$0xff]
        %v992 = vld [vmem:[#allocation2 + $0x828] sm:$0xff]
        %v993 = vld [vmem:[#allocation2 + $0x830] sm:$0xff]
        %v994 = vld [vmem:[#allocation2 + $0x838] sm:$0xff]
        %v995 = vld [vmem:[#allocation2 + $0x840] sm:$0xff]
        %v996 = vld [vmem:[#allocation2 + $0x848] sm:$0xff]
        %v997 = vld [vmem:[#allocation2 + $0x850] sm:$0xff]
        %v998 = vld [vmem:[#allocation2 + $0x858] sm:$0xff]
        %v999 = vld [vmem:[#allocation2 + $0x860] sm:$0xff]
        %v1000 = vld [vmem:[#allocation2 + $0x868] sm:$0xff]
        %v1001 = vld [vmem:[#allocation2 + $0x870] sm:$0xff]
        %v1002 = vld [vmem:[#allocation2 + $0x878] sm:$0xff]
        %v1003 = vld [vmem:[#allocation2 + $0x880] sm:$0xff]
        %v1004 = vld [vmem:[#allocation2 + $0x888] sm:$0xff]
        %v1005 = vld [vmem:[#allocation2 + $0x890] sm:$0xff]
        %v1006 = vld [vmem:[#allocation2 + $0x898] sm:$0xff]
        %v1007 = vld [vmem:[#allocation2 + $0x8a0] sm:$0xff]
        %v1008 = vld [vmem:[#allocation2 + $0x8a8] sm:$0xff]
        %v1009 = vld [vmem:[#allocation2 + $0x8b0] sm:$0xff]
        %v1010 = vld [vmem:[#allocation2 + $0x8b8] sm:$0xff]
        %v1011 = vld [vmem:[#allocation2 + $0x8c0] sm:$0xff]
        %v1012 = vld [vmem:[#allocation2 + $0x8c8] sm:$0xff]
        %v1013 = vld [vmem:[#allocation2 + $0x8d0] sm:$0xff]
        %v1014 = vld [vmem:[#allocation2 + $0x8d8] sm:$0xff]
        %v1015 = vld [vmem:[#allocation2 + $0x8e0] sm:$0xff]
        %v1016 = vld [vmem:[#allocation2 + $0x8e8] sm:$0xff]
        %v1017 = vld [vmem:[#allocation2 + $0x8f0] sm:$0xff]
        %v1018 = vld [vmem:[#allocation2 + $0x8f8] sm:$0xff]
        %v1019 = vld [vmem:[#allocation2 + $0x900] sm:$0xff]
        %v1020 = vld [vmem:[#allocation2 + $0x908] sm:$0xff]
        %v1021 = vld [vmem:[#allocation2 + $0x910] sm:$0xff]
        %v1022 = vld [vmem:[#allocation2 + $0x918] sm:$0xff]
        %v1023 = vld [vmem:[#allocation2 + $0x920] sm:$0xff]
        %v1024 = vld [vmem:[#allocation2 + $0x928] sm:$0xff]
        %v1025 = vld [vmem:[#allocation2 + $0x930] sm:$0xff]
        %v1026 = vld [vmem:[#allocation2 + $0x938] sm:$0xff]
        %v1027 = vld [vmem:[#allocation2 + $0x940] sm:$0xff]
        %v1028 = vld [vmem:[#allocation2 + $0x948] sm:$0xff]
        %v1029 = vld [vmem:[#allocation2 + $0x950] sm:$0xff]
        %v1030 = vld [vmem:[#allocation2 + $0x958] sm:$0xff]
        %v1031 = vld [vmem:[#allocation2 + $0x960] sm:$0xff]
        %v1032 = vld [vmem:[#allocation2 + $0x968] sm:$0xff]
        %v1033 = vld [vmem:[#allocation2 + $0x970] sm:$0xff]
        %v1034 = vld [vmem:[#allocation2 + $0x978] sm:$0xff]
        %v1035 = vld [vmem:[#allocation2 + $0x980] sm:$0xff]
        %v1036 = vld [vmem:[#allocation2 + $0x988] sm:$0xff]
        %v1037 = vld [vmem:[#allocation2 + $0x990] sm:$0xff]
        %v1038 = vld [vmem:[#allocation2 + $0x998] sm:$0xff]
        %v1039 = vld [vmem:[#allocation2 + $0x9a0] sm:$0xff]
        %v1040 = vld [vmem:[#allocation2 + $0x9a8] sm:$0xff]
        %v1041 = vld [vmem:[#allocation2 + $0x9b0] sm:$0xff]
        %v1042 = vld [vmem:[#allocation2 + $0x9b8] sm:$0xff]
        %v1043 = vld [vmem:[#allocation2 + $0x9c0] sm:$0xff]
        %v1044 = vld [vmem:[#allocation2 + $0x9c8] sm:$0xff]
        %v1045 = vld [vmem:[#allocation2 + $0x9d0] sm:$0xff]
        %v1046 = vld [vmem:[#allocation2 + $0x9d8] sm:$0xff]
        %v1047 = vld [vmem:[#allocation2 + $0x9e0] sm:$0xff]
        %v1048 = vld [vmem:[#allocation2 + $0x9e8] sm:$0xff]
        %v1049 = vld [vmem:[#allocation2 + $0x9f0] sm:$0xff]
        %v1050 = vld [vmem:[#allocation2 + $0x9f8] sm:$0xff]
        %v1051 = vld [vmem:[#allocation2 + $0xa00] sm:$0xff]
        %v1052 = vld [vmem:[#allocation2 + $0xa08] sm:$0xff]
        %v1053 = vld [vmem:[#allocation2 + $0xa10] sm:$0xff]
        %v1054 = vld [vmem:[#allocation2 + $0xa18] sm:$0xff]
        %v1055 = vld [vmem:[#allocation2 + $0xa20] sm:$0xff]
        %v1056 = vld [vmem:[#allocation2 + $0xa28] sm:$0xff]
        %v1057 = vld [vmem:[#allocation2 + $0xa30] sm:$0xff]
        %v1058 = vld [vmem:[#allocation2 + $0xa38] sm:$0xff]
        %v1059 = vld [vmem:[#allocation2 + $0xa40] sm:$0xff]
        %v1060 = vld [vmem:[#allocation2 + $0xa48] sm:$0xff]
        %v1061 = vld [vmem:[#allocation2 + $0xa50] sm:$0xff]
        %v1062 = vld [vmem:[#allocation2 + $0xa58] sm:$0xff]
        %v1063 = vld [vmem:[#allocation2 + $0xa60] sm:$0xff]
        %v1064 = vld [vmem:[#allocation2 + $0xa68] sm:$0xff]
        %v1065 = vld [vmem:[#allocation2 + $0xa70] sm:$0xff]
        %v1066 = vld [vmem:[#allocation2 + $0xa78] sm:$0xff]
        %v1067 = vld [vmem:[#allocation2 + $0xa80] sm:$0xff]
        %v1068 = vld [vmem:[#allocation2 + $0xa88] sm:$0xff]
        %v1069 = vld [vmem:[#allocation2 + $0xa90] sm:$0xff]
        %v1070 = vld [vmem:[#allocation2 + $0xa98] sm:$0xff]
        %v1071 = vld [vmem:[#allocation2 + $0xaa0] sm:$0xff]
        %v1072 = vld [vmem:[#allocation2 + $0xaa8] sm:$0xff]
        %v1073 = vld [vmem:[#allocation2 + $0xab0] sm:$0xff]
        %v1074 = vld [vmem:[#allocation2 + $0xab8] sm:$0xff]
        %v1075 = vld [vmem:[#allocation2 + $0xac0] sm:$0xff]
        %v1076 = vld [vmem:[#allocation2 + $0xac8] sm:$0xff]
        %v1077 = vld [vmem:[#allocation2 + $0xad0] sm:$0xff]
        %v1078 = vld [vmem:[#allocation2 + $0xad8] sm:$0xff]
        %v1079 = vld [vmem:[#allocation2 + $0xae0] sm:$0xff]
        %v1080 = vld [vmem:[#allocation2 + $0xae8] sm:$0xff]
        %v1081 = vld [vmem:[#allocation2 + $0xaf0] sm:$0xff]
        %v1082 = vld [vmem:[#allocation2 + $0xaf8] sm:$0xff]
        %v1083 = vld [vmem:[#allocation2 + $0xb00] sm:$0xff]
        %v1084 = vld [vmem:[#allocation2 + $0xb08] sm:$0xff]
        %v1085 = vld [vmem:[#allocation2 + $0xb10] sm:$0xff]
        %v1086 = vld [vmem:[#allocation2 + $0xb18] sm:$0xff]
        %v1087 = vld [vmem:[#allocation2 + $0xb20] sm:$0xff]
        %v1088 = vld [vmem:[#allocation2 + $0xb28] sm:$0xff]
        %v1089 = vld [vmem:[#allocation2 + $0xb30] sm:$0xff]
        %v1090 = vld [vmem:[#allocation2 + $0xb38] sm:$0xff]
        %v1091 = vld [vmem:[#allocation2 + $0xb40] sm:$0xff]
        %v1092 = vld [vmem:[#allocation2 + $0xb48] sm:$0xff]
        %v1093 = vld [vmem:[#allocation2 + $0xb50] sm:$0xff]
        %v1094 = vld [vmem:[#allocation2 + $0xb58] sm:$0xff]
        %v1095 = vld [vmem:[#allocation2 + $0xb60] sm:$0xff]
        %v1096 = vld [vmem:[#allocation2 + $0xb68] sm:$0xff]
        %v1097 = vld [vmem:[#allocation2 + $0xb70] sm:$0xff]
        %v1098 = vld [vmem:[#allocation2 + $0xb78] sm:$0xff]
        %v1099 = vld [vmem:[#allocation2 + $0xb80] sm:$0xff]
        %v1100 = vld [vmem:[#allocation2 + $0xb88] sm:$0xff]
        %v1101 = vld [vmem:[#allocation2 + $0xb90] sm:$0xff]
        %v1102 = vld [vmem:[#allocation2 + $0xb98] sm:$0xff]
        %v1103 = vld [vmem:[#allocation2 + $0xba0] sm:$0xff]
        %v1104 = vld [vmem:[#allocation2 + $0xba8] sm:$0xff]
        %v1105 = vld [vmem:[#allocation2 + $0xbb0] sm:$0xff]
        %v1106 = vld [vmem:[#allocation2 + $0xbb8] sm:$0xff]
        %v1107 = vld [vmem:[#allocation2 + $0xbc0] sm:$0xff]
        %v1108 = vld [vmem:[#allocation2 + $0xbc8] sm:$0xff]
        %v1109 = vld [vmem:[#allocation2 + $0xbd0] sm:$0xff]
        %v1110 = vld [vmem:[#allocation2 + $0xbd8] sm:$0xff]
        %v1111 = vld [vmem:[#allocation2 + $0xbe0] sm:$0xff]
        %v1112 = vld [vmem:[#allocation2 + $0xbe8] sm:$0xff]
        %v1113 = vld [vmem:[#allocation2 + $0xbf0] sm:$0xff]
        %v1114 = vld [vmem:[#allocation2 + $0xbf8] sm:$0xff]
        %v1115 = vld [vmem:[#allocation2 + $0xc00] sm:$0xff]
        %v1116 = vld [vmem:[#allocation2 + $0xc08] sm:$0xff]
        %v1117 = vld [vmem:[#allocation2 + $0xc10] sm:$0xff]
        %v1118 = vld [vmem:[#allocation2 + $0xc18] sm:$0xff]
        %v1119 = vld [vmem:[#allocation2 + $0xc20] sm:$0xff]
        %v1120 = vld [vmem:[#allocation2 + $0xc28] sm:$0xff]
        %v1121 = vld [vmem:[#allocation2 + $0xc30] sm:$0xff]
        %v1122 = vld [vmem:[#allocation2 + $0xc38] sm:$0xff]
        %v1123 = vld [vmem:[#allocation2 + $0xc40] sm:$0xff]
        %v1124 = vld [vmem:[#allocation2 + $0xc48] sm:$0xff]
        %v1125 = vld [vmem:[#allocation2 + $0xc50] sm:$0xff]
        %v1126 = vld [vmem:[#allocation2 + $0xc58] sm:$0xff]
        %v1127 = vld [vmem:[#allocation2 + $0xc60] sm:$0xff]
        %v1128 = vld [vmem:[#allocation2 + $0xc68] sm:$0xff]
        %v1129 = vld [vmem:[#allocation2 + $0xc70] sm:$0xff]
        %v1130 = vld [vmem:[#allocation2 + $0xc78] sm:$0xff]
        %v1131 = vld [vmem:[#allocation2 + $0xc80] sm:$0xff]
        %v1132 = vld [vmem:[#allocation2 + $0xc88] sm:$0xff]
        %v1133 = vld [vmem:[#allocation2 + $0xc90] sm:$0xff]
        %v1134 = vld [vmem:[#allocation2 + $0xc98] sm:$0xff]
        %v1135 = vld [vmem:[#allocation2 + $0xca0] sm:$0xff]
        %v1136 = vld [vmem:[#allocation2 + $0xca8] sm:$0xff]
        %v1137 = vld [vmem:[#allocation2 + $0xcb0] sm:$0xff]
        %v1138 = vld [vmem:[#allocation2 + $0xcb8] sm:$0xff]
        %v1139 = vld [vmem:[#allocation2 + $0xcc0] sm:$0xff]
        %v1140 = vld [vmem:[#allocation2 + $0xcc8] sm:$0xff]
        %v1141 = vld [vmem:[#allocation2 + $0xcd0] sm:$0xff]
        %v1142 = vld [vmem:[#allocation2 + $0xcd8] sm:$0xff]
        %v1143 = vld [vmem:[#allocation2 + $0xce0] sm:$0xff]
        %v1144 = vld [vmem:[#allocation2 + $0xce8] sm:$0xff]
        %v1145 = vld [vmem:[#allocation2 + $0xcf0] sm:$0xff]
        %v1146 = vld [vmem:[#allocation2 + $0xcf8] sm:$0xff]
        %v1147 = vld [vmem:[#allocation2 + $0xd00] sm:$0xff]
        %v1148 = vld [vmem:[#allocation2 + $0xd08] sm:$0xff]
        %v1149 = vld [vmem:[#allocation2 + $0xd10] sm:$0xff]
        %v1150 = vld [vmem:[#allocation2 + $0xd18] sm:$0xff]
        %v1151 = vld [vmem:[#allocation2 + $0xd20] sm:$0xff]
        %v1152 = vld [vmem:[#allocation2 + $0xd28] sm:$0xff]
        %v1153 = vld [vmem:[#allocation2 + $0xd30] sm:$0xff]
        %v1154 = vld [vmem:[#allocation2 + $0xd38] sm:$0xff]
        %v1155 = vld [vmem:[#allocation2 + $0xd40] sm:$0xff]
        %v1156 = vld [vmem:[#allocation2 + $0xd48] sm:$0xff]
        %v1157 = vld [vmem:[#allocation2 + $0xd50] sm:$0xff]
        %v1158 = vld [vmem:[#allocation2 + $0xd58] sm:$0xff]
        %v1159 = vld [vmem:[#allocation2 + $0xd60] sm:$0xff]
        %v1160 = vld [vmem:[#allocation2 + $0xd68] sm:$0xff]
        %v1161 = vld [vmem:[#allocation2 + $0xd70] sm:$0xff]
        %v1162 = vld [vmem:[#allocation2 + $0xd78] sm:$0xff]
        %v1163 = vld [vmem:[#allocation2 + $0xd80] sm:$0xff]
        %v1164 = vld [vmem:[#allocation2 + $0xd88] sm:$0xff]
        %v1165 = vld [vmem:[#allocation2 + $0xd90] sm:$0xff]
        %v1166 = vld [vmem:[#allocation2 + $0xd98] sm:$0xff]
        %v1167 = vld [vmem:[#allocation2 + $0xda0] sm:$0xff]
        %v1168 = vld [vmem:[#allocation2 + $0xda8] sm:$0xff]
        %v1169 = vld [vmem:[#allocation2 + $0xdb0] sm:$0xff]
        %v1170 = vld [vmem:[#allocation2 + $0xdb8] sm:$0xff]
        %v1171 = vld [vmem:[#allocation2 + $0xdc0] sm:$0xff]
        %v1172 = vld [vmem:[#allocation2 + $0xdc8] sm:$0xff]
        %v1173 = vld [vmem:[#allocation2 + $0xdd0] sm:$0xff]
        %v1174 = vld [vmem:[#allocation2 + $0xdd8] sm:$0xff]
        %v1175 = vld [vmem:[#allocation2 + $0xde0] sm:$0xff]
        %v1176 = vld [vmem:[#allocation2 + $0xde8] sm:$0xff]
        %v1177 = vld [vmem:[#allocation2 + $0xdf0] sm:$0xff]
        %v1178 = vld [vmem:[#allocation2 + $0xdf8] sm:$0xff]
        %v1179 = vld [vmem:[#allocation2 + $0xe00] sm:$0xff]
        %v1180 = vld [vmem:[#allocation2 + $0xe08] sm:$0xff]
        %v1181 = vld [vmem:[#allocation2 + $0xe10] sm:$0xff]
        %v1182 = vld [vmem:[#allocation2 + $0xe18] sm:$0xff]
        %v1183 = vld [vmem:[#allocation2 + $0xe20] sm:$0xff]
        %v1184 = vld [vmem:[#allocation2 + $0xe28] sm:$0xff]
        %v1185 = vld [vmem:[#allocation2 + $0xe30] sm:$0xff]
        %v1186 = vld [vmem:[#allocation2 + $0xe38] sm:$0xff]
        %v1187 = vld [vmem:[#allocation2 + $0xe40] sm:$0xff]
        %v1188 = vld [vmem:[#allocation2 + $0xe48] sm:$0xff]
        %v1189 = vld [vmem:[#allocation2 + $0xe50] sm:$0xff]
        %v1190 = vld [vmem:[#allocation2 + $0xe58] sm:$0xff]
        %v1191 = vld [vmem:[#allocation2 + $0xe60] sm:$0xff]
        %v1192 = vld [vmem:[#allocation2 + $0xe68] sm:$0xff]
        %v1193 = vld [vmem:[#allocation2 + $0xe70] sm:$0xff]
        %v1194 = vld [vmem:[#allocation2 + $0xe78] sm:$0xff]
        %v1195 = vld [vmem:[#allocation2 + $0xe80] sm:$0xff]
        %v1196 = vld [vmem:[#allocation2 + $0xe88] sm:$0xff]
        %v1197 = vld [vmem:[#allocation2 + $0xe90] sm:$0xff]
        %v1198 = vld [vmem:[#allocation2 + $0xe98] sm:$0xff]
        %v1199 = vld [vmem:[#allocation2 + $0xea0] sm:$0xff]
        %v1200 = vld [vmem:[#allocation2 + $0xea8] sm:$0xff]
        %v1201 = vld [vmem:[#allocation2 + $0xeb0] sm:$0xff]
        %v1202 = vld [vmem:[#allocation2 + $0xeb8] sm:$0xff]
        %v1203 = vld [vmem:[#allocation2 + $0xec0] sm:$0xff]
        %v1204 = vld [vmem:[#allocation2 + $0xec8] sm:$0xff]
        %v1205 = vld [vmem:[#allocation2 + $0xed0] sm:$0xff]
        %v1206 = vld [vmem:[#allocation2 + $0xed8] sm:$0xff]
        %v1207 = vld [vmem:[#allocation2 + $0xee0] sm:$0xff]
        %v1208 = vld [vmem:[#allocation2 + $0xee8] sm:$0xff]
        %v1209 = vld [vmem:[#allocation2 + $0xef0] sm:$0xff]
        %v1210 = vld [vmem:[#allocation2 + $0xef8] sm:$0xff]
        %v1691 = vunpack.c.l.b16 %v731
        %v1692 = vunpack.c.h.b16 %v731
        %v1693 = vunpack.c.l.b16 %v732
        %v1694 = vunpack.c.h.b16 %v732
        %v1695 = vunpack.c.l.b16 %v733
        %v1696 = vunpack.c.h.b16 %v733
        %v1697 = vunpack.c.l.b16 %v734
        %v1698 = vunpack.c.h.b16 %v734
        %v1699 = vunpack.c.l.b16 %v735
        %v1700 = vunpack.c.h.b16 %v735
        %v1701 = vunpack.c.l.b16 %v736
        %v1702 = vunpack.c.h.b16 %v736
        %v1703 = vunpack.c.l.b16 %v737
        %v1704 = vunpack.c.h.b16 %v737
        %v1705 = vunpack.c.l.b16 %v738
        %v1706 = vunpack.c.h.b16 %v738
        %v1707 = vunpack.c.l.b16 %v739
        %v1708 = vunpack.c.h.b16 %v739
        %v1709 = vunpack.c.l.b16 %v740
        %v1710 = vunpack.c.h.b16 %v740
        %v1711 = vunpack.c.l.b16 %v741
        %v1712 = vunpack.c.h.b16 %v741
        %v1713 = vunpack.c.l.b16 %v742
        %v1714 = vunpack.c.h.b16 %v742
        %v1715 = vunpack.c.l.b16 %v743
        %v1716 = vunpack.c.h.b16 %v743
        %v1717 = vunpack.c.l.b16 %v744
        %v1718 = vunpack.c.h.b16 %v744
        %v1719 = vunpack.c.l.b16 %v745
        %v1720 = vunpack.c.h.b16 %v745
        %v1721 = vunpack.c.l.b16 %v746
        %v1722 = vunpack.c.h.b16 %v746
        %v1723 = vunpack.c.l.b16 %v747
        %v1724 = vunpack.c.h.b16 %v747
        %v1725 = vunpack.c.l.b16 %v748
        %v1726 = vunpack.c.h.b16 %v748
        %v1727 = vunpack.c.l.b16 %v749
        %v1728 = vunpack.c.h.b16 %v749
        %v1729 = vunpack.c.l.b16 %v750
        %v1730 = vunpack.c.h.b16 %v750
        %v1731 = vunpack.c.l.b16 %v751
        %v1732 = vunpack.c.h.b16 %v751
        %v1733 = vunpack.c.l.b16 %v752
        %v1734 = vunpack.c.h.b16 %v752
        %v1735 = vunpack.c.l.b16 %v753
        %v1736 = vunpack.c.h.b16 %v753
        %v1737 = vunpack.c.l.b16 %v754
        %v1738 = vunpack.c.h.b16 %v754
        %v1739 = vunpack.c.l.b16 %v755
        %v1740 = vunpack.c.h.b16 %v755
        %v1741 = vunpack.c.l.b16 %v756
        %v1742 = vunpack.c.h.b16 %v756
        %v1743 = vunpack.c.l.b16 %v757
        %v1744 = vunpack.c.h.b16 %v757
        %v1745 = vunpack.c.l.b16 %v758
        %v1746 = vunpack.c.h.b16 %v758
        %v1747 = vunpack.c.l.b16 %v759
        %v1748 = vunpack.c.h.b16 %v759
        %v1749 = vunpack.c.l.b16 %v760
        %v1750 = vunpack.c.h.b16 %v760
        %v1751 = vunpack.c.l.b16 %v761
        %v1752 = vunpack.c.h.b16 %v761
        %v1753 = vunpack.c.l.b16 %v762
        %v1754 = vunpack.c.h.b16 %v762
        %v1755 = vunpack.c.l.b16 %v763
        %v1756 = vunpack.c.h.b16 %v763
        %v1757 = vunpack.c.l.b16 %v764
        %v1758 = vunpack.c.h.b16 %v764
        %v1759 = vunpack.c.l.b16 %v765
        %v1760 = vunpack.c.h.b16 %v765
        %v1761 = vunpack.c.l.b16 %v766
        %v1762 = vunpack.c.h.b16 %v766
        %v1763 = vunpack.c.l.b16 %v767
        %v1764 = vunpack.c.h.b16 %v767
        %v1765 = vunpack.c.l.b16 %v768
        %v1766 = vunpack.c.h.b16 %v768
        %v1767 = vunpack.c.l.b16 %v769
        %v1768 = vunpack.c.h.b16 %v769
        %v1769 = vunpack.c.l.b16 %v770
        %v1770 = vunpack.c.h.b16 %v770
        %v1771 = vunpack.c.l.b16 %v771
        %v1772 = vunpack.c.h.b16 %v771
        %v1773 = vunpack.c.l.b16 %v772
        %v1774 = vunpack.c.h.b16 %v772
        %v1775 = vunpack.c.l.b16 %v773
        %v1776 = vunpack.c.h.b16 %v773
        %v1777 = vunpack.c.l.b16 %v774
        %v1778 = vunpack.c.h.b16 %v774
        %v1779 = vunpack.c.l.b16 %v775
        %v1780 = vunpack.c.h.b16 %v775
        %v1781 = vunpack.c.l.b16 %v776
        %v1782 = vunpack.c.h.b16 %v776
        %v1783 = vunpack.c.l.b16 %v777
        %v1784 = vunpack.c.h.b16 %v777
        %v1785 = vunpack.c.l.b16 %v778
        %v1786 = vunpack.c.h.b16 %v778
        %v1787 = vunpack.c.l.b16 %v779
        %v1788 = vunpack.c.h.b16 %v779
        %v1789 = vunpack.c.l.b16 %v780
        %v1790 = vunpack.c.h.b16 %v780
        %v1791 = vunpack.c.l.b16 %v781
        %v1792 = vunpack.c.h.b16 %v781
        %v1793 = vunpack.c.l.b16 %v782
        %v1794 = vunpack.c.h.b16 %v782
        %v1795 = vunpack.c.l.b16 %v783
        %v1796 = vunpack.c.h.b16 %v783
        %v1797 = vunpack.c.l.b16 %v784
        %v1798 = vunpack.c.h.b16 %v784
        %v1799 = vunpack.c.l.b16 %v785
        %v1800 = vunpack.c.h.b16 %v785
        %v1801 = vunpack.c.l.b16 %v786
        %v1802 = vunpack.c.h.b16 %v786
        %v1803 = vunpack.c.l.b16 %v787
        %v1804 = vunpack.c.h.b16 %v787
        %v1805 = vunpack.c.l.b16 %v788
        %v1806 = vunpack.c.h.b16 %v788
        %v1807 = vunpack.c.l.b16 %v789
        %v1808 = vunpack.c.h.b16 %v789
        %v1809 = vunpack.c.l.b16 %v790
        %v1810 = vunpack.c.h.b16 %v790
        %v1811 = vunpack.c.l.b16 %v791
        %v1812 = vunpack.c.h.b16 %v791
        %v1813 = vunpack.c.l.b16 %v792
        %v1814 = vunpack.c.h.b16 %v792
        %v1815 = vunpack.c.l.b16 %v793
        %v1816 = vunpack.c.h.b16 %v793
        %v1817 = vunpack.c.l.b16 %v794
        %v1818 = vunpack.c.h.b16 %v794
        %v1819 = vunpack.c.l.b16 %v795
        %v1820 = vunpack.c.h.b16 %v795
        %v1821 = vunpack.c.l.b16 %v796
        %v1822 = vunpack.c.h.b16 %v796
        %v1823 = vunpack.c.l.b16 %v797
        %v1824 = vunpack.c.h.b16 %v797
        %v1825 = vunpack.c.l.b16 %v798
        %v1826 = vunpack.c.h.b16 %v798
        %v1827 = vunpack.c.l.b16 %v799
        %v1828 = vunpack.c.h.b16 %v799
        %v1829 = vunpack.c.l.b16 %v800
        %v1830 = vunpack.c.h.b16 %v800
        %v1831 = vunpack.c.l.b16 %v801
        %v1832 = vunpack.c.h.b16 %v801
        %v1833 = vunpack.c.l.b16 %v802
        %v1834 = vunpack.c.h.b16 %v802
        %v1835 = vunpack.c.l.b16 %v803
        %v1836 = vunpack.c.h.b16 %v803
        %v1837 = vunpack.c.l.b16 %v804
        %v1838 = vunpack.c.h.b16 %v804
        %v1839 = vunpack.c.l.b16 %v805
        %v1840 = vunpack.c.h.b16 %v805
        %v1841 = vunpack.c.l.b16 %v806
        %v1842 = vunpack.c.h.b16 %v806
        %v1843 = vunpack.c.l.b16 %v807
        %v1844 = vunpack.c.h.b16 %v807
        %v1845 = vunpack.c.l.b16 %v808
        %v1846 = vunpack.c.h.b16 %v808
        %v1847 = vunpack.c.l.b16 %v809
        %v1848 = vunpack.c.h.b16 %v809
        %v1849 = vunpack.c.l.b16 %v810
        %v1850 = vunpack.c.h.b16 %v810
        %v1851 = vunpack.c.l.b16 %v811
        %v1852 = vunpack.c.h.b16 %v811
        %v1853 = vunpack.c.l.b16 %v812
        %v1854 = vunpack.c.h.b16 %v812
        %v1855 = vunpack.c.l.b16 %v813
        %v1856 = vunpack.c.h.b16 %v813
        %v1857 = vunpack.c.l.b16 %v814
        %v1858 = vunpack.c.h.b16 %v814
        %v1859 = vunpack.c.l.b16 %v815
        %v1860 = vunpack.c.h.b16 %v815
        %v1861 = vunpack.c.l.b16 %v816
        %v1862 = vunpack.c.h.b16 %v816
        %v1863 = vunpack.c.l.b16 %v817
        %v1864 = vunpack.c.h.b16 %v817
        %v1865 = vunpack.c.l.b16 %v818
        %v1866 = vunpack.c.h.b16 %v818
        %v1867 = vunpack.c.l.b16 %v819
        %v1868 = vunpack.c.h.b16 %v819
        %v1869 = vunpack.c.l.b16 %v820
        %v1870 = vunpack.c.h.b16 %v820
        %v1871 = vunpack.c.l.b16 %v821
        %v1872 = vunpack.c.h.b16 %v821
        %v1873 = vunpack.c.l.b16 %v822
        %v1874 = vunpack.c.h.b16 %v822
        %v1875 = vunpack.c.l.b16 %v823
        %v1876 = vunpack.c.h.b16 %v823
        %v1877 = vunpack.c.l.b16 %v824
        %v1878 = vunpack.c.h.b16 %v824
        %v1879 = vunpack.c.l.b16 %v825
        %v1880 = vunpack.c.h.b16 %v825
        %v1881 = vunpack.c.l.b16 %v826
        %v1882 = vunpack.c.h.b16 %v826
        %v1883 = vunpack.c.l.b16 %v827
        %v1884 = vunpack.c.h.b16 %v827
        %v1885 = vunpack.c.l.b16 %v828
        %v1886 = vunpack.c.h.b16 %v828
        %v1887 = vunpack.c.l.b16 %v829
        %v1888 = vunpack.c.h.b16 %v829
        %v1889 = vunpack.c.l.b16 %v830
        %v1890 = vunpack.c.h.b16 %v830
        %v1891 = vunpack.c.l.b16 %v831
        %v1892 = vunpack.c.h.b16 %v831
        %v1893 = vunpack.c.l.b16 %v832
        %v1894 = vunpack.c.h.b16 %v832
        %v1895 = vunpack.c.l.b16 %v833
        %v1896 = vunpack.c.h.b16 %v833
        %v1897 = vunpack.c.l.b16 %v834
        %v1898 = vunpack.c.h.b16 %v834
        %v1899 = vunpack.c.l.b16 %v835
        %v1900 = vunpack.c.h.b16 %v835
        %v1901 = vunpack.c.l.b16 %v836
        %v1902 = vunpack.c.h.b16 %v836
        %v1903 = vunpack.c.l.b16 %v837
        %v1904 = vunpack.c.h.b16 %v837
        %v1905 = vunpack.c.l.b16 %v838
        %v1906 = vunpack.c.h.b16 %v838
        %v1907 = vunpack.c.l.b16 %v839
        %v1908 = vunpack.c.h.b16 %v839
        %v1909 = vunpack.c.l.b16 %v840
        %v1910 = vunpack.c.h.b16 %v840
        %v1911 = vunpack.c.l.b16 %v841
        %v1912 = vunpack.c.h.b16 %v841
        %v1913 = vunpack.c.l.b16 %v842
        %v1914 = vunpack.c.h.b16 %v842
        %v1915 = vunpack.c.l.b16 %v843
        %v1916 = vunpack.c.h.b16 %v843
        %v1917 = vunpack.c.l.b16 %v844
        %v1918 = vunpack.c.h.b16 %v844
        %v1919 = vunpack.c.l.b16 %v845
        %v1920 = vunpack.c.h.b16 %v845
        %v1921 = vunpack.c.l.b16 %v846
        %v1922 = vunpack.c.h.b16 %v846
        %v1923 = vunpack.c.l.b16 %v847
        %v1924 = vunpack.c.h.b16 %v847
        %v1925 = vunpack.c.l.b16 %v848
        %v1926 = vunpack.c.h.b16 %v848
        %v1927 = vunpack.c.l.b16 %v849
        %v1928 = vunpack.c.h.b16 %v849
        %v1929 = vunpack.c.l.b16 %v850
        %v1930 = vunpack.c.h.b16 %v850
        %v1931 = vunpack.c.l.b16 %v851
        %v1932 = vunpack.c.h.b16 %v851
        %v1933 = vunpack.c.l.b16 %v852
        %v1934 = vunpack.c.h.b16 %v852
        %v1935 = vunpack.c.l.b16 %v853
        %v1936 = vunpack.c.h.b16 %v853
        %v1937 = vunpack.c.l.b16 %v854
        %v1938 = vunpack.c.h.b16 %v854
        %v1939 = vunpack.c.l.b16 %v855
        %v1940 = vunpack.c.h.b16 %v855
        %v1941 = vunpack.c.l.b16 %v856
        %v1942 = vunpack.c.h.b16 %v856
        %v1943 = vunpack.c.l.b16 %v857
        %v1944 = vunpack.c.h.b16 %v857
        %v1945 = vunpack.c.l.b16 %v858
        %v1946 = vunpack.c.h.b16 %v858
        %v1947 = vunpack.c.l.b16 %v859
        %v1948 = vunpack.c.h.b16 %v859
        %v1949 = vunpack.c.l.b16 %v860
        %v1950 = vunpack.c.h.b16 %v860
        %v1951 = vunpack.c.l.b16 %v861
        %v1952 = vunpack.c.h.b16 %v861
        %v1953 = vunpack.c.l.b16 %v862
        %v1954 = vunpack.c.h.b16 %v862
        %v1955 = vunpack.c.l.b16 %v863
        %v1956 = vunpack.c.h.b16 %v863
        %v1957 = vunpack.c.l.b16 %v864
        %v1958 = vunpack.c.h.b16 %v864
        %v1959 = vunpack.c.l.b16 %v865
        %v1960 = vunpack.c.h.b16 %v865
        %v1961 = vunpack.c.l.b16 %v866
        %v1962 = vunpack.c.h.b16 %v866
        %v1963 = vunpack.c.l.b16 %v867
        %v1964 = vunpack.c.h.b16 %v867
        %v1965 = vunpack.c.l.b16 %v868
        %v1966 = vunpack.c.h.b16 %v868
        %v1967 = vunpack.c.l.b16 %v869
        %v1968 = vunpack.c.h.b16 %v869
        %v1969 = vunpack.c.l.b16 %v870
        %v1970 = vunpack.c.h.b16 %v870
        %v1971 = vunpack.c.l.b16 %v871
        %v1972 = vunpack.c.h.b16 %v871
        %v1973 = vunpack.c.l.b16 %v872
        %v1974 = vunpack.c.h.b16 %v872
        %v1975 = vunpack.c.l.b16 %v873
        %v1976 = vunpack.c.h.b16 %v873
        %v1977 = vunpack.c.l.b16 %v874
        %v1978 = vunpack.c.h.b16 %v874
        %v1979 = vunpack.c.l.b16 %v875
        %v1980 = vunpack.c.h.b16 %v875
        %v1981 = vunpack.c.l.b16 %v876
        %v1982 = vunpack.c.h.b16 %v876
        %v1983 = vunpack.c.l.b16 %v877
        %v1984 = vunpack.c.h.b16 %v877
        %v1985 = vunpack.c.l.b16 %v878
        %v1986 = vunpack.c.h.b16 %v878
        %v1987 = vunpack.c.l.b16 %v879
        %v1988 = vunpack.c.h.b16 %v879
        %v1989 = vunpack.c.l.b16 %v880
        %v1990 = vunpack.c.h.b16 %v880
        %v1991 = vunpack.c.l.b16 %v881
        %v1992 = vunpack.c.h.b16 %v881
        %v1993 = vunpack.c.l.b16 %v882
        %v1994 = vunpack.c.h.b16 %v882
        %v1995 = vunpack.c.l.b16 %v883
        %v1996 = vunpack.c.h.b16 %v883
        %v1997 = vunpack.c.l.b16 %v884
        %v1998 = vunpack.c.h.b16 %v884
        %v1999 = vunpack.c.l.b16 %v885
        %v2000 = vunpack.c.h.b16 %v885
        %v2001 = vunpack.c.l.b16 %v886
        %v2002 = vunpack.c.h.b16 %v886
        %v2003 = vunpack.c.l.b16 %v887
        %v2004 = vunpack.c.h.b16 %v887
        %v2005 = vunpack.c.l.b16 %v888
        %v2006 = vunpack.c.h.b16 %v888
        %v2007 = vunpack.c.l.b16 %v889
        %v2008 = vunpack.c.h.b16 %v889
        %v2009 = vunpack.c.l.b16 %v890
        %v2010 = vunpack.c.h.b16 %v890
        %v2011 = vunpack.c.l.b16 %v891
        %v2012 = vunpack.c.h.b16 %v891
        %v2013 = vunpack.c.l.b16 %v892
        %v2014 = vunpack.c.h.b16 %v892
        %v2015 = vunpack.c.l.b16 %v893
        %v2016 = vunpack.c.h.b16 %v893
        %v2017 = vunpack.c.l.b16 %v894
        %v2018 = vunpack.c.h.b16 %v894
        %v2019 = vunpack.c.l.b16 %v895
        %v2020 = vunpack.c.h.b16 %v895
        %v2021 = vunpack.c.l.b16 %v896
        %v2022 = vunpack.c.h.b16 %v896
        %v2023 = vunpack.c.l.b16 %v897
        %v2024 = vunpack.c.h.b16 %v897
        %v2025 = vunpack.c.l.b16 %v898
        %v2026 = vunpack.c.h.b16 %v898
        %v2027 = vunpack.c.l.b16 %v899
        %v2028 = vunpack.c.h.b16 %v899
        %v2029 = vunpack.c.l.b16 %v900
        %v2030 = vunpack.c.h.b16 %v900
        %v2031 = vunpack.c.l.b16 %v901
        %v2032 = vunpack.c.h.b16 %v901
        %v2033 = vunpack.c.l.b16 %v902
        %v2034 = vunpack.c.h.b16 %v902
        %v2035 = vunpack.c.l.b16 %v903
        %v2036 = vunpack.c.h.b16 %v903
        %v2037 = vunpack.c.l.b16 %v904
        %v2038 = vunpack.c.h.b16 %v904
        %v2039 = vunpack.c.l.b16 %v905
        %v2040 = vunpack.c.h.b16 %v905
        %v2041 = vunpack.c.l.b16 %v906
        %v2042 = vunpack.c.h.b16 %v906
        %v2043 = vunpack.c.l.b16 %v907
        %v2044 = vunpack.c.h.b16 %v907
        %v2045 = vunpack.c.l.b16 %v908
        %v2046 = vunpack.c.h.b16 %v908
        %v2047 = vunpack.c.l.b16 %v909
        %v2048 = vunpack.c.h.b16 %v909
        %v2049 = vunpack.c.l.b16 %v910
        %v2050 = vunpack.c.h.b16 %v910
        %v2051 = vunpack.c.l.b16 %v911
        %v2052 = vunpack.c.h.b16 %v911
        %v2053 = vunpack.c.l.b16 %v912
        %v2054 = vunpack.c.h.b16 %v912
        %v2055 = vunpack.c.l.b16 %v913
        %v2056 = vunpack.c.h.b16 %v913
        %v2057 = vunpack.c.l.b16 %v914
        %v2058 = vunpack.c.h.b16 %v914
        %v2059 = vunpack.c.l.b16 %v915
        %v2060 = vunpack.c.h.b16 %v915
        %v2061 = vunpack.c.l.b16 %v916
        %v2062 = vunpack.c.h.b16 %v916
        %v2063 = vunpack.c.l.b16 %v917
        %v2064 = vunpack.c.h.b16 %v917
        %v2065 = vunpack.c.l.b16 %v918
        %v2066 = vunpack.c.h.b16 %v918
        %v2067 = vunpack.c.l.b16 %v919
        %v2068 = vunpack.c.h.b16 %v919
        %v2069 = vunpack.c.l.b16 %v920
        %v2070 = vunpack.c.h.b16 %v920
        %v2071 = vunpack.c.l.b16 %v921
        %v2072 = vunpack.c.h.b16 %v921
        %v2073 = vunpack.c.l.b16 %v922
        %v2074 = vunpack.c.h.b16 %v922
        %v2075 = vunpack.c.l.b16 %v923
        %v2076 = vunpack.c.h.b16 %v923
        %v2077 = vunpack.c.l.b16 %v924
        %v2078 = vunpack.c.h.b16 %v924
        %v2079 = vunpack.c.l.b16 %v925
        %v2080 = vunpack.c.h.b16 %v925
        %v2081 = vunpack.c.l.b16 %v926
        %v2082 = vunpack.c.h.b16 %v926
        %v2083 = vunpack.c.l.b16 %v927
        %v2084 = vunpack.c.h.b16 %v927
        %v2085 = vunpack.c.l.b16 %v928
        %v2086 = vunpack.c.h.b16 %v928
        %v2087 = vunpack.c.l.b16 %v929
        %v2088 = vunpack.c.h.b16 %v929
        %v2089 = vunpack.c.l.b16 %v930
        %v2090 = vunpack.c.h.b16 %v930
        %v2091 = vunpack.c.l.b16 %v931
        %v2092 = vunpack.c.h.b16 %v931
        %v2093 = vunpack.c.l.b16 %v932
        %v2094 = vunpack.c.h.b16 %v932
        %v2095 = vunpack.c.l.b16 %v933
        %v2096 = vunpack.c.h.b16 %v933
        %v2097 = vunpack.c.l.b16 %v934
        %v2098 = vunpack.c.h.b16 %v934
        %v2099 = vunpack.c.l.b16 %v935
        %v2100 = vunpack.c.h.b16 %v935
        %v2101 = vunpack.c.l.b16 %v936
        %v2102 = vunpack.c.h.b16 %v936
        %v2103 = vunpack.c.l.b16 %v937
        %v2104 = vunpack.c.h.b16 %v937
        %v2105 = vunpack.c.l.b16 %v938
        %v2106 = vunpack.c.h.b16 %v938
        %v2107 = vunpack.c.l.b16 %v939
        %v2108 = vunpack.c.h.b16 %v939
        %v2109 = vunpack.c.l.b16 %v940
        %v2110 = vunpack.c.h.b16 %v940
        %v2111 = vunpack.c.l.b16 %v941
        %v2112 = vunpack.c.h.b16 %v941
        %v2113 = vunpack.c.l.b16 %v942
        %v2114 = vunpack.c.h.b16 %v942
        %v2115 = vunpack.c.l.b16 %v943
        %v2116 = vunpack.c.h.b16 %v943
        %v2117 = vunpack.c.l.b16 %v944
        %v2118 = vunpack.c.h.b16 %v944
        %v2119 = vunpack.c.l.b16 %v945
        %v2120 = vunpack.c.h.b16 %v945
        %v2121 = vunpack.c.l.b16 %v946
        %v2122 = vunpack.c.h.b16 %v946
        %v2123 = vunpack.c.l.b16 %v947
        %v2124 = vunpack.c.h.b16 %v947
        %v2125 = vunpack.c.l.b16 %v948
        %v2126 = vunpack.c.h.b16 %v948
        %v2127 = vunpack.c.l.b16 %v949
        %v2128 = vunpack.c.h.b16 %v949
        %v2129 = vunpack.c.l.b16 %v950
        %v2130 = vunpack.c.h.b16 %v950
        %v2131 = vunpack.c.l.b16 %v951
        %v2132 = vunpack.c.h.b16 %v951
        %v2133 = vunpack.c.l.b16 %v952
        %v2134 = vunpack.c.h.b16 %v952
        %v2135 = vunpack.c.l.b16 %v953
        %v2136 = vunpack.c.h.b16 %v953
        %v2137 = vunpack.c.l.b16 %v954
        %v2138 = vunpack.c.h.b16 %v954
        %v2139 = vunpack.c.l.b16 %v955
        %v2140 = vunpack.c.h.b16 %v955
        %v2141 = vunpack.c.l.b16 %v956
        %v2142 = vunpack.c.h.b16 %v956
        %v2143 = vunpack.c.l.b16 %v957
        %v2144 = vunpack.c.h.b16 %v957
        %v2145 = vunpack.c.l.b16 %v958
        %v2146 = vunpack.c.h.b16 %v958
        %v2147 = vunpack.c.l.b16 %v959
        %v2148 = vunpack.c.h.b16 %v959
        %v2149 = vunpack.c.l.b16 %v960
        %v2150 = vunpack.c.h.b16 %v960
        %v2151 = vunpack.c.l.b16 %v961
        %v2152 = vunpack.c.h.b16 %v961
        %v2153 = vunpack.c.l.b16 %v962
        %v2154 = vunpack.c.h.b16 %v962
        %v2155 = vunpack.c.l.b16 %v963
        %v2156 = vunpack.c.h.b16 %v963
        %v2157 = vunpack.c.l.b16 %v964
        %v2158 = vunpack.c.h.b16 %v964
        %v2159 = vunpack.c.l.b16 %v965
        %v2160 = vunpack.c.h.b16 %v965
        %v2161 = vunpack.c.l.b16 %v966
        %v2162 = vunpack.c.h.b16 %v966
        %v2163 = vunpack.c.l.b16 %v967
        %v2164 = vunpack.c.h.b16 %v967
        %v2165 = vunpack.c.l.b16 %v968
        %v2166 = vunpack.c.h.b16 %v968
        %v2167 = vunpack.c.l.b16 %v969
        %v2168 = vunpack.c.h.b16 %v969
        %v2169 = vunpack.c.l.b16 %v970
        %v2170 = vunpack.c.h.b16 %v970
        %v2171 = vunpack.c.l.b16 %v971
        %v2172 = vunpack.c.h.b16 %v971
        %v2173 = vunpack.c.l.b16 %v972
        %v2174 = vunpack.c.h.b16 %v972
        %v2175 = vunpack.c.l.b16 %v973
        %v2176 = vunpack.c.h.b16 %v973
        %v2177 = vunpack.c.l.b16 %v974
        %v2178 = vunpack.c.h.b16 %v974
        %v2179 = vunpack.c.l.b16 %v975
        %v2180 = vunpack.c.h.b16 %v975
        %v2181 = vunpack.c.l.b16 %v976
        %v2182 = vunpack.c.h.b16 %v976
        %v2183 = vunpack.c.l.b16 %v977
        %v2184 = vunpack.c.h.b16 %v977
        %v2185 = vunpack.c.l.b16 %v978
        %v2186 = vunpack.c.h.b16 %v978
        %v2187 = vunpack.c.l.b16 %v979
        %v2188 = vunpack.c.h.b16 %v979
        %v2189 = vunpack.c.l.b16 %v980
        %v2190 = vunpack.c.h.b16 %v980
        %v2191 = vunpack.c.l.b16 %v981
        %v2192 = vunpack.c.h.b16 %v981
        %v2193 = vunpack.c.l.b16 %v982
        %v2194 = vunpack.c.h.b16 %v982
        %v2195 = vunpack.c.l.b16 %v983
        %v2196 = vunpack.c.h.b16 %v983
        %v2197 = vunpack.c.l.b16 %v984
        %v2198 = vunpack.c.h.b16 %v984
        %v2199 = vunpack.c.l.b16 %v985
        %v2200 = vunpack.c.h.b16 %v985
        %v2201 = vunpack.c.l.b16 %v986
        %v2202 = vunpack.c.h.b16 %v986
        %v2203 = vunpack.c.l.b16 %v987
        %v2204 = vunpack.c.h.b16 %v987
        %v2205 = vunpack.c.l.b16 %v988
        %v2206 = vunpack.c.h.b16 %v988
        %v2207 = vunpack.c.l.b16 %v989
        %v2208 = vunpack.c.h.b16 %v989
        %v2209 = vunpack.c.l.b16 %v990
        %v2210 = vunpack.c.h.b16 %v990
        %v2211 = vunpack.c.l.b16 %v991
        %v2212 = vunpack.c.h.b16 %v991
        %v2213 = vunpack.c.l.b16 %v992
        %v2214 = vunpack.c.h.b16 %v992
        %v2215 = vunpack.c.l.b16 %v993
        %v2216 = vunpack.c.h.b16 %v993
        %v2217 = vunpack.c.l.b16 %v994
        %v2218 = vunpack.c.h.b16 %v994
        %v2219 = vunpack.c.l.b16 %v995
        %v2220 = vunpack.c.h.b16 %v995
        %v2221 = vunpack.c.l.b16 %v996
        %v2222 = vunpack.c.h.b16 %v996
        %v2223 = vunpack.c.l.b16 %v997
        %v2224 = vunpack.c.h.b16 %v997
        %v2225 = vunpack.c.l.b16 %v998
        %v2226 = vunpack.c.h.b16 %v998
        %v2227 = vunpack.c.l.b16 %v999
        %v2228 = vunpack.c.h.b16 %v999
        %v2229 = vunpack.c.l.b16 %v1000
        %v2230 = vunpack.c.h.b16 %v1000
        %v2231 = vunpack.c.l.b16 %v1001
        %v2232 = vunpack.c.h.b16 %v1001
        %v2233 = vunpack.c.l.b16 %v1002
        %v2234 = vunpack.c.h.b16 %v1002
        %v2235 = vunpack.c.l.b16 %v1003
        %v2236 = vunpack.c.h.b16 %v1003
        %v2237 = vunpack.c.l.b16 %v1004
        %v2238 = vunpack.c.h.b16 %v1004
        %v2239 = vunpack.c.l.b16 %v1005
        %v2240 = vunpack.c.h.b16 %v1005
        %v2241 = vunpack.c.l.b16 %v1006
        %v2242 = vunpack.c.h.b16 %v1006
        %v2243 = vunpack.c.l.b16 %v1007
        %v2244 = vunpack.c.h.b16 %v1007
        %v2245 = vunpack.c.l.b16 %v1008
        %v2246 = vunpack.c.h.b16 %v1008
        %v2247 = vunpack.c.l.b16 %v1009
        %v2248 = vunpack.c.h.b16 %v1009
        %v2249 = vunpack.c.l.b16 %v1010
        %v2250 = vunpack.c.h.b16 %v1010
        %v2251 = vunpack.c.l.b16 %v1011
        %v2252 = vunpack.c.h.b16 %v1011
        %v2253 = vunpack.c.l.b16 %v1012
        %v2254 = vunpack.c.h.b16 %v1012
        %v2255 = vunpack.c.l.b16 %v1013
        %v2256 = vunpack.c.h.b16 %v1013
        %v2257 = vunpack.c.l.b16 %v1014
        %v2258 = vunpack.c.h.b16 %v1014
        %v2259 = vunpack.c.l.b16 %v1015
        %v2260 = vunpack.c.h.b16 %v1015
        %v2261 = vunpack.c.l.b16 %v1016
        %v2262 = vunpack.c.h.b16 %v1016
        %v2263 = vunpack.c.l.b16 %v1017
        %v2264 = vunpack.c.h.b16 %v1017
        %v2265 = vunpack.c.l.b16 %v1018
        %v2266 = vunpack.c.h.b16 %v1018
        %v2267 = vunpack.c.l.b16 %v1019
        %v2268 = vunpack.c.h.b16 %v1019
        %v2269 = vunpack.c.l.b16 %v1020
        %v2270 = vunpack.c.h.b16 %v1020
        %v2271 = vunpack.c.l.b16 %v1021
        %v2272 = vunpack.c.h.b16 %v1021
        %v2273 = vunpack.c.l.b16 %v1022
        %v2274 = vunpack.c.h.b16 %v1022
        %v2275 = vunpack.c.l.b16 %v1023
        %v2276 = vunpack.c.h.b16 %v1023
        %v2277 = vunpack.c.l.b16 %v1024
        %v2278 = vunpack.c.h.b16 %v1024
        %v2279 = vunpack.c.l.b16 %v1025
        %v2280 = vunpack.c.h.b16 %v1025
        %v2281 = vunpack.c.l.b16 %v1026
        %v2282 = vunpack.c.h.b16 %v1026
        %v2283 = vunpack.c.l.b16 %v1027
        %v2284 = vunpack.c.h.b16 %v1027
        %v2285 = vunpack.c.l.b16 %v1028
        %v2286 = vunpack.c.h.b16 %v1028
        %v2287 = vunpack.c.l.b16 %v1029
        %v2288 = vunpack.c.h.b16 %v1029
        %v2289 = vunpack.c.l.b16 %v1030
        %v2290 = vunpack.c.h.b16 %v1030
        %v2291 = vunpack.c.l.b16 %v1031
        %v2292 = vunpack.c.h.b16 %v1031
        %v2293 = vunpack.c.l.b16 %v1032
        %v2294 = vunpack.c.h.b16 %v1032
        %v2295 = vunpack.c.l.b16 %v1033
        %v2296 = vunpack.c.h.b16 %v1033
        %v2297 = vunpack.c.l.b16 %v1034
        %v2298 = vunpack.c.h.b16 %v1034
        %v2299 = vunpack.c.l.b16 %v1035
        %v2300 = vunpack.c.h.b16 %v1035
        %v2301 = vunpack.c.l.b16 %v1036
        %v2302 = vunpack.c.h.b16 %v1036
        %v2303 = vunpack.c.l.b16 %v1037
        %v2304 = vunpack.c.h.b16 %v1037
        %v2305 = vunpack.c.l.b16 %v1038
        %v2306 = vunpack.c.h.b16 %v1038
        %v2307 = vunpack.c.l.b16 %v1039
        %v2308 = vunpack.c.h.b16 %v1039
        %v2309 = vunpack.c.l.b16 %v1040
        %v2310 = vunpack.c.h.b16 %v1040
        %v2311 = vunpack.c.l.b16 %v1041
        %v2312 = vunpack.c.h.b16 %v1041
        %v2313 = vunpack.c.l.b16 %v1042
        %v2314 = vunpack.c.h.b16 %v1042
        %v2315 = vunpack.c.l.b16 %v1043
        %v2316 = vunpack.c.h.b16 %v1043
        %v2317 = vunpack.c.l.b16 %v1044
        %v2318 = vunpack.c.h.b16 %v1044
        %v2319 = vunpack.c.l.b16 %v1045
        %v2320 = vunpack.c.h.b16 %v1045
        %v2321 = vunpack.c.l.b16 %v1046
        %v2322 = vunpack.c.h.b16 %v1046
        %v2323 = vunpack.c.l.b16 %v1047
        %v2324 = vunpack.c.h.b16 %v1047
        %v2325 = vunpack.c.l.b16 %v1048
        %v2326 = vunpack.c.h.b16 %v1048
        %v2327 = vunpack.c.l.b16 %v1049
        %v2328 = vunpack.c.h.b16 %v1049
        %v2329 = vunpack.c.l.b16 %v1050
        %v2330 = vunpack.c.h.b16 %v1050
        %v2331 = vunpack.c.l.b16 %v1051
        %v2332 = vunpack.c.h.b16 %v1051
        %v2333 = vunpack.c.l.b16 %v1052
        %v2334 = vunpack.c.h.b16 %v1052
        %v2335 = vunpack.c.l.b16 %v1053
        %v2336 = vunpack.c.h.b16 %v1053
        %v2337 = vunpack.c.l.b16 %v1054
        %v2338 = vunpack.c.h.b16 %v1054
        %v2339 = vunpack.c.l.b16 %v1055
        %v2340 = vunpack.c.h.b16 %v1055
        %v2341 = vunpack.c.l.b16 %v1056
        %v2342 = vunpack.c.h.b16 %v1056
        %v2343 = vunpack.c.l.b16 %v1057
        %v2344 = vunpack.c.h.b16 %v1057
        %v2345 = vunpack.c.l.b16 %v1058
        %v2346 = vunpack.c.h.b16 %v1058
        %v2347 = vunpack.c.l.b16 %v1059
        %v2348 = vunpack.c.h.b16 %v1059
        %v2349 = vunpack.c.l.b16 %v1060
        %v2350 = vunpack.c.h.b16 %v1060
        %v2351 = vunpack.c.l.b16 %v1061
        %v2352 = vunpack.c.h.b16 %v1061
        %v2353 = vunpack.c.l.b16 %v1062
        %v2354 = vunpack.c.h.b16 %v1062
        %v2355 = vunpack.c.l.b16 %v1063
        %v2356 = vunpack.c.h.b16 %v1063
        %v2357 = vunpack.c.l.b16 %v1064
        %v2358 = vunpack.c.h.b16 %v1064
        %v2359 = vunpack.c.l.b16 %v1065
        %v2360 = vunpack.c.h.b16 %v1065
        %v2361 = vunpack.c.l.b16 %v1066
        %v2362 = vunpack.c.h.b16 %v1066
        %v2363 = vunpack.c.l.b16 %v1067
        %v2364 = vunpack.c.h.b16 %v1067
        %v2365 = vunpack.c.l.b16 %v1068
        %v2366 = vunpack.c.h.b16 %v1068
        %v2367 = vunpack.c.l.b16 %v1069
        %v2368 = vunpack.c.h.b16 %v1069
        %v2369 = vunpack.c.l.b16 %v1070
        %v2370 = vunpack.c.h.b16 %v1070
        %v2371 = vunpack.c.l.b16 %v1071
        %v2372 = vunpack.c.h.b16 %v1071
        %v2373 = vunpack.c.l.b16 %v1072
        %v2374 = vunpack.c.h.b16 %v1072
        %v2375 = vunpack.c.l.b16 %v1073
        %v2376 = vunpack.c.h.b16 %v1073
        %v2377 = vunpack.c.l.b16 %v1074
        %v2378 = vunpack.c.h.b16 %v1074
        %v2379 = vunpack.c.l.b16 %v1075
        %v2380 = vunpack.c.h.b16 %v1075
        %v2381 = vunpack.c.l.b16 %v1076
        %v2382 = vunpack.c.h.b16 %v1076
        %v2383 = vunpack.c.l.b16 %v1077
        %v2384 = vunpack.c.h.b16 %v1077
        %v2385 = vunpack.c.l.b16 %v1078
        %v2386 = vunpack.c.h.b16 %v1078
        %v2387 = vunpack.c.l.b16 %v1079
        %v2388 = vunpack.c.h.b16 %v1079
        %v2389 = vunpack.c.l.b16 %v1080
        %v2390 = vunpack.c.h.b16 %v1080
        %v2391 = vunpack.c.l.b16 %v1081
        %v2392 = vunpack.c.h.b16 %v1081
        %v2393 = vunpack.c.l.b16 %v1082
        %v2394 = vunpack.c.h.b16 %v1082
        %v2395 = vunpack.c.l.b16 %v1083
        %v2396 = vunpack.c.h.b16 %v1083
        %v2397 = vunpack.c.l.b16 %v1084
        %v2398 = vunpack.c.h.b16 %v1084
        %v2399 = vunpack.c.l.b16 %v1085
        %v2400 = vunpack.c.h.b16 %v1085
        %v2401 = vunpack.c.l.b16 %v1086
        %v2402 = vunpack.c.h.b16 %v1086
        %v2403 = vunpack.c.l.b16 %v1087
        %v2404 = vunpack.c.h.b16 %v1087
        %v2405 = vunpack.c.l.b16 %v1088
        %v2406 = vunpack.c.h.b16 %v1088
        %v2407 = vunpack.c.l.b16 %v1089
        %v2408 = vunpack.c.h.b16 %v1089
        %v2409 = vunpack.c.l.b16 %v1090
        %v2410 = vunpack.c.h.b16 %v1090
        %v2411 = vunpack.c.l.b16 %v1091
        %v2412 = vunpack.c.h.b16 %v1091
        %v2413 = vunpack.c.l.b16 %v1092
        %v2414 = vunpack.c.h.b16 %v1092
        %v2415 = vunpack.c.l.b16 %v1093
        %v2416 = vunpack.c.h.b16 %v1093
        %v2417 = vunpack.c.l.b16 %v1094
        %v2418 = vunpack.c.h.b16 %v1094
        %v2419 = vunpack.c.l.b16 %v1095
        %v2420 = vunpack.c.h.b16 %v1095
        %v2421 = vunpack.c.l.b16 %v1096
        %v2422 = vunpack.c.h.b16 %v1096
        %v2423 = vunpack.c.l.b16 %v1097
        %v2424 = vunpack.c.h.b16 %v1097
        %v2425 = vunpack.c.l.b16 %v1098
        %v2426 = vunpack.c.h.b16 %v1098
        %v2427 = vunpack.c.l.b16 %v1099
        %v2428 = vunpack.c.h.b16 %v1099
        %v2429 = vunpack.c.l.b16 %v1100
        %v2430 = vunpack.c.h.b16 %v1100
        %v2431 = vunpack.c.l.b16 %v1101
        %v2432 = vunpack.c.h.b16 %v1101
        %v2433 = vunpack.c.l.b16 %v1102
        %v2434 = vunpack.c.h.b16 %v1102
        %v2435 = vunpack.c.l.b16 %v1103
        %v2436 = vunpack.c.h.b16 %v1103
        %v2437 = vunpack.c.l.b16 %v1104
        %v2438 = vunpack.c.h.b16 %v1104
        %v2439 = vunpack.c.l.b16 %v1105
        %v2440 = vunpack.c.h.b16 %v1105
        %v2441 = vunpack.c.l.b16 %v1106
        %v2442 = vunpack.c.h.b16 %v1106
        %v2443 = vunpack.c.l.b16 %v1107
        %v2444 = vunpack.c.h.b16 %v1107
        %v2445 = vunpack.c.l.b16 %v1108
        %v2446 = vunpack.c.h.b16 %v1108
        %v2447 = vunpack.c.l.b16 %v1109
        %v2448 = vunpack.c.h.b16 %v1109
        %v2449 = vunpack.c.l.b16 %v1110
        %v2450 = vunpack.c.h.b16 %v1110
        %v2451 = vunpack.c.l.b16 %v1111
        %v2452 = vunpack.c.h.b16 %v1111
        %v2453 = vunpack.c.l.b16 %v1112
        %v2454 = vunpack.c.h.b16 %v1112
        %v2455 = vunpack.c.l.b16 %v1113
        %v2456 = vunpack.c.h.b16 %v1113
        %v2457 = vunpack.c.l.b16 %v1114
        %v2458 = vunpack.c.h.b16 %v1114
        %v2459 = vunpack.c.l.b16 %v1115
        %v2460 = vunpack.c.h.b16 %v1115
        %v2461 = vunpack.c.l.b16 %v1116
        %v2462 = vunpack.c.h.b16 %v1116
        %v2463 = vunpack.c.l.b16 %v1117
        %v2464 = vunpack.c.h.b16 %v1117
        %v2465 = vunpack.c.l.b16 %v1118
        %v2466 = vunpack.c.h.b16 %v1118
        %v2467 = vunpack.c.l.b16 %v1119
        %v2468 = vunpack.c.h.b16 %v1119
        %v2469 = vunpack.c.l.b16 %v1120
        %v2470 = vunpack.c.h.b16 %v1120
        %v2471 = vunpack.c.l.b16 %v1121
        %v2472 = vunpack.c.h.b16 %v1121
        %v2473 = vunpack.c.l.b16 %v1122
        %v2474 = vunpack.c.h.b16 %v1122
        %v2475 = vunpack.c.l.b16 %v1123
        %v2476 = vunpack.c.h.b16 %v1123
        %v2477 = vunpack.c.l.b16 %v1124
        %v2478 = vunpack.c.h.b16 %v1124
        %v2479 = vunpack.c.l.b16 %v1125
        %v2480 = vunpack.c.h.b16 %v1125
        %v2481 = vunpack.c.l.b16 %v1126
        %v2482 = vunpack.c.h.b16 %v1126
        %v2483 = vunpack.c.l.b16 %v1127
        %v2484 = vunpack.c.h.b16 %v1127
        %v2485 = vunpack.c.l.b16 %v1128
        %v2486 = vunpack.c.h.b16 %v1128
        %v2487 = vunpack.c.l.b16 %v1129
        %v2488 = vunpack.c.h.b16 %v1129
        %v2489 = vunpack.c.l.b16 %v1130
        %v2490 = vunpack.c.h.b16 %v1130
        %v2491 = vunpack.c.l.b16 %v1131
        %v2492 = vunpack.c.h.b16 %v1131
        %v2493 = vunpack.c.l.b16 %v1132
        %v2494 = vunpack.c.h.b16 %v1132
        %v2495 = vunpack.c.l.b16 %v1133
        %v2496 = vunpack.c.h.b16 %v1133
        %v2497 = vunpack.c.l.b16 %v1134
        %v2498 = vunpack.c.h.b16 %v1134
        %v2499 = vunpack.c.l.b16 %v1135
        %v2500 = vunpack.c.h.b16 %v1135
        %v2501 = vunpack.c.l.b16 %v1136
        %v2502 = vunpack.c.h.b16 %v1136
        %v2503 = vunpack.c.l.b16 %v1137
        %v2504 = vunpack.c.h.b16 %v1137
        %v2505 = vunpack.c.l.b16 %v1138
        %v2506 = vunpack.c.h.b16 %v1138
        %v2507 = vunpack.c.l.b16 %v1139
        %v2508 = vunpack.c.h.b16 %v1139
        %v2509 = vunpack.c.l.b16 %v1140
        %v2510 = vunpack.c.h.b16 %v1140
        %v2511 = vunpack.c.l.b16 %v1141
        %v2512 = vunpack.c.h.b16 %v1141
        %v2513 = vunpack.c.l.b16 %v1142
        %v2514 = vunpack.c.h.b16 %v1142
        %v2515 = vunpack.c.l.b16 %v1143
        %v2516 = vunpack.c.h.b16 %v1143
        %v2517 = vunpack.c.l.b16 %v1144
        %v2518 = vunpack.c.h.b16 %v1144
        %v2519 = vunpack.c.l.b16 %v1145
        %v2520 = vunpack.c.h.b16 %v1145
        %v2521 = vunpack.c.l.b16 %v1146
        %v2522 = vunpack.c.h.b16 %v1146
        %v2523 = vunpack.c.l.b16 %v1147
        %v2524 = vunpack.c.h.b16 %v1147
        %v2525 = vunpack.c.l.b16 %v1148
        %v2526 = vunpack.c.h.b16 %v1148
        %v2527 = vunpack.c.l.b16 %v1149
        %v2528 = vunpack.c.h.b16 %v1149
        %v2529 = vunpack.c.l.b16 %v1150
        %v2530 = vunpack.c.h.b16 %v1150
        %v2531 = vunpack.c.l.b16 %v1151
        %v2532 = vunpack.c.h.b16 %v1151
        %v2533 = vunpack.c.l.b16 %v1152
        %v2534 = vunpack.c.h.b16 %v1152
        %v2535 = vunpack.c.l.b16 %v1153
        %v2536 = vunpack.c.h.b16 %v1153
        %v2537 = vunpack.c.l.b16 %v1154
        %v2538 = vunpack.c.h.b16 %v1154
        %v2539 = vunpack.c.l.b16 %v1155
        %v2540 = vunpack.c.h.b16 %v1155
        %v2541 = vunpack.c.l.b16 %v1156
        %v2542 = vunpack.c.h.b16 %v1156
        %v2543 = vunpack.c.l.b16 %v1157
        %v2544 = vunpack.c.h.b16 %v1157
        %v2545 = vunpack.c.l.b16 %v1158
        %v2546 = vunpack.c.h.b16 %v1158
        %v2547 = vunpack.c.l.b16 %v1159
        %v2548 = vunpack.c.h.b16 %v1159
        %v2549 = vunpack.c.l.b16 %v1160
        %v2550 = vunpack.c.h.b16 %v1160
        %v2551 = vunpack.c.l.b16 %v1161
        %v2552 = vunpack.c.h.b16 %v1161
        %v2553 = vunpack.c.l.b16 %v1162
        %v2554 = vunpack.c.h.b16 %v1162
        %v2555 = vunpack.c.l.b16 %v1163
        %v2556 = vunpack.c.h.b16 %v1163
        %v2557 = vunpack.c.l.b16 %v1164
        %v2558 = vunpack.c.h.b16 %v1164
        %v2559 = vunpack.c.l.b16 %v1165
        %v2560 = vunpack.c.h.b16 %v1165
        %v2561 = vunpack.c.l.b16 %v1166
        %v2562 = vunpack.c.h.b16 %v1166
        %v2563 = vunpack.c.l.b16 %v1167
        %v2564 = vunpack.c.h.b16 %v1167
        %v2565 = vunpack.c.l.b16 %v1168
        %v2566 = vunpack.c.h.b16 %v1168
        %v2567 = vunpack.c.l.b16 %v1169
        %v2568 = vunpack.c.h.b16 %v1169
        %v2569 = vunpack.c.l.b16 %v1170
        %v2570 = vunpack.c.h.b16 %v1170
        %v2571 = vunpack.c.l.b16 %v1171
        %v2572 = vunpack.c.h.b16 %v1171
        %v2573 = vunpack.c.l.b16 %v1172
        %v2574 = vunpack.c.h.b16 %v1172
        %v2575 = vunpack.c.l.b16 %v1173
        %v2576 = vunpack.c.h.b16 %v1173
        %v2577 = vunpack.c.l.b16 %v1174
        %v2578 = vunpack.c.h.b16 %v1174
        %v2579 = vunpack.c.l.b16 %v1175
        %v2580 = vunpack.c.h.b16 %v1175
        %v2581 = vunpack.c.l.b16 %v1176
        %v2582 = vunpack.c.h.b16 %v1176
        %v2583 = vunpack.c.l.b16 %v1177
        %v2584 = vunpack.c.h.b16 %v1177
        %v2585 = vunpack.c.l.b16 %v1178
        %v2586 = vunpack.c.h.b16 %v1178
        %v2587 = vunpack.c.l.b16 %v1179
        %v2588 = vunpack.c.h.b16 %v1179
        %v2589 = vunpack.c.l.b16 %v1180
        %v2590 = vunpack.c.h.b16 %v1180
        %v2591 = vunpack.c.l.b16 %v1181
        %v2592 = vunpack.c.h.b16 %v1181
        %v2593 = vunpack.c.l.b16 %v1182
        %v2594 = vunpack.c.h.b16 %v1182
        %v2595 = vunpack.c.l.b16 %v1183
        %v2596 = vunpack.c.h.b16 %v1183
        %v2597 = vunpack.c.l.b16 %v1184
        %v2598 = vunpack.c.h.b16 %v1184
        %v2599 = vunpack.c.l.b16 %v1185
        %v2600 = vunpack.c.h.b16 %v1185
        %v2601 = vunpack.c.l.b16 %v1186
        %v2602 = vunpack.c.h.b16 %v1186
        %v2603 = vunpack.c.l.b16 %v1187
        %v2604 = vunpack.c.h.b16 %v1187
        %v2605 = vunpack.c.l.b16 %v1188
        %v2606 = vunpack.c.h.b16 %v1188
        %v2607 = vunpack.c.l.b16 %v1189
        %v2608 = vunpack.c.h.b16 %v1189
        %v2609 = vunpack.c.l.b16 %v1190
        %v2610 = vunpack.c.h.b16 %v1190
        %v2611 = vunpack.c.l.b16 %v1191
        %v2612 = vunpack.c.h.b16 %v1191
        %v2613 = vunpack.c.l.b16 %v1192
        %v2614 = vunpack.c.h.b16 %v1192
        %v2615 = vunpack.c.l.b16 %v1193
        %v2616 = vunpack.c.h.b16 %v1193
        %v2617 = vunpack.c.l.b16 %v1194
        %v2618 = vunpack.c.h.b16 %v1194
        %v2619 = vunpack.c.l.b16 %v1195
        %v2620 = vunpack.c.h.b16 %v1195
        %v2621 = vunpack.c.l.b16 %v1196
        %v2622 = vunpack.c.h.b16 %v1196
        %v2623 = vunpack.c.l.b16 %v1197
        %v2624 = vunpack.c.h.b16 %v1197
        %v2625 = vunpack.c.l.b16 %v1198
        %v2626 = vunpack.c.h.b16 %v1198
        %v2627 = vunpack.c.l.b16 %v1199
        %v2628 = vunpack.c.h.b16 %v1199
        %v2629 = vunpack.c.l.b16 %v1200
        %v2630 = vunpack.c.h.b16 %v1200
        %v2631 = vunpack.c.l.b16 %v1201
        %v2632 = vunpack.c.h.b16 %v1201
        %v2633 = vunpack.c.l.b16 %v1202
        %v2634 = vunpack.c.h.b16 %v1202
        %v2635 = vunpack.c.l.b16 %v1203
        %v2636 = vunpack.c.h.b16 %v1203
        %v2637 = vunpack.c.l.b16 %v1204
        %v2638 = vunpack.c.h.b16 %v1204
        %v2639 = vunpack.c.l.b16 %v1205
        %v2640 = vunpack.c.h.b16 %v1205
        %v2641 = vunpack.c.l.b16 %v1206
        %v2642 = vunpack.c.h.b16 %v1206
        %v2643 = vunpack.c.l.b16 %v1207
        %v2644 = vunpack.c.h.b16 %v1207
        %v2645 = vunpack.c.l.b16 %v1208
        %v2646 = vunpack.c.h.b16 %v1208
        %v2647 = vunpack.c.l.b16 %v1209
        %v2648 = vunpack.c.h.b16 %v1209
        %v2649 = vunpack.c.l.b16 %v1210
        %v2650 = vunpack.c.h.b16 %v1210
        %v2651 = vpack.c.b16 %v1697, %v1691
        %v2652 = vpack.c.b16 %v1698, %v1692
        %v2653 = vpack.c.b16 %v1699, %v1693
        %v2654 = vpack.c.b16 %v1700, %v1694
        %v2655 = vpack.c.b16 %v1701, %v1695
        %v2656 = vpack.c.b16 %v1702, %v1696
        %v2657 = vpack.c.b16 %v1709, %v1703
        %v2658 = vpack.c.b16 %v1710, %v1704
        %v2659 = vpack.c.b16 %v1711, %v1705
        %v2660 = vpack.c.b16 %v1712, %v1706
        %v2661 = vpack.c.b16 %v1713, %v1707
        %v2662 = vpack.c.b16 %v1714, %v1708
        %v2663 = vpack.c.b16 %v1721, %v1715
        %v2664 = vpack.c.b16 %v1722, %v1716
        %v2665 = vpack.c.b16 %v1723, %v1717
        %v2666 = vpack.c.b16 %v1724, %v1718
        %v2667 = vpack.c.b16 %v1725, %v1719
        %v2668 = vpack.c.b16 %v1726, %v1720
        %v2669 = vpack.c.b16 %v1733, %v1727
        %v2670 = vpack.c.b16 %v1734, %v1728
        %v2671 = vpack.c.b16 %v1735, %v1729
        %v2672 = vpack.c.b16 %v1736, %v1730
        %v2673 = vpack.c.b16 %v1737, %v1731
        %v2674 = vpack.c.b16 %v1738, %v1732
        %v2675 = vpack.c.b16 %v1745, %v1739
        %v2676 = vpack.c.b16 %v1746, %v1740
        %v2677 = vpack.c.b16 %v1747, %v1741
        %v2678 = vpack.c.b16 %v1748, %v1742
        %v2679 = vpack.c.b16 %v1749, %v1743
        %v2680 = vpack.c.b16 %v1750, %v1744
        %v2681 = vpack.c.b16 %v1757, %v1751
        %v2682 = vpack.c.b16 %v1758, %v1752
        %v2683 = vpack.c.b16 %v1759, %v1753
        %v2684 = vpack.c.b16 %v1760, %v1754
        %v2685 = vpack.c.b16 %v1761, %v1755
        %v2686 = vpack.c.b16 %v1762, %v1756
        %v2687 = vpack.c.b16 %v1769, %v1763
        %v2688 = vpack.c.b16 %v1770, %v1764
        %v2689 = vpack.c.b16 %v1771, %v1765
        %v2690 = vpack.c.b16 %v1772, %v1766
        %v2691 = vpack.c.b16 %v1773, %v1767
        %v2692 = vpack.c.b16 %v1774, %v1768
        %v2693 = vpack.c.b16 %v1781, %v1775
        %v2694 = vpack.c.b16 %v1782, %v1776
        %v2695 = vpack.c.b16 %v1783, %v1777
        %v2696 = vpack.c.b16 %v1784, %v1778
        %v2697 = vpack.c.b16 %v1785, %v1779
        %v2698 = vpack.c.b16 %v1786, %v1780
        %v2699 = vpack.c.b16 %v1793, %v1787
        %v2700 = vpack.c.b16 %v1794, %v1788
        %v2701 = vpack.c.b16 %v1795, %v1789
        %v2702 = vpack.c.b16 %v1796, %v1790
        %v2703 = vpack.c.b16 %v1797, %v1791
        %v2704 = vpack.c.b16 %v1798, %v1792
        %v2705 = vpack.c.b16 %v1805, %v1799
        %v2706 = vpack.c.b16 %v1806, %v1800
        %v2707 = vpack.c.b16 %v1807, %v1801
        %v2708 = vpack.c.b16 %v1808, %v1802
        %v2709 = vpack.c.b16 %v1809, %v1803
        %v2710 = vpack.c.b16 %v1810, %v1804
        %v2711 = vpack.c.b16 %v1817, %v1811
        %v2712 = vpack.c.b16 %v1818, %v1812
        %v2713 = vpack.c.b16 %v1819, %v1813
        %v2714 = vpack.c.b16 %v1820, %v1814
        %v2715 = vpack.c.b16 %v1821, %v1815
        %v2716 = vpack.c.b16 %v1822, %v1816
        %v2717 = vpack.c.b16 %v1829, %v1823
        %v2718 = vpack.c.b16 %v1830, %v1824
        %v2719 = vpack.c.b16 %v1831, %v1825
        %v2720 = vpack.c.b16 %v1832, %v1826
        %v2721 = vpack.c.b16 %v1833, %v1827
        %v2722 = vpack.c.b16 %v1834, %v1828
        %v2723 = vpack.c.b16 %v1841, %v1835
        %v2724 = vpack.c.b16 %v1842, %v1836
        %v2725 = vpack.c.b16 %v1843, %v1837
        %v2726 = vpack.c.b16 %v1844, %v1838
        %v2727 = vpack.c.b16 %v1845, %v1839
        %v2728 = vpack.c.b16 %v1846, %v1840
        %v2729 = vpack.c.b16 %v1853, %v1847
        %v2730 = vpack.c.b16 %v1854, %v1848
        %v2731 = vpack.c.b16 %v1855, %v1849
        %v2732 = vpack.c.b16 %v1856, %v1850
        %v2733 = vpack.c.b16 %v1857, %v1851
        %v2734 = vpack.c.b16 %v1858, %v1852
        %v2735 = vpack.c.b16 %v1865, %v1859
        %v2736 = vpack.c.b16 %v1866, %v1860
        %v2737 = vpack.c.b16 %v1867, %v1861
        %v2738 = vpack.c.b16 %v1868, %v1862
        %v2739 = vpack.c.b16 %v1869, %v1863
        %v2740 = vpack.c.b16 %v1870, %v1864
        %v2741 = vpack.c.b16 %v1877, %v1871
        %v2742 = vpack.c.b16 %v1878, %v1872
        %v2743 = vpack.c.b16 %v1879, %v1873
        %v2744 = vpack.c.b16 %v1880, %v1874
        %v2745 = vpack.c.b16 %v1881, %v1875
        %v2746 = vpack.c.b16 %v1882, %v1876
        %v2747 = vpack.c.b16 %v1889, %v1883
        %v2748 = vpack.c.b16 %v1890, %v1884
        %v2749 = vpack.c.b16 %v1891, %v1885
        %v2750 = vpack.c.b16 %v1892, %v1886
        %v2751 = vpack.c.b16 %v1893, %v1887
        %v2752 = vpack.c.b16 %v1894, %v1888
        %v2753 = vpack.c.b16 %v1901, %v1895
        %v2754 = vpack.c.b16 %v1902, %v1896
        %v2755 = vpack.c.b16 %v1903, %v1897
        %v2756 = vpack.c.b16 %v1904, %v1898
        %v2757 = vpack.c.b16 %v1905, %v1899
        %v2758 = vpack.c.b16 %v1906, %v1900
        %v2759 = vpack.c.b16 %v1913, %v1907
        %v2760 = vpack.c.b16 %v1914, %v1908
        %v2761 = vpack.c.b16 %v1915, %v1909
        %v2762 = vpack.c.b16 %v1916, %v1910
        %v2763 = vpack.c.b16 %v1917, %v1911
        %v2764 = vpack.c.b16 %v1918, %v1912
        %v2765 = vpack.c.b16 %v1925, %v1919
        %v2766 = vpack.c.b16 %v1926, %v1920
        %v2767 = vpack.c.b16 %v1927, %v1921
        %v2768 = vpack.c.b16 %v1928, %v1922
        %v2769 = vpack.c.b16 %v1929, %v1923
        %v2770 = vpack.c.b16 %v1930, %v1924
        %v2771 = vpack.c.b16 %v1937, %v1931
        %v2772 = vpack.c.b16 %v1938, %v1932
        %v2773 = vpack.c.b16 %v1939, %v1933
        %v2774 = vpack.c.b16 %v1940, %v1934
        %v2775 = vpack.c.b16 %v1941, %v1935
        %v2776 = vpack.c.b16 %v1942, %v1936
        %v2777 = vpack.c.b16 %v1949, %v1943
        %v2778 = vpack.c.b16 %v1950, %v1944
        %v2779 = vpack.c.b16 %v1951, %v1945
        %v2780 = vpack.c.b16 %v1952, %v1946
        %v2781 = vpack.c.b16 %v1953, %v1947
        %v2782 = vpack.c.b16 %v1954, %v1948
        %v2783 = vpack.c.b16 %v1961, %v1955
        %v2784 = vpack.c.b16 %v1962, %v1956
        %v2785 = vpack.c.b16 %v1963, %v1957
        %v2786 = vpack.c.b16 %v1964, %v1958
        %v2787 = vpack.c.b16 %v1965, %v1959
        %v2788 = vpack.c.b16 %v1966, %v1960
        %v2789 = vpack.c.b16 %v1973, %v1967
        %v2790 = vpack.c.b16 %v1974, %v1968
        %v2791 = vpack.c.b16 %v1975, %v1969
        %v2792 = vpack.c.b16 %v1976, %v1970
        %v2793 = vpack.c.b16 %v1977, %v1971
        %v2794 = vpack.c.b16 %v1978, %v1972
        %v2795 = vpack.c.b16 %v1985, %v1979
        %v2796 = vpack.c.b16 %v1986, %v1980
        %v2797 = vpack.c.b16 %v1987, %v1981
        %v2798 = vpack.c.b16 %v1988, %v1982
        %v2799 = vpack.c.b16 %v1989, %v1983
        %v2800 = vpack.c.b16 %v1990, %v1984
        %v2801 = vpack.c.b16 %v1997, %v1991
        %v2802 = vpack.c.b16 %v1998, %v1992
        %v2803 = vpack.c.b16 %v1999, %v1993
        %v2804 = vpack.c.b16 %v2000, %v1994
        %v2805 = vpack.c.b16 %v2001, %v1995
        %v2806 = vpack.c.b16 %v2002, %v1996
        %v2807 = vpack.c.b16 %v2009, %v2003
        %v2808 = vpack.c.b16 %v2010, %v2004
        %v2809 = vpack.c.b16 %v2011, %v2005
        %v2810 = vpack.c.b16 %v2012, %v2006
        %v2811 = vpack.c.b16 %v2013, %v2007
        %v2812 = vpack.c.b16 %v2014, %v2008
        %v2813 = vpack.c.b16 %v2021, %v2015
        %v2814 = vpack.c.b16 %v2022, %v2016
        %v2815 = vpack.c.b16 %v2023, %v2017
        %v2816 = vpack.c.b16 %v2024, %v2018
        %v2817 = vpack.c.b16 %v2025, %v2019
        %v2818 = vpack.c.b16 %v2026, %v2020
        %v2819 = vpack.c.b16 %v2033, %v2027
        %v2820 = vpack.c.b16 %v2034, %v2028
        %v2821 = vpack.c.b16 %v2035, %v2029
        %v2822 = vpack.c.b16 %v2036, %v2030
        %v2823 = vpack.c.b16 %v2037, %v2031
        %v2824 = vpack.c.b16 %v2038, %v2032
        %v2825 = vpack.c.b16 %v2045, %v2039
        %v2826 = vpack.c.b16 %v2046, %v2040
        %v2827 = vpack.c.b16 %v2047, %v2041
        %v2828 = vpack.c.b16 %v2048, %v2042
        %v2829 = vpack.c.b16 %v2049, %v2043
        %v2830 = vpack.c.b16 %v2050, %v2044
        %v2831 = vpack.c.b16 %v2057, %v2051
        %v2832 = vpack.c.b16 %v2058, %v2052
        %v2833 = vpack.c.b16 %v2059, %v2053
        %v2834 = vpack.c.b16 %v2060, %v2054
        %v2835 = vpack.c.b16 %v2061, %v2055
        %v2836 = vpack.c.b16 %v2062, %v2056
        %v2837 = vpack.c.b16 %v2069, %v2063
        %v2838 = vpack.c.b16 %v2070, %v2064
        %v2839 = vpack.c.b16 %v2071, %v2065
        %v2840 = vpack.c.b16 %v2072, %v2066
        %v2841 = vpack.c.b16 %v2073, %v2067
        %v2842 = vpack.c.b16 %v2074, %v2068
        %v2843 = vpack.c.b16 %v2081, %v2075
        %v2844 = vpack.c.b16 %v2082, %v2076
        %v2845 = vpack.c.b16 %v2083, %v2077
        %v2846 = vpack.c.b16 %v2084, %v2078
        %v2847 = vpack.c.b16 %v2085, %v2079
        %v2848 = vpack.c.b16 %v2086, %v2080
        %v2849 = vpack.c.b16 %v2093, %v2087
        %v2850 = vpack.c.b16 %v2094, %v2088
        %v2851 = vpack.c.b16 %v2095, %v2089
        %v2852 = vpack.c.b16 %v2096, %v2090
        %v2853 = vpack.c.b16 %v2097, %v2091
        %v2854 = vpack.c.b16 %v2098, %v2092
        %v2855 = vpack.c.b16 %v2105, %v2099
        %v2856 = vpack.c.b16 %v2106, %v2100
        %v2857 = vpack.c.b16 %v2107, %v2101
        %v2858 = vpack.c.b16 %v2108, %v2102
        %v2859 = vpack.c.b16 %v2109, %v2103
        %v2860 = vpack.c.b16 %v2110, %v2104
        %v2861 = vpack.c.b16 %v2117, %v2111
        %v2862 = vpack.c.b16 %v2118, %v2112
        %v2863 = vpack.c.b16 %v2119, %v2113
        %v2864 = vpack.c.b16 %v2120, %v2114
        %v2865 = vpack.c.b16 %v2121, %v2115
        %v2866 = vpack.c.b16 %v2122, %v2116
        %v2867 = vpack.c.b16 %v2129, %v2123
        %v2868 = vpack.c.b16 %v2130, %v2124
        %v2869 = vpack.c.b16 %v2131, %v2125
        %v2870 = vpack.c.b16 %v2132, %v2126
        %v2871 = vpack.c.b16 %v2133, %v2127
        %v2872 = vpack.c.b16 %v2134, %v2128
        %v2873 = vpack.c.b16 %v2141, %v2135
        %v2874 = vpack.c.b16 %v2142, %v2136
        %v2875 = vpack.c.b16 %v2143, %v2137
        %v2876 = vpack.c.b16 %v2144, %v2138
        %v2877 = vpack.c.b16 %v2145, %v2139
        %v2878 = vpack.c.b16 %v2146, %v2140
        %v2879 = vpack.c.b16 %v2153, %v2147
        %v2880 = vpack.c.b16 %v2154, %v2148
        %v2881 = vpack.c.b16 %v2155, %v2149
        %v2882 = vpack.c.b16 %v2156, %v2150
        %v2883 = vpack.c.b16 %v2157, %v2151
        %v2884 = vpack.c.b16 %v2158, %v2152
        %v2885 = vpack.c.b16 %v2165, %v2159
        %v2886 = vpack.c.b16 %v2166, %v2160
        %v2887 = vpack.c.b16 %v2167, %v2161
        %v2888 = vpack.c.b16 %v2168, %v2162
        %v2889 = vpack.c.b16 %v2169, %v2163
        %v2890 = vpack.c.b16 %v2170, %v2164
        %v2891 = vpack.c.b16 %v2177, %v2171
        %v2892 = vpack.c.b16 %v2178, %v2172
        %v2893 = vpack.c.b16 %v2179, %v2173
        %v2894 = vpack.c.b16 %v2180, %v2174
        %v2895 = vpack.c.b16 %v2181, %v2175
        %v2896 = vpack.c.b16 %v2182, %v2176
        %v2897 = vpack.c.b16 %v2189, %v2183
        %v2898 = vpack.c.b16 %v2190, %v2184
        %v2899 = vpack.c.b16 %v2191, %v2185
        %v2900 = vpack.c.b16 %v2192, %v2186
        %v2901 = vpack.c.b16 %v2193, %v2187
        %v2902 = vpack.c.b16 %v2194, %v2188
        %v2903 = vpack.c.b16 %v2201, %v2195
        %v2904 = vpack.c.b16 %v2202, %v2196
        %v2905 = vpack.c.b16 %v2203, %v2197
        %v2906 = vpack.c.b16 %v2204, %v2198
        %v2907 = vpack.c.b16 %v2205, %v2199
        %v2908 = vpack.c.b16 %v2206, %v2200
        %v2909 = vpack.c.b16 %v2213, %v2207
        %v2910 = vpack.c.b16 %v2214, %v2208
        %v2911 = vpack.c.b16 %v2215, %v2209
        %v2912 = vpack.c.b16 %v2216, %v2210
        %v2913 = vpack.c.b16 %v2217, %v2211
        %v2914 = vpack.c.b16 %v2218, %v2212
        %v2915 = vpack.c.b16 %v2225, %v2219
        %v2916 = vpack.c.b16 %v2226, %v2220
        %v2917 = vpack.c.b16 %v2227, %v2221
        %v2918 = vpack.c.b16 %v2228, %v2222
        %v2919 = vpack.c.b16 %v2229, %v2223
        %v2920 = vpack.c.b16 %v2230, %v2224
        %v2921 = vpack.c.b16 %v2237, %v2231
        %v2922 = vpack.c.b16 %v2238, %v2232
        %v2923 = vpack.c.b16 %v2239, %v2233
        %v2924 = vpack.c.b16 %v2240, %v2234
        %v2925 = vpack.c.b16 %v2241, %v2235
        %v2926 = vpack.c.b16 %v2242, %v2236
        %v2927 = vpack.c.b16 %v2249, %v2243
        %v2928 = vpack.c.b16 %v2250, %v2244
        %v2929 = vpack.c.b16 %v2251, %v2245
        %v2930 = vpack.c.b16 %v2252, %v2246
        %v2931 = vpack.c.b16 %v2253, %v2247
        %v2932 = vpack.c.b16 %v2254, %v2248
        %v2933 = vpack.c.b16 %v2261, %v2255
        %v2934 = vpack.c.b16 %v2262, %v2256
        %v2935 = vpack.c.b16 %v2263, %v2257
        %v2936 = vpack.c.b16 %v2264, %v2258
        %v2937 = vpack.c.b16 %v2265, %v2259
        %v2938 = vpack.c.b16 %v2266, %v2260
        %v2939 = vpack.c.b16 %v2273, %v2267
        %v2940 = vpack.c.b16 %v2274, %v2268
        %v2941 = vpack.c.b16 %v2275, %v2269
        %v2942 = vpack.c.b16 %v2276, %v2270
        %v2943 = vpack.c.b16 %v2277, %v2271
        %v2944 = vpack.c.b16 %v2278, %v2272
        %v2945 = vpack.c.b16 %v2285, %v2279
        %v2946 = vpack.c.b16 %v2286, %v2280
        %v2947 = vpack.c.b16 %v2287, %v2281
        %v2948 = vpack.c.b16 %v2288, %v2282
        %v2949 = vpack.c.b16 %v2289, %v2283
        %v2950 = vpack.c.b16 %v2290, %v2284
        %v2951 = vpack.c.b16 %v2297, %v2291
        %v2952 = vpack.c.b16 %v2298, %v2292
        %v2953 = vpack.c.b16 %v2299, %v2293
        %v2954 = vpack.c.b16 %v2300, %v2294
        %v2955 = vpack.c.b16 %v2301, %v2295
        %v2956 = vpack.c.b16 %v2302, %v2296
        %v2957 = vpack.c.b16 %v2309, %v2303
        %v2958 = vpack.c.b16 %v2310, %v2304
        %v2959 = vpack.c.b16 %v2311, %v2305
        %v2960 = vpack.c.b16 %v2312, %v2306
        %v2961 = vpack.c.b16 %v2313, %v2307
        %v2962 = vpack.c.b16 %v2314, %v2308
        %v2963 = vpack.c.b16 %v2321, %v2315
        %v2964 = vpack.c.b16 %v2322, %v2316
        %v2965 = vpack.c.b16 %v2323, %v2317
        %v2966 = vpack.c.b16 %v2324, %v2318
        %v2967 = vpack.c.b16 %v2325, %v2319
        %v2968 = vpack.c.b16 %v2326, %v2320
        %v2969 = vpack.c.b16 %v2333, %v2327
        %v2970 = vpack.c.b16 %v2334, %v2328
        %v2971 = vpack.c.b16 %v2335, %v2329
        %v2972 = vpack.c.b16 %v2336, %v2330
        %v2973 = vpack.c.b16 %v2337, %v2331
        %v2974 = vpack.c.b16 %v2338, %v2332
        %v2975 = vpack.c.b16 %v2345, %v2339
        %v2976 = vpack.c.b16 %v2346, %v2340
        %v2977 = vpack.c.b16 %v2347, %v2341
        %v2978 = vpack.c.b16 %v2348, %v2342
        %v2979 = vpack.c.b16 %v2349, %v2343
        %v2980 = vpack.c.b16 %v2350, %v2344
        %v2981 = vpack.c.b16 %v2357, %v2351
        %v2982 = vpack.c.b16 %v2358, %v2352
        %v2983 = vpack.c.b16 %v2359, %v2353
        %v2984 = vpack.c.b16 %v2360, %v2354
        %v2985 = vpack.c.b16 %v2361, %v2355
        %v2986 = vpack.c.b16 %v2362, %v2356
        %v2987 = vpack.c.b16 %v2369, %v2363
        %v2988 = vpack.c.b16 %v2370, %v2364
        %v2989 = vpack.c.b16 %v2371, %v2365
        %v2990 = vpack.c.b16 %v2372, %v2366
        %v2991 = vpack.c.b16 %v2373, %v2367
        %v2992 = vpack.c.b16 %v2374, %v2368
        %v2993 = vpack.c.b16 %v2381, %v2375
        %v2994 = vpack.c.b16 %v2382, %v2376
        %v2995 = vpack.c.b16 %v2383, %v2377
        %v2996 = vpack.c.b16 %v2384, %v2378
        %v2997 = vpack.c.b16 %v2385, %v2379
        %v2998 = vpack.c.b16 %v2386, %v2380
        %v2999 = vpack.c.b16 %v2393, %v2387
        %v3000 = vpack.c.b16 %v2394, %v2388
        %v3001 = vpack.c.b16 %v2395, %v2389
        %v3002 = vpack.c.b16 %v2396, %v2390
        %v3003 = vpack.c.b16 %v2397, %v2391
        %v3004 = vpack.c.b16 %v2398, %v2392
        %v3005 = vpack.c.b16 %v2405, %v2399
        %v3006 = vpack.c.b16 %v2406, %v2400
        %v3007 = vpack.c.b16 %v2407, %v2401
        %v3008 = vpack.c.b16 %v2408, %v2402
        %v3009 = vpack.c.b16 %v2409, %v2403
        %v3010 = vpack.c.b16 %v2410, %v2404
        %v3011 = vpack.c.b16 %v2417, %v2411
        %v3012 = vpack.c.b16 %v2418, %v2412
        %v3013 = vpack.c.b16 %v2419, %v2413
        %v3014 = vpack.c.b16 %v2420, %v2414
        %v3015 = vpack.c.b16 %v2421, %v2415
        %v3016 = vpack.c.b16 %v2422, %v2416
        %v3017 = vpack.c.b16 %v2429, %v2423
        %v3018 = vpack.c.b16 %v2430, %v2424
        %v3019 = vpack.c.b16 %v2431, %v2425
        %v3020 = vpack.c.b16 %v2432, %v2426
        %v3021 = vpack.c.b16 %v2433, %v2427
        %v3022 = vpack.c.b16 %v2434, %v2428
        %v3023 = vpack.c.b16 %v2441, %v2435
        %v3024 = vpack.c.b16 %v2442, %v2436
        %v3025 = vpack.c.b16 %v2443, %v2437
        %v3026 = vpack.c.b16 %v2444, %v2438
        %v3027 = vpack.c.b16 %v2445, %v2439
        %v3028 = vpack.c.b16 %v2446, %v2440
        %v3029 = vpack.c.b16 %v2453, %v2447
        %v3030 = vpack.c.b16 %v2454, %v2448
        %v3031 = vpack.c.b16 %v2455, %v2449
        %v3032 = vpack.c.b16 %v2456, %v2450
        %v3033 = vpack.c.b16 %v2457, %v2451
        %v3034 = vpack.c.b16 %v2458, %v2452
        %v3035 = vpack.c.b16 %v2465, %v2459
        %v3036 = vpack.c.b16 %v2466, %v2460
        %v3037 = vpack.c.b16 %v2467, %v2461
        %v3038 = vpack.c.b16 %v2468, %v2462
        %v3039 = vpack.c.b16 %v2469, %v2463
        %v3040 = vpack.c.b16 %v2470, %v2464
        %v3041 = vpack.c.b16 %v2477, %v2471
        %v3042 = vpack.c.b16 %v2478, %v2472
        %v3043 = vpack.c.b16 %v2479, %v2473
        %v3044 = vpack.c.b16 %v2480, %v2474
        %v3045 = vpack.c.b16 %v2481, %v2475
        %v3046 = vpack.c.b16 %v2482, %v2476
        %v3047 = vpack.c.b16 %v2489, %v2483
        %v3048 = vpack.c.b16 %v2490, %v2484
        %v3049 = vpack.c.b16 %v2491, %v2485
        %v3050 = vpack.c.b16 %v2492, %v2486
        %v3051 = vpack.c.b16 %v2493, %v2487
        %v3052 = vpack.c.b16 %v2494, %v2488
        %v3053 = vpack.c.b16 %v2501, %v2495
        %v3054 = vpack.c.b16 %v2502, %v2496
        %v3055 = vpack.c.b16 %v2503, %v2497
        %v3056 = vpack.c.b16 %v2504, %v2498
        %v3057 = vpack.c.b16 %v2505, %v2499
        %v3058 = vpack.c.b16 %v2506, %v2500
        %v3059 = vpack.c.b16 %v2513, %v2507
        %v3060 = vpack.c.b16 %v2514, %v2508
        %v3061 = vpack.c.b16 %v2515, %v2509
        %v3062 = vpack.c.b16 %v2516, %v2510
        %v3063 = vpack.c.b16 %v2517, %v2511
        %v3064 = vpack.c.b16 %v2518, %v2512
        %v3065 = vpack.c.b16 %v2525, %v2519
        %v3066 = vpack.c.b16 %v2526, %v2520
        %v3067 = vpack.c.b16 %v2527, %v2521
        %v3068 = vpack.c.b16 %v2528, %v2522
        %v3069 = vpack.c.b16 %v2529, %v2523
        %v3070 = vpack.c.b16 %v2530, %v2524
        %v3071 = vpack.c.b16 %v2537, %v2531
        %v3072 = vpack.c.b16 %v2538, %v2532
        %v3073 = vpack.c.b16 %v2539, %v2533
        %v3074 = vpack.c.b16 %v2540, %v2534
        %v3075 = vpack.c.b16 %v2541, %v2535
        %v3076 = vpack.c.b16 %v2542, %v2536
        %v3077 = vpack.c.b16 %v2549, %v2543
        %v3078 = vpack.c.b16 %v2550, %v2544
        %v3079 = vpack.c.b16 %v2551, %v2545
        %v3080 = vpack.c.b16 %v2552, %v2546
        %v3081 = vpack.c.b16 %v2553, %v2547
        %v3082 = vpack.c.b16 %v2554, %v2548
        %v3083 = vpack.c.b16 %v2561, %v2555
        %v3084 = vpack.c.b16 %v2562, %v2556
        %v3085 = vpack.c.b16 %v2563, %v2557
        %v3086 = vpack.c.b16 %v2564, %v2558
        %v3087 = vpack.c.b16 %v2565, %v2559
        %v3088 = vpack.c.b16 %v2566, %v2560
        %v3089 = vpack.c.b16 %v2573, %v2567
        %v3090 = vpack.c.b16 %v2574, %v2568
        %v3091 = vpack.c.b16 %v2575, %v2569
        %v3092 = vpack.c.b16 %v2576, %v2570
        %v3093 = vpack.c.b16 %v2577, %v2571
        %v3094 = vpack.c.b16 %v2578, %v2572
        %v3095 = vpack.c.b16 %v2585, %v2579
        %v3096 = vpack.c.b16 %v2586, %v2580
        %v3097 = vpack.c.b16 %v2587, %v2581
        %v3098 = vpack.c.b16 %v2588, %v2582
        %v3099 = vpack.c.b16 %v2589, %v2583
        %v3100 = vpack.c.b16 %v2590, %v2584
        %v3101 = vpack.c.b16 %v2597, %v2591
        %v3102 = vpack.c.b16 %v2598, %v2592
        %v3103 = vpack.c.b16 %v2599, %v2593
        %v3104 = vpack.c.b16 %v2600, %v2594
        %v3105 = vpack.c.b16 %v2601, %v2595
        %v3106 = vpack.c.b16 %v2602, %v2596
        %v3107 = vpack.c.b16 %v2609, %v2603
        %v3108 = vpack.c.b16 %v2610, %v2604
        %v3109 = vpack.c.b16 %v2611, %v2605
        %v3110 = vpack.c.b16 %v2612, %v2606
        %v3111 = vpack.c.b16 %v2613, %v2607
        %v3112 = vpack.c.b16 %v2614, %v2608
        %v3113 = vpack.c.b16 %v2621, %v2615
        %v3114 = vpack.c.b16 %v2622, %v2616
        %v3115 = vpack.c.b16 %v2623, %v2617
        %v3116 = vpack.c.b16 %v2624, %v2618
        %v3117 = vpack.c.b16 %v2625, %v2619
        %v3118 = vpack.c.b16 %v2626, %v2620
        %v3119 = vpack.c.b16 %v2633, %v2627
        %v3120 = vpack.c.b16 %v2634, %v2628
        %v3121 = vpack.c.b16 %v2635, %v2629
        %v3122 = vpack.c.b16 %v2636, %v2630
        %v3123 = vpack.c.b16 %v2637, %v2631
        %v3124 = vpack.c.b16 %v2638, %v2632
        %v3125 = vpack.c.b16 %v2645, %v2639
        %v3126 = vpack.c.b16 %v2646, %v2640
        %v3127 = vpack.c.b16 %v2647, %v2641
        %v3128 = vpack.c.b16 %v2648, %v2642
        %v3129 = vpack.c.b16 %v2649, %v2643
        %v3130 = vpack.c.b16 %v2650, %v2644
        %3611 = vmatpush.bf16.msra.mxu0 %v2693
        %3612 = vmatpush.bf16.msra.mxu0 %v2687
        %3613 = vmatpush.bf16.msra.mxu0 %v2681
        %3614 = vmatpush.bf16.msra.mxu0 %v2675
        %3615 = vmatpush.bf16.msra.mxu0 %v2669
        %3616 = vmatpush.bf16.msra.mxu0 %v2663
        %3617 = vmatpush.bf16.msra.mxu0 %v2657
        %3618 = vmatpush.bf16.msra.mxu0 %v2651
        %3619 = vmatmul.bf16.gmra.mxu0 %v597
        %v3620 = vpop.f32.mrf.mxu0
        %v3621 = vadd.f32 0.0, %v3620
        %v3622 = vpop.f32.mrf.mxu0
        %v3623 = vadd.f32 0.0, %v3622
        %3624 = vmatmul.bf16.gmra.mxu0 %v607
        %v3625 = vpop.f32.mrf.mxu0
        %v3626 = vadd.f32 0.0, %v3625
        %v3627 = vpop.f32.mrf.mxu0
        %v3628 = vadd.f32 0.0, %v3627
        %3629 = vmatmul.bf16.gmra.mxu0 %v617
        %v3630 = vpop.f32.mrf.mxu0
        %v3631 = vadd.f32 0.0, %v3630
        %v3632 = vpop.f32.mrf.mxu0
        %v3633 = vadd.f32 0.0, %v3632
        %3634 = vdwg.mxu0
        %3635 = vmatpush.bf16.msra.mxu0 %v2741
        %3636 = vmatpush.bf16.msra.mxu0 %v2735
        %3637 = vmatpush.bf16.msra.mxu0 %v2729
        %3638 = vmatpush.bf16.msra.mxu0 %v2723
        %3639 = vmatpush.bf16.msra.mxu0 %v2717
        %3640 = vmatpush.bf16.msra.mxu0 %v2711
        %3641 = vmatpush.bf16.msra.mxu0 %v2705
        %3642 = vmatpush.bf16.msra.mxu0 %v2699
        %3643 = vmatmul.bf16.gmra.mxu0 %v598
        %v3644 = vpop.f32.mrf.mxu0
        %v3645 = vadd.f32 %v3621, %v3644
        %v3646 = vpop.f32.mrf.mxu0
        %v3647 = vadd.f32 %v3623, %v3646
        %3648 = vmatmul.bf16.gmra.mxu0 %v608
        %v3649 = vpop.f32.mrf.mxu0
        %v3650 = vadd.f32 %v3626, %v3649
        %v3651 = vpop.f32.mrf.mxu0
        %v3652 = vadd.f32 %v3628, %v3651
        %3653 = vmatmul.bf16.gmra.mxu0 %v618
        %v3654 = vpop.f32.mrf.mxu0
        %v3655 = vadd.f32 %v3631, %v3654
        %v3656 = vpop.f32.mrf.mxu0
        %v3657 = vadd.f32 %v3633, %v3656
        %3658 = vdwg.mxu0
        %3659 = vmatpush.bf16.msra.mxu0 %v2789
        %3660 = vmatpush.bf16.msra.mxu0 %v2783
        %3661 = vmatpush.bf16.msra.mxu0 %v2777
        %3662 = vmatpush.bf16.msra.mxu0 %v2771
        %3663 = vmatpush.bf16.msra.mxu0 %v2765
        %3664 = vmatpush.bf16.msra.mxu0 %v2759
        %3665 = vmatpush.bf16.msra.mxu0 %v2753
        %3666 = vmatpush.bf16.msra.mxu0 %v2747
        %3667 = vmatmul.bf16.gmra.mxu0 %v607
        %v3668 = vpop.f32.mrf.mxu0
        %v3669 = vadd.f32 %v3645, %v3668
        %v3670 = vpop.f32.mrf.mxu0
        %v3671 = vadd.f32 %v3647, %v3670
        %3672 = vmatmul.bf16.gmra.mxu0 %v617
        %v3673 = vpop.f32.mrf.mxu0
        %v3674 = vadd.f32 %v3650, %v3673
        %v3675 = vpop.f32.mrf.mxu0
        %v3676 = vadd.f32 %v3652, %v3675
        %3677 = vmatmul.bf16.gmra.mxu0 %v638
        %v3678 = vpop.f32.mrf.mxu0
        %v3679 = vadd.f32 %v3655, %v3678
        %v3680 = vpop.f32.mrf.mxu0
        %v3681 = vadd.f32 %v3657, %v3680
        %3682 = vdwg.mxu0
        %3683 = vmatpush.bf16.msra.mxu0 %v2837
        %3684 = vmatpush.bf16.msra.mxu0 %v2831
        %3685 = vmatpush.bf16.msra.mxu0 %v2825
        %3686 = vmatpush.bf16.msra.mxu0 %v2819
        %3687 = vmatpush.bf16.msra.mxu0 %v2813
        %3688 = vmatpush.bf16.msra.mxu0 %v2807
        %3689 = vmatpush.bf16.msra.mxu0 %v2801
        %3690 = vmatpush.bf16.msra.mxu0 %v2795
        %3691 = vmatmul.bf16.gmra.mxu0 %v608
        %v3692 = vpop.f32.mrf.mxu0
        %v3693 = vadd.f32 %v3669, %v3692
        %v3694 = vpop.f32.mrf.mxu0
        %v3695 = vadd.f32 %v3671, %v3694
        %3696 = vmatmul.bf16.gmra.mxu0 %v618
        %v3697 = vpop.f32.mrf.mxu0
        %v3698 = vadd.f32 %v3674, %v3697
        %v3699 = vpop.f32.mrf.mxu0
        %v3700 = vadd.f32 %v3676, %v3699
        %3701 = vmatmul.bf16.gmra.mxu0 %v650
        %v3702 = vpop.f32.mrf.mxu0
        %v3703 = vadd.f32 %v3679, %v3702
        %v3704 = vpop.f32.mrf.mxu0
        %v3705 = vadd.f32 %v3681, %v3704
        %3706 = vdwg.mxu0
        %3707 = vmatpush.bf16.msra.mxu0 %v2885
        %3708 = vmatpush.bf16.msra.mxu0 %v2879
        %3709 = vmatpush.bf16.msra.mxu0 %v2873
        %3710 = vmatpush.bf16.msra.mxu0 %v2867
        %3711 = vmatpush.bf16.msra.mxu0 %v2861
        %3712 = vmatpush.bf16.msra.mxu0 %v2855
        %3713 = vmatpush.bf16.msra.mxu0 %v2849
        %3714 = vmatpush.bf16.msra.mxu0 %v2843
        %3715 = vmatmul.bf16.gmra.mxu0 %v617
        %v3716 = vpop.f32.mrf.mxu0
        %v3717 = vadd.f32 %v3693, %v3716
        %v3718 = vpop.f32.mrf.mxu0
        %v3719 = vadd.f32 %v3695, %v3718
        %3720 = vmatmul.bf16.gmra.mxu0 %v638
        %v3721 = vpop.f32.mrf.mxu0
        %v3722 = vadd.f32 %v3698, %v3721
        %v3723 = vpop.f32.mrf.mxu0
        %v3724 = vadd.f32 %v3700, %v3723
        %3725 = vmatmul.bf16.gmra.mxu0 %v669
        %v3726 = vpop.f32.mrf.mxu0
        %v3727 = vadd.f32 %v3703, %v3726
        %v3728 = vpop.f32.mrf.mxu0
        %v3729 = vadd.f32 %v3705, %v3728
        %3730 = vdwg.mxu0
        %3731 = vmatpush.bf16.msra.mxu0 %v2933
        %3732 = vmatpush.bf16.msra.mxu0 %v2927
        %3733 = vmatpush.bf16.msra.mxu0 %v2921
        %3734 = vmatpush.bf16.msra.mxu0 %v2915
        %3735 = vmatpush.bf16.msra.mxu0 %v2909
        %3736 = vmatpush.bf16.msra.mxu0 %v2903
        %3737 = vmatpush.bf16.msra.mxu0 %v2897
        %3738 = vmatpush.bf16.msra.mxu0 %v2891
        %3739 = vmatmul.bf16.gmra.mxu0 %v618
        %v3740 = vpop.f32.mrf.mxu0
        %v3741 = vadd.f32 %v3717, %v3740
        %v3742 = vpop.f32.mrf.mxu0
        %v3743 = vadd.f32 %v3719, %v3742
        %3744 = vmatmul.bf16.gmra.mxu0 %v650
        %v3745 = vpop.f32.mrf.mxu0
        %v3746 = vadd.f32 %v3722, %v3745
        %v3747 = vpop.f32.mrf.mxu0
        %v3748 = vadd.f32 %v3724, %v3747
        %3749 = vmatmul.bf16.gmra.mxu0 %v681
        %v3750 = vpop.f32.mrf.mxu0
        %v3751 = vadd.f32 %v3727, %v3750
        %v3752 = vpop.f32.mrf.mxu0
        %v3753 = vadd.f32 %v3729, %v3752
        %3754 = vdwg.mxu0
        %3755 = vmatpush.bf16.msra.mxu0 %v2981
        %3756 = vmatpush.bf16.msra.mxu0 %v2975
        %3757 = vmatpush.bf16.msra.mxu0 %v2969
        %3758 = vmatpush.bf16.msra.mxu0 %v2963
        %3759 = vmatpush.bf16.msra.mxu0 %v2957
        %3760 = vmatpush.bf16.msra.mxu0 %v2951
        %3761 = vmatpush.bf16.msra.mxu0 %v2945
        %3762 = vmatpush.bf16.msra.mxu0 %v2939
        %3763 = vmatmul.bf16.gmra.mxu0 %v638
        %v3764 = vpop.f32.mrf.mxu0
        %v3765 = vadd.f32 %v3741, %v3764
        %v3766 = vpop.f32.mrf.mxu0
        %v3767 = vadd.f32 %v3743, %v3766
        %3768 = vmatmul.bf16.gmra.mxu0 %v669
        %v3769 = vpop.f32.mrf.mxu0
        %v3770 = vadd.f32 %v3746, %v3769
        %v3771 = vpop.f32.mrf.mxu0
        %v3772 = vadd.f32 %v3748, %v3771
        %3773 = vmatmul.bf16.gmra.mxu0 %v701
        %v3774 = vpop.f32.mrf.mxu0
        %v3775 = vadd.f32 %v3751, %v3774
        %v3776 = vpop.f32.mrf.mxu0
        %v3777 = vadd.f32 %v3753, %v3776
        %3778 = vdwg.mxu0
        %3779 = vmatpush.bf16.msra.mxu0 %v3029
        %3780 = vmatpush.bf16.msra.mxu0 %v3023
        %3781 = vmatpush.bf16.msra.mxu0 %v3017
        %3782 = vmatpush.bf16.msra.mxu0 %v3011
        %3783 = vmatpush.bf16.msra.mxu0 %v3005
        %3784 = vmatpush.bf16.msra.mxu0 %v2999
        %3785 = vmatpush.bf16.msra.mxu0 %v2993
        %3786 = vmatpush.bf16.msra.mxu0 %v2987
        %3787 = vmatmul.bf16.gmra.mxu0 %v650
        %v3788 = vpop.f32.mrf.mxu0
        %v3789 = vadd.f32 %v3765, %v3788
        %v3790 = vpop.f32.mrf.mxu0
        %v3791 = vadd.f32 %v3767, %v3790
        %3792 = vmatmul.bf16.gmra.mxu0 %v681
        %v3793 = vpop.f32.mrf.mxu0
        %v3794 = vadd.f32 %v3770, %v3793
        %v3795 = vpop.f32.mrf.mxu0
        %v3796 = vadd.f32 %v3772, %v3795
        %3797 = vmatmul.bf16.gmra.mxu0 %v713
        %v3798 = vpop.f32.mrf.mxu0
        %v3799 = vadd.f32 %v3775, %v3798
        %v3800 = vpop.f32.mrf.mxu0
        %v3801 = vadd.f32 %v3777, %v3800
        %3802 = vdwg.mxu0
        %3803 = vmatpush.bf16.msra.mxu0 %v3077
        %3804 = vmatpush.bf16.msra.mxu0 %v3071
        %3805 = vmatpush.bf16.msra.mxu0 %v3065
        %3806 = vmatpush.bf16.msra.mxu0 %v3059
        %3807 = vmatpush.bf16.msra.mxu0 %v3053
        %3808 = vmatpush.bf16.msra.mxu0 %v3047
        %3809 = vmatpush.bf16.msra.mxu0 %v3041
        %3810 = vmatpush.bf16.msra.mxu0 %v3035
        %3811 = vmatmul.bf16.gmra.mxu0 %v669
        %v3812 = vpop.f32.mrf.mxu0
        %v3813 = vadd.f32 %v3789, %v3812
        %v3814 = vpop.f32.mrf.mxu0
        %v3815 = vadd.f32 %v3791, %v3814
        %3816 = vmatmul.bf16.gmra.mxu0 %v701
        %v3817 = vpop.f32.mrf.mxu0
        %v3818 = vadd.f32 %v3794, %v3817
        %v3819 = vpop.f32.mrf.mxu0
        %v3820 = vadd.f32 %v3796, %v3819
        %3821 = vmatmul.bf16.gmra.mxu0 %v725
        %v3822 = vpop.f32.mrf.mxu0
        %v3823 = vadd.f32 %v3799, %v3822
        %v3824 = vpop.f32.mrf.mxu0
        %v3825 = vadd.f32 %v3801, %v3824
        %3826 = vdwg.mxu0
        %3827 = vmatpush.bf16.msra.mxu0 %v3125
        %3828 = vmatpush.bf16.msra.mxu0 %v3119
        %3829 = vmatpush.bf16.msra.mxu0 %v3113
        %3830 = vmatpush.bf16.msra.mxu0 %v3107
        %3831 = vmatpush.bf16.msra.mxu0 %v3101
        %3832 = vmatpush.bf16.msra.mxu0 %v3095
        %3833 = vmatpush.bf16.msra.mxu0 %v3089
        %3834 = vmatpush.bf16.msra.mxu0 %v3083
        %3835 = vmatmul.bf16.gmra.mxu0 %v681
        %v3836 = vpop.f32.mrf.mxu0
        %v3837 = vadd.f32 %v3813, %v3836
        %v3838 = vpop.f32.mrf.mxu0
        %v3839 = vadd.f32 %v3815, %v3838
        %3840 = vmatmul.bf16.gmra.mxu0 %v713
        %v3841 = vpop.f32.mrf.mxu0
        %v3842 = vadd.f32 %v3818, %v3841
        %v3843 = vpop.f32.mrf.mxu0
        %v3844 = vadd.f32 %v3820, %v3843
        %3845 = vmatmul.bf16.gmra.mxu0 %v728
        %v3846 = vpop.f32.mrf.mxu0
        %v3847 = vadd.f32 %v3823, %v3846
        %v3848 = vpop.f32.mrf.mxu0
        %v3849 = vadd.f32 %v3825, %v3848
        %3850 = vdwg.mxu0
        %3851 = vmatpush.bf16.msra.mxu0 %v2694
        %3852 = vmatpush.bf16.msra.mxu0 %v2688
        %3853 = vmatpush.bf16.msra.mxu0 %v2682
        %3854 = vmatpush.bf16.msra.mxu0 %v2676
        %3855 = vmatpush.bf16.msra.mxu0 %v2670
        %3856 = vmatpush.bf16.msra.mxu0 %v2664
        %3857 = vmatpush.bf16.msra.mxu0 %v2658
        %3858 = vmatpush.bf16.msra.mxu0 %v2652
        %3859 = vmatmul.bf16.gmra.mxu0 %v597
        %v3860 = vpop.f32.mrf.mxu0
        %v3861 = vadd.f32 0.0, %v3860
        %v3862 = vpop.f32.mrf.mxu0
        %v3863 = vadd.f32 0.0, %v3862
        %3864 = vmatmul.bf16.gmra.mxu0 %v607
        %v3865 = vpop.f32.mrf.mxu0
        %v3866 = vadd.f32 0.0, %v3865
        %v3867 = vpop.f32.mrf.mxu0
        %v3868 = vadd.f32 0.0, %v3867
        %3869 = vmatmul.bf16.gmra.mxu0 %v617
        %v3870 = vpop.f32.mrf.mxu0
        %v3871 = vadd.f32 0.0, %v3870
        %v3872 = vpop.f32.mrf.mxu0
        %v3873 = vadd.f32 0.0, %v3872
        %3874 = vdwg.mxu0
        %3875 = vmatpush.bf16.msra.mxu0 %v2742
        %3876 = vmatpush.bf16.msra.mxu0 %v2736
        %3877 = vmatpush.bf16.msra.mxu0 %v2730
        %3878 = vmatpush.bf16.msra.mxu0 %v2724
        %3879 = vmatpush.bf16.msra.mxu0 %v2718
        %3880 = vmatpush.bf16.msra.mxu0 %v2712
        %3881 = vmatpush.bf16.msra.mxu0 %v2706
        %3882 = vmatpush.bf16.msra.mxu0 %v2700
        %3883 = vmatmul.bf16.gmra.mxu0 %v598
        %v3884 = vpop.f32.mrf.mxu0
        %v3885 = vadd.f32 %v3861, %v3884
        %v3886 = vpop.f32.mrf.mxu0
        %v3887 = vadd.f32 %v3863, %v3886
        %3888 = vmatmul.bf16.gmra.mxu0 %v608
        %v3889 = vpop.f32.mrf.mxu0
        %v3890 = vadd.f32 %v3866, %v3889
        %v3891 = vpop.f32.mrf.mxu0
        %v3892 = vadd.f32 %v3868, %v3891
        %3893 = vmatmul.bf16.gmra.mxu0 %v618
        %v3894 = vpop.f32.mrf.mxu0
        %v3895 = vadd.f32 %v3871, %v3894
        %v3896 = vpop.f32.mrf.mxu0
        %v3897 = vadd.f32 %v3873, %v3896
        %3898 = vdwg.mxu0
        %3899 = vmatpush.bf16.msra.mxu0 %v2790
        %3900 = vmatpush.bf16.msra.mxu0 %v2784
        %3901 = vmatpush.bf16.msra.mxu0 %v2778
        %3902 = vmatpush.bf16.msra.mxu0 %v2772
        %3903 = vmatpush.bf16.msra.mxu0 %v2766
        %3904 = vmatpush.bf16.msra.mxu0 %v2760
        %3905 = vmatpush.bf16.msra.mxu0 %v2754
        %3906 = vmatpush.bf16.msra.mxu0 %v2748
        %3907 = vmatmul.bf16.gmra.mxu0 %v607
        %v3908 = vpop.f32.mrf.mxu0
        %v3909 = vadd.f32 %v3885, %v3908
        %v3910 = vpop.f32.mrf.mxu0
        %v3911 = vadd.f32 %v3887, %v3910
        %3912 = vmatmul.bf16.gmra.mxu0 %v617
        %v3913 = vpop.f32.mrf.mxu0
        %v3914 = vadd.f32 %v3890, %v3913
        %v3915 = vpop.f32.mrf.mxu0
        %v3916 = vadd.f32 %v3892, %v3915
        %3917 = vmatmul.bf16.gmra.mxu0 %v638
        %v3918 = vpop.f32.mrf.mxu0
        %v3919 = vadd.f32 %v3895, %v3918
        %v3920 = vpop.f32.mrf.mxu0
        %v3921 = vadd.f32 %v3897, %v3920
        %3922 = vdwg.mxu0
        %3923 = vmatpush.bf16.msra.mxu0 %v2838
        %3924 = vmatpush.bf16.msra.mxu0 %v2832
        %3925 = vmatpush.bf16.msra.mxu0 %v2826
        %3926 = vmatpush.bf16.msra.mxu0 %v2820
        %3927 = vmatpush.bf16.msra.mxu0 %v2814
        %3928 = vmatpush.bf16.msra.mxu0 %v2808
        %3929 = vmatpush.bf16.msra.mxu0 %v2802
        %3930 = vmatpush.bf16.msra.mxu0 %v2796
        %3931 = vmatmul.bf16.gmra.mxu0 %v608
        %v3932 = vpop.f32.mrf.mxu0
        %v3933 = vadd.f32 %v3909, %v3932
        %v3934 = vpop.f32.mrf.mxu0
        %v3935 = vadd.f32 %v3911, %v3934
        %3936 = vmatmul.bf16.gmra.mxu0 %v618
        %v3937 = vpop.f32.mrf.mxu0
        %v3938 = vadd.f32 %v3914, %v3937
        %v3939 = vpop.f32.mrf.mxu0
        %v3940 = vadd.f32 %v3916, %v3939
        %3941 = vmatmul.bf16.gmra.mxu0 %v650
        %v3942 = vpop.f32.mrf.mxu0
        %v3943 = vadd.f32 %v3919, %v3942
        %v3944 = vpop.f32.mrf.mxu0
        %v3945 = vadd.f32 %v3921, %v3944
        %3946 = vdwg.mxu0
        %3947 = vmatpush.bf16.msra.mxu0 %v2886
        %3948 = vmatpush.bf16.msra.mxu0 %v2880
        %3949 = vmatpush.bf16.msra.mxu0 %v2874
        %3950 = vmatpush.bf16.msra.mxu0 %v2868
        %3951 = vmatpush.bf16.msra.mxu0 %v2862
        %3952 = vmatpush.bf16.msra.mxu0 %v2856
        %3953 = vmatpush.bf16.msra.mxu0 %v2850
        %3954 = vmatpush.bf16.msra.mxu0 %v2844
        %3955 = vmatmul.bf16.gmra.mxu0 %v617
        %v3956 = vpop.f32.mrf.mxu0
        %v3957 = vadd.f32 %v3933, %v3956
        %v3958 = vpop.f32.mrf.mxu0
        %v3959 = vadd.f32 %v3935, %v3958
        %3960 = vmatmul.bf16.gmra.mxu0 %v638
        %v3961 = vpop.f32.mrf.mxu0
        %v3962 = vadd.f32 %v3938, %v3961
        %v3963 = vpop.f32.mrf.mxu0
        %v3964 = vadd.f32 %v3940, %v3963
        %3965 = vmatmul.bf16.gmra.mxu0 %v669
        %v3966 = vpop.f32.mrf.mxu0
        %v3967 = vadd.f32 %v3943, %v3966
        %v3968 = vpop.f32.mrf.mxu0
        %v3969 = vadd.f32 %v3945, %v3968
        %3970 = vdwg.mxu0
        %3971 = vmatpush.bf16.msra.mxu0 %v2934
        %3972 = vmatpush.bf16.msra.mxu0 %v2928
        %3973 = vmatpush.bf16.msra.mxu0 %v2922
        %3974 = vmatpush.bf16.msra.mxu0 %v2916
        %3975 = vmatpush.bf16.msra.mxu0 %v2910
        %3976 = vmatpush.bf16.msra.mxu0 %v2904
        %3977 = vmatpush.bf16.msra.mxu0 %v2898
        %3978 = vmatpush.bf16.msra.mxu0 %v2892
        %3979 = vmatmul.bf16.gmra.mxu0 %v618
        %v3980 = vpop.f32.mrf.mxu0
        %v3981 = vadd.f32 %v3957, %v3980
        %v3982 = vpop.f32.mrf.mxu0
        %v3983 = vadd.f32 %v3959, %v3982
        %3984 = vmatmul.bf16.gmra.mxu0 %v650
        %v3985 = vpop.f32.mrf.mxu0
        %v3986 = vadd.f32 %v3962, %v3985
        %v3987 = vpop.f32.mrf.mxu0
        %v3988 = vadd.f32 %v3964, %v3987
        %3989 = vmatmul.bf16.gmra.mxu0 %v681
        %v3990 = vpop.f32.mrf.mxu0
        %v3991 = vadd.f32 %v3967, %v3990
        %v3992 = vpop.f32.mrf.mxu0
        %v3993 = vadd.f32 %v3969, %v3992
        %3994 = vdwg.mxu0
        %3995 = vmatpush.bf16.msra.mxu0 %v2982
        %3996 = vmatpush.bf16.msra.mxu0 %v2976
        %3997 = vmatpush.bf16.msra.mxu0 %v2970
        %3998 = vmatpush.bf16.msra.mxu0 %v2964
        %3999 = vmatpush.bf16.msra.mxu0 %v2958
        %4000 = vmatpush.bf16.msra.mxu0 %v2952
        %4001 = vmatpush.bf16.msra.mxu0 %v2946
        %4002 = vmatpush.bf16.msra.mxu0 %v2940
        %4003 = vmatmul.bf16.gmra.mxu0 %v638
        %v4004 = vpop.f32.mrf.mxu0
        %v4005 = vadd.f32 %v3981, %v4004
        %v4006 = vpop.f32.mrf.mxu0
        %v4007 = vadd.f32 %v3983, %v4006
        %4008 = vmatmul.bf16.gmra.mxu0 %v669
        %v4009 = vpop.f32.mrf.mxu0
        %v4010 = vadd.f32 %v3986, %v4009
        %v4011 = vpop.f32.mrf.mxu0
        %v4012 = vadd.f32 %v3988, %v4011
        %4013 = vmatmul.bf16.gmra.mxu0 %v701
        %v4014 = vpop.f32.mrf.mxu0
        %v4015 = vadd.f32 %v3991, %v4014
        %v4016 = vpop.f32.mrf.mxu0
        %v4017 = vadd.f32 %v3993, %v4016
        %4018 = vdwg.mxu0
        %4019 = vmatpush.bf16.msra.mxu0 %v3030
        %4020 = vmatpush.bf16.msra.mxu0 %v3024
        %4021 = vmatpush.bf16.msra.mxu0 %v3018
        %4022 = vmatpush.bf16.msra.mxu0 %v3012
        %4023 = vmatpush.bf16.msra.mxu0 %v3006
        %4024 = vmatpush.bf16.msra.mxu0 %v3000
        %4025 = vmatpush.bf16.msra.mxu0 %v2994
        %4026 = vmatpush.bf16.msra.mxu0 %v2988
        %4027 = vmatmul.bf16.gmra.mxu0 %v650
        %v4028 = vpop.f32.mrf.mxu0
        %v4029 = vadd.f32 %v4005, %v4028
        %v4030 = vpop.f32.mrf.mxu0
        %v4031 = vadd.f32 %v4007, %v4030
        %4032 = vmatmul.bf16.gmra.mxu0 %v681
        %v4033 = vpop.f32.mrf.mxu0
        %v4034 = vadd.f32 %v4010, %v4033
        %v4035 = vpop.f32.mrf.mxu0
        %v4036 = vadd.f32 %v4012, %v4035
        %4037 = vmatmul.bf16.gmra.mxu0 %v713
        %v4038 = vpop.f32.mrf.mxu0
        %v4039 = vadd.f32 %v4015, %v4038
        %v4040 = vpop.f32.mrf.mxu0
        %v4041 = vadd.f32 %v4017, %v4040
        %4042 = vdwg.mxu0
        %4043 = vmatpush.bf16.msra.mxu0 %v3078
        %4044 = vmatpush.bf16.msra.mxu0 %v3072
        %4045 = vmatpush.bf16.msra.mxu0 %v3066
        %4046 = vmatpush.bf16.msra.mxu0 %v3060
        %4047 = vmatpush.bf16.msra.mxu0 %v3054
        %4048 = vmatpush.bf16.msra.mxu0 %v3048
        %4049 = vmatpush.bf16.msra.mxu0 %v3042
        %4050 = vmatpush.bf16.msra.mxu0 %v3036
        %4051 = vmatmul.bf16.gmra.mxu0 %v669
        %v4052 = vpop.f32.mrf.mxu0
        %v4053 = vadd.f32 %v4029, %v4052
        %v4054 = vpop.f32.mrf.mxu0
        %v4055 = vadd.f32 %v4031, %v4054
        %4056 = vmatmul.bf16.gmra.mxu0 %v701
        %v4057 = vpop.f32.mrf.mxu0
        %v4058 = vadd.f32 %v4034, %v4057
        %v4059 = vpop.f32.mrf.mxu0
        %v4060 = vadd.f32 %v4036, %v4059
        %4061 = vmatmul.bf16.gmra.mxu0 %v725
        %v4062 = vpop.f32.mrf.mxu0
        %v4063 = vadd.f32 %v4039, %v4062
        %v4064 = vpop.f32.mrf.mxu0
        %v4065 = vadd.f32 %v4041, %v4064
        %4066 = vdwg.mxu0
        %4067 = vmatpush.bf16.msra.mxu0 %v3126
        %4068 = vmatpush.bf16.msra.mxu0 %v3120
        %4069 = vmatpush.bf16.msra.mxu0 %v3114
        %4070 = vmatpush.bf16.msra.mxu0 %v3108
        %4071 = vmatpush.bf16.msra.mxu0 %v3102
        %4072 = vmatpush.bf16.msra.mxu0 %v3096
        %4073 = vmatpush.bf16.msra.mxu0 %v3090
        %4074 = vmatpush.bf16.msra.mxu0 %v3084
        %4075 = vmatmul.bf16.gmra.mxu0 %v681
        %v4076 = vpop.f32.mrf.mxu0
        %v4077 = vadd.f32 %v4053, %v4076
        %v4078 = vpop.f32.mrf.mxu0
        %v4079 = vadd.f32 %v4055, %v4078
        %4080 = vmatmul.bf16.gmra.mxu0 %v713
        %v4081 = vpop.f32.mrf.mxu0
        %v4082 = vadd.f32 %v4058, %v4081
        %v4083 = vpop.f32.mrf.mxu0
        %v4084 = vadd.f32 %v4060, %v4083
        %4085 = vmatmul.bf16.gmra.mxu0 %v728
        %v4086 = vpop.f32.mrf.mxu0
        %v4087 = vadd.f32 %v4063, %v4086
        %v4088 = vpop.f32.mrf.mxu0
        %v4089 = vadd.f32 %v4065, %v4088
        %4090 = vdwg.mxu0
        %4091 = vmatpush.bf16.msra.mxu0 %v2695
        %4092 = vmatpush.bf16.msra.mxu0 %v2689
        %4093 = vmatpush.bf16.msra.mxu0 %v2683
        %4094 = vmatpush.bf16.msra.mxu0 %v2677
        %4095 = vmatpush.bf16.msra.mxu0 %v2671
        %4096 = vmatpush.bf16.msra.mxu0 %v2665
        %4097 = vmatpush.bf16.msra.mxu0 %v2659
        %4098 = vmatpush.bf16.msra.mxu0 %v2653
        %4099 = vmatmul.bf16.gmra.mxu0 %v597
        %v4100 = vpop.f32.mrf.mxu0
        %v4101 = vadd.f32 0.0, %v4100
        %v4102 = vpop.f32.mrf.mxu0
        %v4103 = vadd.f32 0.0, %v4102
        %4104 = vmatmul.bf16.gmra.mxu0 %v607
        %v4105 = vpop.f32.mrf.mxu0
        %v4106 = vadd.f32 0.0, %v4105
        %v4107 = vpop.f32.mrf.mxu0
        %v4108 = vadd.f32 0.0, %v4107
        %4109 = vmatmul.bf16.gmra.mxu0 %v617
        %v4110 = vpop.f32.mrf.mxu0
        %v4111 = vadd.f32 0.0, %v4110
        %v4112 = vpop.f32.mrf.mxu0
        %v4113 = vadd.f32 0.0, %v4112
        %4114 = vdwg.mxu0
        %4115 = vmatpush.bf16.msra.mxu0 %v2743
        %4116 = vmatpush.bf16.msra.mxu0 %v2737
        %4117 = vmatpush.bf16.msra.mxu0 %v2731
        %4118 = vmatpush.bf16.msra.mxu0 %v2725
        %4119 = vmatpush.bf16.msra.mxu0 %v2719
        %4120 = vmatpush.bf16.msra.mxu0 %v2713
        %4121 = vmatpush.bf16.msra.mxu0 %v2707
        %4122 = vmatpush.bf16.msra.mxu0 %v2701
        %4123 = vmatmul.bf16.gmra.mxu0 %v598
        %v4124 = vpop.f32.mrf.mxu0
        %v4125 = vadd.f32 %v4101, %v4124
        %v4126 = vpop.f32.mrf.mxu0
        %v4127 = vadd.f32 %v4103, %v4126
        %4128 = vmatmul.bf16.gmra.mxu0 %v608
        %v4129 = vpop.f32.mrf.mxu0
        %v4130 = vadd.f32 %v4106, %v4129
        %v4131 = vpop.f32.mrf.mxu0
        %v4132 = vadd.f32 %v4108, %v4131
        %4133 = vmatmul.bf16.gmra.mxu0 %v618
        %v4134 = vpop.f32.mrf.mxu0
        %v4135 = vadd.f32 %v4111, %v4134
        %v4136 = vpop.f32.mrf.mxu0
        %v4137 = vadd.f32 %v4113, %v4136
        %4138 = vdwg.mxu0
        %4139 = vmatpush.bf16.msra.mxu0 %v2791
        %4140 = vmatpush.bf16.msra.mxu0 %v2785
        %4141 = vmatpush.bf16.msra.mxu0 %v2779
        %4142 = vmatpush.bf16.msra.mxu0 %v2773
        %4143 = vmatpush.bf16.msra.mxu0 %v2767
        %4144 = vmatpush.bf16.msra.mxu0 %v2761
        %4145 = vmatpush.bf16.msra.mxu0 %v2755
        %4146 = vmatpush.bf16.msra.mxu0 %v2749
        %4147 = vmatmul.bf16.gmra.mxu0 %v607
        %v4148 = vpop.f32.mrf.mxu0
        %v4149 = vadd.f32 %v4125, %v4148
        %v4150 = vpop.f32.mrf.mxu0
        %v4151 = vadd.f32 %v4127, %v4150
        %4152 = vmatmul.bf16.gmra.mxu0 %v617
        %v4153 = vpop.f32.mrf.mxu0
        %v4154 = vadd.f32 %v4130, %v4153
        %v4155 = vpop.f32.mrf.mxu0
        %v4156 = vadd.f32 %v4132, %v4155
        %4157 = vmatmul.bf16.gmra.mxu0 %v638
        %v4158 = vpop.f32.mrf.mxu0
        %v4159 = vadd.f32 %v4135, %v4158
        %v4160 = vpop.f32.mrf.mxu0
        %v4161 = vadd.f32 %v4137, %v4160
        %4162 = vdwg.mxu0
        %4163 = vmatpush.bf16.msra.mxu0 %v2839
        %4164 = vmatpush.bf16.msra.mxu0 %v2833
        %4165 = vmatpush.bf16.msra.mxu0 %v2827
        %4166 = vmatpush.bf16.msra.mxu0 %v2821
        %4167 = vmatpush.bf16.msra.mxu0 %v2815
        %4168 = vmatpush.bf16.msra.mxu0 %v2809
        %4169 = vmatpush.bf16.msra.mxu0 %v2803
        %4170 = vmatpush.bf16.msra.mxu0 %v2797
        %4171 = vmatmul.bf16.gmra.mxu0 %v608
        %v4172 = vpop.f32.mrf.mxu0
        %v4173 = vadd.f32 %v4149, %v4172
        %v4174 = vpop.f32.mrf.mxu0
        %v4175 = vadd.f32 %v4151, %v4174
        %4176 = vmatmul.bf16.gmra.mxu0 %v618
        %v4177 = vpop.f32.mrf.mxu0
        %v4178 = vadd.f32 %v4154, %v4177
        %v4179 = vpop.f32.mrf.mxu0
        %v4180 = vadd.f32 %v4156, %v4179
        %4181 = vmatmul.bf16.gmra.mxu0 %v650
        %v4182 = vpop.f32.mrf.mxu0
        %v4183 = vadd.f32 %v4159, %v4182
        %v4184 = vpop.f32.mrf.mxu0
        %v4185 = vadd.f32 %v4161, %v4184
        %4186 = vdwg.mxu0
        %4187 = vmatpush.bf16.msra.mxu0 %v2887
        %4188 = vmatpush.bf16.msra.mxu0 %v2881
        %4189 = vmatpush.bf16.msra.mxu0 %v2875
        %4190 = vmatpush.bf16.msra.mxu0 %v2869
        %4191 = vmatpush.bf16.msra.mxu0 %v2863
        %4192 = vmatpush.bf16.msra.mxu0 %v2857
        %4193 = vmatpush.bf16.msra.mxu0 %v2851
        %4194 = vmatpush.bf16.msra.mxu0 %v2845
        %4195 = vmatmul.bf16.gmra.mxu0 %v617
        %v4196 = vpop.f32.mrf.mxu0
        %v4197 = vadd.f32 %v4173, %v4196
        %v4198 = vpop.f32.mrf.mxu0
        %v4199 = vadd.f32 %v4175, %v4198
        %4200 = vmatmul.bf16.gmra.mxu0 %v638
        %v4201 = vpop.f32.mrf.mxu0
        %v4202 = vadd.f32 %v4178, %v4201
        %v4203 = vpop.f32.mrf.mxu0
        %v4204 = vadd.f32 %v4180, %v4203
        %4205 = vmatmul.bf16.gmra.mxu0 %v669
        %v4206 = vpop.f32.mrf.mxu0
        %v4207 = vadd.f32 %v4183, %v4206
        %v4208 = vpop.f32.mrf.mxu0
        %v4209 = vadd.f32 %v4185, %v4208
        %4210 = vdwg.mxu0
        %4211 = vmatpush.bf16.msra.mxu0 %v2935
        %4212 = vmatpush.bf16.msra.mxu0 %v2929
        %4213 = vmatpush.bf16.msra.mxu0 %v2923
        %4214 = vmatpush.bf16.msra.mxu0 %v2917
        %4215 = vmatpush.bf16.msra.mxu0 %v2911
        %4216 = vmatpush.bf16.msra.mxu0 %v2905
        %4217 = vmatpush.bf16.msra.mxu0 %v2899
        %4218 = vmatpush.bf16.msra.mxu0 %v2893
        %4219 = vmatmul.bf16.gmra.mxu0 %v618
        %v4220 = vpop.f32.mrf.mxu0
        %v4221 = vadd.f32 %v4197, %v4220
        %v4222 = vpop.f32.mrf.mxu0
        %v4223 = vadd.f32 %v4199, %v4222
        %4224 = vmatmul.bf16.gmra.mxu0 %v650
        %v4225 = vpop.f32.mrf.mxu0
        %v4226 = vadd.f32 %v4202, %v4225
        %v4227 = vpop.f32.mrf.mxu0
        %v4228 = vadd.f32 %v4204, %v4227
        %4229 = vmatmul.bf16.gmra.mxu0 %v681
        %v4230 = vpop.f32.mrf.mxu0
        %v4231 = vadd.f32 %v4207, %v4230
        %v4232 = vpop.f32.mrf.mxu0
        %v4233 = vadd.f32 %v4209, %v4232
        %4234 = vdwg.mxu0
        %4235 = vmatpush.bf16.msra.mxu0 %v2983
        %4236 = vmatpush.bf16.msra.mxu0 %v2977
        %4237 = vmatpush.bf16.msra.mxu0 %v2971
        %4238 = vmatpush.bf16.msra.mxu0 %v2965
        %4239 = vmatpush.bf16.msra.mxu0 %v2959
        %4240 = vmatpush.bf16.msra.mxu0 %v2953
        %4241 = vmatpush.bf16.msra.mxu0 %v2947
        %4242 = vmatpush.bf16.msra.mxu0 %v2941
        %4243 = vmatmul.bf16.gmra.mxu0 %v638
        %v4244 = vpop.f32.mrf.mxu0
        %v4245 = vadd.f32 %v4221, %v4244
        %v4246 = vpop.f32.mrf.mxu0
        %v4247 = vadd.f32 %v4223, %v4246
        %4248 = vmatmul.bf16.gmra.mxu0 %v669
        %v4249 = vpop.f32.mrf.mxu0
        %v4250 = vadd.f32 %v4226, %v4249
        %v4251 = vpop.f32.mrf.mxu0
        %v4252 = vadd.f32 %v4228, %v4251
        %4253 = vmatmul.bf16.gmra.mxu0 %v701
        %v4254 = vpop.f32.mrf.mxu0
        %v4255 = vadd.f32 %v4231, %v4254
        %v4256 = vpop.f32.mrf.mxu0
        %v4257 = vadd.f32 %v4233, %v4256
        %4258 = vdwg.mxu0
        %4259 = vmatpush.bf16.msra.mxu0 %v3031
        %4260 = vmatpush.bf16.msra.mxu0 %v3025
        %4261 = vmatpush.bf16.msra.mxu0 %v3019
        %4262 = vmatpush.bf16.msra.mxu0 %v3013
        %4263 = vmatpush.bf16.msra.mxu0 %v3007
        %4264 = vmatpush.bf16.msra.mxu0 %v3001
        %4265 = vmatpush.bf16.msra.mxu0 %v2995
        %4266 = vmatpush.bf16.msra.mxu0 %v2989
        %4267 = vmatmul.bf16.gmra.mxu0 %v650
        %v4268 = vpop.f32.mrf.mxu0
        %v4269 = vadd.f32 %v4245, %v4268
        %v4270 = vpop.f32.mrf.mxu0
        %v4271 = vadd.f32 %v4247, %v4270
        %4272 = vmatmul.bf16.gmra.mxu0 %v681
        %v4273 = vpop.f32.mrf.mxu0
        %v4274 = vadd.f32 %v4250, %v4273
        %v4275 = vpop.f32.mrf.mxu0
        %v4276 = vadd.f32 %v4252, %v4275
        %4277 = vmatmul.bf16.gmra.mxu0 %v713
        %v4278 = vpop.f32.mrf.mxu0
        %v4279 = vadd.f32 %v4255, %v4278
        %v4280 = vpop.f32.mrf.mxu0
        %v4281 = vadd.f32 %v4257, %v4280
        %4282 = vdwg.mxu0
        %4283 = vmatpush.bf16.msra.mxu0 %v3079
        %4284 = vmatpush.bf16.msra.mxu0 %v3073
        %4285 = vmatpush.bf16.msra.mxu0 %v3067
        %4286 = vmatpush.bf16.msra.mxu0 %v3061
        %4287 = vmatpush.bf16.msra.mxu0 %v3055
        %4288 = vmatpush.bf16.msra.mxu0 %v3049
        %4289 = vmatpush.bf16.msra.mxu0 %v3043
        %4290 = vmatpush.bf16.msra.mxu0 %v3037
        %4291 = vmatmul.bf16.gmra.mxu0 %v669
        %v4292 = vpop.f32.mrf.mxu0
        %v4293 = vadd.f32 %v4269, %v4292
        %v4294 = vpop.f32.mrf.mxu0
        %v4295 = vadd.f32 %v4271, %v4294
        %4296 = vmatmul.bf16.gmra.mxu0 %v701
        %v4297 = vpop.f32.mrf.mxu0
        %v4298 = vadd.f32 %v4274, %v4297
        %v4299 = vpop.f32.mrf.mxu0
        %v4300 = vadd.f32 %v4276, %v4299
        %4301 = vmatmul.bf16.gmra.mxu0 %v725
        %v4302 = vpop.f32.mrf.mxu0
        %v4303 = vadd.f32 %v4279, %v4302
        %v4304 = vpop.f32.mrf.mxu0
        %v4305 = vadd.f32 %v4281, %v4304
        %4306 = vdwg.mxu0
        %4307 = vmatpush.bf16.msra.mxu0 %v3127
        %4308 = vmatpush.bf16.msra.mxu0 %v3121
        %4309 = vmatpush.bf16.msra.mxu0 %v3115
        %4310 = vmatpush.bf16.msra.mxu0 %v3109
        %4311 = vmatpush.bf16.msra.mxu0 %v3103
        %4312 = vmatpush.bf16.msra.mxu0 %v3097
        %4313 = vmatpush.bf16.msra.mxu0 %v3091
        %4314 = vmatpush.bf16.msra.mxu0 %v3085
        %4315 = vmatmul.bf16.gmra.mxu0 %v681
        %v4316 = vpop.f32.mrf.mxu0
        %v4317 = vadd.f32 %v4293, %v4316
        %v4318 = vpop.f32.mrf.mxu0
        %v4319 = vadd.f32 %v4295, %v4318
        %4320 = vmatmul.bf16.gmra.mxu0 %v713
        %v4321 = vpop.f32.mrf.mxu0
        %v4322 = vadd.f32 %v4298, %v4321
        %v4323 = vpop.f32.mrf.mxu0
        %v4324 = vadd.f32 %v4300, %v4323
        %4325 = vmatmul.bf16.gmra.mxu0 %v728
        %v4326 = vpop.f32.mrf.mxu0
        %v4327 = vadd.f32 %v4303, %v4326
        %v4328 = vpop.f32.mrf.mxu0
        %v4329 = vadd.f32 %v4305, %v4328
        %4330 = vdwg.mxu0
        %4331 = vmatpush.bf16.msra.mxu0 %v2696
        %4332 = vmatpush.bf16.msra.mxu0 %v2690
        %4333 = vmatpush.bf16.msra.mxu0 %v2684
        %4334 = vmatpush.bf16.msra.mxu0 %v2678
        %4335 = vmatpush.bf16.msra.mxu0 %v2672
        %4336 = vmatpush.bf16.msra.mxu0 %v2666
        %4337 = vmatpush.bf16.msra.mxu0 %v2660
        %4338 = vmatpush.bf16.msra.mxu0 %v2654
        %4339 = vmatmul.bf16.gmra.mxu0 %v597
        %v4340 = vpop.f32.mrf.mxu0
        %v4341 = vadd.f32 0.0, %v4340
        %v4342 = vpop.f32.mrf.mxu0
        %v4343 = vadd.f32 0.0, %v4342
        %4344 = vmatmul.bf16.gmra.mxu0 %v607
        %v4345 = vpop.f32.mrf.mxu0
        %v4346 = vadd.f32 0.0, %v4345
        %v4347 = vpop.f32.mrf.mxu0
        %v4348 = vadd.f32 0.0, %v4347
        %4349 = vmatmul.bf16.gmra.mxu0 %v617
        %v4350 = vpop.f32.mrf.mxu0
        %v4351 = vadd.f32 0.0, %v4350
        %v4352 = vpop.f32.mrf.mxu0
        %v4353 = vadd.f32 0.0, %v4352
        %4354 = vdwg.mxu0
        %4355 = vmatpush.bf16.msra.mxu0 %v2744
        %4356 = vmatpush.bf16.msra.mxu0 %v2738
        %4357 = vmatpush.bf16.msra.mxu0 %v2732
        %4358 = vmatpush.bf16.msra.mxu0 %v2726
        %4359 = vmatpush.bf16.msra.mxu0 %v2720
        %4360 = vmatpush.bf16.msra.mxu0 %v2714
        %4361 = vmatpush.bf16.msra.mxu0 %v2708
        %4362 = vmatpush.bf16.msra.mxu0 %v2702
        %4363 = vmatmul.bf16.gmra.mxu0 %v598
        %v4364 = vpop.f32.mrf.mxu0
        %v4365 = vadd.f32 %v4341, %v4364
        %v4366 = vpop.f32.mrf.mxu0
        %v4367 = vadd.f32 %v4343, %v4366
        %4368 = vmatmul.bf16.gmra.mxu0 %v608
        %v4369 = vpop.f32.mrf.mxu0
        %v4370 = vadd.f32 %v4346, %v4369
        %v4371 = vpop.f32.mrf.mxu0
        %v4372 = vadd.f32 %v4348, %v4371
        %4373 = vmatmul.bf16.gmra.mxu0 %v618
        %v4374 = vpop.f32.mrf.mxu0
        %v4375 = vadd.f32 %v4351, %v4374
        %v4376 = vpop.f32.mrf.mxu0
        %v4377 = vadd.f32 %v4353, %v4376
        %4378 = vdwg.mxu0
        %4379 = vmatpush.bf16.msra.mxu0 %v2792
        %4380 = vmatpush.bf16.msra.mxu0 %v2786
        %4381 = vmatpush.bf16.msra.mxu0 %v2780
        %4382 = vmatpush.bf16.msra.mxu0 %v2774
        %4383 = vmatpush.bf16.msra.mxu0 %v2768
        %4384 = vmatpush.bf16.msra.mxu0 %v2762
        %4385 = vmatpush.bf16.msra.mxu0 %v2756
        %4386 = vmatpush.bf16.msra.mxu0 %v2750
        %4387 = vmatmul.bf16.gmra.mxu0 %v607
        %v4388 = vpop.f32.mrf.mxu0
        %v4389 = vadd.f32 %v4365, %v4388
        %v4390 = vpop.f32.mrf.mxu0
        %v4391 = vadd.f32 %v4367, %v4390
        %4392 = vmatmul.bf16.gmra.mxu0 %v617
        %v4393 = vpop.f32.mrf.mxu0
        %v4394 = vadd.f32 %v4370, %v4393
        %v4395 = vpop.f32.mrf.mxu0
        %v4396 = vadd.f32 %v4372, %v4395
        %4397 = vmatmul.bf16.gmra.mxu0 %v638
        %v4398 = vpop.f32.mrf.mxu0
        %v4399 = vadd.f32 %v4375, %v4398
        %v4400 = vpop.f32.mrf.mxu0
        %v4401 = vadd.f32 %v4377, %v4400
        %4402 = vdwg.mxu0
        %4403 = vmatpush.bf16.msra.mxu0 %v2840
        %4404 = vmatpush.bf16.msra.mxu0 %v2834
        %4405 = vmatpush.bf16.msra.mxu0 %v2828
        %4406 = vmatpush.bf16.msra.mxu0 %v2822
        %4407 = vmatpush.bf16.msra.mxu0 %v2816
        %4408 = vmatpush.bf16.msra.mxu0 %v2810
        %4409 = vmatpush.bf16.msra.mxu0 %v2804
        %4410 = vmatpush.bf16.msra.mxu0 %v2798
        %4411 = vmatmul.bf16.gmra.mxu0 %v608
        %v4412 = vpop.f32.mrf.mxu0
        %v4413 = vadd.f32 %v4389, %v4412
        %v4414 = vpop.f32.mrf.mxu0
        %v4415 = vadd.f32 %v4391, %v4414
        %4416 = vmatmul.bf16.gmra.mxu0 %v618
        %v4417 = vpop.f32.mrf.mxu0
        %v4418 = vadd.f32 %v4394, %v4417
        %v4419 = vpop.f32.mrf.mxu0
        %v4420 = vadd.f32 %v4396, %v4419
        %4421 = vmatmul.bf16.gmra.mxu0 %v650
        %v4422 = vpop.f32.mrf.mxu0
        %v4423 = vadd.f32 %v4399, %v4422
        %v4424 = vpop.f32.mrf.mxu0
        %v4425 = vadd.f32 %v4401, %v4424
        %4426 = vdwg.mxu0
        %4427 = vmatpush.bf16.msra.mxu0 %v2888
        %4428 = vmatpush.bf16.msra.mxu0 %v2882
        %4429 = vmatpush.bf16.msra.mxu0 %v2876
        %4430 = vmatpush.bf16.msra.mxu0 %v2870
        %4431 = vmatpush.bf16.msra.mxu0 %v2864
        %4432 = vmatpush.bf16.msra.mxu0 %v2858
        %4433 = vmatpush.bf16.msra.mxu0 %v2852
        %4434 = vmatpush.bf16.msra.mxu0 %v2846
        %4435 = vmatmul.bf16.gmra.mxu0 %v617
        %v4436 = vpop.f32.mrf.mxu0
        %v4437 = vadd.f32 %v4413, %v4436
        %v4438 = vpop.f32.mrf.mxu0
        %v4439 = vadd.f32 %v4415, %v4438
        %4440 = vmatmul.bf16.gmra.mxu0 %v638
        %v4441 = vpop.f32.mrf.mxu0
        %v4442 = vadd.f32 %v4418, %v4441
        %v4443 = vpop.f32.mrf.mxu0
        %v4444 = vadd.f32 %v4420, %v4443
        %4445 = vmatmul.bf16.gmra.mxu0 %v669
        %v4446 = vpop.f32.mrf.mxu0
        %v4447 = vadd.f32 %v4423, %v4446
        %v4448 = vpop.f32.mrf.mxu0
        %v4449 = vadd.f32 %v4425, %v4448
        %4450 = vdwg.mxu0
        %4451 = vmatpush.bf16.msra.mxu0 %v2936
        %4452 = vmatpush.bf16.msra.mxu0 %v2930
        %4453 = vmatpush.bf16.msra.mxu0 %v2924
        %4454 = vmatpush.bf16.msra.mxu0 %v2918
        %4455 = vmatpush.bf16.msra.mxu0 %v2912
        %4456 = vmatpush.bf16.msra.mxu0 %v2906
        %4457 = vmatpush.bf16.msra.mxu0 %v2900
        %4458 = vmatpush.bf16.msra.mxu0 %v2894
        %4459 = vmatmul.bf16.gmra.mxu0 %v618
        %v4460 = vpop.f32.mrf.mxu0
        %v4461 = vadd.f32 %v4437, %v4460
        %v4462 = vpop.f32.mrf.mxu0
        %v4463 = vadd.f32 %v4439, %v4462
        %4464 = vmatmul.bf16.gmra.mxu0 %v650
        %v4465 = vpop.f32.mrf.mxu0
        %v4466 = vadd.f32 %v4442, %v4465
        %v4467 = vpop.f32.mrf.mxu0
        %v4468 = vadd.f32 %v4444, %v4467
        %4469 = vmatmul.bf16.gmra.mxu0 %v681
        %v4470 = vpop.f32.mrf.mxu0
        %v4471 = vadd.f32 %v4447, %v4470
        %v4472 = vpop.f32.mrf.mxu0
        %v4473 = vadd.f32 %v4449, %v4472
        %4474 = vdwg.mxu0
        %4475 = vmatpush.bf16.msra.mxu0 %v2984
        %4476 = vmatpush.bf16.msra.mxu0 %v2978
        %4477 = vmatpush.bf16.msra.mxu0 %v2972
        %4478 = vmatpush.bf16.msra.mxu0 %v2966
        %4479 = vmatpush.bf16.msra.mxu0 %v2960
        %4480 = vmatpush.bf16.msra.mxu0 %v2954
        %4481 = vmatpush.bf16.msra.mxu0 %v2948
        %4482 = vmatpush.bf16.msra.mxu0 %v2942
        %4483 = vmatmul.bf16.gmra.mxu0 %v638
        %v4484 = vpop.f32.mrf.mxu0
        %v4485 = vadd.f32 %v4461, %v4484
        %v4486 = vpop.f32.mrf.mxu0
        %v4487 = vadd.f32 %v4463, %v4486
        %4488 = vmatmul.bf16.gmra.mxu0 %v669
        %v4489 = vpop.f32.mrf.mxu0
        %v4490 = vadd.f32 %v4466, %v4489
        %v4491 = vpop.f32.mrf.mxu0
        %v4492 = vadd.f32 %v4468, %v4491
        %4493 = vmatmul.bf16.gmra.mxu0 %v701
        %v4494 = vpop.f32.mrf.mxu0
        %v4495 = vadd.f32 %v4471, %v4494
        %v4496 = vpop.f32.mrf.mxu0
        %v4497 = vadd.f32 %v4473, %v4496
        %4498 = vdwg.mxu0
        %4499 = vmatpush.bf16.msra.mxu0 %v3032
        %4500 = vmatpush.bf16.msra.mxu0 %v3026
        %4501 = vmatpush.bf16.msra.mxu0 %v3020
        %4502 = vmatpush.bf16.msra.mxu0 %v3014
        %4503 = vmatpush.bf16.msra.mxu0 %v3008
        %4504 = vmatpush.bf16.msra.mxu0 %v3002
        %4505 = vmatpush.bf16.msra.mxu0 %v2996
        %4506 = vmatpush.bf16.msra.mxu0 %v2990
        %4507 = vmatmul.bf16.gmra.mxu0 %v650
        %v4508 = vpop.f32.mrf.mxu0
        %v4509 = vadd.f32 %v4485, %v4508
        %v4510 = vpop.f32.mrf.mxu0
        %v4511 = vadd.f32 %v4487, %v4510
        %4512 = vmatmul.bf16.gmra.mxu0 %v681
        %v4513 = vpop.f32.mrf.mxu0
        %v4514 = vadd.f32 %v4490, %v4513
        %v4515 = vpop.f32.mrf.mxu0
        %v4516 = vadd.f32 %v4492, %v4515
        %4517 = vmatmul.bf16.gmra.mxu0 %v713
        %v4518 = vpop.f32.mrf.mxu0
        %v4519 = vadd.f32 %v4495, %v4518
        %v4520 = vpop.f32.mrf.mxu0
        %v4521 = vadd.f32 %v4497, %v4520
        %4522 = vdwg.mxu0
        %4523 = vmatpush.bf16.msra.mxu0 %v3080
        %4524 = vmatpush.bf16.msra.mxu0 %v3074
        %4525 = vmatpush.bf16.msra.mxu0 %v3068
        %4526 = vmatpush.bf16.msra.mxu0 %v3062
        %4527 = vmatpush.bf16.msra.mxu0 %v3056
        %4528 = vmatpush.bf16.msra.mxu0 %v3050
        %4529 = vmatpush.bf16.msra.mxu0 %v3044
        %4530 = vmatpush.bf16.msra.mxu0 %v3038
        %4531 = vmatmul.bf16.gmra.mxu0 %v669
        %v4532 = vpop.f32.mrf.mxu0
        %v4533 = vadd.f32 %v4509, %v4532
        %v4534 = vpop.f32.mrf.mxu0
        %v4535 = vadd.f32 %v4511, %v4534
        %4536 = vmatmul.bf16.gmra.mxu0 %v701
        %v4537 = vpop.f32.mrf.mxu0
        %v4538 = vadd.f32 %v4514, %v4537
        %v4539 = vpop.f32.mrf.mxu0
        %v4540 = vadd.f32 %v4516, %v4539
        %4541 = vmatmul.bf16.gmra.mxu0 %v725
        %v4542 = vpop.f32.mrf.mxu0
        %v4543 = vadd.f32 %v4519, %v4542
        %v4544 = vpop.f32.mrf.mxu0
        %v4545 = vadd.f32 %v4521, %v4544
        %4546 = vdwg.mxu0
        %4547 = vmatpush.bf16.msra.mxu0 %v3128
        %4548 = vmatpush.bf16.msra.mxu0 %v3122
        %4549 = vmatpush.bf16.msra.mxu0 %v3116
        %4550 = vmatpush.bf16.msra.mxu0 %v3110
        %4551 = vmatpush.bf16.msra.mxu0 %v3104
        %4552 = vmatpush.bf16.msra.mxu0 %v3098
        %4553 = vmatpush.bf16.msra.mxu0 %v3092
        %4554 = vmatpush.bf16.msra.mxu0 %v3086
        %4555 = vmatmul.bf16.gmra.mxu0 %v681
        %v4556 = vpop.f32.mrf.mxu0
        %v4557 = vadd.f32 %v4533, %v4556
        %v4558 = vpop.f32.mrf.mxu0
        %v4559 = vadd.f32 %v4535, %v4558
        %4560 = vmatmul.bf16.gmra.mxu0 %v713
        %v4561 = vpop.f32.mrf.mxu0
        %v4562 = vadd.f32 %v4538, %v4561
        %v4563 = vpop.f32.mrf.mxu0
        %v4564 = vadd.f32 %v4540, %v4563
        %4565 = vmatmul.bf16.gmra.mxu0 %v728
        %v4566 = vpop.f32.mrf.mxu0
        %v4567 = vadd.f32 %v4543, %v4566
        %v4568 = vpop.f32.mrf.mxu0
        %v4569 = vadd.f32 %v4545, %v4568
        %4570 = vdwg.mxu0
        %4571 = vmatpush.bf16.msra.mxu0 %v2697
        %4572 = vmatpush.bf16.msra.mxu0 %v2691
        %4573 = vmatpush.bf16.msra.mxu0 %v2685
        %4574 = vmatpush.bf16.msra.mxu0 %v2679
        %4575 = vmatpush.bf16.msra.mxu0 %v2673
        %4576 = vmatpush.bf16.msra.mxu0 %v2667
        %4577 = vmatpush.bf16.msra.mxu0 %v2661
        %4578 = vmatpush.bf16.msra.mxu0 %v2655
        %4579 = vmatmul.bf16.gmra.mxu0 %v597
        %v4580 = vpop.f32.mrf.mxu0
        %v4581 = vadd.f32 0.0, %v4580
        %v4582 = vpop.f32.mrf.mxu0
        %v4583 = vadd.f32 0.0, %v4582
        %4584 = vmatmul.bf16.gmra.mxu0 %v607
        %v4585 = vpop.f32.mrf.mxu0
        %v4586 = vadd.f32 0.0, %v4585
        %v4587 = vpop.f32.mrf.mxu0
        %v4588 = vadd.f32 0.0, %v4587
        %4589 = vmatmul.bf16.gmra.mxu0 %v617
        %v4590 = vpop.f32.mrf.mxu0
        %v4591 = vadd.f32 0.0, %v4590
        %v4592 = vpop.f32.mrf.mxu0
        %v4593 = vadd.f32 0.0, %v4592
        %4594 = vdwg.mxu0
        %4595 = vmatpush.bf16.msra.mxu0 %v2745
        %4596 = vmatpush.bf16.msra.mxu0 %v2739
        %4597 = vmatpush.bf16.msra.mxu0 %v2733
        %4598 = vmatpush.bf16.msra.mxu0 %v2727
        %4599 = vmatpush.bf16.msra.mxu0 %v2721
        %4600 = vmatpush.bf16.msra.mxu0 %v2715
        %4601 = vmatpush.bf16.msra.mxu0 %v2709
        %4602 = vmatpush.bf16.msra.mxu0 %v2703
        %4603 = vmatmul.bf16.gmra.mxu0 %v598
        %v4604 = vpop.f32.mrf.mxu0
        %v4605 = vadd.f32 %v4581, %v4604
        %v4606 = vpop.f32.mrf.mxu0
        %v4607 = vadd.f32 %v4583, %v4606
        %4608 = vmatmul.bf16.gmra.mxu0 %v608
        %v4609 = vpop.f32.mrf.mxu0
        %v4610 = vadd.f32 %v4586, %v4609
        %v4611 = vpop.f32.mrf.mxu0
        %v4612 = vadd.f32 %v4588, %v4611
        %4613 = vmatmul.bf16.gmra.mxu0 %v618
        %v4614 = vpop.f32.mrf.mxu0
        %v4615 = vadd.f32 %v4591, %v4614
        %v4616 = vpop.f32.mrf.mxu0
        %v4617 = vadd.f32 %v4593, %v4616
        %4618 = vdwg.mxu0
        %4619 = vmatpush.bf16.msra.mxu0 %v2793
        %4620 = vmatpush.bf16.msra.mxu0 %v2787
        %4621 = vmatpush.bf16.msra.mxu0 %v2781
        %4622 = vmatpush.bf16.msra.mxu0 %v2775
        %4623 = vmatpush.bf16.msra.mxu0 %v2769
        %4624 = vmatpush.bf16.msra.mxu0 %v2763
        %4625 = vmatpush.bf16.msra.mxu0 %v2757
        %4626 = vmatpush.bf16.msra.mxu0 %v2751
        %4627 = vmatmul.bf16.gmra.mxu0 %v607
        %v4628 = vpop.f32.mrf.mxu0
        %v4629 = vadd.f32 %v4605, %v4628
        %v4630 = vpop.f32.mrf.mxu0
        %v4631 = vadd.f32 %v4607, %v4630
        %4632 = vmatmul.bf16.gmra.mxu0 %v617
        %v4633 = vpop.f32.mrf.mxu0
        %v4634 = vadd.f32 %v4610, %v4633
        %v4635 = vpop.f32.mrf.mxu0
        %v4636 = vadd.f32 %v4612, %v4635
        %4637 = vmatmul.bf16.gmra.mxu0 %v638
        %v4638 = vpop.f32.mrf.mxu0
        %v4639 = vadd.f32 %v4615, %v4638
        %v4640 = vpop.f32.mrf.mxu0
        %v4641 = vadd.f32 %v4617, %v4640
        %4642 = vdwg.mxu0
        %4643 = vmatpush.bf16.msra.mxu0 %v2841
        %4644 = vmatpush.bf16.msra.mxu0 %v2835
        %4645 = vmatpush.bf16.msra.mxu0 %v2829
        %4646 = vmatpush.bf16.msra.mxu0 %v2823
        %4647 = vmatpush.bf16.msra.mxu0 %v2817
        %4648 = vmatpush.bf16.msra.mxu0 %v2811
        %4649 = vmatpush.bf16.msra.mxu0 %v2805
        %4650 = vmatpush.bf16.msra.mxu0 %v2799
        %4651 = vmatmul.bf16.gmra.mxu0 %v608
        %v4652 = vpop.f32.mrf.mxu0
        %v4653 = vadd.f32 %v4629, %v4652
        %v4654 = vpop.f32.mrf.mxu0
        %v4655 = vadd.f32 %v4631, %v4654
        %4656 = vmatmul.bf16.gmra.mxu0 %v618
        %v4657 = vpop.f32.mrf.mxu0
        %v4658 = vadd.f32 %v4634, %v4657
        %v4659 = vpop.f32.mrf.mxu0
        %v4660 = vadd.f32 %v4636, %v4659
        %4661 = vmatmul.bf16.gmra.mxu0 %v650
        %v4662 = vpop.f32.mrf.mxu0
        %v4663 = vadd.f32 %v4639, %v4662
        %v4664 = vpop.f32.mrf.mxu0
        %v4665 = vadd.f32 %v4641, %v4664
        %4666 = vdwg.mxu0
        %4667 = vmatpush.bf16.msra.mxu0 %v2889
        %4668 = vmatpush.bf16.msra.mxu0 %v2883
        %4669 = vmatpush.bf16.msra.mxu0 %v2877
        %4670 = vmatpush.bf16.msra.mxu0 %v2871
        %4671 = vmatpush.bf16.msra.mxu0 %v2865
        %4672 = vmatpush.bf16.msra.mxu0 %v2859
        %4673 = vmatpush.bf16.msra.mxu0 %v2853
        %4674 = vmatpush.bf16.msra.mxu0 %v2847
        %4675 = vmatmul.bf16.gmra.mxu0 %v617
        %v4676 = vpop.f32.mrf.mxu0
        %v4677 = vadd.f32 %v4653, %v4676
        %v4678 = vpop.f32.mrf.mxu0
        %v4679 = vadd.f32 %v4655, %v4678
        %4680 = vmatmul.bf16.gmra.mxu0 %v638
        %v4681 = vpop.f32.mrf.mxu0
        %v4682 = vadd.f32 %v4658, %v4681
        %v4683 = vpop.f32.mrf.mxu0
        %v4684 = vadd.f32 %v4660, %v4683
        %4685 = vmatmul.bf16.gmra.mxu0 %v669
        %v4686 = vpop.f32.mrf.mxu0
        %v4687 = vadd.f32 %v4663, %v4686
        %v4688 = vpop.f32.mrf.mxu0
        %v4689 = vadd.f32 %v4665, %v4688
        %4690 = vdwg.mxu0
        %4691 = vmatpush.bf16.msra.mxu0 %v2937
        %4692 = vmatpush.bf16.msra.mxu0 %v2931
        %4693 = vmatpush.bf16.msra.mxu0 %v2925
        %4694 = vmatpush.bf16.msra.mxu0 %v2919
        %4695 = vmatpush.bf16.msra.mxu0 %v2913
        %4696 = vmatpush.bf16.msra.mxu0 %v2907
        %4697 = vmatpush.bf16.msra.mxu0 %v2901
        %4698 = vmatpush.bf16.msra.mxu0 %v2895
        %4699 = vmatmul.bf16.gmra.mxu0 %v618
        %v4700 = vpop.f32.mrf.mxu0
        %v4701 = vadd.f32 %v4677, %v4700
        %v4702 = vpop.f32.mrf.mxu0
        %v4703 = vadd.f32 %v4679, %v4702
        %4704 = vmatmul.bf16.gmra.mxu0 %v650
        %v4705 = vpop.f32.mrf.mxu0
        %v4706 = vadd.f32 %v4682, %v4705
        %v4707 = vpop.f32.mrf.mxu0
        %v4708 = vadd.f32 %v4684, %v4707
        %4709 = vmatmul.bf16.gmra.mxu0 %v681
        %v4710 = vpop.f32.mrf.mxu0
        %v4711 = vadd.f32 %v4687, %v4710
        %v4712 = vpop.f32.mrf.mxu0
        %v4713 = vadd.f32 %v4689, %v4712
        %4714 = vdwg.mxu0
        %4715 = vmatpush.bf16.msra.mxu0 %v2985
        %4716 = vmatpush.bf16.msra.mxu0 %v2979
        %4717 = vmatpush.bf16.msra.mxu0 %v2973
        %4718 = vmatpush.bf16.msra.mxu0 %v2967
        %4719 = vmatpush.bf16.msra.mxu0 %v2961
        %4720 = vmatpush.bf16.msra.mxu0 %v2955
        %4721 = vmatpush.bf16.msra.mxu0 %v2949
        %4722 = vmatpush.bf16.msra.mxu0 %v2943
        %4723 = vmatmul.bf16.gmra.mxu0 %v638
        %v4724 = vpop.f32.mrf.mxu0
        %v4725 = vadd.f32 %v4701, %v4724
        %v4726 = vpop.f32.mrf.mxu0
        %v4727 = vadd.f32 %v4703, %v4726
        %4728 = vmatmul.bf16.gmra.mxu0 %v669
        %v4729 = vpop.f32.mrf.mxu0
        %v4730 = vadd.f32 %v4706, %v4729
        %v4731 = vpop.f32.mrf.mxu0
        %v4732 = vadd.f32 %v4708, %v4731
        %4733 = vmatmul.bf16.gmra.mxu0 %v701
        %v4734 = vpop.f32.mrf.mxu0
        %v4735 = vadd.f32 %v4711, %v4734
        %v4736 = vpop.f32.mrf.mxu0
        %v4737 = vadd.f32 %v4713, %v4736
        %4738 = vdwg.mxu0
        %4739 = vmatpush.bf16.msra.mxu0 %v3033
        %4740 = vmatpush.bf16.msra.mxu0 %v3027
        %4741 = vmatpush.bf16.msra.mxu0 %v3021
        %4742 = vmatpush.bf16.msra.mxu0 %v3015
        %4743 = vmatpush.bf16.msra.mxu0 %v3009
        %4744 = vmatpush.bf16.msra.mxu0 %v3003
        %4745 = vmatpush.bf16.msra.mxu0 %v2997
        %4746 = vmatpush.bf16.msra.mxu0 %v2991
        %4747 = vmatmul.bf16.gmra.mxu0 %v650
        %v4748 = vpop.f32.mrf.mxu0
        %v4749 = vadd.f32 %v4725, %v4748
        %v4750 = vpop.f32.mrf.mxu0
        %v4751 = vadd.f32 %v4727, %v4750
        %4752 = vmatmul.bf16.gmra.mxu0 %v681
        %v4753 = vpop.f32.mrf.mxu0
        %v4754 = vadd.f32 %v4730, %v4753
        %v4755 = vpop.f32.mrf.mxu0
        %v4756 = vadd.f32 %v4732, %v4755
        %4757 = vmatmul.bf16.gmra.mxu0 %v713
        %v4758 = vpop.f32.mrf.mxu0
        %v4759 = vadd.f32 %v4735, %v4758
        %v4760 = vpop.f32.mrf.mxu0
        %v4761 = vadd.f32 %v4737, %v4760
        %4762 = vdwg.mxu0
        %4763 = vmatpush.bf16.msra.mxu0 %v3081
        %4764 = vmatpush.bf16.msra.mxu0 %v3075
        %4765 = vmatpush.bf16.msra.mxu0 %v3069
        %4766 = vmatpush.bf16.msra.mxu0 %v3063
        %4767 = vmatpush.bf16.msra.mxu0 %v3057
        %4768 = vmatpush.bf16.msra.mxu0 %v3051
        %4769 = vmatpush.bf16.msra.mxu0 %v3045
        %4770 = vmatpush.bf16.msra.mxu0 %v3039
        %4771 = vmatmul.bf16.gmra.mxu0 %v669
        %v4772 = vpop.f32.mrf.mxu0
        %v4773 = vadd.f32 %v4749, %v4772
        %v4774 = vpop.f32.mrf.mxu0
        %v4775 = vadd.f32 %v4751, %v4774
        %4776 = vmatmul.bf16.gmra.mxu0 %v701
        %v4777 = vpop.f32.mrf.mxu0
        %v4778 = vadd.f32 %v4754, %v4777
        %v4779 = vpop.f32.mrf.mxu0
        %v4780 = vadd.f32 %v4756, %v4779
        %4781 = vmatmul.bf16.gmra.mxu0 %v725
        %v4782 = vpop.f32.mrf.mxu0
        %v4783 = vadd.f32 %v4759, %v4782
        %v4784 = vpop.f32.mrf.mxu0
        %v4785 = vadd.f32 %v4761, %v4784
        %4786 = vdwg.mxu0
        %4787 = vmatpush.bf16.msra.mxu0 %v3129
        %4788 = vmatpush.bf16.msra.mxu0 %v3123
        %4789 = vmatpush.bf16.msra.mxu0 %v3117
        %4790 = vmatpush.bf16.msra.mxu0 %v3111
        %4791 = vmatpush.bf16.msra.mxu0 %v3105
        %4792 = vmatpush.bf16.msra.mxu0 %v3099
        %4793 = vmatpush.bf16.msra.mxu0 %v3093
        %4794 = vmatpush.bf16.msra.mxu0 %v3087
        %4795 = vmatmul.bf16.gmra.mxu0 %v681
        %v4796 = vpop.f32.mrf.mxu0
        %v4797 = vadd.f32 %v4773, %v4796
        %v4798 = vpop.f32.mrf.mxu0
        %v4799 = vadd.f32 %v4775, %v4798
        %4800 = vmatmul.bf16.gmra.mxu0 %v713
        %v4801 = vpop.f32.mrf.mxu0
        %v4802 = vadd.f32 %v4778, %v4801
        %v4803 = vpop.f32.mrf.mxu0
        %v4804 = vadd.f32 %v4780, %v4803
        %4805 = vmatmul.bf16.gmra.mxu0 %v728
        %v4806 = vpop.f32.mrf.mxu0
        %v4807 = vadd.f32 %v4783, %v4806
        %v4808 = vpop.f32.mrf.mxu0
        %v4809 = vadd.f32 %v4785, %v4808
        %4810 = vdwg.mxu0
        %4811 = vmatpush.bf16.msra.mxu0 %v2698
        %4812 = vmatpush.bf16.msra.mxu0 %v2692
        %4813 = vmatpush.bf16.msra.mxu0 %v2686
        %4814 = vmatpush.bf16.msra.mxu0 %v2680
        %4815 = vmatpush.bf16.msra.mxu0 %v2674
        %4816 = vmatpush.bf16.msra.mxu0 %v2668
        %4817 = vmatpush.bf16.msra.mxu0 %v2662
        %4818 = vmatpush.bf16.msra.mxu0 %v2656
        %4819 = vmatmul.bf16.gmra.mxu0 %v597
        %v4820 = vpop.f32.mrf.mxu0
        %v4821 = vadd.f32 0.0, %v4820
        %v4822 = vpop.f32.mrf.mxu0
        %v4823 = vadd.f32 0.0, %v4822
        %4824 = vmatmul.bf16.gmra.mxu0 %v607
        %v4825 = vpop.f32.mrf.mxu0
        %v4826 = vadd.f32 0.0, %v4825
        %v4827 = vpop.f32.mrf.mxu0
        %v4828 = vadd.f32 0.0, %v4827
        %4829 = vmatmul.bf16.gmra.mxu0 %v617
        %v4830 = vpop.f32.mrf.mxu0
        %v4831 = vadd.f32 0.0, %v4830
        %v4832 = vpop.f32.mrf.mxu0
        %v4833 = vadd.f32 0.0, %v4832
        %4834 = vdwg.mxu0
        %4835 = vmatpush.bf16.msra.mxu0 %v2746
        %4836 = vmatpush.bf16.msra.mxu0 %v2740
        %4837 = vmatpush.bf16.msra.mxu0 %v2734
        %4838 = vmatpush.bf16.msra.mxu0 %v2728
        %4839 = vmatpush.bf16.msra.mxu0 %v2722
        %4840 = vmatpush.bf16.msra.mxu0 %v2716
        %4841 = vmatpush.bf16.msra.mxu0 %v2710
        %4842 = vmatpush.bf16.msra.mxu0 %v2704
        %4843 = vmatmul.bf16.gmra.mxu0 %v598
        %v4844 = vpop.f32.mrf.mxu0
        %v4845 = vadd.f32 %v4821, %v4844
        %v4846 = vpop.f32.mrf.mxu0
        %v4847 = vadd.f32 %v4823, %v4846
        %4848 = vmatmul.bf16.gmra.mxu0 %v608
        %v4849 = vpop.f32.mrf.mxu0
        %v4850 = vadd.f32 %v4826, %v4849
        %v4851 = vpop.f32.mrf.mxu0
        %v4852 = vadd.f32 %v4828, %v4851
        %4853 = vmatmul.bf16.gmra.mxu0 %v618
        %v4854 = vpop.f32.mrf.mxu0
        %v4855 = vadd.f32 %v4831, %v4854
        %v4856 = vpop.f32.mrf.mxu0
        %v4857 = vadd.f32 %v4833, %v4856
        %4858 = vdwg.mxu0
        %4859 = vmatpush.bf16.msra.mxu0 %v2794
        %4860 = vmatpush.bf16.msra.mxu0 %v2788
        %4861 = vmatpush.bf16.msra.mxu0 %v2782
        %4862 = vmatpush.bf16.msra.mxu0 %v2776
        %4863 = vmatpush.bf16.msra.mxu0 %v2770
        %4864 = vmatpush.bf16.msra.mxu0 %v2764
        %4865 = vmatpush.bf16.msra.mxu0 %v2758
        %4866 = vmatpush.bf16.msra.mxu0 %v2752
        %4867 = vmatmul.bf16.gmra.mxu0 %v607
        %v4868 = vpop.f32.mrf.mxu0
        %v4869 = vadd.f32 %v4845, %v4868
        %v4870 = vpop.f32.mrf.mxu0
        %v4871 = vadd.f32 %v4847, %v4870
        %4872 = vmatmul.bf16.gmra.mxu0 %v617
        %v4873 = vpop.f32.mrf.mxu0
        %v4874 = vadd.f32 %v4850, %v4873
        %v4875 = vpop.f32.mrf.mxu0
        %v4876 = vadd.f32 %v4852, %v4875
        %4877 = vmatmul.bf16.gmra.mxu0 %v638
        %v4878 = vpop.f32.mrf.mxu0
        %v4879 = vadd.f32 %v4855, %v4878
        %v4880 = vpop.f32.mrf.mxu0
        %v4881 = vadd.f32 %v4857, %v4880
        %4882 = vdwg.mxu0
        %4883 = vmatpush.bf16.msra.mxu0 %v2842
        %4884 = vmatpush.bf16.msra.mxu0 %v2836
        %4885 = vmatpush.bf16.msra.mxu0 %v2830
        %4886 = vmatpush.bf16.msra.mxu0 %v2824
        %4887 = vmatpush.bf16.msra.mxu0 %v2818
        %4888 = vmatpush.bf16.msra.mxu0 %v2812
        %4889 = vmatpush.bf16.msra.mxu0 %v2806
        %4890 = vmatpush.bf16.msra.mxu0 %v2800
        %4891 = vmatmul.bf16.gmra.mxu0 %v608
        %v4892 = vpop.f32.mrf.mxu0
        %v4893 = vadd.f32 %v4869, %v4892
        %v4894 = vpop.f32.mrf.mxu0
        %v4895 = vadd.f32 %v4871, %v4894
        %4896 = vmatmul.bf16.gmra.mxu0 %v618
        %v4897 = vpop.f32.mrf.mxu0
        %v4898 = vadd.f32 %v4874, %v4897
        %v4899 = vpop.f32.mrf.mxu0
        %v4900 = vadd.f32 %v4876, %v4899
        %4901 = vmatmul.bf16.gmra.mxu0 %v650
        %v4902 = vpop.f32.mrf.mxu0
        %v4903 = vadd.f32 %v4879, %v4902
        %v4904 = vpop.f32.mrf.mxu0
        %v4905 = vadd.f32 %v4881, %v4904
        %4906 = vdwg.mxu0
        %4907 = vmatpush.bf16.msra.mxu0 %v2890
        %4908 = vmatpush.bf16.msra.mxu0 %v2884
        %4909 = vmatpush.bf16.msra.mxu0 %v2878
        %4910 = vmatpush.bf16.msra.mxu0 %v2872
        %4911 = vmatpush.bf16.msra.mxu0 %v2866
        %4912 = vmatpush.bf16.msra.mxu0 %v2860
        %4913 = vmatpush.bf16.msra.mxu0 %v2854
        %4914 = vmatpush.bf16.msra.mxu0 %v2848
        %4915 = vmatmul.bf16.gmra.mxu0 %v617
        %v4916 = vpop.f32.mrf.mxu0
        %v4917 = vadd.f32 %v4893, %v4916
        %v4918 = vpop.f32.mrf.mxu0
        %v4919 = vadd.f32 %v4895, %v4918
        %4920 = vmatmul.bf16.gmra.mxu0 %v638
        %v4921 = vpop.f32.mrf.mxu0
        %v4922 = vadd.f32 %v4898, %v4921
        %v4923 = vpop.f32.mrf.mxu0
        %v4924 = vadd.f32 %v4900, %v4923
        %4925 = vmatmul.bf16.gmra.mxu0 %v669
        %v4926 = vpop.f32.mrf.mxu0
        %v4927 = vadd.f32 %v4903, %v4926
        %v4928 = vpop.f32.mrf.mxu0
        %v4929 = vadd.f32 %v4905, %v4928
        %4930 = vdwg.mxu0
        %4931 = vmatpush.bf16.msra.mxu0 %v2938
        %4932 = vmatpush.bf16.msra.mxu0 %v2932
        %4933 = vmatpush.bf16.msra.mxu0 %v2926
        %4934 = vmatpush.bf16.msra.mxu0 %v2920
        %4935 = vmatpush.bf16.msra.mxu0 %v2914
        %4936 = vmatpush.bf16.msra.mxu0 %v2908
        %4937 = vmatpush.bf16.msra.mxu0 %v2902
        %4938 = vmatpush.bf16.msra.mxu0 %v2896
        %4939 = vmatmul.bf16.gmra.mxu0 %v618
        %v4940 = vpop.f32.mrf.mxu0
        %v4941 = vadd.f32 %v4917, %v4940
        %v4942 = vpop.f32.mrf.mxu0
        %v4943 = vadd.f32 %v4919, %v4942
        %4944 = vmatmul.bf16.gmra.mxu0 %v650
        %v4945 = vpop.f32.mrf.mxu0
        %v4946 = vadd.f32 %v4922, %v4945
        %v4947 = vpop.f32.mrf.mxu0
        %v4948 = vadd.f32 %v4924, %v4947
        %4949 = vmatmul.bf16.gmra.mxu0 %v681
        %v4950 = vpop.f32.mrf.mxu0
        %v4951 = vadd.f32 %v4927, %v4950
        %v4952 = vpop.f32.mrf.mxu0
        %v4953 = vadd.f32 %v4929, %v4952
        %4954 = vdwg.mxu0
        %4955 = vmatpush.bf16.msra.mxu0 %v2986
        %4956 = vmatpush.bf16.msra.mxu0 %v2980
        %4957 = vmatpush.bf16.msra.mxu0 %v2974
        %4958 = vmatpush.bf16.msra.mxu0 %v2968
        %4959 = vmatpush.bf16.msra.mxu0 %v2962
        %4960 = vmatpush.bf16.msra.mxu0 %v2956
        %4961 = vmatpush.bf16.msra.mxu0 %v2950
        %4962 = vmatpush.bf16.msra.mxu0 %v2944
        %4963 = vmatmul.bf16.gmra.mxu0 %v638
        %v4964 = vpop.f32.mrf.mxu0
        %v4965 = vadd.f32 %v4941, %v4964
        %v4966 = vpop.f32.mrf.mxu0
        %v4967 = vadd.f32 %v4943, %v4966
        %4968 = vmatmul.bf16.gmra.mxu0 %v669
        %v4969 = vpop.f32.mrf.mxu0
        %v4970 = vadd.f32 %v4946, %v4969
        %v4971 = vpop.f32.mrf.mxu0
        %v4972 = vadd.f32 %v4948, %v4971
        %4973 = vmatmul.bf16.gmra.mxu0 %v701
        %v4974 = vpop.f32.mrf.mxu0
        %v4975 = vadd.f32 %v4951, %v4974
        %v4976 = vpop.f32.mrf.mxu0
        %v4977 = vadd.f32 %v4953, %v4976
        %4978 = vdwg.mxu0
        %4979 = vmatpush.bf16.msra.mxu0 %v3034
        %4980 = vmatpush.bf16.msra.mxu0 %v3028
        %4981 = vmatpush.bf16.msra.mxu0 %v3022
        %4982 = vmatpush.bf16.msra.mxu0 %v3016
        %4983 = vmatpush.bf16.msra.mxu0 %v3010
        %4984 = vmatpush.bf16.msra.mxu0 %v3004
        %4985 = vmatpush.bf16.msra.mxu0 %v2998
        %4986 = vmatpush.bf16.msra.mxu0 %v2992
        %4987 = vmatmul.bf16.gmra.mxu0 %v650
        %v4988 = vpop.f32.mrf.mxu0
        %v4989 = vadd.f32 %v4965, %v4988
        %v4990 = vpop.f32.mrf.mxu0
        %v4991 = vadd.f32 %v4967, %v4990
        %4992 = vmatmul.bf16.gmra.mxu0 %v681
        %v4993 = vpop.f32.mrf.mxu0
        %v4994 = vadd.f32 %v4970, %v4993
        %v4995 = vpop.f32.mrf.mxu0
        %v4996 = vadd.f32 %v4972, %v4995
        %4997 = vmatmul.bf16.gmra.mxu0 %v713
        %v4998 = vpop.f32.mrf.mxu0
        %v4999 = vadd.f32 %v4975, %v4998
        %v5000 = vpop.f32.mrf.mxu0
        %v5001 = vadd.f32 %v4977, %v5000
        %5002 = vdwg.mxu0
        %5003 = vmatpush.bf16.msra.mxu0 %v3082
        %5004 = vmatpush.bf16.msra.mxu0 %v3076
        %5005 = vmatpush.bf16.msra.mxu0 %v3070
        %5006 = vmatpush.bf16.msra.mxu0 %v3064
        %5007 = vmatpush.bf16.msra.mxu0 %v3058
        %5008 = vmatpush.bf16.msra.mxu0 %v3052
        %5009 = vmatpush.bf16.msra.mxu0 %v3046
        %5010 = vmatpush.bf16.msra.mxu0 %v3040
        %5011 = vmatmul.bf16.gmra.mxu0 %v669
        %v5012 = vpop.f32.mrf.mxu0
        %v5013 = vadd.f32 %v4989, %v5012
        %v5014 = vpop.f32.mrf.mxu0
        %v5015 = vadd.f32 %v4991, %v5014
        %5016 = vmatmul.bf16.gmra.mxu0 %v701
        %v5017 = vpop.f32.mrf.mxu0
        %v5018 = vadd.f32 %v4994, %v5017
        %v5019 = vpop.f32.mrf.mxu0
        %v5020 = vadd.f32 %v4996, %v5019
        %5021 = vmatmul.bf16.gmra.mxu0 %v725
        %v5022 = vpop.f32.mrf.mxu0
        %v5023 = vadd.f32 %v4999, %v5022
        %v5024 = vpop.f32.mrf.mxu0
        %v5025 = vadd.f32 %v5001, %v5024
        %5026 = vdwg.mxu0
        %5027 = vmatpush.bf16.msra.mxu0 %v3130
        %5028 = vmatpush.bf16.msra.mxu0 %v3124
        %5029 = vmatpush.bf16.msra.mxu0 %v3118
        %5030 = vmatpush.bf16.msra.mxu0 %v3112
        %5031 = vmatpush.bf16.msra.mxu0 %v3106
        %5032 = vmatpush.bf16.msra.mxu0 %v3100
        %5033 = vmatpush.bf16.msra.mxu0 %v3094
        %5034 = vmatpush.bf16.msra.mxu0 %v3088
        %5035 = vmatmul.bf16.gmra.mxu0 %v681
        %v5036 = vpop.f32.mrf.mxu0
        %v5037 = vadd.f32 %v5013, %v5036
        %v5038 = vpop.f32.mrf.mxu0
        %v5039 = vadd.f32 %v5015, %v5038
        %5040 = vmatmul.bf16.gmra.mxu0 %v713
        %v5041 = vpop.f32.mrf.mxu0
        %v5042 = vadd.f32 %v5018, %v5041
        %v5043 = vpop.f32.mrf.mxu0
        %v5044 = vadd.f32 %v5020, %v5043
        %5045 = vmatmul.bf16.gmra.mxu0 %v728
        %v5046 = vpop.f32.mrf.mxu0
        %v5047 = vadd.f32 %v5023, %v5046
        %v5048 = vpop.f32.mrf.mxu0
        %v5049 = vadd.f32 %v5025, %v5048
        %5050 = vdwg.mxu0
        %v5051 = vmax.f32 %v3837, %v4317
        %v5052 = vmax.f32 %v4077, %v4557
        %v5053 = vmax.f32 %v3839, %v4319
        %v5054 = vmax.f32 %v4079, %v4559
        %v5055 = vmax.f32 %v3842, %v4322
        %v5056 = vmax.f32 %v4082, %v4562
        %v5057 = vmax.f32 %v3844, %v4324
        %v5058 = vmax.f32 %v4084, %v4564
        %v5059 = vmax.f32 %v3847, %v4327
        %v5060 = vmax.f32 %v4087, %v4567
        %v5061 = vmax.f32 %v3849, %v4329
        %v5062 = vmax.f32 %v4089, %v4569
        %v5063 = vmax.f32 %v5051, %v4797
        %v5064 = vmax.f32 %v5052, %v5037
        %v5065 = vmax.f32 %v5053, %v4799
        %v5066 = vmax.f32 %v5054, %v5039
        %v5067 = vmax.f32 %v5055, %v4802
        %v5068 = vmax.f32 %v5056, %v5042
        %v5069 = vmax.f32 %v5057, %v4804
        %v5070 = vmax.f32 %v5058, %v5044
        %v5071 = vmax.f32 %v5059, %v4807
        %v5072 = vmax.f32 %v5060, %v5047
        %v5073 = vmax.f32 %v5061, %v4809
        %v5074 = vmax.f32 %v5062, %v5049
        %v5075 = vld [vmem:[#allocation4] sm:$0x3]
        %v5077 = vperm.slane %v5075, 0
        %v5078 = vperm.slane %v5075, 1
        %v5081 = vadd.f32 %v5063, %v5077
        %v5082 = vadd.f32 %v5064, %v5078
        %v5083 = vadd.f32 %v5065, %v5077
        %v5084 = vadd.f32 %v5066, %v5078
        %v5085 = vadd.f32 %v5067, %v5077
        %v5086 = vadd.f32 %v5068, %v5078
        %v5087 = vadd.f32 %v5069, %v5077
        %v5088 = vadd.f32 %v5070, %v5078
        %v5089 = vadd.f32 %v5071, %v5077
        %v5090 = vadd.f32 %v5072, %v5078
        %v5091 = vadd.f32 %v5073, %v5077
        %v5092 = vadd.f32 %v5074, %v5078
        %v5093 = vmax.f32 %v5081, 0.0
        %v5094 = vmax.f32 %v5082, 0.0
        %v5095 = vmax.f32 %v5083, 0.0
        %v5096 = vmax.f32 %v5084, 0.0
        %v5097 = vmax.f32 %v5085, 0.0
        %v5098 = vmax.f32 %v5086, 0.0
        %v5099 = vmax.f32 %v5087, 0.0
        %v5100 = vmax.f32 %v5088, 0.0
        %v5101 = vmax.f32 %v5089, 0.0
        %v5102 = vmax.f32 %v5090, 0.0
        %v5103 = vmax.f32 %v5091, 0.0
        %v5104 = vmax.f32 %v5092, 0.0
        %v5105 = vmax.f32 %v5093, %v5097
        %v5106 = vmax.f32 %v5094, %v5098
        %v5107 = vmax.f32 %v5095, %v5099
        %v5108 = vmax.f32 %v5096, %v5100
        %v5109 = vmax.f32 %v5105, %v5101
        %v5110 = vmax.f32 %v5106, %v5102
        %v5111 = vmax.f32 %v5107, %v5103
        %v5112 = vmax.f32 %v5108, %v5104
        %v5113 = vpack.c.bf16 %v5110, %v5109
        %v5114 = vpack.c.bf16 %v5112, %v5111
        %v5117 = vunpack.c.l.b16 %v5113
        %v5118 = vunpack.c.h.b16 %v5113
        %v5119 = vunpack.c.l.b16 %v5114
        %v5120 = vunpack.c.h.b16 %v5114
        %v5121 = vpack.c.b16 %v5119, %v5117
        %v5122 = vpack.c.b16 %v5120, %v5118
        %v5123 = vrot.slane %v5121, 7
        %v5124 = vrot.slane %v5122, 7
        %vm5125 = vcmask 1040384
        %v5128 = vsel %vm5125, 0, %v5123
        %v5131 = vsel %vm5125, 0, %v5124
        %v5133 = vsel %vm5125, %v5123, 0
        %v5134 = vsel %vm5125, %v5124, 0
        %v5135 = vshrl.u32 %v5128, 16
        %v5137 = vshll.u32 %v5128, 16
        %v5139 = vrot.slane %v5137, 1
        %v5140 = vor.u32 %v5135, %v5139
        %v5141 = vshll.u32 %v5133, 16
        %v5143 = vrot.slane %v5141, 1
        %v5144 = vsel %vm626, %v5140, %v5143
        %v5145 = vshrl.u32 %v5131, 16
        %v5147 = vshll.u32 %v5131, 16
        %v5149 = vrot.slane %v5147, 1
        %v5150 = vor.u32 %v5145, %v5149
        %v5151 = vshll.u32 %v5134, 16
        %v5153 = vrot.slane %v5151, 1
        %v5154 = vsel %vm626, %v5150, %v5153
        %v5161 = vrot.slane %v5128, 1
        %v5162 = vrot.slane %v5133, 1
        %v5163 = vsel %vm722, %v5161, %v5162
        %v5164 = vrot.slane %v5131, 1
        %v5165 = vrot.slane %v5134, 1
        %v5166 = vsel %vm722, %v5164, %v5165
        %vm5169 = vsmask.f32 6400
        %v5170 = vrot.slane %v5135, 1
        %v5171 = vrot.slane %v5137, 2
        %v5172 = vor.u32 %v5170, %v5171
        %v5173 = vshrl.u32 %v5133, 16
        %v5175 = vrot.slane %v5173, 1
        %v5176 = vrot.slane %v5141, 2
        %v5177 = vor.u32 %v5175, %v5176
        %v5178 = vsel %vm5169, %v5172, %v5177
        %v5179 = vrot.slane %v5145, 1
        %v5180 = vrot.slane %v5147, 2
        %v5181 = vor.u32 %v5179, %v5180
        %v5182 = vshrl.u32 %v5134, 16
        %v5184 = vrot.slane %v5182, 1
        %v5185 = vrot.slane %v5151, 2
        %v5186 = vor.u32 %v5184, %v5185
        %v5187 = vsel %vm5169, %v5181, %v5186
        %vm5190 = vcmask 1045504
        %v5191 = vrot.slane %v5128, 2
        %v5192 = vrot.slane %v5133, 2
        %v5193 = vsel %vm5190, %v5191, %v5192
        %v5194 = vrot.slane %v5131, 2
        %v5195 = vrot.slane %v5134, 2
        %v5196 = vsel %vm5190, %v5194, %v5195
        %v5199 = vld [vmem:[#allocation6] sm:$0xff]
        %v5200 = vld [vmem:[#allocation6 + $0x8] sm:$0xff]
        %v5201 = vld [vmem:[#allocation6 + $0x10] sm:$0xff]
        %v5202 = vld [vmem:[#allocation6 + $0x18] sm:$0xff]
        %v5203 = vld [vmem:[#allocation6 + $0x20] sm:$0xff]
        %v5204 = vld [vmem:[#allocation6 + $0x28] sm:$0xff]
        %v5205 = vld [vmem:[#allocation6 + $0x30] sm:$0xff]
        %v5206 = vld [vmem:[#allocation6 + $0x38] sm:$0xff]
        %v5207 = vld [vmem:[#allocation6 + $0x40] sm:$0xff]
        %v5208 = vld [vmem:[#allocation6 + $0x48] sm:$0xff]
        %v5209 = vld [vmem:[#allocation6 + $0x50] sm:$0xff]
        %v5210 = vld [vmem:[#allocation6 + $0x58] sm:$0xff]
        %v5211 = vld [vmem:[#allocation6 + $0x60] sm:$0xff]
        %v5212 = vld [vmem:[#allocation6 + $0x68] sm:$0xff]
        %v5213 = vld [vmem:[#allocation6 + $0x70] sm:$0xff]
        %v5214 = vld [vmem:[#allocation6 + $0x78] sm:$0xff]
        %v5215 = vld [vmem:[#allocation6 + $0x80] sm:$0xff]
        %v5216 = vld [vmem:[#allocation6 + $0x88] sm:$0xff]
        %v5217 = vld [vmem:[#allocation6 + $0x90] sm:$0xff]
        %v5218 = vld [vmem:[#allocation6 + $0x98] sm:$0xff]
        %v5219 = vld [vmem:[#allocation6 + $0xa0] sm:$0xff]
        %v5220 = vld [vmem:[#allocation6 + $0xa8] sm:$0xff]
        %v5221 = vld [vmem:[#allocation6 + $0xb0] sm:$0xff]
        %v5222 = vld [vmem:[#allocation6 + $0xb8] sm:$0xff]
        %v5223 = vld [vmem:[#allocation6 + $0xc0] sm:$0xff]
        %v5224 = vld [vmem:[#allocation6 + $0xc8] sm:$0xff]
        %v5225 = vld [vmem:[#allocation6 + $0xd0] sm:$0xff]
        %v5226 = vld [vmem:[#allocation6 + $0xd8] sm:$0xff]
        %v5227 = vld [vmem:[#allocation6 + $0xe0] sm:$0xff]
        %v5228 = vld [vmem:[#allocation6 + $0xe8] sm:$0xff]
        %v5229 = vld [vmem:[#allocation6 + $0xf0] sm:$0xff]
        %v5230 = vld [vmem:[#allocation6 + $0xf8] sm:$0xff]
        %v5231 = vld [vmem:[#allocation6 + $0x100] sm:$0xff]
        %v5232 = vld [vmem:[#allocation6 + $0x108] sm:$0xff]
        %v5233 = vld [vmem:[#allocation6 + $0x110] sm:$0xff]
        %v5234 = vld [vmem:[#allocation6 + $0x118] sm:$0xff]
        %v5235 = vld [vmem:[#allocation6 + $0x120] sm:$0xff]
        %v5236 = vld [vmem:[#allocation6 + $0x128] sm:$0xff]
        %v5237 = vld [vmem:[#allocation6 + $0x130] sm:$0xff]
        %v5238 = vld [vmem:[#allocation6 + $0x138] sm:$0xff]
        %v5239 = vld [vmem:[#allocation6 + $0x140] sm:$0xff]
        %v5240 = vld [vmem:[#allocation6 + $0x148] sm:$0xff]
        %v5241 = vld [vmem:[#allocation6 + $0x150] sm:$0xff]
        %v5242 = vld [vmem:[#allocation6 + $0x158] sm:$0xff]
        %v5243 = vld [vmem:[#allocation6 + $0x160] sm:$0xff]
        %v5244 = vld [vmem:[#allocation6 + $0x168] sm:$0xff]
        %v5245 = vld [vmem:[#allocation6 + $0x170] sm:$0xff]
        %v5246 = vld [vmem:[#allocation6 + $0x178] sm:$0xff]
        %v5247 = vld [vmem:[#allocation6 + $0x180] sm:$0xff]
        %v5248 = vld [vmem:[#allocation6 + $0x188] sm:$0xff]
        %v5249 = vld [vmem:[#allocation6 + $0x190] sm:$0xff]
        %v5250 = vld [vmem:[#allocation6 + $0x198] sm:$0xff]
        %v5251 = vld [vmem:[#allocation6 + $0x1a0] sm:$0xff]
        %v5252 = vld [vmem:[#allocation6 + $0x1a8] sm:$0xff]
        %v5253 = vld [vmem:[#allocation6 + $0x1b0] sm:$0xff]
        %v5254 = vld [vmem:[#allocation6 + $0x1b8] sm:$0xff]
        %v5255 = vld [vmem:[#allocation6 + $0x1c0] sm:$0xff]
        %v5256 = vld [vmem:[#allocation6 + $0x1c8] sm:$0xff]
        %v5257 = vld [vmem:[#allocation6 + $0x1d0] sm:$0xff]
        %v5258 = vld [vmem:[#allocation6 + $0x1d8] sm:$0xff]
        %v5259 = vld [vmem:[#allocation6 + $0x1e0] sm:$0xff]
        %v5260 = vld [vmem:[#allocation6 + $0x1e8] sm:$0xff]
        %v5261 = vld [vmem:[#allocation6 + $0x1f0] sm:$0xff]
        %v5262 = vld [vmem:[#allocation6 + $0x1f8] sm:$0xff]
        %v5263 = vld [vmem:[#allocation6 + $0x200] sm:$0xff]
        %v5264 = vld [vmem:[#allocation6 + $0x208] sm:$0xff]
        %v5265 = vld [vmem:[#allocation6 + $0x210] sm:$0xff]
        %v5266 = vld [vmem:[#allocation6 + $0x218] sm:$0xff]
        %v5267 = vld [vmem:[#allocation6 + $0x220] sm:$0xff]
        %v5268 = vld [vmem:[#allocation6 + $0x228] sm:$0xff]
        %v5269 = vld [vmem:[#allocation6 + $0x230] sm:$0xff]
        %v5270 = vld [vmem:[#allocation6 + $0x238] sm:$0xff]
        %v5271 = vld [vmem:[#allocation6 + $0x240] sm:$0xff]
        %v5272 = vld [vmem:[#allocation6 + $0x248] sm:$0xff]
        %v5273 = vld [vmem:[#allocation6 + $0x250] sm:$0xff]
        %v5274 = vld [vmem:[#allocation6 + $0x258] sm:$0xff]
        %v5275 = vld [vmem:[#allocation6 + $0x260] sm:$0xff]
        %v5276 = vld [vmem:[#allocation6 + $0x268] sm:$0xff]
        %v5277 = vld [vmem:[#allocation6 + $0x270] sm:$0xff]
        %v5278 = vld [vmem:[#allocation6 + $0x278] sm:$0xff]
        %v5279 = vld [vmem:[#allocation6 + $0x280] sm:$0xff]
        %v5280 = vld [vmem:[#allocation6 + $0x288] sm:$0xff]
        %v5281 = vld [vmem:[#allocation6 + $0x290] sm:$0xff]
        %v5282 = vld [vmem:[#allocation6 + $0x298] sm:$0xff]
        %v5283 = vld [vmem:[#allocation6 + $0x2a0] sm:$0xff]
        %v5284 = vld [vmem:[#allocation6 + $0x2a8] sm:$0xff]
        %v5285 = vld [vmem:[#allocation6 + $0x2b0] sm:$0xff]
        %v5286 = vld [vmem:[#allocation6 + $0x2b8] sm:$0xff]
        %v5287 = vld [vmem:[#allocation6 + $0x2c0] sm:$0xff]
        %v5288 = vld [vmem:[#allocation6 + $0x2c8] sm:$0xff]
        %v5289 = vld [vmem:[#allocation6 + $0x2d0] sm:$0xff]
        %v5290 = vld [vmem:[#allocation6 + $0x2d8] sm:$0xff]
        %v5291 = vld [vmem:[#allocation6 + $0x2e0] sm:$0xff]
        %v5292 = vld [vmem:[#allocation6 + $0x2e8] sm:$0xff]
        %v5293 = vld [vmem:[#allocation6 + $0x2f0] sm:$0xff]
        %v5294 = vld [vmem:[#allocation6 + $0x2f8] sm:$0xff]
        %v5295 = vld [vmem:[#allocation6 + $0x300] sm:$0xff]
        %v5296 = vld [vmem:[#allocation6 + $0x308] sm:$0xff]
        %v5297 = vld [vmem:[#allocation6 + $0x310] sm:$0xff]
        %v5298 = vld [vmem:[#allocation6 + $0x318] sm:$0xff]
        %v5299 = vld [vmem:[#allocation6 + $0x320] sm:$0xff]
        %v5300 = vld [vmem:[#allocation6 + $0x328] sm:$0xff]
        %v5301 = vld [vmem:[#allocation6 + $0x330] sm:$0xff]
        %v5302 = vld [vmem:[#allocation6 + $0x338] sm:$0xff]
        %v5303 = vld [vmem:[#allocation6 + $0x340] sm:$0xff]
        %v5304 = vld [vmem:[#allocation6 + $0x348] sm:$0xff]
        %v5305 = vld [vmem:[#allocation6 + $0x350] sm:$0xff]
        %v5306 = vld [vmem:[#allocation6 + $0x358] sm:$0xff]
        %v5307 = vld [vmem:[#allocation6 + $0x360] sm:$0xff]
        %v5308 = vld [vmem:[#allocation6 + $0x368] sm:$0xff]
        %v5309 = vld [vmem:[#allocation6 + $0x370] sm:$0xff]
        %v5310 = vld [vmem:[#allocation6 + $0x378] sm:$0xff]
        %v5311 = vld [vmem:[#allocation6 + $0x380] sm:$0xff]
        %v5312 = vld [vmem:[#allocation6 + $0x388] sm:$0xff]
        %v5313 = vld [vmem:[#allocation6 + $0x390] sm:$0xff]
        %v5314 = vld [vmem:[#allocation6 + $0x398] sm:$0xff]
        %v5315 = vld [vmem:[#allocation6 + $0x3a0] sm:$0xff]
        %v5316 = vld [vmem:[#allocation6 + $0x3a8] sm:$0xff]
        %v5317 = vld [vmem:[#allocation6 + $0x3b0] sm:$0xff]
        %v5318 = vld [vmem:[#allocation6 + $0x3b8] sm:$0xff]
        %v5319 = vld [vmem:[#allocation6 + $0x3c0] sm:$0xff]
        %v5320 = vld [vmem:[#allocation6 + $0x3c8] sm:$0xff]
        %v5321 = vld [vmem:[#allocation6 + $0x3d0] sm:$0xff]
        %v5322 = vld [vmem:[#allocation6 + $0x3d8] sm:$0xff]
        %v5323 = vld [vmem:[#allocation6 + $0x3e0] sm:$0xff]
        %v5324 = vld [vmem:[#allocation6 + $0x3e8] sm:$0xff]
        %v5325 = vld [vmem:[#allocation6 + $0x3f0] sm:$0xff]
        %v5326 = vld [vmem:[#allocation6 + $0x3f8] sm:$0xff]
        %v5327 = vld [vmem:[#allocation6 + $0x400] sm:$0xff]
        %v5328 = vld [vmem:[#allocation6 + $0x408] sm:$0xff]
        %v5329 = vld [vmem:[#allocation6 + $0x410] sm:$0xff]
        %v5330 = vld [vmem:[#allocation6 + $0x418] sm:$0xff]
        %v5331 = vld [vmem:[#allocation6 + $0x420] sm:$0xff]
        %v5332 = vld [vmem:[#allocation6 + $0x428] sm:$0xff]
        %v5333 = vld [vmem:[#allocation6 + $0x430] sm:$0xff]
        %v5334 = vld [vmem:[#allocation6 + $0x438] sm:$0xff]
        %v5335 = vld [vmem:[#allocation6 + $0x440] sm:$0xff]
        %v5336 = vld [vmem:[#allocation6 + $0x448] sm:$0xff]
        %v5337 = vld [vmem:[#allocation6 + $0x450] sm:$0xff]
        %v5338 = vld [vmem:[#allocation6 + $0x458] sm:$0xff]
        %v5339 = vld [vmem:[#allocation6 + $0x460] sm:$0xff]
        %v5340 = vld [vmem:[#allocation6 + $0x468] sm:$0xff]
        %v5341 = vld [vmem:[#allocation6 + $0x470] sm:$0xff]
        %v5342 = vld [vmem:[#allocation6 + $0x478] sm:$0xff]
        %v5343 = vld [vmem:[#allocation6 + $0x480] sm:$0xff]
        %v5344 = vld [vmem:[#allocation6 + $0x488] sm:$0xff]
        %v5345 = vld [vmem:[#allocation6 + $0x490] sm:$0xff]
        %v5346 = vld [vmem:[#allocation6 + $0x498] sm:$0xff]
        %v5347 = vld [vmem:[#allocation6 + $0x4a0] sm:$0xff]
        %v5348 = vld [vmem:[#allocation6 + $0x4a8] sm:$0xff]
        %v5349 = vld [vmem:[#allocation6 + $0x4b0] sm:$0xff]
        %v5350 = vld [vmem:[#allocation6 + $0x4b8] sm:$0xff]
        %v5351 = vld [vmem:[#allocation6 + $0x4c0] sm:$0xff]
        %v5352 = vld [vmem:[#allocation6 + $0x4c8] sm:$0xff]
        %v5353 = vld [vmem:[#allocation6 + $0x4d0] sm:$0xff]
        %v5354 = vld [vmem:[#allocation6 + $0x4d8] sm:$0xff]
        %v5355 = vld [vmem:[#allocation6 + $0x4e0] sm:$0xff]
        %v5356 = vld [vmem:[#allocation6 + $0x4e8] sm:$0xff]
        %v5357 = vld [vmem:[#allocation6 + $0x4f0] sm:$0xff]
        %v5358 = vld [vmem:[#allocation6 + $0x4f8] sm:$0xff]
        %v5359 = vld [vmem:[#allocation6 + $0x500] sm:$0xff]
        %v5360 = vld [vmem:[#allocation6 + $0x508] sm:$0xff]
        %v5361 = vld [vmem:[#allocation6 + $0x510] sm:$0xff]
        %v5362 = vld [vmem:[#allocation6 + $0x518] sm:$0xff]
        %v5363 = vld [vmem:[#allocation6 + $0x520] sm:$0xff]
        %v5364 = vld [vmem:[#allocation6 + $0x528] sm:$0xff]
        %v5365 = vld [vmem:[#allocation6 + $0x530] sm:$0xff]
        %v5366 = vld [vmem:[#allocation6 + $0x538] sm:$0xff]
        %v5367 = vld [vmem:[#allocation6 + $0x540] sm:$0xff]
        %v5368 = vld [vmem:[#allocation6 + $0x548] sm:$0xff]
        %v5369 = vld [vmem:[#allocation6 + $0x550] sm:$0xff]
        %v5370 = vld [vmem:[#allocation6 + $0x558] sm:$0xff]
        %v5371 = vld [vmem:[#allocation6 + $0x560] sm:$0xff]
        %v5372 = vld [vmem:[#allocation6 + $0x568] sm:$0xff]
        %v5373 = vld [vmem:[#allocation6 + $0x570] sm:$0xff]
        %v5374 = vld [vmem:[#allocation6 + $0x578] sm:$0xff]
        %v5375 = vld [vmem:[#allocation6 + $0x580] sm:$0xff]
        %v5376 = vld [vmem:[#allocation6 + $0x588] sm:$0xff]
        %v5377 = vld [vmem:[#allocation6 + $0x590] sm:$0xff]
        %v5378 = vld [vmem:[#allocation6 + $0x598] sm:$0xff]
        %v5379 = vld [vmem:[#allocation6 + $0x5a0] sm:$0xff]
        %v5380 = vld [vmem:[#allocation6 + $0x5a8] sm:$0xff]
        %v5381 = vld [vmem:[#allocation6 + $0x5b0] sm:$0xff]
        %v5382 = vld [vmem:[#allocation6 + $0x5b8] sm:$0xff]
        %v5383 = vld [vmem:[#allocation6 + $0x5c0] sm:$0xff]
        %v5384 = vld [vmem:[#allocation6 + $0x5c8] sm:$0xff]
        %v5385 = vld [vmem:[#allocation6 + $0x5d0] sm:$0xff]
        %v5386 = vld [vmem:[#allocation6 + $0x5d8] sm:$0xff]
        %v5387 = vld [vmem:[#allocation6 + $0x5e0] sm:$0xff]
        %v5388 = vld [vmem:[#allocation6 + $0x5e8] sm:$0xff]
        %v5389 = vld [vmem:[#allocation6 + $0x5f0] sm:$0xff]
        %v5390 = vld [vmem:[#allocation6 + $0x5f8] sm:$0xff]
        %v5391 = vld [vmem:[#allocation6 + $0x600] sm:$0xff]
        %v5392 = vld [vmem:[#allocation6 + $0x608] sm:$0xff]
        %v5393 = vld [vmem:[#allocation6 + $0x610] sm:$0xff]
        %v5394 = vld [vmem:[#allocation6 + $0x618] sm:$0xff]
        %v5395 = vld [vmem:[#allocation6 + $0x620] sm:$0xff]
        %v5396 = vld [vmem:[#allocation6 + $0x628] sm:$0xff]
        %v5397 = vld [vmem:[#allocation6 + $0x630] sm:$0xff]
        %v5398 = vld [vmem:[#allocation6 + $0x638] sm:$0xff]
        %v5399 = vld [vmem:[#allocation6 + $0x640] sm:$0xff]
        %v5400 = vld [vmem:[#allocation6 + $0x648] sm:$0xff]
        %v5401 = vld [vmem:[#allocation6 + $0x650] sm:$0xff]
        %v5402 = vld [vmem:[#allocation6 + $0x658] sm:$0xff]
        %v5403 = vld [vmem:[#allocation6 + $0x660] sm:$0xff]
        %v5404 = vld [vmem:[#allocation6 + $0x668] sm:$0xff]
        %v5405 = vld [vmem:[#allocation6 + $0x670] sm:$0xff]
        %v5406 = vld [vmem:[#allocation6 + $0x678] sm:$0xff]
        %v5407 = vld [vmem:[#allocation6 + $0x680] sm:$0xff]
        %v5408 = vld [vmem:[#allocation6 + $0x688] sm:$0xff]
        %v5409 = vld [vmem:[#allocation6 + $0x690] sm:$0xff]
        %v5410 = vld [vmem:[#allocation6 + $0x698] sm:$0xff]
        %v5411 = vld [vmem:[#allocation6 + $0x6a0] sm:$0xff]
        %v5412 = vld [vmem:[#allocation6 + $0x6a8] sm:$0xff]
        %v5413 = vld [vmem:[#allocation6 + $0x6b0] sm:$0xff]
        %v5414 = vld [vmem:[#allocation6 + $0x6b8] sm:$0xff]
        %v5415 = vld [vmem:[#allocation6 + $0x6c0] sm:$0xff]
        %v5416 = vld [vmem:[#allocation6 + $0x6c8] sm:$0xff]
        %v5417 = vld [vmem:[#allocation6 + $0x6d0] sm:$0xff]
        %v5418 = vld [vmem:[#allocation6 + $0x6d8] sm:$0xff]
        %v5419 = vld [vmem:[#allocation6 + $0x6e0] sm:$0xff]
        %v5420 = vld [vmem:[#allocation6 + $0x6e8] sm:$0xff]
        %v5421 = vld [vmem:[#allocation6 + $0x6f0] sm:$0xff]
        %v5422 = vld [vmem:[#allocation6 + $0x6f8] sm:$0xff]
        %v5423 = vld [vmem:[#allocation6 + $0x700] sm:$0xff]
        %v5424 = vld [vmem:[#allocation6 + $0x708] sm:$0xff]
        %v5425 = vld [vmem:[#allocation6 + $0x710] sm:$0xff]
        %v5426 = vld [vmem:[#allocation6 + $0x718] sm:$0xff]
        %v5427 = vld [vmem:[#allocation6 + $0x720] sm:$0xff]
        %v5428 = vld [vmem:[#allocation6 + $0x728] sm:$0xff]
        %v5429 = vld [vmem:[#allocation6 + $0x730] sm:$0xff]
        %v5430 = vld [vmem:[#allocation6 + $0x738] sm:$0xff]
        %v5431 = vld [vmem:[#allocation6 + $0x740] sm:$0xff]
        %v5432 = vld [vmem:[#allocation6 + $0x748] sm:$0xff]
        %v5433 = vld [vmem:[#allocation6 + $0x750] sm:$0xff]
        %v5434 = vld [vmem:[#allocation6 + $0x758] sm:$0xff]
        %v5435 = vld [vmem:[#allocation6 + $0x760] sm:$0xff]
        %v5436 = vld [vmem:[#allocation6 + $0x768] sm:$0xff]
        %v5437 = vld [vmem:[#allocation6 + $0x770] sm:$0xff]
        %v5438 = vld [vmem:[#allocation6 + $0x778] sm:$0xff]
        %v5439 = vld [vmem:[#allocation6 + $0x780] sm:$0xff]
        %v5440 = vld [vmem:[#allocation6 + $0x788] sm:$0xff]
        %v5441 = vld [vmem:[#allocation6 + $0x790] sm:$0xff]
        %v5442 = vld [vmem:[#allocation6 + $0x798] sm:$0xff]
        %v5443 = vld [vmem:[#allocation6 + $0x7a0] sm:$0xff]
        %v5444 = vld [vmem:[#allocation6 + $0x7a8] sm:$0xff]
        %v5445 = vld [vmem:[#allocation6 + $0x7b0] sm:$0xff]
        %v5446 = vld [vmem:[#allocation6 + $0x7b8] sm:$0xff]
        %v5447 = vld [vmem:[#allocation6 + $0x7c0] sm:$0xff]
        %v5448 = vld [vmem:[#allocation6 + $0x7c8] sm:$0xff]
        %v5449 = vld [vmem:[#allocation6 + $0x7d0] sm:$0xff]
        %v5450 = vld [vmem:[#allocation6 + $0x7d8] sm:$0xff]
        %v5451 = vld [vmem:[#allocation6 + $0x7e0] sm:$0xff]
        %v5452 = vld [vmem:[#allocation6 + $0x7e8] sm:$0xff]
        %v5453 = vld [vmem:[#allocation6 + $0x7f0] sm:$0xff]
        %v5454 = vld [vmem:[#allocation6 + $0x7f8] sm:$0xff]
        %v5455 = vld [vmem:[#allocation6 + $0x800] sm:$0xff]
        %v5456 = vld [vmem:[#allocation6 + $0x808] sm:$0xff]
        %v5457 = vld [vmem:[#allocation6 + $0x810] sm:$0xff]
        %v5458 = vld [vmem:[#allocation6 + $0x818] sm:$0xff]
        %v5459 = vld [vmem:[#allocation6 + $0x820] sm:$0xff]
        %v5460 = vld [vmem:[#allocation6 + $0x828] sm:$0xff]
        %v5461 = vld [vmem:[#allocation6 + $0x830] sm:$0xff]
        %v5462 = vld [vmem:[#allocation6 + $0x838] sm:$0xff]
        %v5463 = vld [vmem:[#allocation6 + $0x840] sm:$0xff]
        %v5464 = vld [vmem:[#allocation6 + $0x848] sm:$0xff]
        %v5465 = vld [vmem:[#allocation6 + $0x850] sm:$0xff]
        %v5466 = vld [vmem:[#allocation6 + $0x858] sm:$0xff]
        %v5467 = vld [vmem:[#allocation6 + $0x860] sm:$0xff]
        %v5468 = vld [vmem:[#allocation6 + $0x868] sm:$0xff]
        %v5469 = vld [vmem:[#allocation6 + $0x870] sm:$0xff]
        %v5470 = vld [vmem:[#allocation6 + $0x878] sm:$0xff]
        %v5471 = vld [vmem:[#allocation6 + $0x880] sm:$0xff]
        %v5472 = vld [vmem:[#allocation6 + $0x888] sm:$0xff]
        %v5473 = vld [vmem:[#allocation6 + $0x890] sm:$0xff]
        %v5474 = vld [vmem:[#allocation6 + $0x898] sm:$0xff]
        %v5475 = vld [vmem:[#allocation6 + $0x8a0] sm:$0xff]
        %v5476 = vld [vmem:[#allocation6 + $0x8a8] sm:$0xff]
        %v5477 = vld [vmem:[#allocation6 + $0x8b0] sm:$0xff]
        %v5478 = vld [vmem:[#allocation6 + $0x8b8] sm:$0xff]
        %v5479 = vld [vmem:[#allocation6 + $0x8c0] sm:$0xff]
        %v5480 = vld [vmem:[#allocation6 + $0x8c8] sm:$0xff]
        %v5481 = vld [vmem:[#allocation6 + $0x8d0] sm:$0xff]
        %v5482 = vld [vmem:[#allocation6 + $0x8d8] sm:$0xff]
        %v5483 = vld [vmem:[#allocation6 + $0x8e0] sm:$0xff]
        %v5484 = vld [vmem:[#allocation6 + $0x8e8] sm:$0xff]
        %v5485 = vld [vmem:[#allocation6 + $0x8f0] sm:$0xff]
        %v5486 = vld [vmem:[#allocation6 + $0x8f8] sm:$0xff]
        %v5487 = vld [vmem:[#allocation6 + $0x900] sm:$0xff]
        %v5488 = vld [vmem:[#allocation6 + $0x908] sm:$0xff]
        %v5489 = vld [vmem:[#allocation6 + $0x910] sm:$0xff]
        %v5490 = vld [vmem:[#allocation6 + $0x918] sm:$0xff]
        %v5491 = vld [vmem:[#allocation6 + $0x920] sm:$0xff]
        %v5492 = vld [vmem:[#allocation6 + $0x928] sm:$0xff]
        %v5493 = vld [vmem:[#allocation6 + $0x930] sm:$0xff]
        %v5494 = vld [vmem:[#allocation6 + $0x938] sm:$0xff]
        %v5495 = vld [vmem:[#allocation6 + $0x940] sm:$0xff]
        %v5496 = vld [vmem:[#allocation6 + $0x948] sm:$0xff]
        %v5497 = vld [vmem:[#allocation6 + $0x950] sm:$0xff]
        %v5498 = vld [vmem:[#allocation6 + $0x958] sm:$0xff]
        %v5499 = vld [vmem:[#allocation6 + $0x960] sm:$0xff]
        %v5500 = vld [vmem:[#allocation6 + $0x968] sm:$0xff]
        %v5501 = vld [vmem:[#allocation6 + $0x970] sm:$0xff]
        %v5502 = vld [vmem:[#allocation6 + $0x978] sm:$0xff]
        %v5503 = vld [vmem:[#allocation6 + $0x980] sm:$0xff]
        %v5504 = vld [vmem:[#allocation6 + $0x988] sm:$0xff]
        %v5505 = vld [vmem:[#allocation6 + $0x990] sm:$0xff]
        %v5506 = vld [vmem:[#allocation6 + $0x998] sm:$0xff]
        %v5507 = vld [vmem:[#allocation6 + $0x9a0] sm:$0xff]
        %v5508 = vld [vmem:[#allocation6 + $0x9a8] sm:$0xff]
        %v5509 = vld [vmem:[#allocation6 + $0x9b0] sm:$0xff]
        %v5510 = vld [vmem:[#allocation6 + $0x9b8] sm:$0xff]
        %v5511 = vld [vmem:[#allocation6 + $0x9c0] sm:$0xff]
        %v5512 = vld [vmem:[#allocation6 + $0x9c8] sm:$0xff]
        %v5513 = vld [vmem:[#allocation6 + $0x9d0] sm:$0xff]
        %v5514 = vld [vmem:[#allocation6 + $0x9d8] sm:$0xff]
        %v5515 = vld [vmem:[#allocation6 + $0x9e0] sm:$0xff]
        %v5516 = vld [vmem:[#allocation6 + $0x9e8] sm:$0xff]
        %v5517 = vld [vmem:[#allocation6 + $0x9f0] sm:$0xff]
        %v5518 = vld [vmem:[#allocation6 + $0x9f8] sm:$0xff]
        %v5839 = vunpack.c.l.b16 %v5199
        %v5840 = vunpack.c.h.b16 %v5199
        %v5841 = vunpack.c.l.b16 %v5200
        %v5842 = vunpack.c.h.b16 %v5200
        %v5843 = vunpack.c.l.b16 %v5201
        %v5844 = vunpack.c.h.b16 %v5201
        %v5845 = vunpack.c.l.b16 %v5202
        %v5846 = vunpack.c.h.b16 %v5202
        %v5847 = vunpack.c.l.b16 %v5203
        %v5848 = vunpack.c.h.b16 %v5203
        %v5849 = vunpack.c.l.b16 %v5204
        %v5850 = vunpack.c.h.b16 %v5204
        %v5851 = vunpack.c.l.b16 %v5205
        %v5852 = vunpack.c.h.b16 %v5205
        %v5853 = vunpack.c.l.b16 %v5206
        %v5854 = vunpack.c.h.b16 %v5206
        %v5855 = vunpack.c.l.b16 %v5207
        %v5856 = vunpack.c.h.b16 %v5207
        %v5857 = vunpack.c.l.b16 %v5208
        %v5858 = vunpack.c.h.b16 %v5208
        %v5859 = vunpack.c.l.b16 %v5209
        %v5860 = vunpack.c.h.b16 %v5209
        %v5861 = vunpack.c.l.b16 %v5210
        %v5862 = vunpack.c.h.b16 %v5210
        %v5863 = vunpack.c.l.b16 %v5211
        %v5864 = vunpack.c.h.b16 %v5211
        %v5865 = vunpack.c.l.b16 %v5212
        %v5866 = vunpack.c.h.b16 %v5212
        %v5867 = vunpack.c.l.b16 %v5213
        %v5868 = vunpack.c.h.b16 %v5213
        %v5869 = vunpack.c.l.b16 %v5214
        %v5870 = vunpack.c.h.b16 %v5214
        %v5871 = vunpack.c.l.b16 %v5215
        %v5872 = vunpack.c.h.b16 %v5215
        %v5873 = vunpack.c.l.b16 %v5216
        %v5874 = vunpack.c.h.b16 %v5216
        %v5875 = vunpack.c.l.b16 %v5217
        %v5876 = vunpack.c.h.b16 %v5217
        %v5877 = vunpack.c.l.b16 %v5218
        %v5878 = vunpack.c.h.b16 %v5218
        %v5879 = vunpack.c.l.b16 %v5219
        %v5880 = vunpack.c.h.b16 %v5219
        %v5881 = vunpack.c.l.b16 %v5220
        %v5882 = vunpack.c.h.b16 %v5220
        %v5883 = vunpack.c.l.b16 %v5221
        %v5884 = vunpack.c.h.b16 %v5221
        %v5885 = vunpack.c.l.b16 %v5222
        %v5886 = vunpack.c.h.b16 %v5222
        %v5887 = vunpack.c.l.b16 %v5223
        %v5888 = vunpack.c.h.b16 %v5223
        %v5889 = vunpack.c.l.b16 %v5224
        %v5890 = vunpack.c.h.b16 %v5224
        %v5891 = vunpack.c.l.b16 %v5225
        %v5892 = vunpack.c.h.b16 %v5225
        %v5893 = vunpack.c.l.b16 %v5226
        %v5894 = vunpack.c.h.b16 %v5226
        %v5895 = vunpack.c.l.b16 %v5227
        %v5896 = vunpack.c.h.b16 %v5227
        %v5897 = vunpack.c.l.b16 %v5228
        %v5898 = vunpack.c.h.b16 %v5228
        %v5899 = vunpack.c.l.b16 %v5229
        %v5900 = vunpack.c.h.b16 %v5229
        %v5901 = vunpack.c.l.b16 %v5230
        %v5902 = vunpack.c.h.b16 %v5230
        %v5903 = vunpack.c.l.b16 %v5231
        %v5904 = vunpack.c.h.b16 %v5231
        %v5905 = vunpack.c.l.b16 %v5232
        %v5906 = vunpack.c.h.b16 %v5232
        %v5907 = vunpack.c.l.b16 %v5233
        %v5908 = vunpack.c.h.b16 %v5233
        %v5909 = vunpack.c.l.b16 %v5234
        %v5910 = vunpack.c.h.b16 %v5234
        %v5911 = vunpack.c.l.b16 %v5235
        %v5912 = vunpack.c.h.b16 %v5235
        %v5913 = vunpack.c.l.b16 %v5236
        %v5914 = vunpack.c.h.b16 %v5236
        %v5915 = vunpack.c.l.b16 %v5237
        %v5916 = vunpack.c.h.b16 %v5237
        %v5917 = vunpack.c.l.b16 %v5238
        %v5918 = vunpack.c.h.b16 %v5238
        %v5919 = vunpack.c.l.b16 %v5239
        %v5920 = vunpack.c.h.b16 %v5239
        %v5921 = vunpack.c.l.b16 %v5240
        %v5922 = vunpack.c.h.b16 %v5240
        %v5923 = vunpack.c.l.b16 %v5241
        %v5924 = vunpack.c.h.b16 %v5241
        %v5925 = vunpack.c.l.b16 %v5242
        %v5926 = vunpack.c.h.b16 %v5242
        %v5927 = vunpack.c.l.b16 %v5243
        %v5928 = vunpack.c.h.b16 %v5243
        %v5929 = vunpack.c.l.b16 %v5244
        %v5930 = vunpack.c.h.b16 %v5244
        %v5931 = vunpack.c.l.b16 %v5245
        %v5932 = vunpack.c.h.b16 %v5245
        %v5933 = vunpack.c.l.b16 %v5246
        %v5934 = vunpack.c.h.b16 %v5246
        %v5935 = vunpack.c.l.b16 %v5247
        %v5936 = vunpack.c.h.b16 %v5247
        %v5937 = vunpack.c.l.b16 %v5248
        %v5938 = vunpack.c.h.b16 %v5248
        %v5939 = vunpack.c.l.b16 %v5249
        %v5940 = vunpack.c.h.b16 %v5249
        %v5941 = vunpack.c.l.b16 %v5250
        %v5942 = vunpack.c.h.b16 %v5250
        %v5943 = vunpack.c.l.b16 %v5251
        %v5944 = vunpack.c.h.b16 %v5251
        %v5945 = vunpack.c.l.b16 %v5252
        %v5946 = vunpack.c.h.b16 %v5252
        %v5947 = vunpack.c.l.b16 %v5253
        %v5948 = vunpack.c.h.b16 %v5253
        %v5949 = vunpack.c.l.b16 %v5254
        %v5950 = vunpack.c.h.b16 %v5254
        %v5951 = vunpack.c.l.b16 %v5255
        %v5952 = vunpack.c.h.b16 %v5255
        %v5953 = vunpack.c.l.b16 %v5256
        %v5954 = vunpack.c.h.b16 %v5256
        %v5955 = vunpack.c.l.b16 %v5257
        %v5956 = vunpack.c.h.b16 %v5257
        %v5957 = vunpack.c.l.b16 %v5258
        %v5958 = vunpack.c.h.b16 %v5258
        %v5959 = vunpack.c.l.b16 %v5259
        %v5960 = vunpack.c.h.b16 %v5259
        %v5961 = vunpack.c.l.b16 %v5260
        %v5962 = vunpack.c.h.b16 %v5260
        %v5963 = vunpack.c.l.b16 %v5261
        %v5964 = vunpack.c.h.b16 %v5261
        %v5965 = vunpack.c.l.b16 %v5262
        %v5966 = vunpack.c.h.b16 %v5262
        %v5967 = vunpack.c.l.b16 %v5263
        %v5968 = vunpack.c.h.b16 %v5263
        %v5969 = vunpack.c.l.b16 %v5264
        %v5970 = vunpack.c.h.b16 %v5264
        %v5971 = vunpack.c.l.b16 %v5265
        %v5972 = vunpack.c.h.b16 %v5265
        %v5973 = vunpack.c.l.b16 %v5266
        %v5974 = vunpack.c.h.b16 %v5266
        %v5975 = vunpack.c.l.b16 %v5267
        %v5976 = vunpack.c.h.b16 %v5267
        %v5977 = vunpack.c.l.b16 %v5268
        %v5978 = vunpack.c.h.b16 %v5268
        %v5979 = vunpack.c.l.b16 %v5269
        %v5980 = vunpack.c.h.b16 %v5269
        %v5981 = vunpack.c.l.b16 %v5270
        %v5982 = vunpack.c.h.b16 %v5270
        %v5983 = vunpack.c.l.b16 %v5271
        %v5984 = vunpack.c.h.b16 %v5271
        %v5985 = vunpack.c.l.b16 %v5272
        %v5986 = vunpack.c.h.b16 %v5272
        %v5987 = vunpack.c.l.b16 %v5273
        %v5988 = vunpack.c.h.b16 %v5273
        %v5989 = vunpack.c.l.b16 %v5274
        %v5990 = vunpack.c.h.b16 %v5274
        %v5991 = vunpack.c.l.b16 %v5275
        %v5992 = vunpack.c.h.b16 %v5275
        %v5993 = vunpack.c.l.b16 %v5276
        %v5994 = vunpack.c.h.b16 %v5276
        %v5995 = vunpack.c.l.b16 %v5277
        %v5996 = vunpack.c.h.b16 %v5277
        %v5997 = vunpack.c.l.b16 %v5278
        %v5998 = vunpack.c.h.b16 %v5278
        %v5999 = vunpack.c.l.b16 %v5279
        %v6000 = vunpack.c.h.b16 %v5279
        %v6001 = vunpack.c.l.b16 %v5280
        %v6002 = vunpack.c.h.b16 %v5280
        %v6003 = vunpack.c.l.b16 %v5281
        %v6004 = vunpack.c.h.b16 %v5281
        %v6005 = vunpack.c.l.b16 %v5282
        %v6006 = vunpack.c.h.b16 %v5282
        %v6007 = vunpack.c.l.b16 %v5283
        %v6008 = vunpack.c.h.b16 %v5283
        %v6009 = vunpack.c.l.b16 %v5284
        %v6010 = vunpack.c.h.b16 %v5284
        %v6011 = vunpack.c.l.b16 %v5285
        %v6012 = vunpack.c.h.b16 %v5285
        %v6013 = vunpack.c.l.b16 %v5286
        %v6014 = vunpack.c.h.b16 %v5286
        %v6015 = vunpack.c.l.b16 %v5287
        %v6016 = vunpack.c.h.b16 %v5287
        %v6017 = vunpack.c.l.b16 %v5288
        %v6018 = vunpack.c.h.b16 %v5288
        %v6019 = vunpack.c.l.b16 %v5289
        %v6020 = vunpack.c.h.b16 %v5289
        %v6021 = vunpack.c.l.b16 %v5290
        %v6022 = vunpack.c.h.b16 %v5290
        %v6023 = vunpack.c.l.b16 %v5291
        %v6024 = vunpack.c.h.b16 %v5291
        %v6025 = vunpack.c.l.b16 %v5292
        %v6026 = vunpack.c.h.b16 %v5292
        %v6027 = vunpack.c.l.b16 %v5293
        %v6028 = vunpack.c.h.b16 %v5293
        %v6029 = vunpack.c.l.b16 %v5294
        %v6030 = vunpack.c.h.b16 %v5294
        %v6031 = vunpack.c.l.b16 %v5295
        %v6032 = vunpack.c.h.b16 %v5295
        %v6033 = vunpack.c.l.b16 %v5296
        %v6034 = vunpack.c.h.b16 %v5296
        %v6035 = vunpack.c.l.b16 %v5297
        %v6036 = vunpack.c.h.b16 %v5297
        %v6037 = vunpack.c.l.b16 %v5298
        %v6038 = vunpack.c.h.b16 %v5298
        %v6039 = vunpack.c.l.b16 %v5299
        %v6040 = vunpack.c.h.b16 %v5299
        %v6041 = vunpack.c.l.b16 %v5300
        %v6042 = vunpack.c.h.b16 %v5300
        %v6043 = vunpack.c.l.b16 %v5301
        %v6044 = vunpack.c.h.b16 %v5301
        %v6045 = vunpack.c.l.b16 %v5302
        %v6046 = vunpack.c.h.b16 %v5302
        %v6047 = vunpack.c.l.b16 %v5303
        %v6048 = vunpack.c.h.b16 %v5303
        %v6049 = vunpack.c.l.b16 %v5304
        %v6050 = vunpack.c.h.b16 %v5304
        %v6051 = vunpack.c.l.b16 %v5305
        %v6052 = vunpack.c.h.b16 %v5305
        %v6053 = vunpack.c.l.b16 %v5306
        %v6054 = vunpack.c.h.b16 %v5306
        %v6055 = vunpack.c.l.b16 %v5307
        %v6056 = vunpack.c.h.b16 %v5307
        %v6057 = vunpack.c.l.b16 %v5308
        %v6058 = vunpack.c.h.b16 %v5308
        %v6059 = vunpack.c.l.b16 %v5309
        %v6060 = vunpack.c.h.b16 %v5309
        %v6061 = vunpack.c.l.b16 %v5310
        %v6062 = vunpack.c.h.b16 %v5310
        %v6063 = vunpack.c.l.b16 %v5311
        %v6064 = vunpack.c.h.b16 %v5311
        %v6065 = vunpack.c.l.b16 %v5312
        %v6066 = vunpack.c.h.b16 %v5312
        %v6067 = vunpack.c.l.b16 %v5313
        %v6068 = vunpack.c.h.b16 %v5313
        %v6069 = vunpack.c.l.b16 %v5314
        %v6070 = vunpack.c.h.b16 %v5314
        %v6071 = vunpack.c.l.b16 %v5315
        %v6072 = vunpack.c.h.b16 %v5315
        %v6073 = vunpack.c.l.b16 %v5316
        %v6074 = vunpack.c.h.b16 %v5316
        %v6075 = vunpack.c.l.b16 %v5317
        %v6076 = vunpack.c.h.b16 %v5317
        %v6077 = vunpack.c.l.b16 %v5318
        %v6078 = vunpack.c.h.b16 %v5318
        %v6079 = vunpack.c.l.b16 %v5319
        %v6080 = vunpack.c.h.b16 %v5319
        %v6081 = vunpack.c.l.b16 %v5320
        %v6082 = vunpack.c.h.b16 %v5320
        %v6083 = vunpack.c.l.b16 %v5321
        %v6084 = vunpack.c.h.b16 %v5321
        %v6085 = vunpack.c.l.b16 %v5322
        %v6086 = vunpack.c.h.b16 %v5322
        %v6087 = vunpack.c.l.b16 %v5323
        %v6088 = vunpack.c.h.b16 %v5323
        %v6089 = vunpack.c.l.b16 %v5324
        %v6090 = vunpack.c.h.b16 %v5324
        %v6091 = vunpack.c.l.b16 %v5325
        %v6092 = vunpack.c.h.b16 %v5325
        %v6093 = vunpack.c.l.b16 %v5326
        %v6094 = vunpack.c.h.b16 %v5326
        %v6095 = vunpack.c.l.b16 %v5327
        %v6096 = vunpack.c.h.b16 %v5327
        %v6097 = vunpack.c.l.b16 %v5328
        %v6098 = vunpack.c.h.b16 %v5328
        %v6099 = vunpack.c.l.b16 %v5329
        %v6100 = vunpack.c.h.b16 %v5329
        %v6101 = vunpack.c.l.b16 %v5330
        %v6102 = vunpack.c.h.b16 %v5330
        %v6103 = vunpack.c.l.b16 %v5331
        %v6104 = vunpack.c.h.b16 %v5331
        %v6105 = vunpack.c.l.b16 %v5332
        %v6106 = vunpack.c.h.b16 %v5332
        %v6107 = vunpack.c.l.b16 %v5333
        %v6108 = vunpack.c.h.b16 %v5333
        %v6109 = vunpack.c.l.b16 %v5334
        %v6110 = vunpack.c.h.b16 %v5334
        %v6111 = vunpack.c.l.b16 %v5335
        %v6112 = vunpack.c.h.b16 %v5335
        %v6113 = vunpack.c.l.b16 %v5336
        %v6114 = vunpack.c.h.b16 %v5336
        %v6115 = vunpack.c.l.b16 %v5337
        %v6116 = vunpack.c.h.b16 %v5337
        %v6117 = vunpack.c.l.b16 %v5338
        %v6118 = vunpack.c.h.b16 %v5338
        %v6119 = vunpack.c.l.b16 %v5339
        %v6120 = vunpack.c.h.b16 %v5339
        %v6121 = vunpack.c.l.b16 %v5340
        %v6122 = vunpack.c.h.b16 %v5340
        %v6123 = vunpack.c.l.b16 %v5341
        %v6124 = vunpack.c.h.b16 %v5341
        %v6125 = vunpack.c.l.b16 %v5342
        %v6126 = vunpack.c.h.b16 %v5342
        %v6127 = vunpack.c.l.b16 %v5343
        %v6128 = vunpack.c.h.b16 %v5343
        %v6129 = vunpack.c.l.b16 %v5344
        %v6130 = vunpack.c.h.b16 %v5344
        %v6131 = vunpack.c.l.b16 %v5345
        %v6132 = vunpack.c.h.b16 %v5345
        %v6133 = vunpack.c.l.b16 %v5346
        %v6134 = vunpack.c.h.b16 %v5346
        %v6135 = vunpack.c.l.b16 %v5347
        %v6136 = vunpack.c.h.b16 %v5347
        %v6137 = vunpack.c.l.b16 %v5348
        %v6138 = vunpack.c.h.b16 %v5348
        %v6139 = vunpack.c.l.b16 %v5349
        %v6140 = vunpack.c.h.b16 %v5349
        %v6141 = vunpack.c.l.b16 %v5350
        %v6142 = vunpack.c.h.b16 %v5350
        %v6143 = vunpack.c.l.b16 %v5351
        %v6144 = vunpack.c.h.b16 %v5351
        %v6145 = vunpack.c.l.b16 %v5352
        %v6146 = vunpack.c.h.b16 %v5352
        %v6147 = vunpack.c.l.b16 %v5353
        %v6148 = vunpack.c.h.b16 %v5353
        %v6149 = vunpack.c.l.b16 %v5354
        %v6150 = vunpack.c.h.b16 %v5354
        %v6151 = vunpack.c.l.b16 %v5355
        %v6152 = vunpack.c.h.b16 %v5355
        %v6153 = vunpack.c.l.b16 %v5356
        %v6154 = vunpack.c.h.b16 %v5356
        %v6155 = vunpack.c.l.b16 %v5357
        %v6156 = vunpack.c.h.b16 %v5357
        %v6157 = vunpack.c.l.b16 %v5358
        %v6158 = vunpack.c.h.b16 %v5358
        %v6159 = vunpack.c.l.b16 %v5359
        %v6160 = vunpack.c.h.b16 %v5359
        %v6161 = vunpack.c.l.b16 %v5360
        %v6162 = vunpack.c.h.b16 %v5360
        %v6163 = vunpack.c.l.b16 %v5361
        %v6164 = vunpack.c.h.b16 %v5361
        %v6165 = vunpack.c.l.b16 %v5362
        %v6166 = vunpack.c.h.b16 %v5362
        %v6167 = vunpack.c.l.b16 %v5363
        %v6168 = vunpack.c.h.b16 %v5363
        %v6169 = vunpack.c.l.b16 %v5364
        %v6170 = vunpack.c.h.b16 %v5364
        %v6171 = vunpack.c.l.b16 %v5365
        %v6172 = vunpack.c.h.b16 %v5365
        %v6173 = vunpack.c.l.b16 %v5366
        %v6174 = vunpack.c.h.b16 %v5366
        %v6175 = vunpack.c.l.b16 %v5367
        %v6176 = vunpack.c.h.b16 %v5367
        %v6177 = vunpack.c.l.b16 %v5368
        %v6178 = vunpack.c.h.b16 %v5368
        %v6179 = vunpack.c.l.b16 %v5369
        %v6180 = vunpack.c.h.b16 %v5369
        %v6181 = vunpack.c.l.b16 %v5370
        %v6182 = vunpack.c.h.b16 %v5370
        %v6183 = vunpack.c.l.b16 %v5371
        %v6184 = vunpack.c.h.b16 %v5371
        %v6185 = vunpack.c.l.b16 %v5372
        %v6186 = vunpack.c.h.b16 %v5372
        %v6187 = vunpack.c.l.b16 %v5373
        %v6188 = vunpack.c.h.b16 %v5373
        %v6189 = vunpack.c.l.b16 %v5374
        %v6190 = vunpack.c.h.b16 %v5374
        %v6191 = vunpack.c.l.b16 %v5375
        %v6192 = vunpack.c.h.b16 %v5375
        %v6193 = vunpack.c.l.b16 %v5376
        %v6194 = vunpack.c.h.b16 %v5376
        %v6195 = vunpack.c.l.b16 %v5377
        %v6196 = vunpack.c.h.b16 %v5377
        %v6197 = vunpack.c.l.b16 %v5378
        %v6198 = vunpack.c.h.b16 %v5378
        %v6199 = vunpack.c.l.b16 %v5379
        %v6200 = vunpack.c.h.b16 %v5379
        %v6201 = vunpack.c.l.b16 %v5380
        %v6202 = vunpack.c.h.b16 %v5380
        %v6203 = vunpack.c.l.b16 %v5381
        %v6204 = vunpack.c.h.b16 %v5381
        %v6205 = vunpack.c.l.b16 %v5382
        %v6206 = vunpack.c.h.b16 %v5382
        %v6207 = vunpack.c.l.b16 %v5383
        %v6208 = vunpack.c.h.b16 %v5383
        %v6209 = vunpack.c.l.b16 %v5384
        %v6210 = vunpack.c.h.b16 %v5384
        %v6211 = vunpack.c.l.b16 %v5385
        %v6212 = vunpack.c.h.b16 %v5385
        %v6213 = vunpack.c.l.b16 %v5386
        %v6214 = vunpack.c.h.b16 %v5386
        %v6215 = vunpack.c.l.b16 %v5387
        %v6216 = vunpack.c.h.b16 %v5387
        %v6217 = vunpack.c.l.b16 %v5388
        %v6218 = vunpack.c.h.b16 %v5388
        %v6219 = vunpack.c.l.b16 %v5389
        %v6220 = vunpack.c.h.b16 %v5389
        %v6221 = vunpack.c.l.b16 %v5390
        %v6222 = vunpack.c.h.b16 %v5390
        %v6223 = vunpack.c.l.b16 %v5391
        %v6224 = vunpack.c.h.b16 %v5391
        %v6225 = vunpack.c.l.b16 %v5392
        %v6226 = vunpack.c.h.b16 %v5392
        %v6227 = vunpack.c.l.b16 %v5393
        %v6228 = vunpack.c.h.b16 %v5393
        %v6229 = vunpack.c.l.b16 %v5394
        %v6230 = vunpack.c.h.b16 %v5394
        %v6231 = vunpack.c.l.b16 %v5395
        %v6232 = vunpack.c.h.b16 %v5395
        %v6233 = vunpack.c.l.b16 %v5396
        %v6234 = vunpack.c.h.b16 %v5396
        %v6235 = vunpack.c.l.b16 %v5397
        %v6236 = vunpack.c.h.b16 %v5397
        %v6237 = vunpack.c.l.b16 %v5398
        %v6238 = vunpack.c.h.b16 %v5398
        %v6239 = vunpack.c.l.b16 %v5399
        %v6240 = vunpack.c.h.b16 %v5399
        %v6241 = vunpack.c.l.b16 %v5400
        %v6242 = vunpack.c.h.b16 %v5400
        %v6243 = vunpack.c.l.b16 %v5401
        %v6244 = vunpack.c.h.b16 %v5401
        %v6245 = vunpack.c.l.b16 %v5402
        %v6246 = vunpack.c.h.b16 %v5402
        %v6247 = vunpack.c.l.b16 %v5403
        %v6248 = vunpack.c.h.b16 %v5403
        %v6249 = vunpack.c.l.b16 %v5404
        %v6250 = vunpack.c.h.b16 %v5404
        %v6251 = vunpack.c.l.b16 %v5405
        %v6252 = vunpack.c.h.b16 %v5405
        %v6253 = vunpack.c.l.b16 %v5406
        %v6254 = vunpack.c.h.b16 %v5406
        %v6255 = vunpack.c.l.b16 %v5407
        %v6256 = vunpack.c.h.b16 %v5407
        %v6257 = vunpack.c.l.b16 %v5408
        %v6258 = vunpack.c.h.b16 %v5408
        %v6259 = vunpack.c.l.b16 %v5409
        %v6260 = vunpack.c.h.b16 %v5409
        %v6261 = vunpack.c.l.b16 %v5410
        %v6262 = vunpack.c.h.b16 %v5410
        %v6263 = vunpack.c.l.b16 %v5411
        %v6264 = vunpack.c.h.b16 %v5411
        %v6265 = vunpack.c.l.b16 %v5412
        %v6266 = vunpack.c.h.b16 %v5412
        %v6267 = vunpack.c.l.b16 %v5413
        %v6268 = vunpack.c.h.b16 %v5413
        %v6269 = vunpack.c.l.b16 %v5414
        %v6270 = vunpack.c.h.b16 %v5414
        %v6271 = vunpack.c.l.b16 %v5415
        %v6272 = vunpack.c.h.b16 %v5415
        %v6273 = vunpack.c.l.b16 %v5416
        %v6274 = vunpack.c.h.b16 %v5416
        %v6275 = vunpack.c.l.b16 %v5417
        %v6276 = vunpack.c.h.b16 %v5417
        %v6277 = vunpack.c.l.b16 %v5418
        %v6278 = vunpack.c.h.b16 %v5418
        %v6279 = vunpack.c.l.b16 %v5419
        %v6280 = vunpack.c.h.b16 %v5419
        %v6281 = vunpack.c.l.b16 %v5420
        %v6282 = vunpack.c.h.b16 %v5420
        %v6283 = vunpack.c.l.b16 %v5421
        %v6284 = vunpack.c.h.b16 %v5421
        %v6285 = vunpack.c.l.b16 %v5422
        %v6286 = vunpack.c.h.b16 %v5422
        %v6287 = vunpack.c.l.b16 %v5423
        %v6288 = vunpack.c.h.b16 %v5423
        %v6289 = vunpack.c.l.b16 %v5424
        %v6290 = vunpack.c.h.b16 %v5424
        %v6291 = vunpack.c.l.b16 %v5425
        %v6292 = vunpack.c.h.b16 %v5425
        %v6293 = vunpack.c.l.b16 %v5426
        %v6294 = vunpack.c.h.b16 %v5426
        %v6295 = vunpack.c.l.b16 %v5427
        %v6296 = vunpack.c.h.b16 %v5427
        %v6297 = vunpack.c.l.b16 %v5428
        %v6298 = vunpack.c.h.b16 %v5428
        %v6299 = vunpack.c.l.b16 %v5429
        %v6300 = vunpack.c.h.b16 %v5429
        %v6301 = vunpack.c.l.b16 %v5430
        %v6302 = vunpack.c.h.b16 %v5430
        %v6303 = vunpack.c.l.b16 %v5431
        %v6304 = vunpack.c.h.b16 %v5431
        %v6305 = vunpack.c.l.b16 %v5432
        %v6306 = vunpack.c.h.b16 %v5432
        %v6307 = vunpack.c.l.b16 %v5433
        %v6308 = vunpack.c.h.b16 %v5433
        %v6309 = vunpack.c.l.b16 %v5434
        %v6310 = vunpack.c.h.b16 %v5434
        %v6311 = vunpack.c.l.b16 %v5435
        %v6312 = vunpack.c.h.b16 %v5435
        %v6313 = vunpack.c.l.b16 %v5436
        %v6314 = vunpack.c.h.b16 %v5436
        %v6315 = vunpack.c.l.b16 %v5437
        %v6316 = vunpack.c.h.b16 %v5437
        %v6317 = vunpack.c.l.b16 %v5438
        %v6318 = vunpack.c.h.b16 %v5438
        %v6319 = vunpack.c.l.b16 %v5439
        %v6320 = vunpack.c.h.b16 %v5439
        %v6321 = vunpack.c.l.b16 %v5440
        %v6322 = vunpack.c.h.b16 %v5440
        %v6323 = vunpack.c.l.b16 %v5441
        %v6324 = vunpack.c.h.b16 %v5441
        %v6325 = vunpack.c.l.b16 %v5442
        %v6326 = vunpack.c.h.b16 %v5442
        %v6327 = vunpack.c.l.b16 %v5443
        %v6328 = vunpack.c.h.b16 %v5443
        %v6329 = vunpack.c.l.b16 %v5444
        %v6330 = vunpack.c.h.b16 %v5444
        %v6331 = vunpack.c.l.b16 %v5445
        %v6332 = vunpack.c.h.b16 %v5445
        %v6333 = vunpack.c.l.b16 %v5446
        %v6334 = vunpack.c.h.b16 %v5446
        %v6335 = vunpack.c.l.b16 %v5447
        %v6336 = vunpack.c.h.b16 %v5447
        %v6337 = vunpack.c.l.b16 %v5448
        %v6338 = vunpack.c.h.b16 %v5448
        %v6339 = vunpack.c.l.b16 %v5449
        %v6340 = vunpack.c.h.b16 %v5449
        %v6341 = vunpack.c.l.b16 %v5450
        %v6342 = vunpack.c.h.b16 %v5450
        %v6343 = vunpack.c.l.b16 %v5451
        %v6344 = vunpack.c.h.b16 %v5451
        %v6345 = vunpack.c.l.b16 %v5452
        %v6346 = vunpack.c.h.b16 %v5452
        %v6347 = vunpack.c.l.b16 %v5453
        %v6348 = vunpack.c.h.b16 %v5453
        %v6349 = vunpack.c.l.b16 %v5454
        %v6350 = vunpack.c.h.b16 %v5454
        %v6351 = vunpack.c.l.b16 %v5455
        %v6352 = vunpack.c.h.b16 %v5455
        %v6353 = vunpack.c.l.b16 %v5456
        %v6354 = vunpack.c.h.b16 %v5456
        %v6355 = vunpack.c.l.b16 %v5457
        %v6356 = vunpack.c.h.b16 %v5457
        %v6357 = vunpack.c.l.b16 %v5458
        %v6358 = vunpack.c.h.b16 %v5458
        %v6359 = vunpack.c.l.b16 %v5459
        %v6360 = vunpack.c.h.b16 %v5459
        %v6361 = vunpack.c.l.b16 %v5460
        %v6362 = vunpack.c.h.b16 %v5460
        %v6363 = vunpack.c.l.b16 %v5461
        %v6364 = vunpack.c.h.b16 %v5461
        %v6365 = vunpack.c.l.b16 %v5462
        %v6366 = vunpack.c.h.b16 %v5462
        %v6367 = vunpack.c.l.b16 %v5463
        %v6368 = vunpack.c.h.b16 %v5463
        %v6369 = vunpack.c.l.b16 %v5464
        %v6370 = vunpack.c.h.b16 %v5464
        %v6371 = vunpack.c.l.b16 %v5465
        %v6372 = vunpack.c.h.b16 %v5465
        %v6373 = vunpack.c.l.b16 %v5466
        %v6374 = vunpack.c.h.b16 %v5466
        %v6375 = vunpack.c.l.b16 %v5467
        %v6376 = vunpack.c.h.b16 %v5467
        %v6377 = vunpack.c.l.b16 %v5468
        %v6378 = vunpack.c.h.b16 %v5468
        %v6379 = vunpack.c.l.b16 %v5469
        %v6380 = vunpack.c.h.b16 %v5469
        %v6381 = vunpack.c.l.b16 %v5470
        %v6382 = vunpack.c.h.b16 %v5470
        %v6383 = vunpack.c.l.b16 %v5471
        %v6384 = vunpack.c.h.b16 %v5471
        %v6385 = vunpack.c.l.b16 %v5472
        %v6386 = vunpack.c.h.b16 %v5472
        %v6387 = vunpack.c.l.b16 %v5473
        %v6388 = vunpack.c.h.b16 %v5473
        %v6389 = vunpack.c.l.b16 %v5474
        %v6390 = vunpack.c.h.b16 %v5474
        %v6391 = vunpack.c.l.b16 %v5475
        %v6392 = vunpack.c.h.b16 %v5475
        %v6393 = vunpack.c.l.b16 %v5476
        %v6394 = vunpack.c.h.b16 %v5476
        %v6395 = vunpack.c.l.b16 %v5477
        %v6396 = vunpack.c.h.b16 %v5477
        %v6397 = vunpack.c.l.b16 %v5478
        %v6398 = vunpack.c.h.b16 %v5478
        %v6399 = vunpack.c.l.b16 %v5479
        %v6400 = vunpack.c.h.b16 %v5479
        %v6401 = vunpack.c.l.b16 %v5480
        %v6402 = vunpack.c.h.b16 %v5480
        %v6403 = vunpack.c.l.b16 %v5481
        %v6404 = vunpack.c.h.b16 %v5481
        %v6405 = vunpack.c.l.b16 %v5482
        %v6406 = vunpack.c.h.b16 %v5482
        %v6407 = vunpack.c.l.b16 %v5483
        %v6408 = vunpack.c.h.b16 %v5483
        %v6409 = vunpack.c.l.b16 %v5484
        %v6410 = vunpack.c.h.b16 %v5484
        %v6411 = vunpack.c.l.b16 %v5485
        %v6412 = vunpack.c.h.b16 %v5485
        %v6413 = vunpack.c.l.b16 %v5486
        %v6414 = vunpack.c.h.b16 %v5486
        %v6415 = vunpack.c.l.b16 %v5487
        %v6416 = vunpack.c.h.b16 %v5487
        %v6417 = vunpack.c.l.b16 %v5488
        %v6418 = vunpack.c.h.b16 %v5488
        %v6419 = vunpack.c.l.b16 %v5489
        %v6420 = vunpack.c.h.b16 %v5489
        %v6421 = vunpack.c.l.b16 %v5490
        %v6422 = vunpack.c.h.b16 %v5490
        %v6423 = vunpack.c.l.b16 %v5491
        %v6424 = vunpack.c.h.b16 %v5491
        %v6425 = vunpack.c.l.b16 %v5492
        %v6426 = vunpack.c.h.b16 %v5492
        %v6427 = vunpack.c.l.b16 %v5493
        %v6428 = vunpack.c.h.b16 %v5493
        %v6429 = vunpack.c.l.b16 %v5494
        %v6430 = vunpack.c.h.b16 %v5494
        %v6431 = vunpack.c.l.b16 %v5495
        %v6432 = vunpack.c.h.b16 %v5495
        %v6433 = vunpack.c.l.b16 %v5496
        %v6434 = vunpack.c.h.b16 %v5496
        %v6435 = vunpack.c.l.b16 %v5497
        %v6436 = vunpack.c.h.b16 %v5497
        %v6437 = vunpack.c.l.b16 %v5498
        %v6438 = vunpack.c.h.b16 %v5498
        %v6439 = vunpack.c.l.b16 %v5499
        %v6440 = vunpack.c.h.b16 %v5499
        %v6441 = vunpack.c.l.b16 %v5500
        %v6442 = vunpack.c.h.b16 %v5500
        %v6443 = vunpack.c.l.b16 %v5501
        %v6444 = vunpack.c.h.b16 %v5501
        %v6445 = vunpack.c.l.b16 %v5502
        %v6446 = vunpack.c.h.b16 %v5502
        %v6447 = vunpack.c.l.b16 %v5503
        %v6448 = vunpack.c.h.b16 %v5503
        %v6449 = vunpack.c.l.b16 %v5504
        %v6450 = vunpack.c.h.b16 %v5504
        %v6451 = vunpack.c.l.b16 %v5505
        %v6452 = vunpack.c.h.b16 %v5505
        %v6453 = vunpack.c.l.b16 %v5506
        %v6454 = vunpack.c.h.b16 %v5506
        %v6455 = vunpack.c.l.b16 %v5507
        %v6456 = vunpack.c.h.b16 %v5507
        %v6457 = vunpack.c.l.b16 %v5508
        %v6458 = vunpack.c.h.b16 %v5508
        %v6459 = vunpack.c.l.b16 %v5509
        %v6460 = vunpack.c.h.b16 %v5509
        %v6461 = vunpack.c.l.b16 %v5510
        %v6462 = vunpack.c.h.b16 %v5510
        %v6463 = vunpack.c.l.b16 %v5511
        %v6464 = vunpack.c.h.b16 %v5511
        %v6465 = vunpack.c.l.b16 %v5512
        %v6466 = vunpack.c.h.b16 %v5512
        %v6467 = vunpack.c.l.b16 %v5513
        %v6468 = vunpack.c.h.b16 %v5513
        %v6469 = vunpack.c.l.b16 %v5514
        %v6470 = vunpack.c.h.b16 %v5514
        %v6471 = vunpack.c.l.b16 %v5515
        %v6472 = vunpack.c.h.b16 %v5515
        %v6473 = vunpack.c.l.b16 %v5516
        %v6474 = vunpack.c.h.b16 %v5516
        %v6475 = vunpack.c.l.b16 %v5517
        %v6476 = vunpack.c.h.b16 %v5517
        %v6477 = vunpack.c.l.b16 %v5518
        %v6478 = vunpack.c.h.b16 %v5518
        %v6479 = vpack.c.b16 %v5843, %v5839
        %v6480 = vpack.c.b16 %v5844, %v5840
        %v6481 = vpack.c.b16 %v5845, %v5841
        %v6482 = vpack.c.b16 %v5846, %v5842
        %v6483 = vpack.c.b16 %v5851, %v5847
        %v6484 = vpack.c.b16 %v5852, %v5848
        %v6485 = vpack.c.b16 %v5853, %v5849
        %v6486 = vpack.c.b16 %v5854, %v5850
        %v6487 = vpack.c.b16 %v5859, %v5855
        %v6488 = vpack.c.b16 %v5860, %v5856
        %v6489 = vpack.c.b16 %v5861, %v5857
        %v6490 = vpack.c.b16 %v5862, %v5858
        %v6491 = vpack.c.b16 %v5867, %v5863
        %v6492 = vpack.c.b16 %v5868, %v5864
        %v6493 = vpack.c.b16 %v5869, %v5865
        %v6494 = vpack.c.b16 %v5870, %v5866
        %v6495 = vpack.c.b16 %v5875, %v5871
        %v6496 = vpack.c.b16 %v5876, %v5872
        %v6497 = vpack.c.b16 %v5877, %v5873
        %v6498 = vpack.c.b16 %v5878, %v5874
        %v6499 = vpack.c.b16 %v5883, %v5879
        %v6500 = vpack.c.b16 %v5884, %v5880
        %v6501 = vpack.c.b16 %v5885, %v5881
        %v6502 = vpack.c.b16 %v5886, %v5882
        %v6503 = vpack.c.b16 %v5891, %v5887
        %v6504 = vpack.c.b16 %v5892, %v5888
        %v6505 = vpack.c.b16 %v5893, %v5889
        %v6506 = vpack.c.b16 %v5894, %v5890
        %v6507 = vpack.c.b16 %v5899, %v5895
        %v6508 = vpack.c.b16 %v5900, %v5896
        %v6509 = vpack.c.b16 %v5901, %v5897
        %v6510 = vpack.c.b16 %v5902, %v5898
        %v6511 = vpack.c.b16 %v5907, %v5903
        %v6512 = vpack.c.b16 %v5908, %v5904
        %v6513 = vpack.c.b16 %v5909, %v5905
        %v6514 = vpack.c.b16 %v5910, %v5906
        %v6515 = vpack.c.b16 %v5915, %v5911
        %v6516 = vpack.c.b16 %v5916, %v5912
        %v6517 = vpack.c.b16 %v5917, %v5913
        %v6518 = vpack.c.b16 %v5918, %v5914
        %v6519 = vpack.c.b16 %v5923, %v5919
        %v6520 = vpack.c.b16 %v5924, %v5920
        %v6521 = vpack.c.b16 %v5925, %v5921
        %v6522 = vpack.c.b16 %v5926, %v5922
        %v6523 = vpack.c.b16 %v5931, %v5927
        %v6524 = vpack.c.b16 %v5932, %v5928
        %v6525 = vpack.c.b16 %v5933, %v5929
        %v6526 = vpack.c.b16 %v5934, %v5930
        %v6527 = vpack.c.b16 %v5939, %v5935
        %v6528 = vpack.c.b16 %v5940, %v5936
        %v6529 = vpack.c.b16 %v5941, %v5937
        %v6530 = vpack.c.b16 %v5942, %v5938
        %v6531 = vpack.c.b16 %v5947, %v5943
        %v6532 = vpack.c.b16 %v5948, %v5944
        %v6533 = vpack.c.b16 %v5949, %v5945
        %v6534 = vpack.c.b16 %v5950, %v5946
        %v6535 = vpack.c.b16 %v5955, %v5951
        %v6536 = vpack.c.b16 %v5956, %v5952
        %v6537 = vpack.c.b16 %v5957, %v5953
        %v6538 = vpack.c.b16 %v5958, %v5954
        %v6539 = vpack.c.b16 %v5963, %v5959
        %v6540 = vpack.c.b16 %v5964, %v5960
        %v6541 = vpack.c.b16 %v5965, %v5961
        %v6542 = vpack.c.b16 %v5966, %v5962
        %v6543 = vpack.c.b16 %v5971, %v5967
        %v6544 = vpack.c.b16 %v5972, %v5968
        %v6545 = vpack.c.b16 %v5973, %v5969
        %v6546 = vpack.c.b16 %v5974, %v5970
        %v6547 = vpack.c.b16 %v5979, %v5975
        %v6548 = vpack.c.b16 %v5980, %v5976
        %v6549 = vpack.c.b16 %v5981, %v5977
        %v6550 = vpack.c.b16 %v5982, %v5978
        %v6551 = vpack.c.b16 %v5987, %v5983
        %v6552 = vpack.c.b16 %v5988, %v5984
        %v6553 = vpack.c.b16 %v5989, %v5985
        %v6554 = vpack.c.b16 %v5990, %v5986
        %v6555 = vpack.c.b16 %v5995, %v5991
        %v6556 = vpack.c.b16 %v5996, %v5992
        %v6557 = vpack.c.b16 %v5997, %v5993
        %v6558 = vpack.c.b16 %v5998, %v5994
        %v6559 = vpack.c.b16 %v6003, %v5999
        %v6560 = vpack.c.b16 %v6004, %v6000
        %v6561 = vpack.c.b16 %v6005, %v6001
        %v6562 = vpack.c.b16 %v6006, %v6002
        %v6563 = vpack.c.b16 %v6011, %v6007
        %v6564 = vpack.c.b16 %v6012, %v6008
        %v6565 = vpack.c.b16 %v6013, %v6009
        %v6566 = vpack.c.b16 %v6014, %v6010
        %v6567 = vpack.c.b16 %v6019, %v6015
        %v6568 = vpack.c.b16 %v6020, %v6016
        %v6569 = vpack.c.b16 %v6021, %v6017
        %v6570 = vpack.c.b16 %v6022, %v6018
        %v6571 = vpack.c.b16 %v6027, %v6023
        %v6572 = vpack.c.b16 %v6028, %v6024
        %v6573 = vpack.c.b16 %v6029, %v6025
        %v6574 = vpack.c.b16 %v6030, %v6026
        %v6575 = vpack.c.b16 %v6035, %v6031
        %v6576 = vpack.c.b16 %v6036, %v6032
        %v6577 = vpack.c.b16 %v6037, %v6033
        %v6578 = vpack.c.b16 %v6038, %v6034
        %v6579 = vpack.c.b16 %v6043, %v6039
        %v6580 = vpack.c.b16 %v6044, %v6040
        %v6581 = vpack.c.b16 %v6045, %v6041
        %v6582 = vpack.c.b16 %v6046, %v6042
        %v6583 = vpack.c.b16 %v6051, %v6047
        %v6584 = vpack.c.b16 %v6052, %v6048
        %v6585 = vpack.c.b16 %v6053, %v6049
        %v6586 = vpack.c.b16 %v6054, %v6050
        %v6587 = vpack.c.b16 %v6059, %v6055
        %v6588 = vpack.c.b16 %v6060, %v6056
        %v6589 = vpack.c.b16 %v6061, %v6057
        %v6590 = vpack.c.b16 %v6062, %v6058
        %v6591 = vpack.c.b16 %v6067, %v6063
        %v6592 = vpack.c.b16 %v6068, %v6064
        %v6593 = vpack.c.b16 %v6069, %v6065
        %v6594 = vpack.c.b16 %v6070, %v6066
        %v6595 = vpack.c.b16 %v6075, %v6071
        %v6596 = vpack.c.b16 %v6076, %v6072
        %v6597 = vpack.c.b16 %v6077, %v6073
        %v6598 = vpack.c.b16 %v6078, %v6074
        %v6599 = vpack.c.b16 %v6083, %v6079
        %v6600 = vpack.c.b16 %v6084, %v6080
        %v6601 = vpack.c.b16 %v6085, %v6081
        %v6602 = vpack.c.b16 %v6086, %v6082
        %v6603 = vpack.c.b16 %v6091, %v6087
        %v6604 = vpack.c.b16 %v6092, %v6088
        %v6605 = vpack.c.b16 %v6093, %v6089
        %v6606 = vpack.c.b16 %v6094, %v6090
        %v6607 = vpack.c.b16 %v6099, %v6095
        %v6608 = vpack.c.b16 %v6100, %v6096
        %v6609 = vpack.c.b16 %v6101, %v6097
        %v6610 = vpack.c.b16 %v6102, %v6098
        %v6611 = vpack.c.b16 %v6107, %v6103
        %v6612 = vpack.c.b16 %v6108, %v6104
        %v6613 = vpack.c.b16 %v6109, %v6105
        %v6614 = vpack.c.b16 %v6110, %v6106
        %v6615 = vpack.c.b16 %v6115, %v6111
        %v6616 = vpack.c.b16 %v6116, %v6112
        %v6617 = vpack.c.b16 %v6117, %v6113
        %v6618 = vpack.c.b16 %v6118, %v6114
        %v6619 = vpack.c.b16 %v6123, %v6119
        %v6620 = vpack.c.b16 %v6124, %v6120
        %v6621 = vpack.c.b16 %v6125, %v6121
        %v6622 = vpack.c.b16 %v6126, %v6122
        %v6623 = vpack.c.b16 %v6131, %v6127
        %v6624 = vpack.c.b16 %v6132, %v6128
        %v6625 = vpack.c.b16 %v6133, %v6129
        %v6626 = vpack.c.b16 %v6134, %v6130
        %v6627 = vpack.c.b16 %v6139, %v6135
        %v6628 = vpack.c.b16 %v6140, %v6136
        %v6629 = vpack.c.b16 %v6141, %v6137
        %v6630 = vpack.c.b16 %v6142, %v6138
        %v6631 = vpack.c.b16 %v6147, %v6143
        %v6632 = vpack.c.b16 %v6148, %v6144
        %v6633 = vpack.c.b16 %v6149, %v6145
        %v6634 = vpack.c.b16 %v6150, %v6146
        %v6635 = vpack.c.b16 %v6155, %v6151
        %v6636 = vpack.c.b16 %v6156, %v6152
        %v6637 = vpack.c.b16 %v6157, %v6153
        %v6638 = vpack.c.b16 %v6158, %v6154
        %v6639 = vpack.c.b16 %v6163, %v6159
        %v6640 = vpack.c.b16 %v6164, %v6160
        %v6641 = vpack.c.b16 %v6165, %v6161
        %v6642 = vpack.c.b16 %v6166, %v6162
        %v6643 = vpack.c.b16 %v6171, %v6167
        %v6644 = vpack.c.b16 %v6172, %v6168
        %v6645 = vpack.c.b16 %v6173, %v6169
        %v6646 = vpack.c.b16 %v6174, %v6170
        %v6647 = vpack.c.b16 %v6179, %v6175
        %v6648 = vpack.c.b16 %v6180, %v6176
        %v6649 = vpack.c.b16 %v6181, %v6177
        %v6650 = vpack.c.b16 %v6182, %v6178
        %v6651 = vpack.c.b16 %v6187, %v6183
        %v6652 = vpack.c.b16 %v6188, %v6184
        %v6653 = vpack.c.b16 %v6189, %v6185
        %v6654 = vpack.c.b16 %v6190, %v6186
        %v6655 = vpack.c.b16 %v6195, %v6191
        %v6656 = vpack.c.b16 %v6196, %v6192
        %v6657 = vpack.c.b16 %v6197, %v6193
        %v6658 = vpack.c.b16 %v6198, %v6194
        %v6659 = vpack.c.b16 %v6203, %v6199
        %v6660 = vpack.c.b16 %v6204, %v6200
        %v6661 = vpack.c.b16 %v6205, %v6201
        %v6662 = vpack.c.b16 %v6206, %v6202
        %v6663 = vpack.c.b16 %v6211, %v6207
        %v6664 = vpack.c.b16 %v6212, %v6208
        %v6665 = vpack.c.b16 %v6213, %v6209
        %v6666 = vpack.c.b16 %v6214, %v6210
        %v6667 = vpack.c.b16 %v6219, %v6215
        %v6668 = vpack.c.b16 %v6220, %v6216
        %v6669 = vpack.c.b16 %v6221, %v6217
        %v6670 = vpack.c.b16 %v6222, %v6218
        %v6671 = vpack.c.b16 %v6227, %v6223
        %v6672 = vpack.c.b16 %v6228, %v6224
        %v6673 = vpack.c.b16 %v6229, %v6225
        %v6674 = vpack.c.b16 %v6230, %v6226
        %v6675 = vpack.c.b16 %v6235, %v6231
        %v6676 = vpack.c.b16 %v6236, %v6232
        %v6677 = vpack.c.b16 %v6237, %v6233
        %v6678 = vpack.c.b16 %v6238, %v6234
        %v6679 = vpack.c.b16 %v6243, %v6239
        %v6680 = vpack.c.b16 %v6244, %v6240
        %v6681 = vpack.c.b16 %v6245, %v6241
        %v6682 = vpack.c.b16 %v6246, %v6242
        %v6683 = vpack.c.b16 %v6251, %v6247
        %v6684 = vpack.c.b16 %v6252, %v6248
        %v6685 = vpack.c.b16 %v6253, %v6249
        %v6686 = vpack.c.b16 %v6254, %v6250
        %v6687 = vpack.c.b16 %v6259, %v6255
        %v6688 = vpack.c.b16 %v6260, %v6256
        %v6689 = vpack.c.b16 %v6261, %v6257
        %v6690 = vpack.c.b16 %v6262, %v6258
        %v6691 = vpack.c.b16 %v6267, %v6263
        %v6692 = vpack.c.b16 %v6268, %v6264
        %v6693 = vpack.c.b16 %v6269, %v6265
        %v6694 = vpack.c.b16 %v6270, %v6266
        %v6695 = vpack.c.b16 %v6275, %v6271
        %v6696 = vpack.c.b16 %v6276, %v6272
        %v6697 = vpack.c.b16 %v6277, %v6273
        %v6698 = vpack.c.b16 %v6278, %v6274
        %v6699 = vpack.c.b16 %v6283, %v6279
        %v6700 = vpack.c.b16 %v6284, %v6280
        %v6701 = vpack.c.b16 %v6285, %v6281
        %v6702 = vpack.c.b16 %v6286, %v6282
        %v6703 = vpack.c.b16 %v6291, %v6287
        %v6704 = vpack.c.b16 %v6292, %v6288
        %v6705 = vpack.c.b16 %v6293, %v6289
        %v6706 = vpack.c.b16 %v6294, %v6290
        %v6707 = vpack.c.b16 %v6299, %v6295
        %v6708 = vpack.c.b16 %v6300, %v6296
        %v6709 = vpack.c.b16 %v6301, %v6297
        %v6710 = vpack.c.b16 %v6302, %v6298
        %v6711 = vpack.c.b16 %v6307, %v6303
        %v6712 = vpack.c.b16 %v6308, %v6304
        %v6713 = vpack.c.b16 %v6309, %v6305
        %v6714 = vpack.c.b16 %v6310, %v6306
        %v6715 = vpack.c.b16 %v6315, %v6311
        %v6716 = vpack.c.b16 %v6316, %v6312
        %v6717 = vpack.c.b16 %v6317, %v6313
        %v6718 = vpack.c.b16 %v6318, %v6314
        %v6719 = vpack.c.b16 %v6323, %v6319
        %v6720 = vpack.c.b16 %v6324, %v6320
        %v6721 = vpack.c.b16 %v6325, %v6321
        %v6722 = vpack.c.b16 %v6326, %v6322
        %v6723 = vpack.c.b16 %v6331, %v6327
        %v6724 = vpack.c.b16 %v6332, %v6328
        %v6725 = vpack.c.b16 %v6333, %v6329
        %v6726 = vpack.c.b16 %v6334, %v6330
        %v6727 = vpack.c.b16 %v6339, %v6335
        %v6728 = vpack.c.b16 %v6340, %v6336
        %v6729 = vpack.c.b16 %v6341, %v6337
        %v6730 = vpack.c.b16 %v6342, %v6338
        %v6731 = vpack.c.b16 %v6347, %v6343
        %v6732 = vpack.c.b16 %v6348, %v6344
        %v6733 = vpack.c.b16 %v6349, %v6345
        %v6734 = vpack.c.b16 %v6350, %v6346
        %v6735 = vpack.c.b16 %v6355, %v6351
        %v6736 = vpack.c.b16 %v6356, %v6352
        %v6737 = vpack.c.b16 %v6357, %v6353
        %v6738 = vpack.c.b16 %v6358, %v6354
        %v6739 = vpack.c.b16 %v6363, %v6359
        %v6740 = vpack.c.b16 %v6364, %v6360
        %v6741 = vpack.c.b16 %v6365, %v6361
        %v6742 = vpack.c.b16 %v6366, %v6362
        %v6743 = vpack.c.b16 %v6371, %v6367
        %v6744 = vpack.c.b16 %v6372, %v6368
        %v6745 = vpack.c.b16 %v6373, %v6369
        %v6746 = vpack.c.b16 %v6374, %v6370
        %v6747 = vpack.c.b16 %v6379, %v6375
        %v6748 = vpack.c.b16 %v6380, %v6376
        %v6749 = vpack.c.b16 %v6381, %v6377
        %v6750 = vpack.c.b16 %v6382, %v6378
        %v6751 = vpack.c.b16 %v6387, %v6383
        %v6752 = vpack.c.b16 %v6388, %v6384
        %v6753 = vpack.c.b16 %v6389, %v6385
        %v6754 = vpack.c.b16 %v6390, %v6386
        %v6755 = vpack.c.b16 %v6395, %v6391
        %v6756 = vpack.c.b16 %v6396, %v6392
        %v6757 = vpack.c.b16 %v6397, %v6393
        %v6758 = vpack.c.b16 %v6398, %v6394
        %v6759 = vpack.c.b16 %v6403, %v6399
        %v6760 = vpack.c.b16 %v6404, %v6400
        %v6761 = vpack.c.b16 %v6405, %v6401
        %v6762 = vpack.c.b16 %v6406, %v6402
        %v6763 = vpack.c.b16 %v6411, %v6407
        %v6764 = vpack.c.b16 %v6412, %v6408
        %v6765 = vpack.c.b16 %v6413, %v6409
        %v6766 = vpack.c.b16 %v6414, %v6410
        %v6767 = vpack.c.b16 %v6419, %v6415
        %v6768 = vpack.c.b16 %v6420, %v6416
        %v6769 = vpack.c.b16 %v6421, %v6417
        %v6770 = vpack.c.b16 %v6422, %v6418
        %v6771 = vpack.c.b16 %v6427, %v6423
        %v6772 = vpack.c.b16 %v6428, %v6424
        %v6773 = vpack.c.b16 %v6429, %v6425
        %v6774 = vpack.c.b16 %v6430, %v6426
        %v6775 = vpack.c.b16 %v6435, %v6431
        %v6776 = vpack.c.b16 %v6436, %v6432
        %v6777 = vpack.c.b16 %v6437, %v6433
        %v6778 = vpack.c.b16 %v6438, %v6434
        %v6779 = vpack.c.b16 %v6443, %v6439
        %v6780 = vpack.c.b16 %v6444, %v6440
        %v6781 = vpack.c.b16 %v6445, %v6441
        %v6782 = vpack.c.b16 %v6446, %v6442
        %v6783 = vpack.c.b16 %v6451, %v6447
        %v6784 = vpack.c.b16 %v6452, %v6448
        %v6785 = vpack.c.b16 %v6453, %v6449
        %v6786 = vpack.c.b16 %v6454, %v6450
        %v6787 = vpack.c.b16 %v6459, %v6455
        %v6788 = vpack.c.b16 %v6460, %v6456
        %v6789 = vpack.c.b16 %v6461, %v6457
        %v6790 = vpack.c.b16 %v6462, %v6458
        %v6791 = vpack.c.b16 %v6467, %v6463
        %v6792 = vpack.c.b16 %v6468, %v6464
        %v6793 = vpack.c.b16 %v6469, %v6465
        %v6794 = vpack.c.b16 %v6470, %v6466
        %v6795 = vpack.c.b16 %v6475, %v6471
        %v6796 = vpack.c.b16 %v6476, %v6472
        %v6797 = vpack.c.b16 %v6477, %v6473
        %v6798 = vpack.c.b16 %v6478, %v6474
        %7119 = vmatpush.bf16.msra.mxu0 %v6507
        %7120 = vmatpush.bf16.msra.mxu0 %v6503
        %7121 = vmatpush.bf16.msra.mxu0 %v6499
        %7122 = vmatpush.bf16.msra.mxu0 %v6495
        %7123 = vmatpush.bf16.msra.mxu0 %v6491
        %7124 = vmatpush.bf16.msra.mxu0 %v6487
        %7125 = vmatpush.bf16.msra.mxu0 %v6483
        %7126 = vmatpush.bf16.msra.mxu0 %v6479
        %7127 = vmatmul.bf16.gmra.mxu0 %v5128
        %v7128 = vpop.f32.mrf.mxu0
        %v7129 = vadd.f32 0.0, %v7128
        %v7130 = vpop.f32.mrf.mxu0
        %v7131 = vadd.f32 0.0, %v7130
        %7132 = vdwg.mxu0
        %7133 = vmatpush.bf16.msra.mxu0 %v6539
        %7134 = vmatpush.bf16.msra.mxu0 %v6535
        %7135 = vmatpush.bf16.msra.mxu0 %v6531
        %7136 = vmatpush.bf16.msra.mxu0 %v6527
        %7137 = vmatpush.bf16.msra.mxu0 %v6523
        %7138 = vmatpush.bf16.msra.mxu0 %v6519
        %7139 = vmatpush.bf16.msra.mxu0 %v6515
        %7140 = vmatpush.bf16.msra.mxu0 %v6511
        %7141 = vmatmul.bf16.gmra.mxu0 %v5131
        %v7142 = vpop.f32.mrf.mxu0
        %v7143 = vadd.f32 %v7129, %v7142
        %v7144 = vpop.f32.mrf.mxu0
        %v7145 = vadd.f32 %v7131, %v7144
        %7146 = vdwg.mxu0
        %7147 = vmatpush.bf16.msra.mxu0 %v6571
        %7148 = vmatpush.bf16.msra.mxu0 %v6567
        %7149 = vmatpush.bf16.msra.mxu0 %v6563
        %7150 = vmatpush.bf16.msra.mxu0 %v6559
        %7151 = vmatpush.bf16.msra.mxu0 %v6555
        %7152 = vmatpush.bf16.msra.mxu0 %v6551
        %7153 = vmatpush.bf16.msra.mxu0 %v6547
        %7154 = vmatpush.bf16.msra.mxu0 %v6543
        %7155 = vmatmul.bf16.gmra.mxu0 %v5144
        %v7156 = vpop.f32.mrf.mxu0
        %v7157 = vadd.f32 %v7143, %v7156
        %v7158 = vpop.f32.mrf.mxu0
        %v7159 = vadd.f32 %v7145, %v7158
        %7160 = vdwg.mxu0
        %7161 = vmatpush.bf16.msra.mxu0 %v6603
        %7162 = vmatpush.bf16.msra.mxu0 %v6599
        %7163 = vmatpush.bf16.msra.mxu0 %v6595
        %7164 = vmatpush.bf16.msra.mxu0 %v6591
        %7165 = vmatpush.bf16.msra.mxu0 %v6587
        %7166 = vmatpush.bf16.msra.mxu0 %v6583
        %7167 = vmatpush.bf16.msra.mxu0 %v6579
        %7168 = vmatpush.bf16.msra.mxu0 %v6575
        %7169 = vmatmul.bf16.gmra.mxu0 %v5154
        %v7170 = vpop.f32.mrf.mxu0
        %v7171 = vadd.f32 %v7157, %v7170
        %v7172 = vpop.f32.mrf.mxu0
        %v7173 = vadd.f32 %v7159, %v7172
        %7174 = vdwg.mxu0
        %7175 = vmatpush.bf16.msra.mxu0 %v6635
        %7176 = vmatpush.bf16.msra.mxu0 %v6631
        %7177 = vmatpush.bf16.msra.mxu0 %v6627
        %7178 = vmatpush.bf16.msra.mxu0 %v6623
        %7179 = vmatpush.bf16.msra.mxu0 %v6619
        %7180 = vmatpush.bf16.msra.mxu0 %v6615
        %7181 = vmatpush.bf16.msra.mxu0 %v6611
        %7182 = vmatpush.bf16.msra.mxu0 %v6607
        %7183 = vmatmul.bf16.gmra.mxu0 %v5163
        %v7184 = vpop.f32.mrf.mxu0
        %v7185 = vadd.f32 %v7171, %v7184
        %v7186 = vpop.f32.mrf.mxu0
        %v7187 = vadd.f32 %v7173, %v7186
        %7188 = vdwg.mxu0
        %7189 = vmatpush.bf16.msra.mxu0 %v6667
        %7190 = vmatpush.bf16.msra.mxu0 %v6663
        %7191 = vmatpush.bf16.msra.mxu0 %v6659
        %7192 = vmatpush.bf16.msra.mxu0 %v6655
        %7193 = vmatpush.bf16.msra.mxu0 %v6651
        %7194 = vmatpush.bf16.msra.mxu0 %v6647
        %7195 = vmatpush.bf16.msra.mxu0 %v6643
        %7196 = vmatpush.bf16.msra.mxu0 %v6639
        %7197 = vmatmul.bf16.gmra.mxu0 %v5166
        %v7198 = vpop.f32.mrf.mxu0
        %v7199 = vadd.f32 %v7185, %v7198
        %v7200 = vpop.f32.mrf.mxu0
        %v7201 = vadd.f32 %v7187, %v7200
        %7202 = vdwg.mxu0
        %7203 = vmatpush.bf16.msra.mxu0 %v6699
        %7204 = vmatpush.bf16.msra.mxu0 %v6695
        %7205 = vmatpush.bf16.msra.mxu0 %v6691
        %7206 = vmatpush.bf16.msra.mxu0 %v6687
        %7207 = vmatpush.bf16.msra.mxu0 %v6683
        %7208 = vmatpush.bf16.msra.mxu0 %v6679
        %7209 = vmatpush.bf16.msra.mxu0 %v6675
        %7210 = vmatpush.bf16.msra.mxu0 %v6671
        %7211 = vmatmul.bf16.gmra.mxu0 %v5178
        %v7212 = vpop.f32.mrf.mxu0
        %v7213 = vadd.f32 %v7199, %v7212
        %v7214 = vpop.f32.mrf.mxu0
        %v7215 = vadd.f32 %v7201, %v7214
        %7216 = vdwg.mxu0
        %7217 = vmatpush.bf16.msra.mxu0 %v6731
        %7218 = vmatpush.bf16.msra.mxu0 %v6727
        %7219 = vmatpush.bf16.msra.mxu0 %v6723
        %7220 = vmatpush.bf16.msra.mxu0 %v6719
        %7221 = vmatpush.bf16.msra.mxu0 %v6715
        %7222 = vmatpush.bf16.msra.mxu0 %v6711
        %7223 = vmatpush.bf16.msra.mxu0 %v6707
        %7224 = vmatpush.bf16.msra.mxu0 %v6703
        %7225 = vmatmul.bf16.gmra.mxu0 %v5187
        %v7226 = vpop.f32.mrf.mxu0
        %v7227 = vadd.f32 %v7213, %v7226
        %v7228 = vpop.f32.mrf.mxu0
        %v7229 = vadd.f32 %v7215, %v7228
        %7230 = vdwg.mxu0
        %7231 = vmatpush.bf16.msra.mxu0 %v6763
        %7232 = vmatpush.bf16.msra.mxu0 %v6759
        %7233 = vmatpush.bf16.msra.mxu0 %v6755
        %7234 = vmatpush.bf16.msra.mxu0 %v6751
        %7235 = vmatpush.bf16.msra.mxu0 %v6747
        %7236 = vmatpush.bf16.msra.mxu0 %v6743
        %7237 = vmatpush.bf16.msra.mxu0 %v6739
        %7238 = vmatpush.bf16.msra.mxu0 %v6735
        %7239 = vmatmul.bf16.gmra.mxu0 %v5193
        %v7240 = vpop.f32.mrf.mxu0
        %v7241 = vadd.f32 %v7227, %v7240
        %v7242 = vpop.f32.mrf.mxu0
        %v7243 = vadd.f32 %v7229, %v7242
        %7244 = vdwg.mxu0
        %7245 = vmatpush.bf16.msra.mxu0 %v6795
        %7246 = vmatpush.bf16.msra.mxu0 %v6791
        %7247 = vmatpush.bf16.msra.mxu0 %v6787
        %7248 = vmatpush.bf16.msra.mxu0 %v6783
        %7249 = vmatpush.bf16.msra.mxu0 %v6779
        %7250 = vmatpush.bf16.msra.mxu0 %v6775
        %7251 = vmatpush.bf16.msra.mxu0 %v6771
        %7252 = vmatpush.bf16.msra.mxu0 %v6767
        %7253 = vmatmul.bf16.gmra.mxu0 %v5196
        %v7254 = vpop.f32.mrf.mxu0
        %v7255 = vadd.f32 %v7241, %v7254
        %v7256 = vpop.f32.mrf.mxu0
        %v7257 = vadd.f32 %v7243, %v7256
        %7258 = vdwg.mxu0
        %7259 = vmatpush.bf16.msra.mxu0 %v6508
        %7260 = vmatpush.bf16.msra.mxu0 %v6504
        %7261 = vmatpush.bf16.msra.mxu0 %v6500
        %7262 = vmatpush.bf16.msra.mxu0 %v6496
        %7263 = vmatpush.bf16.msra.mxu0 %v6492
        %7264 = vmatpush.bf16.msra.mxu0 %v6488
        %7265 = vmatpush.bf16.msra.mxu0 %v6484
        %7266 = vmatpush.bf16.msra.mxu0 %v6480
        %7267 = vmatmul.bf16.gmra.mxu0 %v5128
        %v7268 = vpop.f32.mrf.mxu0
        %v7269 = vadd.f32 0.0, %v7268
        %v7270 = vpop.f32.mrf.mxu0
        %v7271 = vadd.f32 0.0, %v7270
        %7272 = vdwg.mxu0
        %7273 = vmatpush.bf16.msra.mxu0 %v6540
        %7274 = vmatpush.bf16.msra.mxu0 %v6536
        %7275 = vmatpush.bf16.msra.mxu0 %v6532
        %7276 = vmatpush.bf16.msra.mxu0 %v6528
        %7277 = vmatpush.bf16.msra.mxu0 %v6524
        %7278 = vmatpush.bf16.msra.mxu0 %v6520
        %7279 = vmatpush.bf16.msra.mxu0 %v6516
        %7280 = vmatpush.bf16.msra.mxu0 %v6512
        %7281 = vmatmul.bf16.gmra.mxu0 %v5131
        %v7282 = vpop.f32.mrf.mxu0
        %v7283 = vadd.f32 %v7269, %v7282
        %v7284 = vpop.f32.mrf.mxu0
        %v7285 = vadd.f32 %v7271, %v7284
        %7286 = vdwg.mxu0
        %7287 = vmatpush.bf16.msra.mxu0 %v6572
        %7288 = vmatpush.bf16.msra.mxu0 %v6568
        %7289 = vmatpush.bf16.msra.mxu0 %v6564
        %7290 = vmatpush.bf16.msra.mxu0 %v6560
        %7291 = vmatpush.bf16.msra.mxu0 %v6556
        %7292 = vmatpush.bf16.msra.mxu0 %v6552
        %7293 = vmatpush.bf16.msra.mxu0 %v6548
        %7294 = vmatpush.bf16.msra.mxu0 %v6544
        %7295 = vmatmul.bf16.gmra.mxu0 %v5144
        %v7296 = vpop.f32.mrf.mxu0
        %v7297 = vadd.f32 %v7283, %v7296
        %v7298 = vpop.f32.mrf.mxu0
        %v7299 = vadd.f32 %v7285, %v7298
        %7300 = vdwg.mxu0
        %7301 = vmatpush.bf16.msra.mxu0 %v6604
        %7302 = vmatpush.bf16.msra.mxu0 %v6600
        %7303 = vmatpush.bf16.msra.mxu0 %v6596
        %7304 = vmatpush.bf16.msra.mxu0 %v6592
        %7305 = vmatpush.bf16.msra.mxu0 %v6588
        %7306 = vmatpush.bf16.msra.mxu0 %v6584
        %7307 = vmatpush.bf16.msra.mxu0 %v6580
        %7308 = vmatpush.bf16.msra.mxu0 %v6576
        %7309 = vmatmul.bf16.gmra.mxu0 %v5154
        %v7310 = vpop.f32.mrf.mxu0
        %v7311 = vadd.f32 %v7297, %v7310
        %v7312 = vpop.f32.mrf.mxu0
        %v7313 = vadd.f32 %v7299, %v7312
        %7314 = vdwg.mxu0
        %7315 = vmatpush.bf16.msra.mxu0 %v6636
        %7316 = vmatpush.bf16.msra.mxu0 %v6632
        %7317 = vmatpush.bf16.msra.mxu0 %v6628
        %7318 = vmatpush.bf16.msra.mxu0 %v6624
        %7319 = vmatpush.bf16.msra.mxu0 %v6620
        %7320 = vmatpush.bf16.msra.mxu0 %v6616
        %7321 = vmatpush.bf16.msra.mxu0 %v6612
        %7322 = vmatpush.bf16.msra.mxu0 %v6608
        %7323 = vmatmul.bf16.gmra.mxu0 %v5163
        %v7324 = vpop.f32.mrf.mxu0
        %v7325 = vadd.f32 %v7311, %v7324
        %v7326 = vpop.f32.mrf.mxu0
        %v7327 = vadd.f32 %v7313, %v7326
        %7328 = vdwg.mxu0
        %7329 = vmatpush.bf16.msra.mxu0 %v6668
        %7330 = vmatpush.bf16.msra.mxu0 %v6664
        %7331 = vmatpush.bf16.msra.mxu0 %v6660
        %7332 = vmatpush.bf16.msra.mxu0 %v6656
        %7333 = vmatpush.bf16.msra.mxu0 %v6652
        %7334 = vmatpush.bf16.msra.mxu0 %v6648
        %7335 = vmatpush.bf16.msra.mxu0 %v6644
        %7336 = vmatpush.bf16.msra.mxu0 %v6640
        %7337 = vmatmul.bf16.gmra.mxu0 %v5166
        %v7338 = vpop.f32.mrf.mxu0
        %v7339 = vadd.f32 %v7325, %v7338
        %v7340 = vpop.f32.mrf.mxu0
        %v7341 = vadd.f32 %v7327, %v7340
        %7342 = vdwg.mxu0
        %7343 = vmatpush.bf16.msra.mxu0 %v6700
        %7344 = vmatpush.bf16.msra.mxu0 %v6696
        %7345 = vmatpush.bf16.msra.mxu0 %v6692
        %7346 = vmatpush.bf16.msra.mxu0 %v6688
        %7347 = vmatpush.bf16.msra.mxu0 %v6684
        %7348 = vmatpush.bf16.msra.mxu0 %v6680
        %7349 = vmatpush.bf16.msra.mxu0 %v6676
        %7350 = vmatpush.bf16.msra.mxu0 %v6672
        %7351 = vmatmul.bf16.gmra.mxu0 %v5178
        %v7352 = vpop.f32.mrf.mxu0
        %v7353 = vadd.f32 %v7339, %v7352
        %v7354 = vpop.f32.mrf.mxu0
        %v7355 = vadd.f32 %v7341, %v7354
        %7356 = vdwg.mxu0
        %7357 = vmatpush.bf16.msra.mxu0 %v6732
        %7358 = vmatpush.bf16.msra.mxu0 %v6728
        %7359 = vmatpush.bf16.msra.mxu0 %v6724
        %7360 = vmatpush.bf16.msra.mxu0 %v6720
        %7361 = vmatpush.bf16.msra.mxu0 %v6716
        %7362 = vmatpush.bf16.msra.mxu0 %v6712
        %7363 = vmatpush.bf16.msra.mxu0 %v6708
        %7364 = vmatpush.bf16.msra.mxu0 %v6704
        %7365 = vmatmul.bf16.gmra.mxu0 %v5187
        %v7366 = vpop.f32.mrf.mxu0
        %v7367 = vadd.f32 %v7353, %v7366
        %v7368 = vpop.f32.mrf.mxu0
        %v7369 = vadd.f32 %v7355, %v7368
        %7370 = vdwg.mxu0
        %7371 = vmatpush.bf16.msra.mxu0 %v6764
        %7372 = vmatpush.bf16.msra.mxu0 %v6760
        %7373 = vmatpush.bf16.msra.mxu0 %v6756
        %7374 = vmatpush.bf16.msra.mxu0 %v6752
        %7375 = vmatpush.bf16.msra.mxu0 %v6748
        %7376 = vmatpush.bf16.msra.mxu0 %v6744
        %7377 = vmatpush.bf16.msra.mxu0 %v6740
        %7378 = vmatpush.bf16.msra.mxu0 %v6736
        %7379 = vmatmul.bf16.gmra.mxu0 %v5193
        %v7380 = vpop.f32.mrf.mxu0
        %v7381 = vadd.f32 %v7367, %v7380
        %v7382 = vpop.f32.mrf.mxu0
        %v7383 = vadd.f32 %v7369, %v7382
        %7384 = vdwg.mxu0
        %7385 = vmatpush.bf16.msra.mxu0 %v6796
        %7386 = vmatpush.bf16.msra.mxu0 %v6792
        %7387 = vmatpush.bf16.msra.mxu0 %v6788
        %7388 = vmatpush.bf16.msra.mxu0 %v6784
        %7389 = vmatpush.bf16.msra.mxu0 %v6780
        %7390 = vmatpush.bf16.msra.mxu0 %v6776
        %7391 = vmatpush.bf16.msra.mxu0 %v6772
        %7392 = vmatpush.bf16.msra.mxu0 %v6768
        %7393 = vmatmul.bf16.gmra.mxu0 %v5196
        %v7394 = vpop.f32.mrf.mxu0
        %v7395 = vadd.f32 %v7381, %v7394
        %v7396 = vpop.f32.mrf.mxu0
        %v7397 = vadd.f32 %v7383, %v7396
        %7398 = vdwg.mxu0
        %7399 = vmatpush.bf16.msra.mxu0 %v6509
        %7400 = vmatpush.bf16.msra.mxu0 %v6505
        %7401 = vmatpush.bf16.msra.mxu0 %v6501
        %7402 = vmatpush.bf16.msra.mxu0 %v6497
        %7403 = vmatpush.bf16.msra.mxu0 %v6493
        %7404 = vmatpush.bf16.msra.mxu0 %v6489
        %7405 = vmatpush.bf16.msra.mxu0 %v6485
        %7406 = vmatpush.bf16.msra.mxu0 %v6481
        %7407 = vmatmul.bf16.gmra.mxu0 %v5128
        %v7408 = vpop.f32.mrf.mxu0
        %v7409 = vadd.f32 0.0, %v7408
        %v7410 = vpop.f32.mrf.mxu0
        %v7411 = vadd.f32 0.0, %v7410
        %7412 = vdwg.mxu0
        %7413 = vmatpush.bf16.msra.mxu0 %v6541
        %7414 = vmatpush.bf16.msra.mxu0 %v6537
        %7415 = vmatpush.bf16.msra.mxu0 %v6533
        %7416 = vmatpush.bf16.msra.mxu0 %v6529
        %7417 = vmatpush.bf16.msra.mxu0 %v6525
        %7418 = vmatpush.bf16.msra.mxu0 %v6521
        %7419 = vmatpush.bf16.msra.mxu0 %v6517
        %7420 = vmatpush.bf16.msra.mxu0 %v6513
        %7421 = vmatmul.bf16.gmra.mxu0 %v5131
        %v7422 = vpop.f32.mrf.mxu0
        %v7423 = vadd.f32 %v7409, %v7422
        %v7424 = vpop.f32.mrf.mxu0
        %v7425 = vadd.f32 %v7411, %v7424
        %7426 = vdwg.mxu0
        %7427 = vmatpush.bf16.msra.mxu0 %v6573
        %7428 = vmatpush.bf16.msra.mxu0 %v6569
        %7429 = vmatpush.bf16.msra.mxu0 %v6565
        %7430 = vmatpush.bf16.msra.mxu0 %v6561
        %7431 = vmatpush.bf16.msra.mxu0 %v6557
        %7432 = vmatpush.bf16.msra.mxu0 %v6553
        %7433 = vmatpush.bf16.msra.mxu0 %v6549
        %7434 = vmatpush.bf16.msra.mxu0 %v6545
        %7435 = vmatmul.bf16.gmra.mxu0 %v5144
        %v7436 = vpop.f32.mrf.mxu0
        %v7437 = vadd.f32 %v7423, %v7436
        %v7438 = vpop.f32.mrf.mxu0
        %v7439 = vadd.f32 %v7425, %v7438
        %7440 = vdwg.mxu0
        %7441 = vmatpush.bf16.msra.mxu0 %v6605
        %7442 = vmatpush.bf16.msra.mxu0 %v6601
        %7443 = vmatpush.bf16.msra.mxu0 %v6597
        %7444 = vmatpush.bf16.msra.mxu0 %v6593
        %7445 = vmatpush.bf16.msra.mxu0 %v6589
        %7446 = vmatpush.bf16.msra.mxu0 %v6585
        %7447 = vmatpush.bf16.msra.mxu0 %v6581
        %7448 = vmatpush.bf16.msra.mxu0 %v6577
        %7449 = vmatmul.bf16.gmra.mxu0 %v5154
        %v7450 = vpop.f32.mrf.mxu0
        %v7451 = vadd.f32 %v7437, %v7450
        %v7452 = vpop.f32.mrf.mxu0
        %v7453 = vadd.f32 %v7439, %v7452
        %7454 = vdwg.mxu0
        %7455 = vmatpush.bf16.msra.mxu0 %v6637
        %7456 = vmatpush.bf16.msra.mxu0 %v6633
        %7457 = vmatpush.bf16.msra.mxu0 %v6629
        %7458 = vmatpush.bf16.msra.mxu0 %v6625
        %7459 = vmatpush.bf16.msra.mxu0 %v6621
        %7460 = vmatpush.bf16.msra.mxu0 %v6617
        %7461 = vmatpush.bf16.msra.mxu0 %v6613
        %7462 = vmatpush.bf16.msra.mxu0 %v6609
        %7463 = vmatmul.bf16.gmra.mxu0 %v5163
        %v7464 = vpop.f32.mrf.mxu0
        %v7465 = vadd.f32 %v7451, %v7464
        %v7466 = vpop.f32.mrf.mxu0
        %v7467 = vadd.f32 %v7453, %v7466
        %7468 = vdwg.mxu0
        %7469 = vmatpush.bf16.msra.mxu0 %v6669
        %7470 = vmatpush.bf16.msra.mxu0 %v6665
        %7471 = vmatpush.bf16.msra.mxu0 %v6661
        %7472 = vmatpush.bf16.msra.mxu0 %v6657
        %7473 = vmatpush.bf16.msra.mxu0 %v6653
        %7474 = vmatpush.bf16.msra.mxu0 %v6649
        %7475 = vmatpush.bf16.msra.mxu0 %v6645
        %7476 = vmatpush.bf16.msra.mxu0 %v6641
        %7477 = vmatmul.bf16.gmra.mxu0 %v5166
        %v7478 = vpop.f32.mrf.mxu0
        %v7479 = vadd.f32 %v7465, %v7478
        %v7480 = vpop.f32.mrf.mxu0
        %v7481 = vadd.f32 %v7467, %v7480
        %7482 = vdwg.mxu0
        %7483 = vmatpush.bf16.msra.mxu0 %v6701
        %7484 = vmatpush.bf16.msra.mxu0 %v6697
        %7485 = vmatpush.bf16.msra.mxu0 %v6693
        %7486 = vmatpush.bf16.msra.mxu0 %v6689
        %7487 = vmatpush.bf16.msra.mxu0 %v6685
        %7488 = vmatpush.bf16.msra.mxu0 %v6681
        %7489 = vmatpush.bf16.msra.mxu0 %v6677
        %7490 = vmatpush.bf16.msra.mxu0 %v6673
        %7491 = vmatmul.bf16.gmra.mxu0 %v5178
        %v7492 = vpop.f32.mrf.mxu0
        %v7493 = vadd.f32 %v7479, %v7492
        %v7494 = vpop.f32.mrf.mxu0
        %v7495 = vadd.f32 %v7481, %v7494
        %7496 = vdwg.mxu0
        %7497 = vmatpush.bf16.msra.mxu0 %v6733
        %7498 = vmatpush.bf16.msra.mxu0 %v6729
        %7499 = vmatpush.bf16.msra.mxu0 %v6725
        %7500 = vmatpush.bf16.msra.mxu0 %v6721
        %7501 = vmatpush.bf16.msra.mxu0 %v6717
        %7502 = vmatpush.bf16.msra.mxu0 %v6713
        %7503 = vmatpush.bf16.msra.mxu0 %v6709
        %7504 = vmatpush.bf16.msra.mxu0 %v6705
        %7505 = vmatmul.bf16.gmra.mxu0 %v5187
        %v7506 = vpop.f32.mrf.mxu0
        %v7507 = vadd.f32 %v7493, %v7506
        %v7508 = vpop.f32.mrf.mxu0
        %v7509 = vadd.f32 %v7495, %v7508
        %7510 = vdwg.mxu0
        %7511 = vmatpush.bf16.msra.mxu0 %v6765
        %7512 = vmatpush.bf16.msra.mxu0 %v6761
        %7513 = vmatpush.bf16.msra.mxu0 %v6757
        %7514 = vmatpush.bf16.msra.mxu0 %v6753
        %7515 = vmatpush.bf16.msra.mxu0 %v6749
        %7516 = vmatpush.bf16.msra.mxu0 %v6745
        %7517 = vmatpush.bf16.msra.mxu0 %v6741
        %7518 = vmatpush.bf16.msra.mxu0 %v6737
        %7519 = vmatmul.bf16.gmra.mxu0 %v5193
        %v7520 = vpop.f32.mrf.mxu0
        %v7521 = vadd.f32 %v7507, %v7520
        %v7522 = vpop.f32.mrf.mxu0
        %v7523 = vadd.f32 %v7509, %v7522
        %7524 = vdwg.mxu0
        %7525 = vmatpush.bf16.msra.mxu0 %v6797
        %7526 = vmatpush.bf16.msra.mxu0 %v6793
        %7527 = vmatpush.bf16.msra.mxu0 %v6789
        %7528 = vmatpush.bf16.msra.mxu0 %v6785
        %7529 = vmatpush.bf16.msra.mxu0 %v6781
        %7530 = vmatpush.bf16.msra.mxu0 %v6777
        %7531 = vmatpush.bf16.msra.mxu0 %v6773
        %7532 = vmatpush.bf16.msra.mxu0 %v6769
        %7533 = vmatmul.bf16.gmra.mxu0 %v5196
        %v7534 = vpop.f32.mrf.mxu0
        %v7535 = vadd.f32 %v7521, %v7534
        %v7536 = vpop.f32.mrf.mxu0
        %v7537 = vadd.f32 %v7523, %v7536
        %7538 = vdwg.mxu0
        %7539 = vmatpush.bf16.msra.mxu0 %v6510
        %7540 = vmatpush.bf16.msra.mxu0 %v6506
        %7541 = vmatpush.bf16.msra.mxu0 %v6502
        %7542 = vmatpush.bf16.msra.mxu0 %v6498
        %7543 = vmatpush.bf16.msra.mxu0 %v6494
        %7544 = vmatpush.bf16.msra.mxu0 %v6490
        %7545 = vmatpush.bf16.msra.mxu0 %v6486
        %7546 = vmatpush.bf16.msra.mxu0 %v6482
        %7547 = vmatmul.bf16.gmra.mxu0 %v5128
        %v7548 = vpop.f32.mrf.mxu0
        %v7549 = vadd.f32 0.0, %v7548
        %v7550 = vpop.f32.mrf.mxu0
        %v7551 = vadd.f32 0.0, %v7550
        %7552 = vdwg.mxu0
        %7553 = vmatpush.bf16.msra.mxu0 %v6542
        %7554 = vmatpush.bf16.msra.mxu0 %v6538
        %7555 = vmatpush.bf16.msra.mxu0 %v6534
        %7556 = vmatpush.bf16.msra.mxu0 %v6530
        %7557 = vmatpush.bf16.msra.mxu0 %v6526
        %7558 = vmatpush.bf16.msra.mxu0 %v6522
        %7559 = vmatpush.bf16.msra.mxu0 %v6518
        %7560 = vmatpush.bf16.msra.mxu0 %v6514
        %7561 = vmatmul.bf16.gmra.mxu0 %v5131
        %v7562 = vpop.f32.mrf.mxu0
        %v7563 = vadd.f32 %v7549, %v7562
        %v7564 = vpop.f32.mrf.mxu0
        %v7565 = vadd.f32 %v7551, %v7564
        %7566 = vdwg.mxu0
        %7567 = vmatpush.bf16.msra.mxu0 %v6574
        %7568 = vmatpush.bf16.msra.mxu0 %v6570
        %7569 = vmatpush.bf16.msra.mxu0 %v6566
        %7570 = vmatpush.bf16.msra.mxu0 %v6562
        %7571 = vmatpush.bf16.msra.mxu0 %v6558
        %7572 = vmatpush.bf16.msra.mxu0 %v6554
        %7573 = vmatpush.bf16.msra.mxu0 %v6550
        %7574 = vmatpush.bf16.msra.mxu0 %v6546
        %7575 = vmatmul.bf16.gmra.mxu0 %v5144
        %v7576 = vpop.f32.mrf.mxu0
        %v7577 = vadd.f32 %v7563, %v7576
        %v7578 = vpop.f32.mrf.mxu0
        %v7579 = vadd.f32 %v7565, %v7578
        %7580 = vdwg.mxu0
        %7581 = vmatpush.bf16.msra.mxu0 %v6606
        %7582 = vmatpush.bf16.msra.mxu0 %v6602
        %7583 = vmatpush.bf16.msra.mxu0 %v6598
        %7584 = vmatpush.bf16.msra.mxu0 %v6594
        %7585 = vmatpush.bf16.msra.mxu0 %v6590
        %7586 = vmatpush.bf16.msra.mxu0 %v6586
        %7587 = vmatpush.bf16.msra.mxu0 %v6582
        %7588 = vmatpush.bf16.msra.mxu0 %v6578
        %7589 = vmatmul.bf16.gmra.mxu0 %v5154
        %v7590 = vpop.f32.mrf.mxu0
        %v7591 = vadd.f32 %v7577, %v7590
        %v7592 = vpop.f32.mrf.mxu0
        %v7593 = vadd.f32 %v7579, %v7592
        %7594 = vdwg.mxu0
        %7595 = vmatpush.bf16.msra.mxu0 %v6638
        %7596 = vmatpush.bf16.msra.mxu0 %v6634
        %7597 = vmatpush.bf16.msra.mxu0 %v6630
        %7598 = vmatpush.bf16.msra.mxu0 %v6626
        %7599 = vmatpush.bf16.msra.mxu0 %v6622
        %7600 = vmatpush.bf16.msra.mxu0 %v6618
        %7601 = vmatpush.bf16.msra.mxu0 %v6614
        %7602 = vmatpush.bf16.msra.mxu0 %v6610
        %7603 = vmatmul.bf16.gmra.mxu0 %v5163
        %v7604 = vpop.f32.mrf.mxu0
        %v7605 = vadd.f32 %v7591, %v7604
        %v7606 = vpop.f32.mrf.mxu0
        %v7607 = vadd.f32 %v7593, %v7606
        %7608 = vdwg.mxu0
        %7609 = vmatpush.bf16.msra.mxu0 %v6670
        %7610 = vmatpush.bf16.msra.mxu0 %v6666
        %7611 = vmatpush.bf16.msra.mxu0 %v6662
        %7612 = vmatpush.bf16.msra.mxu0 %v6658
        %7613 = vmatpush.bf16.msra.mxu0 %v6654
        %7614 = vmatpush.bf16.msra.mxu0 %v6650
        %7615 = vmatpush.bf16.msra.mxu0 %v6646
        %7616 = vmatpush.bf16.msra.mxu0 %v6642
        %7617 = vmatmul.bf16.gmra.mxu0 %v5166
        %v7618 = vpop.f32.mrf.mxu0
        %v7619 = vadd.f32 %v7605, %v7618
        %v7620 = vpop.f32.mrf.mxu0
        %v7621 = vadd.f32 %v7607, %v7620
        %7622 = vdwg.mxu0
        %7623 = vmatpush.bf16.msra.mxu0 %v6702
        %7624 = vmatpush.bf16.msra.mxu0 %v6698
        %7625 = vmatpush.bf16.msra.mxu0 %v6694
        %7626 = vmatpush.bf16.msra.mxu0 %v6690
        %7627 = vmatpush.bf16.msra.mxu0 %v6686
        %7628 = vmatpush.bf16.msra.mxu0 %v6682
        %7629 = vmatpush.bf16.msra.mxu0 %v6678
        %7630 = vmatpush.bf16.msra.mxu0 %v6674
        %7631 = vmatmul.bf16.gmra.mxu0 %v5178
        %v7632 = vpop.f32.mrf.mxu0
        %v7633 = vadd.f32 %v7619, %v7632
        %v7634 = vpop.f32.mrf.mxu0
        %v7635 = vadd.f32 %v7621, %v7634
        %7636 = vdwg.mxu0
        %7637 = vmatpush.bf16.msra.mxu0 %v6734
        %7638 = vmatpush.bf16.msra.mxu0 %v6730
        %7639 = vmatpush.bf16.msra.mxu0 %v6726
        %7640 = vmatpush.bf16.msra.mxu0 %v6722
        %7641 = vmatpush.bf16.msra.mxu0 %v6718
        %7642 = vmatpush.bf16.msra.mxu0 %v6714
        %7643 = vmatpush.bf16.msra.mxu0 %v6710
        %7644 = vmatpush.bf16.msra.mxu0 %v6706
        %7645 = vmatmul.bf16.gmra.mxu0 %v5187
        %v7646 = vpop.f32.mrf.mxu0
        %v7647 = vadd.f32 %v7633, %v7646
        %v7648 = vpop.f32.mrf.mxu0
        %v7649 = vadd.f32 %v7635, %v7648
        %7650 = vdwg.mxu0
        %7651 = vmatpush.bf16.msra.mxu0 %v6766
        %7652 = vmatpush.bf16.msra.mxu0 %v6762
        %7653 = vmatpush.bf16.msra.mxu0 %v6758
        %7654 = vmatpush.bf16.msra.mxu0 %v6754
        %7655 = vmatpush.bf16.msra.mxu0 %v6750
        %7656 = vmatpush.bf16.msra.mxu0 %v6746
        %7657 = vmatpush.bf16.msra.mxu0 %v6742
        %7658 = vmatpush.bf16.msra.mxu0 %v6738
        %7659 = vmatmul.bf16.gmra.mxu0 %v5193
        %v7660 = vpop.f32.mrf.mxu0
        %v7661 = vadd.f32 %v7647, %v7660
        %v7662 = vpop.f32.mrf.mxu0
        %v7663 = vadd.f32 %v7649, %v7662
        %7664 = vdwg.mxu0
        %7665 = vmatpush.bf16.msra.mxu0 %v6798
        %7666 = vmatpush.bf16.msra.mxu0 %v6794
        %7667 = vmatpush.bf16.msra.mxu0 %v6790
        %7668 = vmatpush.bf16.msra.mxu0 %v6786
        %7669 = vmatpush.bf16.msra.mxu0 %v6782
        %7670 = vmatpush.bf16.msra.mxu0 %v6778
        %7671 = vmatpush.bf16.msra.mxu0 %v6774
        %7672 = vmatpush.bf16.msra.mxu0 %v6770
        %7673 = vmatmul.bf16.gmra.mxu0 %v5196
        %v7674 = vpop.f32.mrf.mxu0
        %v7675 = vadd.f32 %v7661, %v7674
        %v7676 = vpop.f32.mrf.mxu0
        %v7677 = vadd.f32 %v7663, %v7676
        %7678 = vdwg.mxu0
        %v7679 = vmax.f32 %v7255, %v7395
        %v7680 = vmax.f32 %v7257, %v7397
        %v7681 = vmax.f32 %v7535, %v7675
        %v7682 = vmax.f32 %v7537, %v7677
        %v7683 = vmax.f32 %v7679, %v7681
        %v7684 = vmax.f32 %v7680, %v7682
        %v7685 = vld [vmem:[#allocation7] sm:$0x1]
        %v7687 = vperm.slane %v7685, 0
        %v7689 = vadd.f32 %v7683, %v7687
        %v7690 = vadd.f32 %v7684, %v7687
        %v7691 = vmax.f32 %v7689, 0.0
        %v7692 = vmax.f32 %v7690, 0.0
        %v7694 = vrot.slane %v7691, 1
        %v7696 = vmax.f32 %v7691, %v7694
        %v7698 = vrot.slane %v7696, 2
        %v7700 = vmax.f32 %v7696, %v7698
        %v7701 = vpack.c.bf16 %v7700, %v7700
        %v7703 = vrot.slane %v7692, 1
        %v7705 = vmax.f32 %v7692, %v7703
        %v7707 = vrot.slane %v7705, 2
        %v7709 = vmax.f32 %v7705, %v7707
        %v7710 = vpack.c.bf16 %v7709, %v7709
        %v7711 = vld [vmem:[%s576] sm:$0x1]
        %v7713 = vunpack.c.l.b16 %v7701
        %v7714 = vpack.c.b16 %v7713, %v7713
        %v7715 = vrot.slane %v7714, 2
        %v7718 = vunpack.c.l.b16 %v7710
        %v7719 = vpack.c.b16 %v7718, %v7718
        %v7720 = vrot.slane %v7719, 2
        %v7722 = vld [vmem:[#allocation9] sm:$0xff]
        %v7723 = vld [vmem:[#allocation9 + $0x8] sm:$0xff]
        %v7724 = vld [vmem:[#allocation9 + $0x10] sm:$0xff]
        %v7725 = vld [vmem:[#allocation9 + $0x18] sm:$0xff]
        %v7726 = vld [vmem:[#allocation9 + $0x20] sm:$0xff]
        %v7727 = vld [vmem:[#allocation9 + $0x28] sm:$0xff]
        %v7728 = vld [vmem:[#allocation9 + $0x30] sm:$0xff]
        %v7729 = vld [vmem:[#allocation9 + $0x38] sm:$0xff]
        %v7730 = vld [vmem:[#allocation9 + $0x40] sm:$0xff]
        %v7731 = vld [vmem:[#allocation9 + $0x48] sm:$0xff]
        %v7732 = vld [vmem:[#allocation9 + $0x50] sm:$0xff]
        %v7733 = vld [vmem:[#allocation9 + $0x58] sm:$0xff]
        %v7734 = vld [vmem:[#allocation9 + $0x60] sm:$0xff]
        %v7735 = vld [vmem:[#allocation9 + $0x68] sm:$0xff]
        %v7736 = vld [vmem:[#allocation9 + $0x70] sm:$0xff]
        %v7737 = vld [vmem:[#allocation9 + $0x78] sm:$0xff]
        %v7738 = vld [vmem:[#allocation9 + $0x80] sm:$0xff]
        %v7739 = vld [vmem:[#allocation9 + $0x88] sm:$0xff]
        %v7740 = vld [vmem:[#allocation9 + $0x90] sm:$0xff]
        %v7741 = vld [vmem:[#allocation9 + $0x98] sm:$0xff]
        %v7742 = vld [vmem:[#allocation9 + $0xa0] sm:$0xff]
        %v7743 = vld [vmem:[#allocation9 + $0xa8] sm:$0xff]
        %v7744 = vld [vmem:[#allocation9 + $0xb0] sm:$0xff]
        %v7745 = vld [vmem:[#allocation9 + $0xb8] sm:$0xff]
        %v7746 = vld [vmem:[#allocation9 + $0xc0] sm:$0xff]
        %v7747 = vld [vmem:[#allocation9 + $0xc8] sm:$0xff]
        %v7748 = vld [vmem:[#allocation9 + $0xd0] sm:$0xff]
        %v7749 = vld [vmem:[#allocation9 + $0xd8] sm:$0xff]
        %v7750 = vld [vmem:[#allocation9 + $0xe0] sm:$0xff]
        %v7751 = vld [vmem:[#allocation9 + $0xe8] sm:$0xff]
        %v7752 = vld [vmem:[#allocation9 + $0xf0] sm:$0xff]
        %v7753 = vld [vmem:[#allocation9 + $0xf8] sm:$0xff]
        %v7754 = vld [vmem:[#allocation9 + $0x100] sm:$0xff]
        %v7755 = vld [vmem:[#allocation9 + $0x108] sm:$0xff]
        %v7756 = vld [vmem:[#allocation9 + $0x110] sm:$0xff]
        %v7757 = vld [vmem:[#allocation9 + $0x118] sm:$0xff]
        %v7758 = vld [vmem:[#allocation9 + $0x120] sm:$0xff]
        %v7759 = vld [vmem:[#allocation9 + $0x128] sm:$0xff]
        %v7760 = vld [vmem:[#allocation9 + $0x130] sm:$0xff]
        %v7761 = vld [vmem:[#allocation9 + $0x138] sm:$0xff]
        %v7762 = vld [vmem:[#allocation9 + $0x140] sm:$0xff]
        %v7763 = vld [vmem:[#allocation9 + $0x148] sm:$0xff]
        %v7764 = vld [vmem:[#allocation9 + $0x150] sm:$0xff]
        %v7765 = vld [vmem:[#allocation9 + $0x158] sm:$0xff]
        %v7766 = vld [vmem:[#allocation9 + $0x160] sm:$0xff]
        %v7767 = vld [vmem:[#allocation9 + $0x168] sm:$0xff]
        %v7768 = vld [vmem:[#allocation9 + $0x170] sm:$0xff]
        %v7769 = vld [vmem:[#allocation9 + $0x178] sm:$0xff]
        %v7770 = vld [vmem:[#allocation9 + $0x180] sm:$0xff]
        %v7771 = vld [vmem:[#allocation9 + $0x188] sm:$0xff]
        %v7772 = vld [vmem:[#allocation9 + $0x190] sm:$0xff]
        %v7773 = vld [vmem:[#allocation9 + $0x198] sm:$0xff]
        %v7774 = vld [vmem:[#allocation9 + $0x1a0] sm:$0xff]
        %v7775 = vld [vmem:[#allocation9 + $0x1a8] sm:$0xff]
        %v7776 = vld [vmem:[#allocation9 + $0x1b0] sm:$0xff]
        %v7777 = vld [vmem:[#allocation9 + $0x1b8] sm:$0xff]
        %v7778 = vld [vmem:[#allocation9 + $0x1c0] sm:$0xff]
        %v7779 = vld [vmem:[#allocation9 + $0x1c8] sm:$0xff]
        %v7780 = vld [vmem:[#allocation9 + $0x1d0] sm:$0xff]
        %v7781 = vld [vmem:[#allocation9 + $0x1d8] sm:$0xff]
        %v7782 = vld [vmem:[#allocation9 + $0x1e0] sm:$0xff]
        %v7783 = vld [vmem:[#allocation9 + $0x1e8] sm:$0xff]
        %v7784 = vld [vmem:[#allocation9 + $0x1f0] sm:$0xff]
        %v7785 = vld [vmem:[#allocation9 + $0x1f8] sm:$0xff]
        %v7786 = vld [vmem:[#allocation9 + $0x200] sm:$0xff]
        %v7787 = vld [vmem:[#allocation9 + $0x208] sm:$0xff]
        %v7788 = vld [vmem:[#allocation9 + $0x210] sm:$0xff]
        %v7789 = vld [vmem:[#allocation9 + $0x218] sm:$0xff]
        %v7790 = vld [vmem:[#allocation9 + $0x220] sm:$0xff]
        %v7791 = vld [vmem:[#allocation9 + $0x228] sm:$0xff]
        %v7792 = vld [vmem:[#allocation9 + $0x230] sm:$0xff]
        %v7793 = vld [vmem:[#allocation9 + $0x238] sm:$0xff]
        %v7794 = vld [vmem:[#allocation9 + $0x240] sm:$0xff]
        %v7795 = vld [vmem:[#allocation9 + $0x248] sm:$0xff]
        %v7796 = vld [vmem:[#allocation9 + $0x250] sm:$0xff]
        %v7797 = vld [vmem:[#allocation9 + $0x258] sm:$0xff]
        %v7798 = vld [vmem:[#allocation9 + $0x260] sm:$0xff]
        %v7799 = vld [vmem:[#allocation9 + $0x268] sm:$0xff]
        %v7800 = vld [vmem:[#allocation9 + $0x270] sm:$0xff]
        %v7801 = vld [vmem:[#allocation9 + $0x278] sm:$0xff]
        %v7802 = vld [vmem:[#allocation10] sm:$0x3]
        %v7883 = vunpack.c.l.b16 %v7722
        %v7884 = vunpack.c.h.b16 %v7722
        %v7885 = vunpack.c.l.b16 %v7723
        %v7886 = vunpack.c.h.b16 %v7723
        %v7887 = vunpack.c.l.b16 %v7724
        %v7888 = vunpack.c.h.b16 %v7724
        %v7889 = vunpack.c.l.b16 %v7725
        %v7890 = vunpack.c.h.b16 %v7725
        %v7891 = vunpack.c.l.b16 %v7726
        %v7892 = vunpack.c.h.b16 %v7726
        %v7893 = vunpack.c.l.b16 %v7727
        %v7894 = vunpack.c.h.b16 %v7727
        %v7895 = vunpack.c.l.b16 %v7728
        %v7896 = vunpack.c.h.b16 %v7728
        %v7897 = vunpack.c.l.b16 %v7729
        %v7898 = vunpack.c.h.b16 %v7729
        %v7899 = vunpack.c.l.b16 %v7730
        %v7900 = vunpack.c.h.b16 %v7730
        %v7901 = vunpack.c.l.b16 %v7731
        %v7902 = vunpack.c.h.b16 %v7731
        %v7903 = vunpack.c.l.b16 %v7732
        %v7904 = vunpack.c.h.b16 %v7732
        %v7905 = vunpack.c.l.b16 %v7733
        %v7906 = vunpack.c.h.b16 %v7733
        %v7907 = vunpack.c.l.b16 %v7734
        %v7908 = vunpack.c.h.b16 %v7734
        %v7909 = vunpack.c.l.b16 %v7735
        %v7910 = vunpack.c.h.b16 %v7735
        %v7911 = vunpack.c.l.b16 %v7736
        %v7912 = vunpack.c.h.b16 %v7736
        %v7913 = vunpack.c.l.b16 %v7737
        %v7914 = vunpack.c.h.b16 %v7737
        %v7915 = vunpack.c.l.b16 %v7738
        %v7916 = vunpack.c.h.b16 %v7738
        %v7917 = vunpack.c.l.b16 %v7739
        %v7918 = vunpack.c.h.b16 %v7739
        %v7919 = vunpack.c.l.b16 %v7740
        %v7920 = vunpack.c.h.b16 %v7740
        %v7921 = vunpack.c.l.b16 %v7741
        %v7922 = vunpack.c.h.b16 %v7741
        %v7923 = vunpack.c.l.b16 %v7742
        %v7924 = vunpack.c.h.b16 %v7742
        %v7925 = vunpack.c.l.b16 %v7743
        %v7926 = vunpack.c.h.b16 %v7743
        %v7927 = vunpack.c.l.b16 %v7744
        %v7928 = vunpack.c.h.b16 %v7744
        %v7929 = vunpack.c.l.b16 %v7745
        %v7930 = vunpack.c.h.b16 %v7745
        %v7931 = vunpack.c.l.b16 %v7746
        %v7932 = vunpack.c.h.b16 %v7746
        %v7933 = vunpack.c.l.b16 %v7747
        %v7934 = vunpack.c.h.b16 %v7747
        %v7935 = vunpack.c.l.b16 %v7748
        %v7936 = vunpack.c.h.b16 %v7748
        %v7937 = vunpack.c.l.b16 %v7749
        %v7938 = vunpack.c.h.b16 %v7749
        %v7939 = vunpack.c.l.b16 %v7750
        %v7940 = vunpack.c.h.b16 %v7750
        %v7941 = vunpack.c.l.b16 %v7751
        %v7942 = vunpack.c.h.b16 %v7751
        %v7943 = vunpack.c.l.b16 %v7752
        %v7944 = vunpack.c.h.b16 %v7752
        %v7945 = vunpack.c.l.b16 %v7753
        %v7946 = vunpack.c.h.b16 %v7753
        %v7947 = vunpack.c.l.b16 %v7754
        %v7948 = vunpack.c.h.b16 %v7754
        %v7949 = vunpack.c.l.b16 %v7755
        %v7950 = vunpack.c.h.b16 %v7755
        %v7951 = vunpack.c.l.b16 %v7756
        %v7952 = vunpack.c.h.b16 %v7756
        %v7953 = vunpack.c.l.b16 %v7757
        %v7954 = vunpack.c.h.b16 %v7757
        %v7955 = vunpack.c.l.b16 %v7758
        %v7956 = vunpack.c.h.b16 %v7758
        %v7957 = vunpack.c.l.b16 %v7759
        %v7958 = vunpack.c.h.b16 %v7759
        %v7959 = vunpack.c.l.b16 %v7760
        %v7960 = vunpack.c.h.b16 %v7760
        %v7961 = vunpack.c.l.b16 %v7761
        %v7962 = vunpack.c.h.b16 %v7761
        %v7963 = vunpack.c.l.b16 %v7762
        %v7964 = vunpack.c.h.b16 %v7762
        %v7965 = vunpack.c.l.b16 %v7763
        %v7966 = vunpack.c.h.b16 %v7763
        %v7967 = vunpack.c.l.b16 %v7764
        %v7968 = vunpack.c.h.b16 %v7764
        %v7969 = vunpack.c.l.b16 %v7765
        %v7970 = vunpack.c.h.b16 %v7765
        %v7971 = vunpack.c.l.b16 %v7766
        %v7972 = vunpack.c.h.b16 %v7766
        %v7973 = vunpack.c.l.b16 %v7767
        %v7974 = vunpack.c.h.b16 %v7767
        %v7975 = vunpack.c.l.b16 %v7768
        %v7976 = vunpack.c.h.b16 %v7768
        %v7977 = vunpack.c.l.b16 %v7769
        %v7978 = vunpack.c.h.b16 %v7769
        %v7979 = vunpack.c.l.b16 %v7770
        %v7980 = vunpack.c.h.b16 %v7770
        %v7981 = vunpack.c.l.b16 %v7771
        %v7982 = vunpack.c.h.b16 %v7771
        %v7983 = vunpack.c.l.b16 %v7772
        %v7984 = vunpack.c.h.b16 %v7772
        %v7985 = vunpack.c.l.b16 %v7773
        %v7986 = vunpack.c.h.b16 %v7773
        %v7987 = vunpack.c.l.b16 %v7774
        %v7988 = vunpack.c.h.b16 %v7774
        %v7989 = vunpack.c.l.b16 %v7775
        %v7990 = vunpack.c.h.b16 %v7775
        %v7991 = vunpack.c.l.b16 %v7776
        %v7992 = vunpack.c.h.b16 %v7776
        %v7993 = vunpack.c.l.b16 %v7777
        %v7994 = vunpack.c.h.b16 %v7777
        %v7995 = vunpack.c.l.b16 %v7778
        %v7996 = vunpack.c.h.b16 %v7778
        %v7997 = vunpack.c.l.b16 %v7779
        %v7998 = vunpack.c.h.b16 %v7779
        %v7999 = vunpack.c.l.b16 %v7780
        %v8000 = vunpack.c.h.b16 %v7780
        %v8001 = vunpack.c.l.b16 %v7781
        %v8002 = vunpack.c.h.b16 %v7781
        %v8003 = vunpack.c.l.b16 %v7782
        %v8004 = vunpack.c.h.b16 %v7782
        %v8005 = vunpack.c.l.b16 %v7783
        %v8006 = vunpack.c.h.b16 %v7783
        %v8007 = vunpack.c.l.b16 %v7784
        %v8008 = vunpack.c.h.b16 %v7784
        %v8009 = vunpack.c.l.b16 %v7785
        %v8010 = vunpack.c.h.b16 %v7785
        %v8011 = vunpack.c.l.b16 %v7786
        %v8012 = vunpack.c.h.b16 %v7786
        %v8013 = vunpack.c.l.b16 %v7787
        %v8014 = vunpack.c.h.b16 %v7787
        %v8015 = vunpack.c.l.b16 %v7788
        %v8016 = vunpack.c.h.b16 %v7788
        %v8017 = vunpack.c.l.b16 %v7789
        %v8018 = vunpack.c.h.b16 %v7789
        %v8019 = vunpack.c.l.b16 %v7790
        %v8020 = vunpack.c.h.b16 %v7790
        %v8021 = vunpack.c.l.b16 %v7791
        %v8022 = vunpack.c.h.b16 %v7791
        %v8023 = vunpack.c.l.b16 %v7792
        %v8024 = vunpack.c.h.b16 %v7792
        %v8025 = vunpack.c.l.b16 %v7793
        %v8026 = vunpack.c.h.b16 %v7793
        %v8027 = vunpack.c.l.b16 %v7794
        %v8028 = vunpack.c.h.b16 %v7794
        %v8029 = vunpack.c.l.b16 %v7795
        %v8030 = vunpack.c.h.b16 %v7795
        %v8031 = vunpack.c.l.b16 %v7796
        %v8032 = vunpack.c.h.b16 %v7796
        %v8033 = vunpack.c.l.b16 %v7797
        %v8034 = vunpack.c.h.b16 %v7797
        %v8035 = vunpack.c.l.b16 %v7798
        %v8036 = vunpack.c.h.b16 %v7798
        %v8037 = vunpack.c.l.b16 %v7799
        %v8038 = vunpack.c.h.b16 %v7799
        %v8039 = vunpack.c.l.b16 %v7800
        %v8040 = vunpack.c.h.b16 %v7800
        %v8041 = vunpack.c.l.b16 %v7801
        %v8042 = vunpack.c.h.b16 %v7801
        %v8043 = vpack.c.b16 %v7885, %v7883
        %v8044 = vpack.c.b16 %v7886, %v7884
        %v8045 = vpack.c.b16 %v7889, %v7887
        %v8046 = vpack.c.b16 %v7890, %v7888
        %v8047 = vpack.c.b16 %v7893, %v7891
        %v8048 = vpack.c.b16 %v7894, %v7892
        %v8049 = vpack.c.b16 %v7897, %v7895
        %v8050 = vpack.c.b16 %v7898, %v7896
        %v8051 = vpack.c.b16 %v7901, %v7899
        %v8052 = vpack.c.b16 %v7902, %v7900
        %v8053 = vpack.c.b16 %v7905, %v7903
        %v8054 = vpack.c.b16 %v7906, %v7904
        %v8055 = vpack.c.b16 %v7909, %v7907
        %v8056 = vpack.c.b16 %v7910, %v7908
        %v8057 = vpack.c.b16 %v7913, %v7911
        %v8058 = vpack.c.b16 %v7914, %v7912
        %v8059 = vpack.c.b16 %v7917, %v7915
        %v8060 = vpack.c.b16 %v7918, %v7916
        %v8061 = vpack.c.b16 %v7921, %v7919
        %v8062 = vpack.c.b16 %v7922, %v7920
        %v8063 = vpack.c.b16 %v7925, %v7923
        %v8064 = vpack.c.b16 %v7926, %v7924
        %v8065 = vpack.c.b16 %v7929, %v7927
        %v8066 = vpack.c.b16 %v7930, %v7928
        %v8067 = vpack.c.b16 %v7933, %v7931
        %v8068 = vpack.c.b16 %v7934, %v7932
        %v8069 = vpack.c.b16 %v7937, %v7935
        %v8070 = vpack.c.b16 %v7938, %v7936
        %v8071 = vpack.c.b16 %v7941, %v7939
        %v8072 = vpack.c.b16 %v7942, %v7940
        %v8073 = vpack.c.b16 %v7945, %v7943
        %v8074 = vpack.c.b16 %v7946, %v7944
        %v8075 = vpack.c.b16 %v7949, %v7947
        %v8076 = vpack.c.b16 %v7950, %v7948
        %v8077 = vpack.c.b16 %v7953, %v7951
        %v8078 = vpack.c.b16 %v7954, %v7952
        %v8079 = vpack.c.b16 %v7957, %v7955
        %v8080 = vpack.c.b16 %v7958, %v7956
        %v8081 = vpack.c.b16 %v7961, %v7959
        %v8082 = vpack.c.b16 %v7962, %v7960
        %v8083 = vpack.c.b16 %v7965, %v7963
        %v8084 = vpack.c.b16 %v7966, %v7964
        %v8085 = vpack.c.b16 %v7969, %v7967
        %v8086 = vpack.c.b16 %v7970, %v7968
        %v8087 = vpack.c.b16 %v7973, %v7971
        %v8088 = vpack.c.b16 %v7974, %v7972
        %v8089 = vpack.c.b16 %v7977, %v7975
        %v8090 = vpack.c.b16 %v7978, %v7976
        %v8091 = vpack.c.b16 %v7981, %v7979
        %v8092 = vpack.c.b16 %v7982, %v7980
        %v8093 = vpack.c.b16 %v7985, %v7983
        %v8094 = vpack.c.b16 %v7986, %v7984
        %v8095 = vpack.c.b16 %v7989, %v7987
        %v8096 = vpack.c.b16 %v7990, %v7988
        %v8097 = vpack.c.b16 %v7993, %v7991
        %v8098 = vpack.c.b16 %v7994, %v7992
        %v8099 = vpack.c.b16 %v7997, %v7995
        %v8100 = vpack.c.b16 %v7998, %v7996
        %v8101 = vpack.c.b16 %v8001, %v7999
        %v8102 = vpack.c.b16 %v8002, %v8000
        %v8103 = vpack.c.b16 %v8005, %v8003
        %v8104 = vpack.c.b16 %v8006, %v8004
        %v8105 = vpack.c.b16 %v8009, %v8007
        %v8106 = vpack.c.b16 %v8010, %v8008
        %v8107 = vpack.c.b16 %v8013, %v8011
        %v8108 = vpack.c.b16 %v8014, %v8012
        %v8109 = vpack.c.b16 %v8017, %v8015
        %v8110 = vpack.c.b16 %v8018, %v8016
        %v8111 = vpack.c.b16 %v8021, %v8019
        %v8112 = vpack.c.b16 %v8022, %v8020
        %v8113 = vpack.c.b16 %v8025, %v8023
        %v8114 = vpack.c.b16 %v8026, %v8024
        %v8115 = vpack.c.b16 %v8029, %v8027
        %v8116 = vpack.c.b16 %v8030, %v8028
        %v8117 = vpack.c.b16 %v8033, %v8031
        %v8118 = vpack.c.b16 %v8034, %v8032
        %v8119 = vpack.c.b16 %v8037, %v8035
        %v8120 = vpack.c.b16 %v8038, %v8036
        %v8121 = vpack.c.b16 %v8041, %v8039
        %v8122 = vpack.c.b16 %v8042, %v8040
        %v8204 = vperm.slane %v7802, 0
        %v8205 = vperm.slane %v7802, 1
        %8208 = vmatpush.bf16.msra.mxu0 %v8057
        %8209 = vmatpush.bf16.msra.mxu0 %v8055
        %8210 = vmatpush.bf16.msra.mxu0 %v8053
        %8211 = vmatpush.bf16.msra.mxu0 %v8051
        %8212 = vmatpush.bf16.msra.mxu0 %v8049
        %8213 = vmatpush.bf16.msra.mxu0 %v8047
        %8214 = vmatpush.bf16.msra.mxu0 %v8045
        %8215 = vmatpush.bf16.msra.mxu0 %v8043
        %8216 = vmatmul.bf16.gmra.mxu0 %v7701
        %v8217 = vpop.f32.mrf.mxu0
        %v8218 = vadd.f32 %v8204, %v8217
        %v8219 = vpop.f32.mrf.mxu0
        %8220 = vdwg.mxu0
        %8221 = vmatpush.bf16.msra.mxu0 %v8073
        %8222 = vmatpush.bf16.msra.mxu0 %v8071
        %8223 = vmatpush.bf16.msra.mxu0 %v8069
        %8224 = vmatpush.bf16.msra.mxu0 %v8067
        %8225 = vmatpush.bf16.msra.mxu0 %v8065
        %8226 = vmatpush.bf16.msra.mxu0 %v8063
        %8227 = vmatpush.bf16.msra.mxu0 %v8061
        %8228 = vmatpush.bf16.msra.mxu0 %v8059
        %8229 = vmatmul.bf16.gmra.mxu0 %v7715
        %v8230 = vpop.f32.mrf.mxu0
        %v8231 = vadd.f32 %v8218, %v8230
        %v8232 = vpop.f32.mrf.mxu0
        %8233 = vdwg.mxu0
        %8234 = vmatpush.bf16.msra.mxu0 %v8089
        %8235 = vmatpush.bf16.msra.mxu0 %v8087
        %8236 = vmatpush.bf16.msra.mxu0 %v8085
        %8237 = vmatpush.bf16.msra.mxu0 %v8083
        %8238 = vmatpush.bf16.msra.mxu0 %v8081
        %8239 = vmatpush.bf16.msra.mxu0 %v8079
        %8240 = vmatpush.bf16.msra.mxu0 %v8077
        %8241 = vmatpush.bf16.msra.mxu0 %v8075
        %8242 = vmatmul.bf16.gmra.mxu0 %v7710
        %v8243 = vpop.f32.mrf.mxu0
        %v8244 = vadd.f32 %v8231, %v8243
        %v8245 = vpop.f32.mrf.mxu0
        %8246 = vdwg.mxu0
        %8247 = vmatpush.bf16.msra.mxu0 %v8105
        %8248 = vmatpush.bf16.msra.mxu0 %v8103
        %8249 = vmatpush.bf16.msra.mxu0 %v8101
        %8250 = vmatpush.bf16.msra.mxu0 %v8099
        %8251 = vmatpush.bf16.msra.mxu0 %v8097
        %8252 = vmatpush.bf16.msra.mxu0 %v8095
        %8253 = vmatpush.bf16.msra.mxu0 %v8093
        %8254 = vmatpush.bf16.msra.mxu0 %v8091
        %8255 = vmatmul.bf16.gmra.mxu0 %v7720
        %v8256 = vpop.f32.mrf.mxu0
        %v8257 = vadd.f32 %v8244, %v8256
        %v8258 = vpop.f32.mrf.mxu0
        %8259 = vdwg.mxu0
        %8260 = vmatpush.bf16.msra.mxu0 %v8121
        %8261 = vmatpush.bf16.msra.mxu0 %v8119
        %8262 = vmatpush.bf16.msra.mxu0 %v8117
        %8263 = vmatpush.bf16.msra.mxu0 %v8115
        %8264 = vmatpush.bf16.msra.mxu0 %v8113
        %8265 = vmatpush.bf16.msra.mxu0 %v8111
        %8266 = vmatpush.bf16.msra.mxu0 %v8109
        %8267 = vmatpush.bf16.msra.mxu0 %v8107
        %8268 = vmatmul.bf16.gmra.mxu0 %v7711
        %v8269 = vpop.f32.mrf.mxu0
        %v8270 = vadd.f32 %v8257, %v8269
        %v8271 = vpop.f32.mrf.mxu0
        %8272 = vdwg.mxu0
        %8273 = vmatpush.bf16.msra.mxu0 %v8058
        %8274 = vmatpush.bf16.msra.mxu0 %v8056
        %8275 = vmatpush.bf16.msra.mxu0 %v8054
        %8276 = vmatpush.bf16.msra.mxu0 %v8052
        %8277 = vmatpush.bf16.msra.mxu0 %v8050
        %8278 = vmatpush.bf16.msra.mxu0 %v8048
        %8279 = vmatpush.bf16.msra.mxu0 %v8046
        %8280 = vmatpush.bf16.msra.mxu0 %v8044
        %8281 = vmatmul.bf16.gmra.mxu0 %v7701
        %v8282 = vpop.f32.mrf.mxu0
        %v8283 = vadd.f32 %v8205, %v8282
        %v8284 = vpop.f32.mrf.mxu0
        %8285 = vdwg.mxu0
        %8286 = vmatpush.bf16.msra.mxu0 %v8074
        %8287 = vmatpush.bf16.msra.mxu0 %v8072
        %8288 = vmatpush.bf16.msra.mxu0 %v8070
        %8289 = vmatpush.bf16.msra.mxu0 %v8068
        %8290 = vmatpush.bf16.msra.mxu0 %v8066
        %8291 = vmatpush.bf16.msra.mxu0 %v8064
        %8292 = vmatpush.bf16.msra.mxu0 %v8062
        %8293 = vmatpush.bf16.msra.mxu0 %v8060
        %8294 = vmatmul.bf16.gmra.mxu0 %v7715
        %v8295 = vpop.f32.mrf.mxu0
        %v8296 = vadd.f32 %v8283, %v8295
        %v8297 = vpop.f32.mrf.mxu0
        %8298 = vdwg.mxu0
        %8299 = vmatpush.bf16.msra.mxu0 %v8090
        %8300 = vmatpush.bf16.msra.mxu0 %v8088
        %8301 = vmatpush.bf16.msra.mxu0 %v8086
        %8302 = vmatpush.bf16.msra.mxu0 %v8084
        %8303 = vmatpush.bf16.msra.mxu0 %v8082
        %8304 = vmatpush.bf16.msra.mxu0 %v8080
        %8305 = vmatpush.bf16.msra.mxu0 %v8078
        %8306 = vmatpush.bf16.msra.mxu0 %v8076
        %8307 = vmatmul.bf16.gmra.mxu0 %v7710
        %v8308 = vpop.f32.mrf.mxu0
        %v8309 = vadd.f32 %v8296, %v8308
        %v8310 = vpop.f32.mrf.mxu0
        %8311 = vdwg.mxu0
        %8312 = vmatpush.bf16.msra.mxu0 %v8106
        %8313 = vmatpush.bf16.msra.mxu0 %v8104
        %8314 = vmatpush.bf16.msra.mxu0 %v8102
        %8315 = vmatpush.bf16.msra.mxu0 %v8100
        %8316 = vmatpush.bf16.msra.mxu0 %v8098
        %8317 = vmatpush.bf16.msra.mxu0 %v8096
        %8318 = vmatpush.bf16.msra.mxu0 %v8094
        %8319 = vmatpush.bf16.msra.mxu0 %v8092
        %8320 = vmatmul.bf16.gmra.mxu0 %v7720
        %v8321 = vpop.f32.mrf.mxu0
        %v8322 = vadd.f32 %v8309, %v8321
        %v8323 = vpop.f32.mrf.mxu0
        %8324 = vdwg.mxu0
        %8325 = vmatpush.bf16.msra.mxu0 %v8122
        %8326 = vmatpush.bf16.msra.mxu0 %v8120
        %8327 = vmatpush.bf16.msra.mxu0 %v8118
        %8328 = vmatpush.bf16.msra.mxu0 %v8116
        %8329 = vmatpush.bf16.msra.mxu0 %v8114
        %8330 = vmatpush.bf16.msra.mxu0 %v8112
        %8331 = vmatpush.bf16.msra.mxu0 %v8110
        %8332 = vmatpush.bf16.msra.mxu0 %v8108
        %8333 = vmatmul.bf16.gmra.mxu0 %v7711
        %v8334 = vpop.f32.mrf.mxu0
        %v8335 = vadd.f32 %v8322, %v8334
        %v8336 = vpop.f32.mrf.mxu0
        %8337 = vdwg.mxu0
        %v8338 = vmax.f32 %v8270, 0.0
        %v8339 = vmax.f32 %v8335, 0.0
        %v8340 = vpack.c.bf16 %v8338, %v8338
        %v8341 = vpack.c.bf16 %v8339, %v8339
        %v8342 = vld [vmem:[#allocation12] sm:$0xff]
        %v8343 = vld [vmem:[#allocation12 + $0x8] sm:$0xff]
        %v8344 = vld [vmem:[#allocation12 + $0x10] sm:$0xff]
        %v8345 = vld [vmem:[#allocation12 + $0x18] sm:$0xff]
        %v8346 = vld [vmem:[#allocation12 + $0x20] sm:$0xff]
        %v8347 = vld [vmem:[#allocation12 + $0x28] sm:$0xff]
        %v8348 = vld [vmem:[#allocation12 + $0x30] sm:$0xff]
        %v8349 = vld [vmem:[#allocation12 + $0x38] sm:$0xff]
        %v8350 = vld [vmem:[#allocation12 + $0x40] sm:$0xff]
        %v8351 = vld [vmem:[#allocation12 + $0x48] sm:$0xff]
        %v8352 = vld [vmem:[#allocation12 + $0x50] sm:$0xff]
        %v8353 = vld [vmem:[#allocation12 + $0x58] sm:$0xff]
        %v8354 = vld [vmem:[#allocation12 + $0x60] sm:$0xff]
        %v8355 = vld [vmem:[#allocation12 + $0x68] sm:$0xff]
        %v8356 = vld [vmem:[#allocation12 + $0x70] sm:$0xff]
        %v8357 = vld [vmem:[#allocation12 + $0x78] sm:$0xff]
        %v8358 = vld [vmem:[#allocation12 + $0x80] sm:$0xff]
        %v8359 = vld [vmem:[#allocation12 + $0x88] sm:$0xff]
        %v8360 = vld [vmem:[#allocation12 + $0x90] sm:$0xff]
        %v8361 = vld [vmem:[#allocation12 + $0x98] sm:$0xff]
        %v8362 = vld [vmem:[#allocation12 + $0xa0] sm:$0xff]
        %v8363 = vld [vmem:[#allocation12 + $0xa8] sm:$0xff]
        %v8364 = vld [vmem:[#allocation12 + $0xb0] sm:$0xff]
        %v8365 = vld [vmem:[#allocation12 + $0xb8] sm:$0xff]
        %v8366 = vld [vmem:[#allocation12 + $0xc0] sm:$0xff]
        %v8367 = vld [vmem:[#allocation12 + $0xc8] sm:$0xff]
        %v8368 = vld [vmem:[#allocation12 + $0xd0] sm:$0xff]
        %v8369 = vld [vmem:[#allocation12 + $0xd8] sm:$0xff]
        %v8370 = vld [vmem:[#allocation12 + $0xe0] sm:$0xff]
        %v8371 = vld [vmem:[#allocation12 + $0xe8] sm:$0xff]
        %v8372 = vld [vmem:[#allocation12 + $0xf0] sm:$0xff]
        %v8373 = vld [vmem:[#allocation12 + $0xf8] sm:$0xff]
        %v8374 = vld [vmem:[#allocation13] sm:$0x3]
        %v8407 = vunpack.c.l.b16 %v8342
        %v8408 = vunpack.c.h.b16 %v8342
        %v8409 = vunpack.c.l.b16 %v8343
        %v8410 = vunpack.c.h.b16 %v8343
        %v8411 = vunpack.c.l.b16 %v8344
        %v8412 = vunpack.c.h.b16 %v8344
        %v8413 = vunpack.c.l.b16 %v8345
        %v8414 = vunpack.c.h.b16 %v8345
        %v8415 = vunpack.c.l.b16 %v8346
        %v8416 = vunpack.c.h.b16 %v8346
        %v8417 = vunpack.c.l.b16 %v8347
        %v8418 = vunpack.c.h.b16 %v8347
        %v8419 = vunpack.c.l.b16 %v8348
        %v8420 = vunpack.c.h.b16 %v8348
        %v8421 = vunpack.c.l.b16 %v8349
        %v8422 = vunpack.c.h.b16 %v8349
        %v8423 = vunpack.c.l.b16 %v8350
        %v8424 = vunpack.c.h.b16 %v8350
        %v8425 = vunpack.c.l.b16 %v8351
        %v8426 = vunpack.c.h.b16 %v8351
        %v8427 = vunpack.c.l.b16 %v8352
        %v8428 = vunpack.c.h.b16 %v8352
        %v8429 = vunpack.c.l.b16 %v8353
        %v8430 = vunpack.c.h.b16 %v8353
        %v8431 = vunpack.c.l.b16 %v8354
        %v8432 = vunpack.c.h.b16 %v8354
        %v8433 = vunpack.c.l.b16 %v8355
        %v8434 = vunpack.c.h.b16 %v8355
        %v8435 = vunpack.c.l.b16 %v8356
        %v8436 = vunpack.c.h.b16 %v8356
        %v8437 = vunpack.c.l.b16 %v8357
        %v8438 = vunpack.c.h.b16 %v8357
        %v8439 = vunpack.c.l.b16 %v8358
        %v8440 = vunpack.c.h.b16 %v8358
        %v8441 = vunpack.c.l.b16 %v8359
        %v8442 = vunpack.c.h.b16 %v8359
        %v8443 = vunpack.c.l.b16 %v8360
        %v8444 = vunpack.c.h.b16 %v8360
        %v8445 = vunpack.c.l.b16 %v8361
        %v8446 = vunpack.c.h.b16 %v8361
        %v8447 = vunpack.c.l.b16 %v8362
        %v8448 = vunpack.c.h.b16 %v8362
        %v8449 = vunpack.c.l.b16 %v8363
        %v8450 = vunpack.c.h.b16 %v8363
        %v8451 = vunpack.c.l.b16 %v8364
        %v8452 = vunpack.c.h.b16 %v8364
        %v8453 = vunpack.c.l.b16 %v8365
        %v8454 = vunpack.c.h.b16 %v8365
        %v8455 = vunpack.c.l.b16 %v8366
        %v8456 = vunpack.c.h.b16 %v8366
        %v8457 = vunpack.c.l.b16 %v8367
        %v8458 = vunpack.c.h.b16 %v8367
        %v8459 = vunpack.c.l.b16 %v8368
        %v8460 = vunpack.c.h.b16 %v8368
        %v8461 = vunpack.c.l.b16 %v8369
        %v8462 = vunpack.c.h.b16 %v8369
        %v8463 = vunpack.c.l.b16 %v8370
        %v8464 = vunpack.c.h.b16 %v8370
        %v8465 = vunpack.c.l.b16 %v8371
        %v8466 = vunpack.c.h.b16 %v8371
        %v8467 = vunpack.c.l.b16 %v8372
        %v8468 = vunpack.c.h.b16 %v8372
        %v8469 = vunpack.c.l.b16 %v8373
        %v8470 = vunpack.c.h.b16 %v8373
        %v8471 = vpack.c.b16 %v8409, %v8407
        %v8472 = vpack.c.b16 %v8410, %v8408
        %v8473 = vpack.c.b16 %v8413, %v8411
        %v8474 = vpack.c.b16 %v8414, %v8412
        %v8475 = vpack.c.b16 %v8417, %v8415
        %v8476 = vpack.c.b16 %v8418, %v8416
        %v8477 = vpack.c.b16 %v8421, %v8419
        %v8478 = vpack.c.b16 %v8422, %v8420
        %v8479 = vpack.c.b16 %v8425, %v8423
        %v8480 = vpack.c.b16 %v8426, %v8424
        %v8481 = vpack.c.b16 %v8429, %v8427
        %v8482 = vpack.c.b16 %v8430, %v8428
        %v8483 = vpack.c.b16 %v8433, %v8431
        %v8484 = vpack.c.b16 %v8434, %v8432
        %v8485 = vpack.c.b16 %v8437, %v8435
        %v8486 = vpack.c.b16 %v8438, %v8436
        %v8487 = vpack.c.b16 %v8441, %v8439
        %v8488 = vpack.c.b16 %v8442, %v8440
        %v8489 = vpack.c.b16 %v8445, %v8443
        %v8490 = vpack.c.b16 %v8446, %v8444
        %v8491 = vpack.c.b16 %v8449, %v8447
        %v8492 = vpack.c.b16 %v8450, %v8448
        %v8493 = vpack.c.b16 %v8453, %v8451
        %v8494 = vpack.c.b16 %v8454, %v8452
        %v8495 = vpack.c.b16 %v8457, %v8455
        %v8496 = vpack.c.b16 %v8458, %v8456
        %v8497 = vpack.c.b16 %v8461, %v8459
        %v8498 = vpack.c.b16 %v8462, %v8460
        %v8499 = vpack.c.b16 %v8465, %v8463
        %v8500 = vpack.c.b16 %v8466, %v8464
        %v8501 = vpack.c.b16 %v8469, %v8467
        %v8502 = vpack.c.b16 %v8470, %v8468
        %v8536 = vperm.slane %v8374, 0
        %v8537 = vperm.slane %v8374, 1
        %8540 = vmatpush.bf16.msra.mxu0 %v8485
        %8541 = vmatpush.bf16.msra.mxu0 %v8483
        %8542 = vmatpush.bf16.msra.mxu0 %v8481
        %8543 = vmatpush.bf16.msra.mxu0 %v8479
        %8544 = vmatpush.bf16.msra.mxu0 %v8477
        %8545 = vmatpush.bf16.msra.mxu0 %v8475
        %8546 = vmatpush.bf16.msra.mxu0 %v8473
        %8547 = vmatpush.bf16.msra.mxu0 %v8471
        %8548 = vmatmul.bf16.gmra.mxu0 %v8340
        %v8549 = vpop.f32.mrf.mxu0
        %v8550 = vadd.f32 %v8536, %v8549
        %v8551 = vpop.f32.mrf.mxu0
        %8552 = vdwg.mxu0
        %8553 = vmatpush.bf16.msra.mxu0 %v8501
        %8554 = vmatpush.bf16.msra.mxu0 %v8499
        %8555 = vmatpush.bf16.msra.mxu0 %v8497
        %8556 = vmatpush.bf16.msra.mxu0 %v8495
        %8557 = vmatpush.bf16.msra.mxu0 %v8493
        %8558 = vmatpush.bf16.msra.mxu0 %v8491
        %8559 = vmatpush.bf16.msra.mxu0 %v8489
        %8560 = vmatpush.bf16.msra.mxu0 %v8487
        %8561 = vmatmul.bf16.gmra.mxu0 %v8341
        %v8562 = vpop.f32.mrf.mxu0
        %v8563 = vadd.f32 %v8550, %v8562
        %v8564 = vpop.f32.mrf.mxu0
        %8565 = vdwg.mxu0
        %8566 = vmatpush.bf16.msra.mxu0 %v8486
        %8567 = vmatpush.bf16.msra.mxu0 %v8484
        %8568 = vmatpush.bf16.msra.mxu0 %v8482
        %8569 = vmatpush.bf16.msra.mxu0 %v8480
        %8570 = vmatpush.bf16.msra.mxu0 %v8478
        %8571 = vmatpush.bf16.msra.mxu0 %v8476
        %8572 = vmatpush.bf16.msra.mxu0 %v8474
        %8573 = vmatpush.bf16.msra.mxu0 %v8472
        %8574 = vmatmul.bf16.gmra.mxu0 %v8340
        %v8575 = vpop.f32.mrf.mxu0
        %v8576 = vadd.f32 %v8537, %v8575
        %v8577 = vpop.f32.mrf.mxu0
        %8578 = vdwg.mxu0
        %8579 = vmatpush.bf16.msra.mxu0 %v8502
        %8580 = vmatpush.bf16.msra.mxu0 %v8500
        %8581 = vmatpush.bf16.msra.mxu0 %v8498
        %8582 = vmatpush.bf16.msra.mxu0 %v8496
        %8583 = vmatpush.bf16.msra.mxu0 %v8494
        %8584 = vmatpush.bf16.msra.mxu0 %v8492
        %8585 = vmatpush.bf16.msra.mxu0 %v8490
        %8586 = vmatpush.bf16.msra.mxu0 %v8488
        %8587 = vmatmul.bf16.gmra.mxu0 %v8341
        %v8588 = vpop.f32.mrf.mxu0
        %v8589 = vadd.f32 %v8576, %v8588
        %v8590 = vpop.f32.mrf.mxu0
        %8591 = vdwg.mxu0
        %v8592 = vmax.f32 %v8563, 0.0
        %v8593 = vmax.f32 %v8589, 0.0
        %v8594 = vpack.c.bf16 %v8592, %v8592
        %v8595 = vpack.c.bf16 %v8593, %v8593
        %v8596 = vld [vmem:[#allocation15] sm:$0xf]
        %v8597 = vld [vmem:[#allocation15 + $0x4] sm:$0xf]
        %v8598 = vld [vmem:[#allocation15 + $0x8] sm:$0xf]
        %v8599 = vld [vmem:[#allocation15 + $0xc] sm:$0xf]
        %v8600 = vld [vmem:[#allocation15 + $0x10] sm:$0xf]
        %v8601 = vld [vmem:[#allocation15 + $0x14] sm:$0xf]
        %v8602 = vld [vmem:[#allocation15 + $0x18] sm:$0xf]
        %v8603 = vld [vmem:[#allocation15 + $0x1c] sm:$0xf]
        %v8604 = vld [vmem:[#allocation15 + $0x20] sm:$0xf]
        %v8605 = vld [vmem:[#allocation15 + $0x24] sm:$0xf]
        %v8606 = vld [vmem:[#allocation15 + $0x28] sm:$0xf]
        %v8607 = vld [vmem:[#allocation15 + $0x2c] sm:$0xf]
        %v8608 = vld [vmem:[#allocation15 + $0x30] sm:$0xf]
        %v8609 = vld [vmem:[#allocation15 + $0x34] sm:$0xf]
        %v8610 = vld [vmem:[#allocation15 + $0x38] sm:$0xf]
        %v8611 = vld [vmem:[#allocation15 + $0x3c] sm:$0xf]
        %v8612 = vld [vmem:[#allocation15 + $0x40] sm:$0xf]
        %v8613 = vld [vmem:[#allocation15 + $0x44] sm:$0xf]
        %v8614 = vld [vmem:[#allocation15 + $0x48] sm:$0xf]
        %v8615 = vld [vmem:[#allocation15 + $0x4c] sm:$0xf]
        %v8616 = vld [vmem:[#allocation15 + $0x50] sm:$0xf]
        %v8617 = vld [vmem:[#allocation15 + $0x54] sm:$0xf]
        %v8618 = vld [vmem:[#allocation15 + $0x58] sm:$0xf]
        %v8619 = vld [vmem:[#allocation15 + $0x5c] sm:$0xf]
        %v8620 = vld [vmem:[#allocation15 + $0x60] sm:$0xf]
        %v8621 = vld [vmem:[#allocation15 + $0x64] sm:$0xf]
        %v8622 = vld [vmem:[#allocation15 + $0x68] sm:$0xf]
        %v8623 = vld [vmem:[#allocation15 + $0x6c] sm:$0xf]
        %v8624 = vld [vmem:[#allocation15 + $0x70] sm:$0xf]
        %v8625 = vld [vmem:[#allocation15 + $0x74] sm:$0xf]
        %v8626 = vld [vmem:[#allocation15 + $0x78] sm:$0xf]
        %v8627 = vld [vmem:[#allocation15 + $0x7c] sm:$0xf]
        %v8628 = vld [vmem:[#allocation16] sm:$0x1]
        %v8661 = vunpack.c.l.b16 %v8596
        %v8662 = vunpack.c.l.b16 %v8597
        %v8663 = vunpack.c.l.b16 %v8598
        %v8664 = vunpack.c.l.b16 %v8599
        %v8665 = vunpack.c.l.b16 %v8600
        %v8666 = vunpack.c.l.b16 %v8601
        %v8667 = vunpack.c.l.b16 %v8602
        %v8668 = vunpack.c.l.b16 %v8603
        %v8669 = vunpack.c.l.b16 %v8604
        %v8670 = vunpack.c.l.b16 %v8605
        %v8671 = vunpack.c.l.b16 %v8606
        %v8672 = vunpack.c.l.b16 %v8607
        %v8673 = vunpack.c.l.b16 %v8608
        %v8674 = vunpack.c.l.b16 %v8609
        %v8675 = vunpack.c.l.b16 %v8610
        %v8676 = vunpack.c.l.b16 %v8611
        %v8677 = vunpack.c.l.b16 %v8612
        %v8678 = vunpack.c.l.b16 %v8613
        %v8679 = vunpack.c.l.b16 %v8614
        %v8680 = vunpack.c.l.b16 %v8615
        %v8681 = vunpack.c.l.b16 %v8616
        %v8682 = vunpack.c.l.b16 %v8617
        %v8683 = vunpack.c.l.b16 %v8618
        %v8684 = vunpack.c.l.b16 %v8619
        %v8685 = vunpack.c.l.b16 %v8620
        %v8686 = vunpack.c.l.b16 %v8621
        %v8687 = vunpack.c.l.b16 %v8622
        %v8688 = vunpack.c.l.b16 %v8623
        %v8689 = vunpack.c.l.b16 %v8624
        %v8690 = vunpack.c.l.b16 %v8625
        %v8691 = vunpack.c.l.b16 %v8626
        %v8692 = vunpack.c.l.b16 %v8627
        %v8693 = vpack.c.b16 %v8662, %v8661
        %v8694 = vpack.c.b16 %v8664, %v8663
        %v8695 = vpack.c.b16 %v8666, %v8665
        %v8696 = vpack.c.b16 %v8668, %v8667
        %v8697 = vpack.c.b16 %v8670, %v8669
        %v8698 = vpack.c.b16 %v8672, %v8671
        %v8699 = vpack.c.b16 %v8674, %v8673
        %v8700 = vpack.c.b16 %v8676, %v8675
        %v8701 = vpack.c.b16 %v8678, %v8677
        %v8702 = vpack.c.b16 %v8680, %v8679
        %v8703 = vpack.c.b16 %v8682, %v8681
        %v8704 = vpack.c.b16 %v8684, %v8683
        %v8705 = vpack.c.b16 %v8686, %v8685
        %v8706 = vpack.c.b16 %v8688, %v8687
        %v8707 = vpack.c.b16 %v8690, %v8689
        %v8708 = vpack.c.b16 %v8692, %v8691
        %8725 = vmatpush.bf16.msra.mxu0 %v8700
        %8726 = vmatpush.bf16.msra.mxu0 %v8699
        %8727 = vmatpush.bf16.msra.mxu0 %v8698
        %8728 = vmatpush.bf16.msra.mxu0 %v8697
        %8729 = vmatpush.bf16.msra.mxu0 %v8696
        %8730 = vmatpush.bf16.msra.mxu0 %v8695
        %8731 = vmatpush.bf16.msra.mxu0 %v8694
        %8732 = vmatpush.bf16.msra.mxu0 %v8693
        %8733 = vmatmul.bf16.gmra.mxu0 %v8594
        %v8734 = vpop.f32.mrf.mxu0
        %v8735 = vadd.f32 %v8628, %v8734
        %v8736 = vpop.f32.mrf.mxu0
        %8737 = vdwg.mxu0
        %8738 = vmatpush.bf16.msra.mxu0 %v8708
        %8739 = vmatpush.bf16.msra.mxu0 %v8707
        %8740 = vmatpush.bf16.msra.mxu0 %v8706
        %8741 = vmatpush.bf16.msra.mxu0 %v8705
        %8742 = vmatpush.bf16.msra.mxu0 %v8704
        %8743 = vmatpush.bf16.msra.mxu0 %v8703
        %8744 = vmatpush.bf16.msra.mxu0 %v8702
        %8745 = vmatpush.bf16.msra.mxu0 %v8701
        %8746 = vmatmul.bf16.gmra.mxu0 %v8595
        %v8747 = vpop.f32.mrf.mxu0
        %v8748 = vadd.f32 %v8735, %v8747
        %v8749 = vpop.f32.mrf.mxu0
        %8750 = vdwg.mxu0
        %8751 = vst [vmem:[%s579] sm:$0x1] %v8748
        %p8752 = scmp.lt.s32.totalorder %s29, 1
        %s8753 = scalar_select %p8752, %s29, 1
        %s8754 = scalar_lea.vmem %s12, %s8753
        // Predicated region
        $region109: #{critic_forward.1} parent=67 // pred_check
          %p8755 = pneg %p309
        $region110: #{critic_forward.1} parent=67 // pred_check_branch
          %8757 = sbr.rel (%p8755) target = $region112
        $region111: #{critic_forward.1} parent=67 // pred_region
          _
        $region112: #{critic_forward.1} parent=67 // pred_fallthru
          _
      $region68: #{critic_forward.1} parent=5 // pred_fallthru
        _
      %p8758 = scmp.le.s32.totalorder 2, %s24
      // Predicated region
      $region113: #{critic_forward.1} parent=5 // pred_check
        %p8759 = pneg %p8758
      $region114: #{critic_forward.1} parent=5 // pred_check_branch
        %8761 = sbr.rel (%p8759) target = $region116
      $region115: #{critic_forward.1} parent=5 // pred_region
        %s8762 = ssub.s32 %s24, 2
        // Predicated region
        $region117: #{critic_forward.1} parent=115 // pred_check
          %p8763 = pneg %p315
        $region118: #{critic_forward.1} parent=115 // pred_check_branch
          %8765 = sbr.rel (%p8763) target = $region120
        $region119: #{critic_forward.1} parent=115 // pred_region
          %p8766 = scmp.lt.s32.totalorder %s30, 1
          %s8767 = scalar_select %p8766, %s30, 1
          %s8768 = scalar_lea.vmem %s12, %s8767
        $region120: #{critic_forward.1} parent=115 // pred_fallthru
          _
      $region116: #{critic_forward.1} parent=5 // pred_fallthru
        _
    $region6: #{critic_forward.1} parent=1 // loop_footer
      %s28 = sadd.s32 1, %s24
    $region7: #{critic_forward.1} parent=1 // loop_footer_branch
      %23 = sbr.rel target = $region3
    $region8: #{critic_forward.1} parent=1 // loop_exit
      _
    %8769 = vsyncpa [#allocation3], 1
    %s8770 = scalar_lea.sflag [#allocation3], 1
    %8771 = vsyncpa %s8770, 1
    %8772 = vsyncpa [#allocation5], 1
    %8773 = vsyncpa [#allocation8], 1
    %8774 = vsyncpa [#allocation11], 1
    %8775 = vsyncpa [#allocation14], 1
    %8776 = vsyncpa [#allocation17], 1

</llo_original>
